<compile_context>
chip_gen: v7x
topology: tpu7x:2x2x1
jax: 0.10.0
libtpu: 0.0.40
codegen_flags: <defaults>
</compile_context>

<pallas_src>
import numpy as np
import jax
import jax.numpy as jnp
from jax.experimental import pallas as pl
from jax.experimental.pallas import tpu as pltpu

KEEP_FROM = 12  # out = out[12:]


# ----------------------------------------------------------------------------
# Fused kernel builder: all GRU layers + Linear in one kernel invocation.
# ----------------------------------------------------------------------------
def build_fused_kernel(S, B, H, n_layers, keep_from):
    """Kernel refs layout:
       [x(S*B,Din)],
       then per layer l: [w_ih (3,Din_l,H), w_hh (3,H,H), b (4,1,H)],
       then [w_fc (H,O), b_fc (1,O)],
       then out_ref ((S-keep_from)*B, O),
       then scratch hseq_ref (S*B, H).
       Gate order r, z, n.  b = [b_ir+b_hr, b_iz+b_hz, b_in, b_hn]."""

    def kernel(*refs):
        x_ref = refs[0]
        wfc_ref = refs[1 + 3 * n_layers]
        bfc_ref = refs[2 + 3 * n_layers]
        out_ref = refs[3 + 3 * n_layers]
        hseq_ref = refs[4 + 3 * n_layers]

        seq = x_ref[...]                                   # (S*B, Din) layer input
        for l in range(n_layers):
            wih_ref = refs[1 + 3 * l]
            whh_ref = refs[2 + 3 * l]
            b_ref = refs[3 + 3 * l]

            # Hoisted input projections over the whole sequence (no serial dep).
            gi_r = jnp.dot(seq, wih_ref[0],
                           preferred_element_type=jnp.float32) + b_ref[0]
            gi_z = jnp.dot(seq, wih_ref[1],
                           preferred_element_type=jnp.float32) + b_ref[1]
            gi_n = jnp.dot(seq, wih_ref[2],
                           preferred_element_type=jnp.float32) + b_ref[2]

            # Hoist recurrent weights / bias broadcast out of the time loop.
            w_hr = whh_ref[0]
            w_hz = whh_ref[1]
            w_hn = whh_ref[2]
            b_hn = jnp.broadcast_to(b_ref[3], (B, H))

            h = jnp.zeros((B, H), jnp.float32)
            for t in range(S):                             # fully unrolled, static slices
                lo = t * B
                r = jax.nn.sigmoid(
                    gi_r[lo:lo + B] +
                    jnp.dot(h, w_hr, preferred_element_type=jnp.float32))
                z = jax.nn.sigmoid(
                    gi_z[lo:lo + B] +
                    jnp.dot(h, w_hz, preferred_element_type=jnp.float32))
                n = jnp.tanh(
                    gi_n[lo:lo + B] + r *
                    (jnp.dot(h, w_hn, preferred_element_type=jnp.float32) + b_hn))
                h = (1.0 - z) * n + z * h
                hseq_ref[lo:lo + B, :] = h
            seq = hseq_ref[...]                            # next layer's (S*B, H) input

        # Epilogue: Linear applied only to time steps >= keep_from.
        y_in = seq[keep_from * B:, :]                      # ((S-keep_from)*B, H)
        out_ref[...] = (jnp.dot(y_in, wfc_ref[...],
                                preferred_element_type=jnp.float32) + bfc_ref[...])

    return kernel


def _full_spec(a):
    nd = a.ndim
    return pl.BlockSpec(a.shape, lambda i, nd=nd: (0,) * nd)


# ----------------------------------------------------------------------------
# Full model forward (single fused Pallas call).
# ----------------------------------------------------------------------------
def gru_model_forward(x, gru_params, w_fc, b_fc):
    """x: (S, B, D); gru_params: list of (w_ih(3H,Din), w_hh(3H,H), b_ih(3H,), b_hh(3H,));
       w_fc: (O, H); b_fc: (O,).  Returns (S-12, B, O)."""
    S, B, D = x.shape
    n_layers = len(gru_params)
    H = gru_params[0][1].shape[1]
    O = w_fc.shape[0]
    S2 = S - KEEP_FROM

    inputs = [jnp.asarray(x, jnp.float32).reshape(S * B, D)]
    for (w_ih, w_hh, b_ih, b_hh) in gru_params:
        w_ih = jnp.asarray(w_ih, jnp.float32)
        w_hh = jnp.asarray(w_hh, jnp.float32)
        b_ih = jnp.asarray(b_ih, jnp.float32)
        b_hh = jnp.asarray(b_hh, jnp.float32)
        # Split packed [r; z; n] gates; transpose so dots are (rows, Din) @ (Din, H).
        wih_g = jnp.stack([w_ih[g * H:(g + 1) * H].T for g in range(3)])   # (3, Din, H)
        whh_g = jnp.stack([w_hh[g * H:(g + 1) * H].T for g in range(3)])   # (3, H, H)
        b_g = jnp.stack([
            (b_ih[:H] + b_hh[:H]).reshape(1, H),              # r: combined bias
            (b_ih[H:2 * H] + b_hh[H:2 * H]).reshape(1, H),    # z: combined bias
            b_ih[2 * H:].reshape(1, H),                       # n: input bias
            b_hh[2 * H:].reshape(1, H),                       # n: hidden bias (inside r*())
        ])                                                    # (4, 1, H)
        inputs += [wih_g, whh_g, b_g]
    inputs += [jnp.asarray(w_fc, jnp.float32).T,              # (H, O)
               jnp.asarray(b_fc, jnp.float32).reshape(1, O)]  # (1, O)

    kernel = build_fused_kernel(S, B, H, n_layers, KEEP_FROM)

    out2d = pl.pallas_call(
        kernel,
        out_shape=jax.ShapeDtypeStruct((S2 * B, O), jnp.float32),
        grid=(1,),
        in_specs=[_full_spec(a) for a in inputs],
        out_specs=pl.BlockSpec((S2 * B, O), lambda i: (0, 0)),
        scratch_shapes=[pltpu.VMEM((S * B, H), jnp.float32)],
        compiler_params=pltpu.CompilerParams(
            dimension_semantics=("arbitrary",)),
    )(*inputs)
    return out2d.reshape(S2, B, O)


# ----------------------------------------------------------------------------
# Pure-JAX reference (for correctness check)
# ----------------------------------------------------------------------------
def gru_model_reference(x, gru_params, w_fc, b_fc):
    layer_in = x
    for (w_ih, w_hh, b_ih, b_hh) in gru_params:
        H = w_hh.shape[1]
        B = x.shape[1]

        def step(h, x_t):
            gi = x_t @ w_ih.T + b_ih
            gh = h @ w_hh.T + b_hh
            r = jax.nn.sigmoid(gi[:, :H] + gh[:, :H])
            z = jax.nn.sigmoid(gi[:, H:2 * H] + gh[:, H:2 * H])
            n = jnp.tanh(gi[:, 2 * H:] + r * gh[:, 2 * H:])
            h_new = (1.0 - z) * n + z * h
            return h_new, h_new

        h0 = jnp.zeros((B, H), jnp.float32)
        _, outs = jax.lax.scan(step, h0, layer_in)
        layer_in = outs
    out = layer_in[KEEP_FROM:]
    return out @ w_fc.T + b_fc


# ----------------------------------------------------------------------------
if __name__ == "__main__":
    # Small shapes consistent with the module; seq_len must exceed 12.
    SEQ, BATCH = 16, 2
    IN_DIM, HIDDEN_DIM, OUT_DIM, HIDDEN_LAYER = 8, 32, 4, 2

    key = jax.random.PRNGKey(0)
    k_x, key = jax.random.split(key)
    x = jax.random.normal(k_x, (SEQ, BATCH, IN_DIM), dtype=jnp.float32)

    # Deterministic PyTorch-style uniform(-1/sqrt(H), 1/sqrt(H)) init.
    bound = 1.0 / np.sqrt(HIDDEN_DIM)
    gru_params = []
    for layer in range(HIDDEN_LAYER):
        d_in = IN_DIM if layer == 0 else HIDDEN_DIM
        k1, k2, k3, k4, key = jax.random.split(key, 5)
        w_ih = jax.random.uniform(k1, (3 * HIDDEN_DIM, d_in),
                                  minval=-bound, maxval=bound, dtype=jnp.float32)
        w_hh = jax.random.uniform(k2, (3 * HIDDEN_DIM, HIDDEN_DIM),
                                  minval=-bound, maxval=bound, dtype=jnp.float32)
        b_ih = jax.random.uniform(k3, (3 * HIDDEN_DIM,),
                                  minval=-bound, maxval=bound, dtype=jnp.float32)
        b_hh = jax.random.uniform(k4, (3 * HIDDEN_DIM,),
                                  minval=-bound, maxval=bound, dtype=jnp.float32)
        gru_params.append((w_ih, w_hh, b_ih, b_hh))

    k5, k6, key = jax.random.split(key, 3)
    fc_bound = 1.0 / np.sqrt(HIDDEN_DIM)
    w_fc = jax.random.uniform(k5, (OUT_DIM, HIDDEN_DIM),
                              minval=-fc_bound, maxval=fc_bound, dtype=jnp.float32)
    b_fc = jax.random.uniform(k6, (OUT_DIM,),
                              minval=-fc_bound, maxval=fc_bound, dtype=jnp.float32)

    out = gru_model_forward(x, gru_params, w_fc, b_fc)
    out = jax.block_until_ready(out)

    ref = jax.block_until_ready(gru_model_reference(x, gru_params, w_fc, b_fc))
    assert out.shape == (SEQ - 12, BATCH, OUT_DIM), out.shape
    np.testing.assert_allclose(np.asarray(out), np.asarray(ref),
                               rtol=1e-4, atol=1e-4)

    print("KERNEL_OK")
</pallas_src>

<mosaic_0001>
module attributes {stable_mosaic.version = 11 : i64} {
  func.func @kernel(%arg0: i32, %arg1: memref<32x8xf32, #tpu.memory_space<vmem>>, %arg2: memref<3x8x32xf32, #tpu.memory_space<vmem>>, %arg3: memref<3x32x32xf32, #tpu.memory_space<vmem>>, %arg4: memref<4x1x32xf32, #tpu.memory_space<vmem>>, %arg5: memref<3x32x32xf32, #tpu.memory_space<vmem>>, %arg6: memref<3x32x32xf32, #tpu.memory_space<vmem>>, %arg7: memref<4x1x32xf32, #tpu.memory_space<vmem>>, %arg8: memref<32x4xf32, #tpu.memory_space<vmem>>, %arg9: memref<1x4xf32, #tpu.memory_space<vmem>>, %arg10: memref<8x4xf32, #tpu.memory_space<vmem>>, %arg11: memref<32x32xf32, #tpu.memory_space<vmem>>) attributes {dimension_semantics = [#tpu.dimension_semantics<arbitrary>], iteration_bounds = array<i64: 1>, scalar_prefetch = 0 : i64, scratch_operands = 1 : i64, tpu.core_type = #tpu.core_type<tc>, window_params = [{pipeline_mode = #tpu.pipeline_mode<synchronous>, transform_indices = @transform_0, window_bounds = array<i64: 32, 8>}, {pipeline_mode = #tpu.pipeline_mode<synchronous>, transform_indices = @transform_1, window_bounds = array<i64: 3, 8, 32>}, {pipeline_mode = #tpu.pipeline_mode<synchronous>, transform_indices = @transform_2, window_bounds = array<i64: 3, 32, 32>}, {pipeline_mode = #tpu.pipeline_mode<synchronous>, transform_indices = @transform_3, window_bounds = array<i64: 4, 1, 32>}, {pipeline_mode = #tpu.pipeline_mode<synchronous>, transform_indices = @transform_4, window_bounds = array<i64: 3, 32, 32>}, {pipeline_mode = #tpu.pipeline_mode<synchronous>, transform_indices = @transform_5, window_bounds = array<i64: 3, 32, 32>}, {pipeline_mode = #tpu.pipeline_mode<synchronous>, transform_indices = @transform_6, window_bounds = array<i64: 4, 1, 32>}, {pipeline_mode = #tpu.pipeline_mode<synchronous>, transform_indices = @transform_7, window_bounds = array<i64: 32, 4>}, {pipeline_mode = #tpu.pipeline_mode<synchronous>, transform_indices = @transform_8, window_bounds = array<i64: 1, 4>}, {pipeline_mode = #tpu.pipeline_mode<synchronous>, transform_indices = @transform_9, window_bounds = array<i64: 8, 4>}]} {
    %c0 = arith.constant 0 : index
    %c0_0 = arith.constant 0 : index
    %0 = vector.load %arg1[%c0, %c0_0] : memref<32x8xf32, #tpu.memory_space<vmem>>, vector<32x8xf32>
    %c0_1 = arith.constant 0 : index
    %c0_2 = arith.constant 0 : index
    %c0_3 = arith.constant 0 : index
    %1 = vector.load %arg2[%c0_1, %c0_2, %c0_3] : memref<3x8x32xf32, #tpu.memory_space<vmem>>, vector<1x8x32xf32>
    %2 = vector.shape_cast %1 : vector<1x8x32xf32> to vector<8x32xf32>
    %cst = arith.constant dense<0.000000e+00> : vector<32x32xf32>
    %3 = tpu.matmul %0, %2, %cst {dimension_numbers = #tpu.dot_dimension_numbers<[1], [0], [0], [1], [0, 0, 1, 1], [], []>} : vector<32x8xf32>, vector<8x32xf32>, vector<32x32xf32> -> vector<32x32xf32>
    %c0_4 = arith.constant 0 : index
    %c0_5 = arith.constant 0 : index
    %c0_6 = arith.constant 0 : index
    %4 = vector.load %arg4[%c0_4, %c0_5, %c0_6] : memref<4x1x32xf32, #tpu.memory_space<vmem>>, vector<1x1x32xf32>
    %5 = vector.shape_cast %4 : vector<1x1x32xf32> to vector<1x32xf32>
    %6 = vector.broadcast %5 : vector<1x32xf32> to vector<32x32xf32>
    %7 = arith.addf %3, %6 : vector<32x32xf32>
    %c1 = arith.constant 1 : index
    %c0_7 = arith.constant 0 : index
    %c0_8 = arith.constant 0 : index
    %8 = vector.load %arg2[%c1, %c0_7, %c0_8] : memref<3x8x32xf32, #tpu.memory_space<vmem>>, vector<1x8x32xf32>
    %9 = vector.shape_cast %8 : vector<1x8x32xf32> to vector<8x32xf32>
    %cst_9 = arith.constant dense<0.000000e+00> : vector<32x32xf32>
    %10 = tpu.matmul %0, %9, %cst_9 {dimension_numbers = #tpu.dot_dimension_numbers<[1], [0], [0], [1], [0, 0, 1, 1], [], []>} : vector<32x8xf32>, vector<8x32xf32>, vector<32x32xf32> -> vector<32x32xf32>
    %c1_10 = arith.constant 1 : index
    %c0_11 = arith.constant 0 : index
    %c0_12 = arith.constant 0 : index
    %11 = vector.load %arg4[%c1_10, %c0_11, %c0_12] : memref<4x1x32xf32, #tpu.memory_space<vmem>>, vector<1x1x32xf32>
    %12 = vector.shape_cast %11 : vector<1x1x32xf32> to vector<1x32xf32>
    %13 = vector.broadcast %12 : vector<1x32xf32> to vector<32x32xf32>
    %14 = arith.addf %10, %13 : vector<32x32xf32>
    %c2 = arith.constant 2 : index
    %c0_13 = arith.constant 0 : index
    %c0_14 = arith.constant 0 : index
    %15 = vector.load %arg2[%c2, %c0_13, %c0_14] : memref<3x8x32xf32, #tpu.memory_space<vmem>>, vector<1x8x32xf32>
    %16 = vector.shape_cast %15 : vector<1x8x32xf32> to vector<8x32xf32>
    %cst_15 = arith.constant dense<0.000000e+00> : vector<32x32xf32>
    %17 = tpu.matmul %0, %16, %cst_15 {dimension_numbers = #tpu.dot_dimension_numbers<[1], [0], [0], [1], [0, 0, 1, 1], [], []>} : vector<32x8xf32>, vector<8x32xf32>, vector<32x32xf32> -> vector<32x32xf32>
    %c2_16 = arith.constant 2 : index
    %c0_17 = arith.constant 0 : index
    %c0_18 = arith.constant 0 : index
    %18 = vector.load %arg4[%c2_16, %c0_17, %c0_18] : memref<4x1x32xf32, #tpu.memory_space<vmem>>, vector<1x1x32xf32>
    %19 = vector.shape_cast %18 : vector<1x1x32xf32> to vector<1x32xf32>
    %20 = vector.broadcast %19 : vector<1x32xf32> to vector<32x32xf32>
    %21 = arith.addf %17, %20 : vector<32x32xf32>
    %c0_19 = arith.constant 0 : index
    %c0_20 = arith.constant 0 : index
    %c0_21 = arith.constant 0 : index
    %22 = vector.load %arg3[%c0_19, %c0_20, %c0_21] : memref<3x32x32xf32, #tpu.memory_space<vmem>>, vector<1x32x32xf32>
    %23 = vector.shape_cast %22 : vector<1x32x32xf32> to vector<32x32xf32>
    %c1_22 = arith.constant 1 : index
    %c0_23 = arith.constant 0 : index
    %c0_24 = arith.constant 0 : index
    %24 = vector.load %arg3[%c1_22, %c0_23, %c0_24] : memref<3x32x32xf32, #tpu.memory_space<vmem>>, vector<1x32x32xf32>
    %25 = vector.shape_cast %24 : vector<1x32x32xf32> to vector<32x32xf32>
    %c2_25 = arith.constant 2 : index
    %c0_26 = arith.constant 0 : index
    %c0_27 = arith.constant 0 : index
    %26 = vector.load %arg3[%c2_25, %c0_26, %c0_27] : memref<3x32x32xf32, #tpu.memory_space<vmem>>, vector<1x32x32xf32>
    %27 = vector.shape_cast %26 : vector<1x32x32xf32> to vector<32x32xf32>
    %c3 = arith.constant 3 : index
    %c0_28 = arith.constant 0 : index
    %c0_29 = arith.constant 0 : index
    %28 = vector.load %arg4[%c3, %c0_28, %c0_29] : memref<4x1x32xf32, #tpu.memory_space<vmem>>, vector<1x1x32xf32>
    %29 = vector.shape_cast %28 : vector<1x1x32xf32> to vector<1x32xf32>
    %30 = vector.shape_cast %29 : vector<1x32xf32> to vector<1x32xf32>
    %31 = vector.broadcast %30 : vector<1x32xf32> to vector<2x32xf32>
    %cst_30 = arith.constant 0.000000e+00 : f32
    %32 = vector.broadcast %cst_30 : f32 to vector<2x32xf32>
    %33 = vector.extract_strided_slice %7 {offsets = [0, 0], sizes = [2, 32], strides = [1, 1]} : vector<32x32xf32> to vector<2x32xf32>
    %cst_31 = arith.constant dense<0.000000e+00> : vector<2x32xf32>
    %34 = tpu.matmul %32, %23, %cst_31 {dimension_numbers = #tpu.dot_dimension_numbers<[1], [0], [0], [1], [0, 0, 1, 1], [], []>} : vector<2x32xf32>, vector<32x32xf32>, vector<2x32xf32> -> vector<2x32xf32>
    %35 = arith.addf %33, %34 : vector<2x32xf32>
    %36 = arith.negf %35 : vector<2x32xf32>
    %37 = math.exp %36 : vector<2x32xf32>
    %cst_32 = arith.constant 1.000000e+00 : f32
    %38 = vector.broadcast %cst_32 : f32 to vector<2x32xf32>
    %39 = arith.addf %38, %37 : vector<2x32xf32>
    %40 = arith.divf %38, %39 : vector<2x32xf32>
    %41 = vector.extract_strided_slice %14 {offsets = [0, 0], sizes = [2, 32], strides = [1, 1]} : vector<32x32xf32> to vector<2x32xf32>
    %cst_33 = arith.constant dense<0.000000e+00> : vector<2x32xf32>
    %42 = tpu.matmul %32, %25, %cst_33 {dimension_numbers = #tpu.dot_dimension_numbers<[1], [0], [0], [1], [0, 0, 1, 1], [], []>} : vector<2x32xf32>, vector<32x32xf32>, vector<2x32xf32> -> vector<2x32xf32>
    %43 = arith.addf %41, %42 : vector<2x32xf32>
    %44 = arith.negf %43 : vector<2x32xf32>
    %45 = math.exp %44 : vector<2x32xf32>
    %cst_34 = arith.constant 1.000000e+00 : f32
    %46 = vector.broadcast %cst_34 : f32 to vector<2x32xf32>
    %47 = arith.addf %46, %45 : vector<2x32xf32>
    %48 = arith.divf %46, %47 : vector<2x32xf32>
    %49 = vector.extract_strided_slice %21 {offsets = [0, 0], sizes = [2, 32], strides = [1, 1]} : vector<32x32xf32> to vector<2x32xf32>
    %cst_35 = arith.constant dense<0.000000e+00> : vector<2x32xf32>
    %50 = tpu.matmul %32, %27, %cst_35 {dimension_numbers = #tpu.dot_dimension_numbers<[1], [0], [0], [1], [0, 0, 1, 1], [], []>} : vector<2x32xf32>, vector<32x32xf32>, vector<2x32xf32> -> vector<2x32xf32>
    %51 = arith.addf %50, %31 : vector<2x32xf32>
    %52 = arith.mulf %40, %51 : vector<2x32xf32>
    %53 = arith.addf %49, %52 : vector<2x32xf32>
    %54 = math.tanh %53 : vector<2x32xf32>
    %cst_36 = arith.constant 1.000000e+00 : f32
    %55 = vector.broadcast %cst_36 : f32 to vector<2x32xf32>
    %56 = arith.subf %55, %48 : vector<2x32xf32>
    %57 = arith.mulf %56, %54 : vector<2x32xf32>
    %58 = arith.mulf %48, %32 : vector<2x32xf32>
    %59 = arith.addf %57, %58 : vector<2x32xf32>
    %c0_37 = arith.constant 0 : index
    %c0_38 = arith.constant 0 : index
    %60 = vector.load %arg11[%c0_37, %c0_38] : memref<32x32xf32, #tpu.memory_space<vmem>>, vector<2x32xf32>
    tpu.vector_store %arg11[%c0_37, %c0_38], %59 {strides = array<i32>} : memref<32x32xf32, #tpu.memory_space<vmem>>, vector<2x32xf32>,
    %61 = vector.extract_strided_slice %7 {offsets = [2, 0], sizes = [2, 32], strides = [1, 1]} : vector<32x32xf32> to vector<2x32xf32>
    %cst_39 = arith.constant dense<0.000000e+00> : vector<2x32xf32>
    %62 = tpu.matmul %59, %23, %cst_39 {dimension_numbers = #tpu.dot_dimension_numbers<[1], [0], [0], [1], [0, 0, 1, 1], [], []>} : vector<2x32xf32>, vector<32x32xf32>, vector<2x32xf32> -> vector<2x32xf32>
    %63 = arith.addf %61, %62 : vector<2x32xf32>
    %64 = arith.negf %63 : vector<2x32xf32>
    %65 = math.exp %64 : vector<2x32xf32>
    %cst_40 = arith.constant 1.000000e+00 : f32
    %66 = vector.broadcast %cst_40 : f32 to vector<2x32xf32>
    %67 = arith.addf %66, %65 : vector<2x32xf32>
    %68 = arith.divf %66, %67 : vector<2x32xf32>
    %69 = vector.extract_strided_slice %14 {offsets = [2, 0], sizes = [2, 32], strides = [1, 1]} : vector<32x32xf32> to vector<2x32xf32>
    %cst_41 = arith.constant dense<0.000000e+00> : vector<2x32xf32>
    %70 = tpu.matmul %59, %25, %cst_41 {dimension_numbers = #tpu.dot_dimension_numbers<[1], [0], [0], [1], [0, 0, 1, 1], [], []>} : vector<2x32xf32>, vector<32x32xf32>, vector<2x32xf32> -> vector<2x32xf32>
    %71 = arith.addf %69, %70 : vector<2x32xf32>
    %72 = arith.negf %71 : vector<2x32xf32>
    %73 = math.exp %72 : vector<2x32xf32>
    %cst_42 = arith.constant 1.000000e+00 : f32
    %74 = vector.broadcast %cst_42 : f32 to vector<2x32xf32>
    %75 = arith.addf %74, %73 : vector<2x32xf32>
    %76 = arith.divf %74, %75 : vector<2x32xf32>
    %77 = vector.extract_strided_slice %21 {offsets = [2, 0], sizes = [2, 32], strides = [1, 1]} : vector<32x32xf32> to vector<2x32xf32>
    %cst_43 = arith.constant dense<0.000000e+00> : vector<2x32xf32>
    %78 = tpu.matmul %59, %27, %cst_43 {dimension_numbers = #tpu.dot_dimension_numbers<[1], [0], [0], [1], [0, 0, 1, 1], [], []>} : vector<2x32xf32>, vector<32x32xf32>, vector<2x32xf32> -> vector<2x32xf32>
    %79 = arith.addf %78, %31 : vector<2x32xf32>
    %80 = arith.mulf %68, %79 : vector<2x32xf32>
    %81 = arith.addf %77, %80 : vector<2x32xf32>
    %82 = math.tanh %81 : vector<2x32xf32>
    %cst_44 = arith.constant 1.000000e+00 : f32
    %83 = vector.broadcast %cst_44 : f32 to vector<2x32xf32>
    %84 = arith.subf %83, %76 : vector<2x32xf32>
    %85 = arith.mulf %84, %82 : vector<2x32xf32>
    %86 = arith.mulf %76, %59 : vector<2x32xf32>
    %87 = arith.addf %85, %86 : vector<2x32xf32>
    %c2_45 = arith.constant 2 : index
    %c0_46 = arith.constant 0 : index
    %88 = vector.load %arg11[%c2_45, %c0_46] : memref<32x32xf32, #tpu.memory_space<vmem>>, vector<2x32xf32>
    tpu.vector_store %arg11[%c2_45, %c0_46], %87 {strides = array<i32>} : memref<32x32xf32, #tpu.memory_space<vmem>>, vector<2x32xf32>,
    %89 = vector.extract_strided_slice %7 {offsets = [4, 0], sizes = [2, 32], strides = [1, 1]} : vector<32x32xf32> to vector<2x32xf32>
    %cst_47 = arith.constant dense<0.000000e+00> : vector<2x32xf32>
    %90 = tpu.matmul %87, %23, %cst_47 {dimension_numbers = #tpu.dot_dimension_numbers<[1], [0], [0], [1], [0, 0, 1, 1], [], []>} : vector<2x32xf32>, vector<32x32xf32>, vector<2x32xf32> -> vector<2x32xf32>
    %91 = arith.addf %89, %90 : vector<2x32xf32>
    %92 = arith.negf %91 : vector<2x32xf32>
    %93 = math.exp %92 : vector<2x32xf32>
    %cst_48 = arith.constant 1.000000e+00 : f32
    %94 = vector.broadcast %cst_48 : f32 to vector<2x32xf32>
    %95 = arith.addf %94, %93 : vector<2x32xf32>
    %96 = arith.divf %94, %95 : vector<2x32xf32>
    %97 = vector.extract_strided_slice %14 {offsets = [4, 0], sizes = [2, 32], strides = [1, 1]} : vector<32x32xf32> to vector<2x32xf32>
    %cst_49 = arith.constant dense<0.000000e+00> : vector<2x32xf32>
    %98 = tpu.matmul %87, %25, %cst_49 {dimension_numbers = #tpu.dot_dimension_numbers<[1], [0], [0], [1], [0, 0, 1, 1], [], []>} : vector<2x32xf32>, vector<32x32xf32>, vector<2x32xf32> -> vector<2x32xf32>
    %99 = arith.addf %97, %98 : vector<2x32xf32>
    %100 = arith.negf %99 : vector<2x32xf32>
    %101 = math.exp %100 : vector<2x32xf32>
    %cst_50 = arith.constant 1.000000e+00 : f32
    %102 = vector.broadcast %cst_50 : f32 to vector<2x32xf32>
    %103 = arith.addf %102, %101 : vector<2x32xf32>
    %104 = arith.divf %102, %103 : vector<2x32xf32>
    %105 = vector.extract_strided_slice %21 {offsets = [4, 0], sizes = [2, 32], strides = [1, 1]} : vector<32x32xf32> to vector<2x32xf32>
    %cst_51 = arith.constant dense<0.000000e+00> : vector<2x32xf32>
    %106 = tpu.matmul %87, %27, %cst_51 {dimension_numbers = #tpu.dot_dimension_numbers<[1], [0], [0], [1], [0, 0, 1, 1], [], []>} : vector<2x32xf32>, vector<32x32xf32>, vector<2x32xf32> -> vector<2x32xf32>
    %107 = arith.addf %106, %31 : vector<2x32xf32>
    %108 = arith.mulf %96, %107 : vector<2x32xf32>
    %109 = arith.addf %105, %108 : vector<2x32xf32>
    %110 = math.tanh %109 : vector<2x32xf32>
    %cst_52 = arith.constant 1.000000e+00 : f32
    %111 = vector.broadcast %cst_52 : f32 to vector<2x32xf32>
    %112 = arith.subf %111, %104 : vector<2x32xf32>
    %113 = arith.mulf %112, %110 : vector<2x32xf32>
    %114 = arith.mulf %104, %87 : vector<2x32xf32>
    %115 = arith.addf %113, %114 : vector<2x32xf32>
    %c4 = arith.constant 4 : index
    %c0_53 = arith.constant 0 : index
    %116 = vector.load %arg11[%c4, %c0_53] : memref<32x32xf32, #tpu.memory_space<vmem>>, vector<2x32xf32>
    tpu.vector_store %arg11[%c4, %c0_53], %115 {strides = array<i32>} : memref<32x32xf32, #tpu.memory_space<vmem>>, vector<2x32xf32>,
    %117 = vector.extract_strided_slice %7 {offsets = [6, 0], sizes = [2, 32], strides = [1, 1]} : vector<32x32xf32> to vector<2x32xf32>
    %cst_54 = arith.constant dense<0.000000e+00> : vector<2x32xf32>
    %118 = tpu.matmul %115, %23, %cst_54 {dimension_numbers = #tpu.dot_dimension_numbers<[1], [0], [0], [1], [0, 0, 1, 1], [], []>} : vector<2x32xf32>, vector<32x32xf32>, vector<2x32xf32> -> vector<2x32xf32>
    %119 = arith.addf %117, %118 : vector<2x32xf32>
    %120 = arith.negf %119 : vector<2x32xf32>
    %121 = math.exp %120 : vector<2x32xf32>
    %cst_55 = arith.constant 1.000000e+00 : f32
    %122 = vector.broadcast %cst_55 : f32 to vector<2x32xf32>
    %123 = arith.addf %122, %121 : vector<2x32xf32>
    %124 = arith.divf %122, %123 : vector<2x32xf32>
    %125 = vector.extract_strided_slice %14 {offsets = [6, 0], sizes = [2, 32], strides = [1, 1]} : vector<32x32xf32> to vector<2x32xf32>
    %cst_56 = arith.constant dense<0.000000e+00> : vector<2x32xf32>
    %126 = tpu.matmul %115, %25, %cst_56 {dimension_numbers = #tpu.dot_dimension_numbers<[1], [0], [0], [1], [0, 0, 1, 1], [], []>} : vector<2x32xf32>, vector<32x32xf32>, vector<2x32xf32> -> vector<2x32xf32>
    %127 = arith.addf %125, %126 : vector<2x32xf32>
    %128 = arith.negf %127 : vector<2x32xf32>
    %129 = math.exp %128 : vector<2x32xf32>
    %cst_57 = arith.constant 1.000000e+00 : f32
    %130 = vector.broadcast %cst_57 : f32 to vector<2x32xf32>
    %131 = arith.addf %130, %129 : vector<2x32xf32>
    %132 = arith.divf %130, %131 : vector<2x32xf32>
    %133 = vector.extract_strided_slice %21 {offsets = [6, 0], sizes = [2, 32], strides = [1, 1]} : vector<32x32xf32> to vector<2x32xf32>
    %cst_58 = arith.constant dense<0.000000e+00> : vector<2x32xf32>
    %134 = tpu.matmul %115, %27, %cst_58 {dimension_numbers = #tpu.dot_dimension_numbers<[1], [0], [0], [1], [0, 0, 1, 1], [], []>} : vector<2x32xf32>, vector<32x32xf32>, vector<2x32xf32> -> vector<2x32xf32>
    %135 = arith.addf %134, %31 : vector<2x32xf32>
    %136 = arith.mulf %124, %135 : vector<2x32xf32>
    %137 = arith.addf %133, %136 : vector<2x32xf32>
    %138 = math.tanh %137 : vector<2x32xf32>
    %cst_59 = arith.constant 1.000000e+00 : f32
    %139 = vector.broadcast %cst_59 : f32 to vector<2x32xf32>
    %140 = arith.subf %139, %132 : vector<2x32xf32>
    %141 = arith.mulf %140, %138 : vector<2x32xf32>
    %142 = arith.mulf %132, %115 : vector<2x32xf32>
    %143 = arith.addf %141, %142 : vector<2x32xf32>
    %c6 = arith.constant 6 : index
    %c0_60 = arith.constant 0 : index
    %144 = vector.load %arg11[%c6, %c0_60] : memref<32x32xf32, #tpu.memory_space<vmem>>, vector<2x32xf32>
    tpu.vector_store %arg11[%c6, %c0_60], %143 {strides = array<i32>} : memref<32x32xf32, #tpu.memory_space<vmem>>, vector<2x32xf32>,
    %145 = vector.extract_strided_slice %7 {offsets = [8, 0], sizes = [2, 32], strides = [1, 1]} : vector<32x32xf32> to vector<2x32xf32>
    %cst_61 = arith.constant dense<0.000000e+00> : vector<2x32xf32>
    %146 = tpu.matmul %143, %23, %cst_61 {dimension_numbers = #tpu.dot_dimension_numbers<[1], [0], [0], [1], [0, 0, 1, 1], [], []>} : vector<2x32xf32>, vector<32x32xf32>, vector<2x32xf32> -> vector<2x32xf32>
    %147 = arith.addf %145, %146 : vector<2x32xf32>
    %148 = arith.negf %147 : vector<2x32xf32>
    %149 = math.exp %148 : vector<2x32xf32>
    %cst_62 = arith.constant 1.000000e+00 : f32
    %150 = vector.broadcast %cst_62 : f32 to vector<2x32xf32>
    %151 = arith.addf %150, %149 : vector<2x32xf32>
    %152 = arith.divf %150, %151 : vector<2x32xf32>
    %153 = vector.extract_strided_slice %14 {offsets = [8, 0], sizes = [2, 32], strides = [1, 1]} : vector<32x32xf32> to vector<2x32xf32>
    %cst_63 = arith.constant dense<0.000000e+00> : vector<2x32xf32>
    %154 = tpu.matmul %143, %25, %cst_63 {dimension_numbers = #tpu.dot_dimension_numbers<[1], [0], [0], [1], [0, 0, 1, 1], [], []>} : vector<2x32xf32>, vector<32x32xf32>, vector<2x32xf32> -> vector<2x32xf32>
    %155 = arith.addf %153, %154 : vector<2x32xf32>
    %156 = arith.negf %155 : vector<2x32xf32>
    %157 = math.exp %156 : vector<2x32xf32>
    %cst_64 = arith.constant 1.000000e+00 : f32
    %158 = vector.broadcast %cst_64 : f32 to vector<2x32xf32>
    %159 = arith.addf %158, %157 : vector<2x32xf32>
    %160 = arith.divf %158, %159 : vector<2x32xf32>
    %161 = vector.extract_strided_slice %21 {offsets = [8, 0], sizes = [2, 32], strides = [1, 1]} : vector<32x32xf32> to vector<2x32xf32>
    %cst_65 = arith.constant dense<0.000000e+00> : vector<2x32xf32>
    %162 = tpu.matmul %143, %27, %cst_65 {dimension_numbers = #tpu.dot_dimension_numbers<[1], [0], [0], [1], [0, 0, 1, 1], [], []>} : vector<2x32xf32>, vector<32x32xf32>, vector<2x32xf32> -> vector<2x32xf32>
    %163 = arith.addf %162, %31 : vector<2x32xf32>
    %164 = arith.mulf %152, %163 : vector<2x32xf32>
    %165 = arith.addf %161, %164 : vector<2x32xf32>
    %166 = math.tanh %165 : vector<2x32xf32>
    %cst_66 = arith.constant 1.000000e+00 : f32
    %167 = vector.broadcast %cst_66 : f32 to vector<2x32xf32>
    %168 = arith.subf %167, %160 : vector<2x32xf32>
    %169 = arith.mulf %168, %166 : vector<2x32xf32>
    %170 = arith.mulf %160, %143 : vector<2x32xf32>
    %171 = arith.addf %169, %170 : vector<2x32xf32>
    %c8 = arith.constant 8 : index
    %c0_67 = arith.constant 0 : index
    %172 = vector.load %arg11[%c8, %c0_67] : memref<32x32xf32, #tpu.memory_space<vmem>>, vector<2x32xf32>
    tpu.vector_store %arg11[%c8, %c0_67], %171 {strides = array<i32>} : memref<32x32xf32, #tpu.memory_space<vmem>>, vector<2x32xf32>,
    %173 = vector.extract_strided_slice %7 {offsets = [10, 0], sizes = [2, 32], strides = [1, 1]} : vector<32x32xf32> to vector<2x32xf32>
    %cst_68 = arith.constant dense<0.000000e+00> : vector<2x32xf32>
    %174 = tpu.matmul %171, %23, %cst_68 {dimension_numbers = #tpu.dot_dimension_numbers<[1], [0], [0], [1], [0, 0, 1, 1], [], []>} : vector<2x32xf32>, vector<32x32xf32>, vector<2x32xf32> -> vector<2x32xf32>
    %175 = arith.addf %173, %174 : vector<2x32xf32>
    %176 = arith.negf %175 : vector<2x32xf32>
    %177 = math.exp %176 : vector<2x32xf32>
    %cst_69 = arith.constant 1.000000e+00 : f32
    %178 = vector.broadcast %cst_69 : f32 to vector<2x32xf32>
    %179 = arith.addf %178, %177 : vector<2x32xf32>
    %180 = arith.divf %178, %179 : vector<2x32xf32>
    %181 = vector.extract_strided_slice %14 {offsets = [10, 0], sizes = [2, 32], strides = [1, 1]} : vector<32x32xf32> to vector<2x32xf32>
    %cst_70 = arith.constant dense<0.000000e+00> : vector<2x32xf32>
    %182 = tpu.matmul %171, %25, %cst_70 {dimension_numbers = #tpu.dot_dimension_numbers<[1], [0], [0], [1], [0, 0, 1, 1], [], []>} : vector<2x32xf32>, vector<32x32xf32>, vector<2x32xf32> -> vector<2x32xf32>
    %183 = arith.addf %181, %182 : vector<2x32xf32>
    %184 = arith.negf %183 : vector<2x32xf32>
    %185 = math.exp %184 : vector<2x32xf32>
    %cst_71 = arith.constant 1.000000e+00 : f32
    %186 = vector.broadcast %cst_71 : f32 to vector<2x32xf32>
    %187 = arith.addf %186, %185 : vector<2x32xf32>
    %188 = arith.divf %186, %187 : vector<2x32xf32>
    %189 = vector.extract_strided_slice %21 {offsets = [10, 0], sizes = [2, 32], strides = [1, 1]} : vector<32x32xf32> to vector<2x32xf32>
    %cst_72 = arith.constant dense<0.000000e+00> : vector<2x32xf32>
    %190 = tpu.matmul %171, %27, %cst_72 {dimension_numbers = #tpu.dot_dimension_numbers<[1], [0], [0], [1], [0, 0, 1, 1], [], []>} : vector<2x32xf32>, vector<32x32xf32>, vector<2x32xf32> -> vector<2x32xf32>
    %191 = arith.addf %190, %31 : vector<2x32xf32>
    %192 = arith.mulf %180, %191 : vector<2x32xf32>
    %193 = arith.addf %189, %192 : vector<2x32xf32>
    %194 = math.tanh %193 : vector<2x32xf32>
    %cst_73 = arith.constant 1.000000e+00 : f32
    %195 = vector.broadcast %cst_73 : f32 to vector<2x32xf32>
    %196 = arith.subf %195, %188 : vector<2x32xf32>
    %197 = arith.mulf %196, %194 : vector<2x32xf32>
    %198 = arith.mulf %188, %171 : vector<2x32xf32>
    %199 = arith.addf %197, %198 : vector<2x32xf32>
    %c10 = arith.constant 10 : index
    %c0_74 = arith.constant 0 : index
    %200 = vector.load %arg11[%c10, %c0_74] : memref<32x32xf32, #tpu.memory_space<vmem>>, vector<2x32xf32>
    tpu.vector_store %arg11[%c10, %c0_74], %199 {strides = array<i32>} : memref<32x32xf32, #tpu.memory_space<vmem>>, vector<2x32xf32>,
    %201 = vector.extract_strided_slice %7 {offsets = [12, 0], sizes = [2, 32], strides = [1, 1]} : vector<32x32xf32> to vector<2x32xf32>
    %cst_75 = arith.constant dense<0.000000e+00> : vector<2x32xf32>
    %202 = tpu.matmul %199, %23, %cst_75 {dimension_numbers = #tpu.dot_dimension_numbers<[1], [0], [0], [1], [0, 0, 1, 1], [], []>} : vector<2x32xf32>, vector<32x32xf32>, vector<2x32xf32> -> vector<2x32xf32>
    %203 = arith.addf %201, %202 : vector<2x32xf32>
    %204 = arith.negf %203 : vector<2x32xf32>
    %205 = math.exp %204 : vector<2x32xf32>
    %cst_76 = arith.constant 1.000000e+00 : f32
    %206 = vector.broadcast %cst_76 : f32 to vector<2x32xf32>
    %207 = arith.addf %206, %205 : vector<2x32xf32>
    %208 = arith.divf %206, %207 : vector<2x32xf32>
    %209 = vector.extract_strided_slice %14 {offsets = [12, 0], sizes = [2, 32], strides = [1, 1]} : vector<32x32xf32> to vector<2x32xf32>
    %cst_77 = arith.constant dense<0.000000e+00> : vector<2x32xf32>
    %210 = tpu.matmul %199, %25, %cst_77 {dimension_numbers = #tpu.dot_dimension_numbers<[1], [0], [0], [1], [0, 0, 1, 1], [], []>} : vector<2x32xf32>, vector<32x32xf32>, vector<2x32xf32> -> vector<2x32xf32>
    %211 = arith.addf %209, %210 : vector<2x32xf32>
    %212 = arith.negf %211 : vector<2x32xf32>
    %213 = math.exp %212 : vector<2x32xf32>
    %cst_78 = arith.constant 1.000000e+00 : f32
    %214 = vector.broadcast %cst_78 : f32 to vector<2x32xf32>
    %215 = arith.addf %214, %213 : vector<2x32xf32>
    %216 = arith.divf %214, %215 : vector<2x32xf32>
    %217 = vector.extract_strided_slice %21 {offsets = [12, 0], sizes = [2, 32], strides = [1, 1]} : vector<32x32xf32> to vector<2x32xf32>
    %cst_79 = arith.constant dense<0.000000e+00> : vector<2x32xf32>
    %218 = tpu.matmul %199, %27, %cst_79 {dimension_numbers = #tpu.dot_dimension_numbers<[1], [0], [0], [1], [0, 0, 1, 1], [], []>} : vector<2x32xf32>, vector<32x32xf32>, vector<2x32xf32> -> vector<2x32xf32>
    %219 = arith.addf %218, %31 : vector<2x32xf32>
    %220 = arith.mulf %208, %219 : vector<2x32xf32>
    %221 = arith.addf %217, %220 : vector<2x32xf32>
    %222 = math.tanh %221 : vector<2x32xf32>
    %cst_80 = arith.constant 1.000000e+00 : f32
    %223 = vector.broadcast %cst_80 : f32 to vector<2x32xf32>
    %224 = arith.subf %223, %216 : vector<2x32xf32>
    %225 = arith.mulf %224, %222 : vector<2x32xf32>
    %226 = arith.mulf %216, %199 : vector<2x32xf32>
    %227 = arith.addf %225, %226 : vector<2x32xf32>
    %c12 = arith.constant 12 : index
    %c0_81 = arith.constant 0 : index
    %228 = vector.load %arg11[%c12, %c0_81] : memref<32x32xf32, #tpu.memory_space<vmem>>, vector<2x32xf32>
    tpu.vector_store %arg11[%c12, %c0_81], %227 {strides = array<i32>} : memref<32x32xf32, #tpu.memory_space<vmem>>, vector<2x32xf32>,
    %229 = vector.extract_strided_slice %7 {offsets = [14, 0], sizes = [2, 32], strides = [1, 1]} : vector<32x32xf32> to vector<2x32xf32>
    %cst_82 = arith.constant dense<0.000000e+00> : vector<2x32xf32>
    %230 = tpu.matmul %227, %23, %cst_82 {dimension_numbers = #tpu.dot_dimension_numbers<[1], [0], [0], [1], [0, 0, 1, 1], [], []>} : vector<2x32xf32>, vector<32x32xf32>, vector<2x32xf32> -> vector<2x32xf32>
    %231 = arith.addf %229, %230 : vector<2x32xf32>
    %232 = arith.negf %231 : vector<2x32xf32>
    %233 = math.exp %232 : vector<2x32xf32>
    %cst_83 = arith.constant 1.000000e+00 : f32
    %234 = vector.broadcast %cst_83 : f32 to vector<2x32xf32>
    %235 = arith.addf %234, %233 : vector<2x32xf32>
    %236 = arith.divf %234, %235 : vector<2x32xf32>
    %237 = vector.extract_strided_slice %14 {offsets = [14, 0], sizes = [2, 32], strides = [1, 1]} : vector<32x32xf32> to vector<2x32xf32>
    %cst_84 = arith.constant dense<0.000000e+00> : vector<2x32xf32>
    %238 = tpu.matmul %227, %25, %cst_84 {dimension_numbers = #tpu.dot_dimension_numbers<[1], [0], [0], [1], [0, 0, 1, 1], [], []>} : vector<2x32xf32>, vector<32x32xf32>, vector<2x32xf32> -> vector<2x32xf32>
    %239 = arith.addf %237, %238 : vector<2x32xf32>
    %240 = arith.negf %239 : vector<2x32xf32>
    %241 = math.exp %240 : vector<2x32xf32>
    %cst_85 = arith.constant 1.000000e+00 : f32
    %242 = vector.broadcast %cst_85 : f32 to vector<2x32xf32>
    %243 = arith.addf %242, %241 : vector<2x32xf32>
    %244 = arith.divf %242, %243 : vector<2x32xf32>
    %245 = vector.extract_strided_slice %21 {offsets = [14, 0], sizes = [2, 32], strides = [1, 1]} : vector<32x32xf32> to vector<2x32xf32>
    %cst_86 = arith.constant dense<0.000000e+00> : vector<2x32xf32>
    %246 = tpu.matmul %227, %27, %cst_86 {dimension_numbers = #tpu.dot_dimension_numbers<[1], [0], [0], [1], [0, 0, 1, 1], [], []>} : vector<2x32xf32>, vector<32x32xf32>, vector<2x32xf32> -> vector<2x32xf32>
    %247 = arith.addf %246, %31 : vector<2x32xf32>
    %248 = arith.mulf %236, %247 : vector<2x32xf32>
    %249 = arith.addf %245, %248 : vector<2x32xf32>
    %250 = math.tanh %249 : vector<2x32xf32>
    %cst_87 = arith.constant 1.000000e+00 : f32
    %251 = vector.broadcast %cst_87 : f32 to vector<2x32xf32>
    %252 = arith.subf %251, %244 : vector<2x32xf32>
    %253 = arith.mulf %252, %250 : vector<2x32xf32>
    %254 = arith.mulf %244, %227 : vector<2x32xf32>
    %255 = arith.addf %253, %254 : vector<2x32xf32>
    %c14 = arith.constant 14 : index
    %c0_88 = arith.constant 0 : index
    %256 = vector.load %arg11[%c14, %c0_88] : memref<32x32xf32, #tpu.memory_space<vmem>>, vector<2x32xf32>
    tpu.vector_store %arg11[%c14, %c0_88], %255 {strides = array<i32>} : memref<32x32xf32, #tpu.memory_space<vmem>>, vector<2x32xf32>,
    %257 = vector.extract_strided_slice %7 {offsets = [16, 0], sizes = [2, 32], strides = [1, 1]} : vector<32x32xf32> to vector<2x32xf32>
    %cst_89 = arith.constant dense<0.000000e+00> : vector<2x32xf32>
    %258 = tpu.matmul %255, %23, %cst_89 {dimension_numbers = #tpu.dot_dimension_numbers<[1], [0], [0], [1], [0, 0, 1, 1], [], []>} : vector<2x32xf32>, vector<32x32xf32>, vector<2x32xf32> -> vector<2x32xf32>
    %259 = arith.addf %257, %258 : vector<2x32xf32>
    %260 = arith.negf %259 : vector<2x32xf32>
    %261 = math.exp %260 : vector<2x32xf32>
    %cst_90 = arith.constant 1.000000e+00 : f32
    %262 = vector.broadcast %cst_90 : f32 to vector<2x32xf32>
    %263 = arith.addf %262, %261 : vector<2x32xf32>
    %264 = arith.divf %262, %263 : vector<2x32xf32>
    %265 = vector.extract_strided_slice %14 {offsets = [16, 0], sizes = [2, 32], strides = [1, 1]} : vector<32x32xf32> to vector<2x32xf32>
    %cst_91 = arith.constant dense<0.000000e+00> : vector<2x32xf32>
    %266 = tpu.matmul %255, %25, %cst_91 {dimension_numbers = #tpu.dot_dimension_numbers<[1], [0], [0], [1], [0, 0, 1, 1], [], []>} : vector<2x32xf32>, vector<32x32xf32>, vector<2x32xf32> -> vector<2x32xf32>
    %267 = arith.addf %265, %266 : vector<2x32xf32>
    %268 = arith.negf %267 : vector<2x32xf32>
    %269 = math.exp %268 : vector<2x32xf32>
    %cst_92 = arith.constant 1.000000e+00 : f32
    %270 = vector.broadcast %cst_92 : f32 to vector<2x32xf32>
    %271 = arith.addf %270, %269 : vector<2x32xf32>
    %272 = arith.divf %270, %271 : vector<2x32xf32>
    %273 = vector.extract_strided_slice %21 {offsets = [16, 0], sizes = [2, 32], strides = [1, 1]} : vector<32x32xf32> to vector<2x32xf32>
    %cst_93 = arith.constant dense<0.000000e+00> : vector<2x32xf32>
    %274 = tpu.matmul %255, %27, %cst_93 {dimension_numbers = #tpu.dot_dimension_numbers<[1], [0], [0], [1], [0, 0, 1, 1], [], []>} : vector<2x32xf32>, vector<32x32xf32>, vector<2x32xf32> -> vector<2x32xf32>
    %275 = arith.addf %274, %31 : vector<2x32xf32>
    %276 = arith.mulf %264, %275 : vector<2x32xf32>
    %277 = arith.addf %273, %276 : vector<2x32xf32>
    %278 = math.tanh %277 : vector<2x32xf32>
    %cst_94 = arith.constant 1.000000e+00 : f32
    %279 = vector.broadcast %cst_94 : f32 to vector<2x32xf32>
    %280 = arith.subf %279, %272 : vector<2x32xf32>
    %281 = arith.mulf %280, %278 : vector<2x32xf32>
    %282 = arith.mulf %272, %255 : vector<2x32xf32>
    %283 = arith.addf %281, %282 : vector<2x32xf32>
    %c16 = arith.constant 16 : index
    %c0_95 = arith.constant 0 : index
    %284 = vector.load %arg11[%c16, %c0_95] : memref<32x32xf32, #tpu.memory_space<vmem>>, vector<2x32xf32>
    tpu.vector_store %arg11[%c16, %c0_95], %283 {strides = array<i32>} : memref<32x32xf32, #tpu.memory_space<vmem>>, vector<2x32xf32>,
    %285 = vector.extract_strided_slice %7 {offsets = [18, 0], sizes = [2, 32], strides = [1, 1]} : vector<32x32xf32> to vector<2x32xf32>
    %cst_96 = arith.constant dense<0.000000e+00> : vector<2x32xf32>
    %286 = tpu.matmul %283, %23, %cst_96 {dimension_numbers = #tpu.dot_dimension_numbers<[1], [0], [0], [1], [0, 0, 1, 1], [], []>} : vector<2x32xf32>, vector<32x32xf32>, vector<2x32xf32> -> vector<2x32xf32>
    %287 = arith.addf %285, %286 : vector<2x32xf32>
    %288 = arith.negf %287 : vector<2x32xf32>
    %289 = math.exp %288 : vector<2x32xf32>
    %cst_97 = arith.constant 1.000000e+00 : f32
    %290 = vector.broadcast %cst_97 : f32 to vector<2x32xf32>
    %291 = arith.addf %290, %289 : vector<2x32xf32>
    %292 = arith.divf %290, %291 : vector<2x32xf32>
    %293 = vector.extract_strided_slice %14 {offsets = [18, 0], sizes = [2, 32], strides = [1, 1]} : vector<32x32xf32> to vector<2x32xf32>
    %cst_98 = arith.constant dense<0.000000e+00> : vector<2x32xf32>
    %294 = tpu.matmul %283, %25, %cst_98 {dimension_numbers = #tpu.dot_dimension_numbers<[1], [0], [0], [1], [0, 0, 1, 1], [], []>} : vector<2x32xf32>, vector<32x32xf32>, vector<2x32xf32> -> vector<2x32xf32>
    %295 = arith.addf %293, %294 : vector<2x32xf32>
    %296 = arith.negf %295 : vector<2x32xf32>
    %297 = math.exp %296 : vector<2x32xf32>
    %cst_99 = arith.constant 1.000000e+00 : f32
    %298 = vector.broadcast %cst_99 : f32 to vector<2x32xf32>
    %299 = arith.addf %298, %297 : vector<2x32xf32>
    %300 = arith.divf %298, %299 : vector<2x32xf32>
    %301 = vector.extract_strided_slice %21 {offsets = [18, 0], sizes = [2, 32], strides = [1, 1]} : vector<32x32xf32> to vector<2x32xf32>
    %cst_100 = arith.constant dense<0.000000e+00> : vector<2x32xf32>
    %302 = tpu.matmul %283, %27, %cst_100 {dimension_numbers = #tpu.dot_dimension_numbers<[1], [0], [0], [1], [0, 0, 1, 1], [], []>} : vector<2x32xf32>, vector<32x32xf32>, vector<2x32xf32> -> vector<2x32xf32>
    %303 = arith.addf %302, %31 : vector<2x32xf32>
    %304 = arith.mulf %292, %303 : vector<2x32xf32>
    %305 = arith.addf %301, %304 : vector<2x32xf32>
    %306 = math.tanh %305 : vector<2x32xf32>
    %cst_101 = arith.constant 1.000000e+00 : f32
    %307 = vector.broadcast %cst_101 : f32 to vector<2x32xf32>
    %308 = arith.subf %307, %300 : vector<2x32xf32>
    %309 = arith.mulf %308, %306 : vector<2x32xf32>
    %310 = arith.mulf %300, %283 : vector<2x32xf32>
    %311 = arith.addf %309, %310 : vector<2x32xf32>
    %c18 = arith.constant 18 : index
    %c0_102 = arith.constant 0 : index
    %312 = vector.load %arg11[%c18, %c0_102] : memref<32x32xf32, #tpu.memory_space<vmem>>, vector<2x32xf32>
    tpu.vector_store %arg11[%c18, %c0_102], %311 {strides = array<i32>} : memref<32x32xf32, #tpu.memory_space<vmem>>, vector<2x32xf32>,
    %313 = vector.extract_strided_slice %7 {offsets = [20, 0], sizes = [2, 32], strides = [1, 1]} : vector<32x32xf32> to vector<2x32xf32>
    %cst_103 = arith.constant dense<0.000000e+00> : vector<2x32xf32>
    %314 = tpu.matmul %311, %23, %cst_103 {dimension_numbers = #tpu.dot_dimension_numbers<[1], [0], [0], [1], [0, 0, 1, 1], [], []>} : vector<2x32xf32>, vector<32x32xf32>, vector<2x32xf32> -> vector<2x32xf32>
    %315 = arith.addf %313, %314 : vector<2x32xf32>
    %316 = arith.negf %315 : vector<2x32xf32>
    %317 = math.exp %316 : vector<2x32xf32>
    %cst_104 = arith.constant 1.000000e+00 : f32
    %318 = vector.broadcast %cst_104 : f32 to vector<2x32xf32>
    %319 = arith.addf %318, %317 : vector<2x32xf32>
    %320 = arith.divf %318, %319 : vector<2x32xf32>
    %321 = vector.extract_strided_slice %14 {offsets = [20, 0], sizes = [2, 32], strides = [1, 1]} : vector<32x32xf32> to vector<2x32xf32>
    %cst_105 = arith.constant dense<0.000000e+00> : vector<2x32xf32>
    %322 = tpu.matmul %311, %25, %cst_105 {dimension_numbers = #tpu.dot_dimension_numbers<[1], [0], [0], [1], [0, 0, 1, 1], [], []>} : vector<2x32xf32>, vector<32x32xf32>, vector<2x32xf32> -> vector<2x32xf32>
    %323 = arith.addf %321, %322 : vector<2x32xf32>
    %324 = arith.negf %323 : vector<2x32xf32>
    %325 = math.exp %324 : vector<2x32xf32>
    %cst_106 = arith.constant 1.000000e+00 : f32
    %326 = vector.broadcast %cst_106 : f32 to vector<2x32xf32>
    %327 = arith.addf %326, %325 : vector<2x32xf32>
    %328 = arith.divf %326, %327 : vector<2x32xf32>
    %329 = vector.extract_strided_slice %21 {offsets = [20, 0], sizes = [2, 32], strides = [1, 1]} : vector<32x32xf32> to vector<2x32xf32>
    %cst_107 = arith.constant dense<0.000000e+00> : vector<2x32xf32>
    %330 = tpu.matmul %311, %27, %cst_107 {dimension_numbers = #tpu.dot_dimension_numbers<[1], [0], [0], [1], [0, 0, 1, 1], [], []>} : vector<2x32xf32>, vector<32x32xf32>, vector<2x32xf32> -> vector<2x32xf32>
    %331 = arith.addf %330, %31 : vector<2x32xf32>
    %332 = arith.mulf %320, %331 : vector<2x32xf32>
    %333 = arith.addf %329, %332 : vector<2x32xf32>
    %334 = math.tanh %333 : vector<2x32xf32>
    %cst_108 = arith.constant 1.000000e+00 : f32
    %335 = vector.broadcast %cst_108 : f32 to vector<2x32xf32>
    %336 = arith.subf %335, %328 : vector<2x32xf32>
    %337 = arith.mulf %336, %334 : vector<2x32xf32>
    %338 = arith.mulf %328, %311 : vector<2x32xf32>
    %339 = arith.addf %337, %338 : vector<2x32xf32>
    %c20 = arith.constant 20 : index
    %c0_109 = arith.constant 0 : index
    %340 = vector.load %arg11[%c20, %c0_109] : memref<32x32xf32, #tpu.memory_space<vmem>>, vector<2x32xf32>
    tpu.vector_store %arg11[%c20, %c0_109], %339 {strides = array<i32>} : memref<32x32xf32, #tpu.memory_space<vmem>>, vector<2x32xf32>,
    %341 = vector.extract_strided_slice %7 {offsets = [22, 0], sizes = [2, 32], strides = [1, 1]} : vector<32x32xf32> to vector<2x32xf32>
    %cst_110 = arith.constant dense<0.000000e+00> : vector<2x32xf32>
    %342 = tpu.matmul %339, %23, %cst_110 {dimension_numbers = #tpu.dot_dimension_numbers<[1], [0], [0], [1], [0, 0, 1, 1], [], []>} : vector<2x32xf32>, vector<32x32xf32>, vector<2x32xf32> -> vector<2x32xf32>
    %343 = arith.addf %341, %342 : vector<2x32xf32>
    %344 = arith.negf %343 : vector<2x32xf32>
    %345 = math.exp %344 : vector<2x32xf32>
    %cst_111 = arith.constant 1.000000e+00 : f32
    %346 = vector.broadcast %cst_111 : f32 to vector<2x32xf32>
    %347 = arith.addf %346, %345 : vector<2x32xf32>
    %348 = arith.divf %346, %347 : vector<2x32xf32>
    %349 = vector.extract_strided_slice %14 {offsets = [22, 0], sizes = [2, 32], strides = [1, 1]} : vector<32x32xf32> to vector<2x32xf32>
    %cst_112 = arith.constant dense<0.000000e+00> : vector<2x32xf32>
    %350 = tpu.matmul %339, %25, %cst_112 {dimension_numbers = #tpu.dot_dimension_numbers<[1], [0], [0], [1], [0, 0, 1, 1], [], []>} : vector<2x32xf32>, vector<32x32xf32>, vector<2x32xf32> -> vector<2x32xf32>
    %351 = arith.addf %349, %350 : vector<2x32xf32>
    %352 = arith.negf %351 : vector<2x32xf32>
    %353 = math.exp %352 : vector<2x32xf32>
    %cst_113 = arith.constant 1.000000e+00 : f32
    %354 = vector.broadcast %cst_113 : f32 to vector<2x32xf32>
    %355 = arith.addf %354, %353 : vector<2x32xf32>
    %356 = arith.divf %354, %355 : vector<2x32xf32>
    %357 = vector.extract_strided_slice %21 {offsets = [22, 0], sizes = [2, 32], strides = [1, 1]} : vector<32x32xf32> to vector<2x32xf32>
    %cst_114 = arith.constant dense<0.000000e+00> : vector<2x32xf32>
    %358 = tpu.matmul %339, %27, %cst_114 {dimension_numbers = #tpu.dot_dimension_numbers<[1], [0], [0], [1], [0, 0, 1, 1], [], []>} : vector<2x32xf32>, vector<32x32xf32>, vector<2x32xf32> -> vector<2x32xf32>
    %359 = arith.addf %358, %31 : vector<2x32xf32>
    %360 = arith.mulf %348, %359 : vector<2x32xf32>
    %361 = arith.addf %357, %360 : vector<2x32xf32>
    %362 = math.tanh %361 : vector<2x32xf32>
    %cst_115 = arith.constant 1.000000e+00 : f32
    %363 = vector.broadcast %cst_115 : f32 to vector<2x32xf32>
    %364 = arith.subf %363, %356 : vector<2x32xf32>
    %365 = arith.mulf %364, %362 : vector<2x32xf32>
    %366 = arith.mulf %356, %339 : vector<2x32xf32>
    %367 = arith.addf %365, %366 : vector<2x32xf32>
    %c22 = arith.constant 22 : index
    %c0_116 = arith.constant 0 : index
    %368 = vector.load %arg11[%c22, %c0_116] : memref<32x32xf32, #tpu.memory_space<vmem>>, vector<2x32xf32>
    tpu.vector_store %arg11[%c22, %c0_116], %367 {strides = array<i32>} : memref<32x32xf32, #tpu.memory_space<vmem>>, vector<2x32xf32>,
    %369 = vector.extract_strided_slice %7 {offsets = [24, 0], sizes = [2, 32], strides = [1, 1]} : vector<32x32xf32> to vector<2x32xf32>
    %cst_117 = arith.constant dense<0.000000e+00> : vector<2x32xf32>
    %370 = tpu.matmul %367, %23, %cst_117 {dimension_numbers = #tpu.dot_dimension_numbers<[1], [0], [0], [1], [0, 0, 1, 1], [], []>} : vector<2x32xf32>, vector<32x32xf32>, vector<2x32xf32> -> vector<2x32xf32>
    %371 = arith.addf %369, %370 : vector<2x32xf32>
    %372 = arith.negf %371 : vector<2x32xf32>
    %373 = math.exp %372 : vector<2x32xf32>
    %cst_118 = arith.constant 1.000000e+00 : f32
    %374 = vector.broadcast %cst_118 : f32 to vector<2x32xf32>
    %375 = arith.addf %374, %373 : vector<2x32xf32>
    %376 = arith.divf %374, %375 : vector<2x32xf32>
    %377 = vector.extract_strided_slice %14 {offsets = [24, 0], sizes = [2, 32], strides = [1, 1]} : vector<32x32xf32> to vector<2x32xf32>
    %cst_119 = arith.constant dense<0.000000e+00> : vector<2x32xf32>
    %378 = tpu.matmul %367, %25, %cst_119 {dimension_numbers = #tpu.dot_dimension_numbers<[1], [0], [0], [1], [0, 0, 1, 1], [], []>} : vector<2x32xf32>, vector<32x32xf32>, vector<2x32xf32> -> vector<2x32xf32>
    %379 = arith.addf %377, %378 : vector<2x32xf32>
    %380 = arith.negf %379 : vector<2x32xf32>
    %381 = math.exp %380 : vector<2x32xf32>
    %cst_120 = arith.constant 1.000000e+00 : f32
    %382 = vector.broadcast %cst_120 : f32 to vector<2x32xf32>
    %383 = arith.addf %382, %381 : vector<2x32xf32>
    %384 = arith.divf %382, %383 : vector<2x32xf32>
    %385 = vector.extract_strided_slice %21 {offsets = [24, 0], sizes = [2, 32], strides = [1, 1]} : vector<32x32xf32> to vector<2x32xf32>
    %cst_121 = arith.constant dense<0.000000e+00> : vector<2x32xf32>
    %386 = tpu.matmul %367, %27, %cst_121 {dimension_numbers = #tpu.dot_dimension_numbers<[1], [0], [0], [1], [0, 0, 1, 1], [], []>} : vector<2x32xf32>, vector<32x32xf32>, vector<2x32xf32> -> vector<2x32xf32>
    %387 = arith.addf %386, %31 : vector<2x32xf32>
    %388 = arith.mulf %376, %387 : vector<2x32xf32>
    %389 = arith.addf %385, %388 : vector<2x32xf32>
    %390 = math.tanh %389 : vector<2x32xf32>
    %cst_122 = arith.constant 1.000000e+00 : f32
    %391 = vector.broadcast %cst_122 : f32 to vector<2x32xf32>
    %392 = arith.subf %391, %384 : vector<2x32xf32>
    %393 = arith.mulf %392, %390 : vector<2x32xf32>
    %394 = arith.mulf %384, %367 : vector<2x32xf32>
    %395 = arith.addf %393, %394 : vector<2x32xf32>
    %c24 = arith.constant 24 : index
    %c0_123 = arith.constant 0 : index
    %396 = vector.load %arg11[%c24, %c0_123] : memref<32x32xf32, #tpu.memory_space<vmem>>, vector<2x32xf32>
    tpu.vector_store %arg11[%c24, %c0_123], %395 {strides = array<i32>} : memref<32x32xf32, #tpu.memory_space<vmem>>, vector<2x32xf32>,
    %397 = vector.extract_strided_slice %7 {offsets = [26, 0], sizes = [2, 32], strides = [1, 1]} : vector<32x32xf32> to vector<2x32xf32>
    %cst_124 = arith.constant dense<0.000000e+00> : vector<2x32xf32>
    %398 = tpu.matmul %395, %23, %cst_124 {dimension_numbers = #tpu.dot_dimension_numbers<[1], [0], [0], [1], [0, 0, 1, 1], [], []>} : vector<2x32xf32>, vector<32x32xf32>, vector<2x32xf32> -> vector<2x32xf32>
    %399 = arith.addf %397, %398 : vector<2x32xf32>
    %400 = arith.negf %399 : vector<2x32xf32>
    %401 = math.exp %400 : vector<2x32xf32>
    %cst_125 = arith.constant 1.000000e+00 : f32
    %402 = vector.broadcast %cst_125 : f32 to vector<2x32xf32>
    %403 = arith.addf %402, %401 : vector<2x32xf32>
    %404 = arith.divf %402, %403 : vector<2x32xf32>
    %405 = vector.extract_strided_slice %14 {offsets = [26, 0], sizes = [2, 32], strides = [1, 1]} : vector<32x32xf32> to vector<2x32xf32>
    %cst_126 = arith.constant dense<0.000000e+00> : vector<2x32xf32>
    %406 = tpu.matmul %395, %25, %cst_126 {dimension_numbers = #tpu.dot_dimension_numbers<[1], [0], [0], [1], [0, 0, 1, 1], [], []>} : vector<2x32xf32>, vector<32x32xf32>, vector<2x32xf32> -> vector<2x32xf32>
    %407 = arith.addf %405, %406 : vector<2x32xf32>
    %408 = arith.negf %407 : vector<2x32xf32>
    %409 = math.exp %408 : vector<2x32xf32>
    %cst_127 = arith.constant 1.000000e+00 : f32
    %410 = vector.broadcast %cst_127 : f32 to vector<2x32xf32>
    %411 = arith.addf %410, %409 : vector<2x32xf32>
    %412 = arith.divf %410, %411 : vector<2x32xf32>
    %413 = vector.extract_strided_slice %21 {offsets = [26, 0], sizes = [2, 32], strides = [1, 1]} : vector<32x32xf32> to vector<2x32xf32>
    %cst_128 = arith.constant dense<0.000000e+00> : vector<2x32xf32>
    %414 = tpu.matmul %395, %27, %cst_128 {dimension_numbers = #tpu.dot_dimension_numbers<[1], [0], [0], [1], [0, 0, 1, 1], [], []>} : vector<2x32xf32>, vector<32x32xf32>, vector<2x32xf32> -> vector<2x32xf32>
    %415 = arith.addf %414, %31 : vector<2x32xf32>
    %416 = arith.mulf %404, %415 : vector<2x32xf32>
    %417 = arith.addf %413, %416 : vector<2x32xf32>
    %418 = math.tanh %417 : vector<2x32xf32>
    %cst_129 = arith.constant 1.000000e+00 : f32
    %419 = vector.broadcast %cst_129 : f32 to vector<2x32xf32>
    %420 = arith.subf %419, %412 : vector<2x32xf32>
    %421 = arith.mulf %420, %418 : vector<2x32xf32>
    %422 = arith.mulf %412, %395 : vector<2x32xf32>
    %423 = arith.addf %421, %422 : vector<2x32xf32>
    %c26 = arith.constant 26 : index
    %c0_130 = arith.constant 0 : index
    %424 = vector.load %arg11[%c26, %c0_130] : memref<32x32xf32, #tpu.memory_space<vmem>>, vector<2x32xf32>
    tpu.vector_store %arg11[%c26, %c0_130], %423 {strides = array<i32>} : memref<32x32xf32, #tpu.memory_space<vmem>>, vector<2x32xf32>,
    %425 = vector.extract_strided_slice %7 {offsets = [28, 0], sizes = [2, 32], strides = [1, 1]} : vector<32x32xf32> to vector<2x32xf32>
    %cst_131 = arith.constant dense<0.000000e+00> : vector<2x32xf32>
    %426 = tpu.matmul %423, %23, %cst_131 {dimension_numbers = #tpu.dot_dimension_numbers<[1], [0], [0], [1], [0, 0, 1, 1], [], []>} : vector<2x32xf32>, vector<32x32xf32>, vector<2x32xf32> -> vector<2x32xf32>
    %427 = arith.addf %425, %426 : vector<2x32xf32>
    %428 = arith.negf %427 : vector<2x32xf32>
    %429 = math.exp %428 : vector<2x32xf32>
    %cst_132 = arith.constant 1.000000e+00 : f32
    %430 = vector.broadcast %cst_132 : f32 to vector<2x32xf32>
    %431 = arith.addf %430, %429 : vector<2x32xf32>
    %432 = arith.divf %430, %431 : vector<2x32xf32>
    %433 = vector.extract_strided_slice %14 {offsets = [28, 0], sizes = [2, 32], strides = [1, 1]} : vector<32x32xf32> to vector<2x32xf32>
    %cst_133 = arith.constant dense<0.000000e+00> : vector<2x32xf32>
    %434 = tpu.matmul %423, %25, %cst_133 {dimension_numbers = #tpu.dot_dimension_numbers<[1], [0], [0], [1], [0, 0, 1, 1], [], []>} : vector<2x32xf32>, vector<32x32xf32>, vector<2x32xf32> -> vector<2x32xf32>
    %435 = arith.addf %433, %434 : vector<2x32xf32>
    %436 = arith.negf %435 : vector<2x32xf32>
    %437 = math.exp %436 : vector<2x32xf32>
    %cst_134 = arith.constant 1.000000e+00 : f32
    %438 = vector.broadcast %cst_134 : f32 to vector<2x32xf32>
    %439 = arith.addf %438, %437 : vector<2x32xf32>
    %440 = arith.divf %438, %439 : vector<2x32xf32>
    %441 = vector.extract_strided_slice %21 {offsets = [28, 0], sizes = [2, 32], strides = [1, 1]} : vector<32x32xf32> to vector<2x32xf32>
    %cst_135 = arith.constant dense<0.000000e+00> : vector<2x32xf32>
    %442 = tpu.matmul %423, %27, %cst_135 {dimension_numbers = #tpu.dot_dimension_numbers<[1], [0], [0], [1], [0, 0, 1, 1], [], []>} : vector<2x32xf32>, vector<32x32xf32>, vector<2x32xf32> -> vector<2x32xf32>
    %443 = arith.addf %442, %31 : vector<2x32xf32>
    %444 = arith.mulf %432, %443 : vector<2x32xf32>
    %445 = arith.addf %441, %444 : vector<2x32xf32>
    %446 = math.tanh %445 : vector<2x32xf32>
    %cst_136 = arith.constant 1.000000e+00 : f32
    %447 = vector.broadcast %cst_136 : f32 to vector<2x32xf32>
    %448 = arith.subf %447, %440 : vector<2x32xf32>
    %449 = arith.mulf %448, %446 : vector<2x32xf32>
    %450 = arith.mulf %440, %423 : vector<2x32xf32>
    %451 = arith.addf %449, %450 : vector<2x32xf32>
    %c28 = arith.constant 28 : index
    %c0_137 = arith.constant 0 : index
    %452 = vector.load %arg11[%c28, %c0_137] : memref<32x32xf32, #tpu.memory_space<vmem>>, vector<2x32xf32>
    tpu.vector_store %arg11[%c28, %c0_137], %451 {strides = array<i32>} : memref<32x32xf32, #tpu.memory_space<vmem>>, vector<2x32xf32>,
    %453 = vector.extract_strided_slice %7 {offsets = [30, 0], sizes = [2, 32], strides = [1, 1]} : vector<32x32xf32> to vector<2x32xf32>
    %cst_138 = arith.constant dense<0.000000e+00> : vector<2x32xf32>
    %454 = tpu.matmul %451, %23, %cst_138 {dimension_numbers = #tpu.dot_dimension_numbers<[1], [0], [0], [1], [0, 0, 1, 1], [], []>} : vector<2x32xf32>, vector<32x32xf32>, vector<2x32xf32> -> vector<2x32xf32>
    %455 = arith.addf %453, %454 : vector<2x32xf32>
    %456 = arith.negf %455 : vector<2x32xf32>
    %457 = math.exp %456 : vector<2x32xf32>
    %cst_139 = arith.constant 1.000000e+00 : f32
    %458 = vector.broadcast %cst_139 : f32 to vector<2x32xf32>
    %459 = arith.addf %458, %457 : vector<2x32xf32>
    %460 = arith.divf %458, %459 : vector<2x32xf32>
    %461 = vector.extract_strided_slice %14 {offsets = [30, 0], sizes = [2, 32], strides = [1, 1]} : vector<32x32xf32> to vector<2x32xf32>
    %cst_140 = arith.constant dense<0.000000e+00> : vector<2x32xf32>
    %462 = tpu.matmul %451, %25, %cst_140 {dimension_numbers = #tpu.dot_dimension_numbers<[1], [0], [0], [1], [0, 0, 1, 1], [], []>} : vector<2x32xf32>, vector<32x32xf32>, vector<2x32xf32> -> vector<2x32xf32>
    %463 = arith.addf %461, %462 : vector<2x32xf32>
    %464 = arith.negf %463 : vector<2x32xf32>
    %465 = math.exp %464 : vector<2x32xf32>
    %cst_141 = arith.constant 1.000000e+00 : f32
    %466 = vector.broadcast %cst_141 : f32 to vector<2x32xf32>
    %467 = arith.addf %466, %465 : vector<2x32xf32>
    %468 = arith.divf %466, %467 : vector<2x32xf32>
    %469 = vector.extract_strided_slice %21 {offsets = [30, 0], sizes = [2, 32], strides = [1, 1]} : vector<32x32xf32> to vector<2x32xf32>
    %cst_142 = arith.constant dense<0.000000e+00> : vector<2x32xf32>
    %470 = tpu.matmul %451, %27, %cst_142 {dimension_numbers = #tpu.dot_dimension_numbers<[1], [0], [0], [1], [0, 0, 1, 1], [], []>} : vector<2x32xf32>, vector<32x32xf32>, vector<2x32xf32> -> vector<2x32xf32>
    %471 = arith.addf %470, %31 : vector<2x32xf32>
    %472 = arith.mulf %460, %471 : vector<2x32xf32>
    %473 = arith.addf %469, %472 : vector<2x32xf32>
    %474 = math.tanh %473 : vector<2x32xf32>
    %cst_143 = arith.constant 1.000000e+00 : f32
    %475 = vector.broadcast %cst_143 : f32 to vector<2x32xf32>
    %476 = arith.subf %475, %468 : vector<2x32xf32>
    %477 = arith.mulf %476, %474 : vector<2x32xf32>
    %478 = arith.mulf %468, %451 : vector<2x32xf32>
    %479 = arith.addf %477, %478 : vector<2x32xf32>
    %c30 = arith.constant 30 : index
    %c0_144 = arith.constant 0 : index
    %480 = vector.load %arg11[%c30, %c0_144] : memref<32x32xf32, #tpu.memory_space<vmem>>, vector<2x32xf32>
    tpu.vector_store %arg11[%c30, %c0_144], %479 {strides = array<i32>} : memref<32x32xf32, #tpu.memory_space<vmem>>, vector<2x32xf32>,
    %c0_145 = arith.constant 0 : index
    %c0_146 = arith.constant 0 : index
    %481 = vector.load %arg11[%c0_145, %c0_146] : memref<32x32xf32, #tpu.memory_space<vmem>>, vector<32x32xf32>
    %c0_147 = arith.constant 0 : index
    %c0_148 = arith.constant 0 : index
    %c0_149 = arith.constant 0 : index
    %482 = vector.load %arg5[%c0_147, %c0_148, %c0_149] : memref<3x32x32xf32, #tpu.memory_space<vmem>>, vector<1x32x32xf32>
    %483 = vector.shape_cast %482 : vector<1x32x32xf32> to vector<32x32xf32>
    %cst_150 = arith.constant dense<0.000000e+00> : vector<32x32xf32>
    %484 = tpu.matmul %481, %483, %cst_150 {dimension_numbers = #tpu.dot_dimension_numbers<[1], [0], [0], [1], [0, 0, 1, 1], [], []>} : vector<32x32xf32>, vector<32x32xf32>, vector<32x32xf32> -> vector<32x32xf32>
    %c0_151 = arith.constant 0 : index
    %c0_152 = arith.constant 0 : index
    %c0_153 = arith.constant 0 : index
    %485 = vector.load %arg7[%c0_151, %c0_152, %c0_153] : memref<4x1x32xf32, #tpu.memory_space<vmem>>, vector<1x1x32xf32>
    %486 = vector.shape_cast %485 : vector<1x1x32xf32> to vector<1x32xf32>
    %487 = vector.broadcast %486 : vector<1x32xf32> to vector<32x32xf32>
    %488 = arith.addf %484, %487 : vector<32x32xf32>
    %c1_154 = arith.constant 1 : index
    %c0_155 = arith.constant 0 : index
    %c0_156 = arith.constant 0 : index
    %489 = vector.load %arg5[%c1_154, %c0_155, %c0_156] : memref<3x32x32xf32, #tpu.memory_space<vmem>>, vector<1x32x32xf32>
    %490 = vector.shape_cast %489 : vector<1x32x32xf32> to vector<32x32xf32>
    %cst_157 = arith.constant dense<0.000000e+00> : vector<32x32xf32>
    %491 = tpu.matmul %481, %490, %cst_157 {dimension_numbers = #tpu.dot_dimension_numbers<[1], [0], [0], [1], [0, 0, 1, 1], [], []>} : vector<32x32xf32>, vector<32x32xf32>, vector<32x32xf32> -> vector<32x32xf32>
    %c1_158 = arith.constant 1 : index
    %c0_159 = arith.constant 0 : index
    %c0_160 = arith.constant 0 : index
    %492 = vector.load %arg7[%c1_158, %c0_159, %c0_160] : memref<4x1x32xf32, #tpu.memory_space<vmem>>, vector<1x1x32xf32>
    %493 = vector.shape_cast %492 : vector<1x1x32xf32> to vector<1x32xf32>
    %494 = vector.broadcast %493 : vector<1x32xf32> to vector<32x32xf32>
    %495 = arith.addf %491, %494 : vector<32x32xf32>
    %c2_161 = arith.constant 2 : index
    %c0_162 = arith.constant 0 : index
    %c0_163 = arith.constant 0 : index
    %496 = vector.load %arg5[%c2_161, %c0_162, %c0_163] : memref<3x32x32xf32, #tpu.memory_space<vmem>>, vector<1x32x32xf32>
    %497 = vector.shape_cast %496 : vector<1x32x32xf32> to vector<32x32xf32>
    %cst_164 = arith.constant dense<0.000000e+00> : vector<32x32xf32>
    %498 = tpu.matmul %481, %497, %cst_164 {dimension_numbers = #tpu.dot_dimension_numbers<[1], [0], [0], [1], [0, 0, 1, 1], [], []>} : vector<32x32xf32>, vector<32x32xf32>, vector<32x32xf32> -> vector<32x32xf32>
    %c2_165 = arith.constant 2 : index
    %c0_166 = arith.constant 0 : index
    %c0_167 = arith.constant 0 : index
    %499 = vector.load %arg7[%c2_165, %c0_166, %c0_167] : memref<4x1x32xf32, #tpu.memory_space<vmem>>, vector<1x1x32xf32>
    %500 = vector.shape_cast %499 : vector<1x1x32xf32> to vector<1x32xf32>
    %501 = vector.broadcast %500 : vector<1x32xf32> to vector<32x32xf32>
    %502 = arith.addf %498, %501 : vector<32x32xf32>
    %c0_168 = arith.constant 0 : index
    %c0_169 = arith.constant 0 : index
    %c0_170 = arith.constant 0 : index
    %503 = vector.load %arg6[%c0_168, %c0_169, %c0_170] : memref<3x32x32xf32, #tpu.memory_space<vmem>>, vector<1x32x32xf32>
    %504 = vector.shape_cast %503 : vector<1x32x32xf32> to vector<32x32xf32>
    %c1_171 = arith.constant 1 : index
    %c0_172 = arith.constant 0 : index
    %c0_173 = arith.constant 0 : index
    %505 = vector.load %arg6[%c1_171, %c0_172, %c0_173] : memref<3x32x32xf32, #tpu.memory_space<vmem>>, vector<1x32x32xf32>
    %506 = vector.shape_cast %505 : vector<1x32x32xf32> to vector<32x32xf32>
    %c2_174 = arith.constant 2 : index
    %c0_175 = arith.constant 0 : index
    %c0_176 = arith.constant 0 : index
    %507 = vector.load %arg6[%c2_174, %c0_175, %c0_176] : memref<3x32x32xf32, #tpu.memory_space<vmem>>, vector<1x32x32xf32>
    %508 = vector.shape_cast %507 : vector<1x32x32xf32> to vector<32x32xf32>
    %c3_177 = arith.constant 3 : index
    %c0_178 = arith.constant 0 : index
    %c0_179 = arith.constant 0 : index
    %509 = vector.load %arg7[%c3_177, %c0_178, %c0_179] : memref<4x1x32xf32, #tpu.memory_space<vmem>>, vector<1x1x32xf32>
    %510 = vector.shape_cast %509 : vector<1x1x32xf32> to vector<1x32xf32>
    %511 = vector.shape_cast %510 : vector<1x32xf32> to vector<1x32xf32>
    %512 = vector.broadcast %511 : vector<1x32xf32> to vector<2x32xf32>
    %cst_180 = arith.constant 0.000000e+00 : f32
    %513 = vector.broadcast %cst_180 : f32 to vector<2x32xf32>
    %514 = vector.extract_strided_slice %488 {offsets = [0, 0], sizes = [2, 32], strides = [1, 1]} : vector<32x32xf32> to vector<2x32xf32>
    %cst_181 = arith.constant dense<0.000000e+00> : vector<2x32xf32>
    %515 = tpu.matmul %513, %504, %cst_181 {dimension_numbers = #tpu.dot_dimension_numbers<[1], [0], [0], [1], [0, 0, 1, 1], [], []>} : vector<2x32xf32>, vector<32x32xf32>, vector<2x32xf32> -> vector<2x32xf32>
    %516 = arith.addf %514, %515 : vector<2x32xf32>
    %517 = arith.negf %516 : vector<2x32xf32>
    %518 = math.exp %517 : vector<2x32xf32>
    %cst_182 = arith.constant 1.000000e+00 : f32
    %519 = vector.broadcast %cst_182 : f32 to vector<2x32xf32>
    %520 = arith.addf %519, %518 : vector<2x32xf32>
    %521 = arith.divf %519, %520 : vector<2x32xf32>
    %522 = vector.extract_strided_slice %495 {offsets = [0, 0], sizes = [2, 32], strides = [1, 1]} : vector<32x32xf32> to vector<2x32xf32>
    %cst_183 = arith.constant dense<0.000000e+00> : vector<2x32xf32>
    %523 = tpu.matmul %513, %506, %cst_183 {dimension_numbers = #tpu.dot_dimension_numbers<[1], [0], [0], [1], [0, 0, 1, 1], [], []>} : vector<2x32xf32>, vector<32x32xf32>, vector<2x32xf32> -> vector<2x32xf32>
    %524 = arith.addf %522, %523 : vector<2x32xf32>
    %525 = arith.negf %524 : vector<2x32xf32>
    %526 = math.exp %525 : vector<2x32xf32>
    %cst_184 = arith.constant 1.000000e+00 : f32
    %527 = vector.broadcast %cst_184 : f32 to vector<2x32xf32>
    %528 = arith.addf %527, %526 : vector<2x32xf32>
    %529 = arith.divf %527, %528 : vector<2x32xf32>
    %530 = vector.extract_strided_slice %502 {offsets = [0, 0], sizes = [2, 32], strides = [1, 1]} : vector<32x32xf32> to vector<2x32xf32>
    %cst_185 = arith.constant dense<0.000000e+00> : vector<2x32xf32>
    %531 = tpu.matmul %513, %508, %cst_185 {dimension_numbers = #tpu.dot_dimension_numbers<[1], [0], [0], [1], [0, 0, 1, 1], [], []>} : vector<2x32xf32>, vector<32x32xf32>, vector<2x32xf32> -> vector<2x32xf32>
    %532 = arith.addf %531, %512 : vector<2x32xf32>
    %533 = arith.mulf %521, %532 : vector<2x32xf32>
    %534 = arith.addf %530, %533 : vector<2x32xf32>
    %535 = math.tanh %534 : vector<2x32xf32>
    %cst_186 = arith.constant 1.000000e+00 : f32
    %536 = vector.broadcast %cst_186 : f32 to vector<2x32xf32>
    %537 = arith.subf %536, %529 : vector<2x32xf32>
    %538 = arith.mulf %537, %535 : vector<2x32xf32>
    %539 = arith.mulf %529, %513 : vector<2x32xf32>
    %540 = arith.addf %538, %539 : vector<2x32xf32>
    %c0_187 = arith.constant 0 : index
    %c0_188 = arith.constant 0 : index
    %541 = vector.load %arg11[%c0_187, %c0_188] : memref<32x32xf32, #tpu.memory_space<vmem>>, vector<2x32xf32>
    tpu.vector_store %arg11[%c0_187, %c0_188], %540 {strides = array<i32>} : memref<32x32xf32, #tpu.memory_space<vmem>>, vector<2x32xf32>,
    %542 = vector.extract_strided_slice %488 {offsets = [2, 0], sizes = [2, 32], strides = [1, 1]} : vector<32x32xf32> to vector<2x32xf32>
    %cst_189 = arith.constant dense<0.000000e+00> : vector<2x32xf32>
    %543 = tpu.matmul %540, %504, %cst_189 {dimension_numbers = #tpu.dot_dimension_numbers<[1], [0], [0], [1], [0, 0, 1, 1], [], []>} : vector<2x32xf32>, vector<32x32xf32>, vector<2x32xf32> -> vector<2x32xf32>
    %544 = arith.addf %542, %543 : vector<2x32xf32>
    %545 = arith.negf %544 : vector<2x32xf32>
    %546 = math.exp %545 : vector<2x32xf32>
    %cst_190 = arith.constant 1.000000e+00 : f32
    %547 = vector.broadcast %cst_190 : f32 to vector<2x32xf32>
    %548 = arith.addf %547, %546 : vector<2x32xf32>
    %549 = arith.divf %547, %548 : vector<2x32xf32>
    %550 = vector.extract_strided_slice %495 {offsets = [2, 0], sizes = [2, 32], strides = [1, 1]} : vector<32x32xf32> to vector<2x32xf32>
    %cst_191 = arith.constant dense<0.000000e+00> : vector<2x32xf32>
    %551 = tpu.matmul %540, %506, %cst_191 {dimension_numbers = #tpu.dot_dimension_numbers<[1], [0], [0], [1], [0, 0, 1, 1], [], []>} : vector<2x32xf32>, vector<32x32xf32>, vector<2x32xf32> -> vector<2x32xf32>
    %552 = arith.addf %550, %551 : vector<2x32xf32>
    %553 = arith.negf %552 : vector<2x32xf32>
    %554 = math.exp %553 : vector<2x32xf32>
    %cst_192 = arith.constant 1.000000e+00 : f32
    %555 = vector.broadcast %cst_192 : f32 to vector<2x32xf32>
    %556 = arith.addf %555, %554 : vector<2x32xf32>
    %557 = arith.divf %555, %556 : vector<2x32xf32>
    %558 = vector.extract_strided_slice %502 {offsets = [2, 0], sizes = [2, 32], strides = [1, 1]} : vector<32x32xf32> to vector<2x32xf32>
    %cst_193 = arith.constant dense<0.000000e+00> : vector<2x32xf32>
    %559 = tpu.matmul %540, %508, %cst_193 {dimension_numbers = #tpu.dot_dimension_numbers<[1], [0], [0], [1], [0, 0, 1, 1], [], []>} : vector<2x32xf32>, vector<32x32xf32>, vector<2x32xf32> -> vector<2x32xf32>
    %560 = arith.addf %559, %512 : vector<2x32xf32>
    %561 = arith.mulf %549, %560 : vector<2x32xf32>
    %562 = arith.addf %558, %561 : vector<2x32xf32>
    %563 = math.tanh %562 : vector<2x32xf32>
    %cst_194 = arith.constant 1.000000e+00 : f32
    %564 = vector.broadcast %cst_194 : f32 to vector<2x32xf32>
    %565 = arith.subf %564, %557 : vector<2x32xf32>
    %566 = arith.mulf %565, %563 : vector<2x32xf32>
    %567 = arith.mulf %557, %540 : vector<2x32xf32>
    %568 = arith.addf %566, %567 : vector<2x32xf32>
    %c2_195 = arith.constant 2 : index
    %c0_196 = arith.constant 0 : index
    %569 = vector.load %arg11[%c2_195, %c0_196] : memref<32x32xf32, #tpu.memory_space<vmem>>, vector<2x32xf32>
    tpu.vector_store %arg11[%c2_195, %c0_196], %568 {strides = array<i32>} : memref<32x32xf32, #tpu.memory_space<vmem>>, vector<2x32xf32>,
    %570 = vector.extract_strided_slice %488 {offsets = [4, 0], sizes = [2, 32], strides = [1, 1]} : vector<32x32xf32> to vector<2x32xf32>
    %cst_197 = arith.constant dense<0.000000e+00> : vector<2x32xf32>
    %571 = tpu.matmul %568, %504, %cst_197 {dimension_numbers = #tpu.dot_dimension_numbers<[1], [0], [0], [1], [0, 0, 1, 1], [], []>} : vector<2x32xf32>, vector<32x32xf32>, vector<2x32xf32> -> vector<2x32xf32>
    %572 = arith.addf %570, %571 : vector<2x32xf32>
    %573 = arith.negf %572 : vector<2x32xf32>
    %574 = math.exp %573 : vector<2x32xf32>
    %cst_198 = arith.constant 1.000000e+00 : f32
    %575 = vector.broadcast %cst_198 : f32 to vector<2x32xf32>
    %576 = arith.addf %575, %574 : vector<2x32xf32>
    %577 = arith.divf %575, %576 : vector<2x32xf32>
    %578 = vector.extract_strided_slice %495 {offsets = [4, 0], sizes = [2, 32], strides = [1, 1]} : vector<32x32xf32> to vector<2x32xf32>
    %cst_199 = arith.constant dense<0.000000e+00> : vector<2x32xf32>
    %579 = tpu.matmul %568, %506, %cst_199 {dimension_numbers = #tpu.dot_dimension_numbers<[1], [0], [0], [1], [0, 0, 1, 1], [], []>} : vector<2x32xf32>, vector<32x32xf32>, vector<2x32xf32> -> vector<2x32xf32>
    %580 = arith.addf %578, %579 : vector<2x32xf32>
    %581 = arith.negf %580 : vector<2x32xf32>
    %582 = math.exp %581 : vector<2x32xf32>
    %cst_200 = arith.constant 1.000000e+00 : f32
    %583 = vector.broadcast %cst_200 : f32 to vector<2x32xf32>
    %584 = arith.addf %583, %582 : vector<2x32xf32>
    %585 = arith.divf %583, %584 : vector<2x32xf32>
    %586 = vector.extract_strided_slice %502 {offsets = [4, 0], sizes = [2, 32], strides = [1, 1]} : vector<32x32xf32> to vector<2x32xf32>
    %cst_201 = arith.constant dense<0.000000e+00> : vector<2x32xf32>
    %587 = tpu.matmul %568, %508, %cst_201 {dimension_numbers = #tpu.dot_dimension_numbers<[1], [0], [0], [1], [0, 0, 1, 1], [], []>} : vector<2x32xf32>, vector<32x32xf32>, vector<2x32xf32> -> vector<2x32xf32>
    %588 = arith.addf %587, %512 : vector<2x32xf32>
    %589 = arith.mulf %577, %588 : vector<2x32xf32>
    %590 = arith.addf %586, %589 : vector<2x32xf32>
    %591 = math.tanh %590 : vector<2x32xf32>
    %cst_202 = arith.constant 1.000000e+00 : f32
    %592 = vector.broadcast %cst_202 : f32 to vector<2x32xf32>
    %593 = arith.subf %592, %585 : vector<2x32xf32>
    %594 = arith.mulf %593, %591 : vector<2x32xf32>
    %595 = arith.mulf %585, %568 : vector<2x32xf32>
    %596 = arith.addf %594, %595 : vector<2x32xf32>
    %c4_203 = arith.constant 4 : index
    %c0_204 = arith.constant 0 : index
    %597 = vector.load %arg11[%c4_203, %c0_204] : memref<32x32xf32, #tpu.memory_space<vmem>>, vector<2x32xf32>
    tpu.vector_store %arg11[%c4_203, %c0_204], %596 {strides = array<i32>} : memref<32x32xf32, #tpu.memory_space<vmem>>, vector<2x32xf32>,
    %598 = vector.extract_strided_slice %488 {offsets = [6, 0], sizes = [2, 32], strides = [1, 1]} : vector<32x32xf32> to vector<2x32xf32>
    %cst_205 = arith.constant dense<0.000000e+00> : vector<2x32xf32>
    %599 = tpu.matmul %596, %504, %cst_205 {dimension_numbers = #tpu.dot_dimension_numbers<[1], [0], [0], [1], [0, 0, 1, 1], [], []>} : vector<2x32xf32>, vector<32x32xf32>, vector<2x32xf32> -> vector<2x32xf32>
    %600 = arith.addf %598, %599 : vector<2x32xf32>
    %601 = arith.negf %600 : vector<2x32xf32>
    %602 = math.exp %601 : vector<2x32xf32>
    %cst_206 = arith.constant 1.000000e+00 : f32
    %603 = vector.broadcast %cst_206 : f32 to vector<2x32xf32>
    %604 = arith.addf %603, %602 : vector<2x32xf32>
    %605 = arith.divf %603, %604 : vector<2x32xf32>
    %606 = vector.extract_strided_slice %495 {offsets = [6, 0], sizes = [2, 32], strides = [1, 1]} : vector<32x32xf32> to vector<2x32xf32>
    %cst_207 = arith.constant dense<0.000000e+00> : vector<2x32xf32>
    %607 = tpu.matmul %596, %506, %cst_207 {dimension_numbers = #tpu.dot_dimension_numbers<[1], [0], [0], [1], [0, 0, 1, 1], [], []>} : vector<2x32xf32>, vector<32x32xf32>, vector<2x32xf32> -> vector<2x32xf32>
    %608 = arith.addf %606, %607 : vector<2x32xf32>
    %609 = arith.negf %608 : vector<2x32xf32>
    %610 = math.exp %609 : vector<2x32xf32>
    %cst_208 = arith.constant 1.000000e+00 : f32
    %611 = vector.broadcast %cst_208 : f32 to vector<2x32xf32>
    %612 = arith.addf %611, %610 : vector<2x32xf32>
    %613 = arith.divf %611, %612 : vector<2x32xf32>
    %614 = vector.extract_strided_slice %502 {offsets = [6, 0], sizes = [2, 32], strides = [1, 1]} : vector<32x32xf32> to vector<2x32xf32>
    %cst_209 = arith.constant dense<0.000000e+00> : vector<2x32xf32>
    %615 = tpu.matmul %596, %508, %cst_209 {dimension_numbers = #tpu.dot_dimension_numbers<[1], [0], [0], [1], [0, 0, 1, 1], [], []>} : vector<2x32xf32>, vector<32x32xf32>, vector<2x32xf32> -> vector<2x32xf32>
    %616 = arith.addf %615, %512 : vector<2x32xf32>
    %617 = arith.mulf %605, %616 : vector<2x32xf32>
    %618 = arith.addf %614, %617 : vector<2x32xf32>
    %619 = math.tanh %618 : vector<2x32xf32>
    %cst_210 = arith.constant 1.000000e+00 : f32
    %620 = vector.broadcast %cst_210 : f32 to vector<2x32xf32>
    %621 = arith.subf %620, %613 : vector<2x32xf32>
    %622 = arith.mulf %621, %619 : vector<2x32xf32>
    %623 = arith.mulf %613, %596 : vector<2x32xf32>
    %624 = arith.addf %622, %623 : vector<2x32xf32>
    %c6_211 = arith.constant 6 : index
    %c0_212 = arith.constant 0 : index
    %625 = vector.load %arg11[%c6_211, %c0_212] : memref<32x32xf32, #tpu.memory_space<vmem>>, vector<2x32xf32>
    tpu.vector_store %arg11[%c6_211, %c0_212], %624 {strides = array<i32>} : memref<32x32xf32, #tpu.memory_space<vmem>>, vector<2x32xf32>,
    %626 = vector.extract_strided_slice %488 {offsets = [8, 0], sizes = [2, 32], strides = [1, 1]} : vector<32x32xf32> to vector<2x32xf32>
    %cst_213 = arith.constant dense<0.000000e+00> : vector<2x32xf32>
    %627 = tpu.matmul %624, %504, %cst_213 {dimension_numbers = #tpu.dot_dimension_numbers<[1], [0], [0], [1], [0, 0, 1, 1], [], []>} : vector<2x32xf32>, vector<32x32xf32>, vector<2x32xf32> -> vector<2x32xf32>
    %628 = arith.addf %626, %627 : vector<2x32xf32>
    %629 = arith.negf %628 : vector<2x32xf32>
    %630 = math.exp %629 : vector<2x32xf32>
    %cst_214 = arith.constant 1.000000e+00 : f32
    %631 = vector.broadcast %cst_214 : f32 to vector<2x32xf32>
    %632 = arith.addf %631, %630 : vector<2x32xf32>
    %633 = arith.divf %631, %632 : vector<2x32xf32>
    %634 = vector.extract_strided_slice %495 {offsets = [8, 0], sizes = [2, 32], strides = [1, 1]} : vector<32x32xf32> to vector<2x32xf32>
    %cst_215 = arith.constant dense<0.000000e+00> : vector<2x32xf32>
    %635 = tpu.matmul %624, %506, %cst_215 {dimension_numbers = #tpu.dot_dimension_numbers<[1], [0], [0], [1], [0, 0, 1, 1], [], []>} : vector<2x32xf32>, vector<32x32xf32>, vector<2x32xf32> -> vector<2x32xf32>
    %636 = arith.addf %634, %635 : vector<2x32xf32>
    %637 = arith.negf %636 : vector<2x32xf32>
    %638 = math.exp %637 : vector<2x32xf32>
    %cst_216 = arith.constant 1.000000e+00 : f32
    %639 = vector.broadcast %cst_216 : f32 to vector<2x32xf32>
    %640 = arith.addf %639, %638 : vector<2x32xf32>
    %641 = arith.divf %639, %640 : vector<2x32xf32>
    %642 = vector.extract_strided_slice %502 {offsets = [8, 0], sizes = [2, 32], strides = [1, 1]} : vector<32x32xf32> to vector<2x32xf32>
    %cst_217 = arith.constant dense<0.000000e+00> : vector<2x32xf32>
    %643 = tpu.matmul %624, %508, %cst_217 {dimension_numbers = #tpu.dot_dimension_numbers<[1], [0], [0], [1], [0, 0, 1, 1], [], []>} : vector<2x32xf32>, vector<32x32xf32>, vector<2x32xf32> -> vector<2x32xf32>
    %644 = arith.addf %643, %512 : vector<2x32xf32>
    %645 = arith.mulf %633, %644 : vector<2x32xf32>
    %646 = arith.addf %642, %645 : vector<2x32xf32>
    %647 = math.tanh %646 : vector<2x32xf32>
    %cst_218 = arith.constant 1.000000e+00 : f32
    %648 = vector.broadcast %cst_218 : f32 to vector<2x32xf32>
    %649 = arith.subf %648, %641 : vector<2x32xf32>
    %650 = arith.mulf %649, %647 : vector<2x32xf32>
    %651 = arith.mulf %641, %624 : vector<2x32xf32>
    %652 = arith.addf %650, %651 : vector<2x32xf32>
    %c8_219 = arith.constant 8 : index
    %c0_220 = arith.constant 0 : index
    %653 = vector.load %arg11[%c8_219, %c0_220] : memref<32x32xf32, #tpu.memory_space<vmem>>, vector<2x32xf32>
    tpu.vector_store %arg11[%c8_219, %c0_220], %652 {strides = array<i32>} : memref<32x32xf32, #tpu.memory_space<vmem>>, vector<2x32xf32>,
    %654 = vector.extract_strided_slice %488 {offsets = [10, 0], sizes = [2, 32], strides = [1, 1]} : vector<32x32xf32> to vector<2x32xf32>
    %cst_221 = arith.constant dense<0.000000e+00> : vector<2x32xf32>
    %655 = tpu.matmul %652, %504, %cst_221 {dimension_numbers = #tpu.dot_dimension_numbers<[1], [0], [0], [1], [0, 0, 1, 1], [], []>} : vector<2x32xf32>, vector<32x32xf32>, vector<2x32xf32> -> vector<2x32xf32>
    %656 = arith.addf %654, %655 : vector<2x32xf32>
    %657 = arith.negf %656 : vector<2x32xf32>
    %658 = math.exp %657 : vector<2x32xf32>
    %cst_222 = arith.constant 1.000000e+00 : f32
    %659 = vector.broadcast %cst_222 : f32 to vector<2x32xf32>
    %660 = arith.addf %659, %658 : vector<2x32xf32>
    %661 = arith.divf %659, %660 : vector<2x32xf32>
    %662 = vector.extract_strided_slice %495 {offsets = [10, 0], sizes = [2, 32], strides = [1, 1]} : vector<32x32xf32> to vector<2x32xf32>
    %cst_223 = arith.constant dense<0.000000e+00> : vector<2x32xf32>
    %663 = tpu.matmul %652, %506, %cst_223 {dimension_numbers = #tpu.dot_dimension_numbers<[1], [0], [0], [1], [0, 0, 1, 1], [], []>} : vector<2x32xf32>, vector<32x32xf32>, vector<2x32xf32> -> vector<2x32xf32>
    %664 = arith.addf %662, %663 : vector<2x32xf32>
    %665 = arith.negf %664 : vector<2x32xf32>
    %666 = math.exp %665 : vector<2x32xf32>
    %cst_224 = arith.constant 1.000000e+00 : f32
    %667 = vector.broadcast %cst_224 : f32 to vector<2x32xf32>
    %668 = arith.addf %667, %666 : vector<2x32xf32>
    %669 = arith.divf %667, %668 : vector<2x32xf32>
    %670 = vector.extract_strided_slice %502 {offsets = [10, 0], sizes = [2, 32], strides = [1, 1]} : vector<32x32xf32> to vector<2x32xf32>
    %cst_225 = arith.constant dense<0.000000e+00> : vector<2x32xf32>
    %671 = tpu.matmul %652, %508, %cst_225 {dimension_numbers = #tpu.dot_dimension_numbers<[1], [0], [0], [1], [0, 0, 1, 1], [], []>} : vector<2x32xf32>, vector<32x32xf32>, vector<2x32xf32> -> vector<2x32xf32>
    %672 = arith.addf %671, %512 : vector<2x32xf32>
    %673 = arith.mulf %661, %672 : vector<2x32xf32>
    %674 = arith.addf %670, %673 : vector<2x32xf32>
    %675 = math.tanh %674 : vector<2x32xf32>
    %cst_226 = arith.constant 1.000000e+00 : f32
    %676 = vector.broadcast %cst_226 : f32 to vector<2x32xf32>
    %677 = arith.subf %676, %669 : vector<2x32xf32>
    %678 = arith.mulf %677, %675 : vector<2x32xf32>
    %679 = arith.mulf %669, %652 : vector<2x32xf32>
    %680 = arith.addf %678, %679 : vector<2x32xf32>
    %c10_227 = arith.constant 10 : index
    %c0_228 = arith.constant 0 : index
    %681 = vector.load %arg11[%c10_227, %c0_228] : memref<32x32xf32, #tpu.memory_space<vmem>>, vector<2x32xf32>
    tpu.vector_store %arg11[%c10_227, %c0_228], %680 {strides = array<i32>} : memref<32x32xf32, #tpu.memory_space<vmem>>, vector<2x32xf32>,
    %682 = vector.extract_strided_slice %488 {offsets = [12, 0], sizes = [2, 32], strides = [1, 1]} : vector<32x32xf32> to vector<2x32xf32>
    %cst_229 = arith.constant dense<0.000000e+00> : vector<2x32xf32>
    %683 = tpu.matmul %680, %504, %cst_229 {dimension_numbers = #tpu.dot_dimension_numbers<[1], [0], [0], [1], [0, 0, 1, 1], [], []>} : vector<2x32xf32>, vector<32x32xf32>, vector<2x32xf32> -> vector<2x32xf32>
    %684 = arith.addf %682, %683 : vector<2x32xf32>
    %685 = arith.negf %684 : vector<2x32xf32>
    %686 = math.exp %685 : vector<2x32xf32>
    %cst_230 = arith.constant 1.000000e+00 : f32
    %687 = vector.broadcast %cst_230 : f32 to vector<2x32xf32>
    %688 = arith.addf %687, %686 : vector<2x32xf32>
    %689 = arith.divf %687, %688 : vector<2x32xf32>
    %690 = vector.extract_strided_slice %495 {offsets = [12, 0], sizes = [2, 32], strides = [1, 1]} : vector<32x32xf32> to vector<2x32xf32>
    %cst_231 = arith.constant dense<0.000000e+00> : vector<2x32xf32>
    %691 = tpu.matmul %680, %506, %cst_231 {dimension_numbers = #tpu.dot_dimension_numbers<[1], [0], [0], [1], [0, 0, 1, 1], [], []>} : vector<2x32xf32>, vector<32x32xf32>, vector<2x32xf32> -> vector<2x32xf32>
    %692 = arith.addf %690, %691 : vector<2x32xf32>
    %693 = arith.negf %692 : vector<2x32xf32>
    %694 = math.exp %693 : vector<2x32xf32>
    %cst_232 = arith.constant 1.000000e+00 : f32
    %695 = vector.broadcast %cst_232 : f32 to vector<2x32xf32>
    %696 = arith.addf %695, %694 : vector<2x32xf32>
    %697 = arith.divf %695, %696 : vector<2x32xf32>
    %698 = vector.extract_strided_slice %502 {offsets = [12, 0], sizes = [2, 32], strides = [1, 1]} : vector<32x32xf32> to vector<2x32xf32>
    %cst_233 = arith.constant dense<0.000000e+00> : vector<2x32xf32>
    %699 = tpu.matmul %680, %508, %cst_233 {dimension_numbers = #tpu.dot_dimension_numbers<[1], [0], [0], [1], [0, 0, 1, 1], [], []>} : vector<2x32xf32>, vector<32x32xf32>, vector<2x32xf32> -> vector<2x32xf32>
    %700 = arith.addf %699, %512 : vector<2x32xf32>
    %701 = arith.mulf %689, %700 : vector<2x32xf32>
    %702 = arith.addf %698, %701 : vector<2x32xf32>
    %703 = math.tanh %702 : vector<2x32xf32>
    %cst_234 = arith.constant 1.000000e+00 : f32
    %704 = vector.broadcast %cst_234 : f32 to vector<2x32xf32>
    %705 = arith.subf %704, %697 : vector<2x32xf32>
    %706 = arith.mulf %705, %703 : vector<2x32xf32>
    %707 = arith.mulf %697, %680 : vector<2x32xf32>
    %708 = arith.addf %706, %707 : vector<2x32xf32>
    %c12_235 = arith.constant 12 : index
    %c0_236 = arith.constant 0 : index
    %709 = vector.load %arg11[%c12_235, %c0_236] : memref<32x32xf32, #tpu.memory_space<vmem>>, vector<2x32xf32>
    tpu.vector_store %arg11[%c12_235, %c0_236], %708 {strides = array<i32>} : memref<32x32xf32, #tpu.memory_space<vmem>>, vector<2x32xf32>,
    %710 = vector.extract_strided_slice %488 {offsets = [14, 0], sizes = [2, 32], strides = [1, 1]} : vector<32x32xf32> to vector<2x32xf32>
    %cst_237 = arith.constant dense<0.000000e+00> : vector<2x32xf32>
    %711 = tpu.matmul %708, %504, %cst_237 {dimension_numbers = #tpu.dot_dimension_numbers<[1], [0], [0], [1], [0, 0, 1, 1], [], []>} : vector<2x32xf32>, vector<32x32xf32>, vector<2x32xf32> -> vector<2x32xf32>
    %712 = arith.addf %710, %711 : vector<2x32xf32>
    %713 = arith.negf %712 : vector<2x32xf32>
    %714 = math.exp %713 : vector<2x32xf32>
    %cst_238 = arith.constant 1.000000e+00 : f32
    %715 = vector.broadcast %cst_238 : f32 to vector<2x32xf32>
    %716 = arith.addf %715, %714 : vector<2x32xf32>
    %717 = arith.divf %715, %716 : vector<2x32xf32>
    %718 = vector.extract_strided_slice %495 {offsets = [14, 0], sizes = [2, 32], strides = [1, 1]} : vector<32x32xf32> to vector<2x32xf32>
    %cst_239 = arith.constant dense<0.000000e+00> : vector<2x32xf32>
    %719 = tpu.matmul %708, %506, %cst_239 {dimension_numbers = #tpu.dot_dimension_numbers<[1], [0], [0], [1], [0, 0, 1, 1], [], []>} : vector<2x32xf32>, vector<32x32xf32>, vector<2x32xf32> -> vector<2x32xf32>
    %720 = arith.addf %718, %719 : vector<2x32xf32>
    %721 = arith.negf %720 : vector<2x32xf32>
    %722 = math.exp %721 : vector<2x32xf32>
    %cst_240 = arith.constant 1.000000e+00 : f32
    %723 = vector.broadcast %cst_240 : f32 to vector<2x32xf32>
    %724 = arith.addf %723, %722 : vector<2x32xf32>
    %725 = arith.divf %723, %724 : vector<2x32xf32>
    %726 = vector.extract_strided_slice %502 {offsets = [14, 0], sizes = [2, 32], strides = [1, 1]} : vector<32x32xf32> to vector<2x32xf32>
    %cst_241 = arith.constant dense<0.000000e+00> : vector<2x32xf32>
    %727 = tpu.matmul %708, %508, %cst_241 {dimension_numbers = #tpu.dot_dimension_numbers<[1], [0], [0], [1], [0, 0, 1, 1], [], []>} : vector<2x32xf32>, vector<32x32xf32>, vector<2x32xf32> -> vector<2x32xf32>
    %728 = arith.addf %727, %512 : vector<2x32xf32>
    %729 = arith.mulf %717, %728 : vector<2x32xf32>
    %730 = arith.addf %726, %729 : vector<2x32xf32>
    %731 = math.tanh %730 : vector<2x32xf32>
    %cst_242 = arith.constant 1.000000e+00 : f32
    %732 = vector.broadcast %cst_242 : f32 to vector<2x32xf32>
    %733 = arith.subf %732, %725 : vector<2x32xf32>
    %734 = arith.mulf %733, %731 : vector<2x32xf32>
    %735 = arith.mulf %725, %708 : vector<2x32xf32>
    %736 = arith.addf %734, %735 : vector<2x32xf32>
    %c14_243 = arith.constant 14 : index
    %c0_244 = arith.constant 0 : index
    %737 = vector.load %arg11[%c14_243, %c0_244] : memref<32x32xf32, #tpu.memory_space<vmem>>, vector<2x32xf32>
    tpu.vector_store %arg11[%c14_243, %c0_244], %736 {strides = array<i32>} : memref<32x32xf32, #tpu.memory_space<vmem>>, vector<2x32xf32>,
    %738 = vector.extract_strided_slice %488 {offsets = [16, 0], sizes = [2, 32], strides = [1, 1]} : vector<32x32xf32> to vector<2x32xf32>
    %cst_245 = arith.constant dense<0.000000e+00> : vector<2x32xf32>
    %739 = tpu.matmul %736, %504, %cst_245 {dimension_numbers = #tpu.dot_dimension_numbers<[1], [0], [0], [1], [0, 0, 1, 1], [], []>} : vector<2x32xf32>, vector<32x32xf32>, vector<2x32xf32> -> vector<2x32xf32>
    %740 = arith.addf %738, %739 : vector<2x32xf32>
    %741 = arith.negf %740 : vector<2x32xf32>
    %742 = math.exp %741 : vector<2x32xf32>
    %cst_246 = arith.constant 1.000000e+00 : f32
    %743 = vector.broadcast %cst_246 : f32 to vector<2x32xf32>
    %744 = arith.addf %743, %742 : vector<2x32xf32>
    %745 = arith.divf %743, %744 : vector<2x32xf32>
    %746 = vector.extract_strided_slice %495 {offsets = [16, 0], sizes = [2, 32], strides = [1, 1]} : vector<32x32xf32> to vector<2x32xf32>
    %cst_247 = arith.constant dense<0.000000e+00> : vector<2x32xf32>
    %747 = tpu.matmul %736, %506, %cst_247 {dimension_numbers = #tpu.dot_dimension_numbers<[1], [0], [0], [1], [0, 0, 1, 1], [], []>} : vector<2x32xf32>, vector<32x32xf32>, vector<2x32xf32> -> vector<2x32xf32>
    %748 = arith.addf %746, %747 : vector<2x32xf32>
    %749 = arith.negf %748 : vector<2x32xf32>
    %750 = math.exp %749 : vector<2x32xf32>
    %cst_248 = arith.constant 1.000000e+00 : f32
    %751 = vector.broadcast %cst_248 : f32 to vector<2x32xf32>
    %752 = arith.addf %751, %750 : vector<2x32xf32>
    %753 = arith.divf %751, %752 : vector<2x32xf32>
    %754 = vector.extract_strided_slice %502 {offsets = [16, 0], sizes = [2, 32], strides = [1, 1]} : vector<32x32xf32> to vector<2x32xf32>
    %cst_249 = arith.constant dense<0.000000e+00> : vector<2x32xf32>
    %755 = tpu.matmul %736, %508, %cst_249 {dimension_numbers = #tpu.dot_dimension_numbers<[1], [0], [0], [1], [0, 0, 1, 1], [], []>} : vector<2x32xf32>, vector<32x32xf32>, vector<2x32xf32> -> vector<2x32xf32>
    %756 = arith.addf %755, %512 : vector<2x32xf32>
    %757 = arith.mulf %745, %756 : vector<2x32xf32>
    %758 = arith.addf %754, %757 : vector<2x32xf32>
    %759 = math.tanh %758 : vector<2x32xf32>
    %cst_250 = arith.constant 1.000000e+00 : f32
    %760 = vector.broadcast %cst_250 : f32 to vector<2x32xf32>
    %761 = arith.subf %760, %753 : vector<2x32xf32>
    %762 = arith.mulf %761, %759 : vector<2x32xf32>
    %763 = arith.mulf %753, %736 : vector<2x32xf32>
    %764 = arith.addf %762, %763 : vector<2x32xf32>
    %c16_251 = arith.constant 16 : index
    %c0_252 = arith.constant 0 : index
    %765 = vector.load %arg11[%c16_251, %c0_252] : memref<32x32xf32, #tpu.memory_space<vmem>>, vector<2x32xf32>
    tpu.vector_store %arg11[%c16_251, %c0_252], %764 {strides = array<i32>} : memref<32x32xf32, #tpu.memory_space<vmem>>, vector<2x32xf32>,
    %766 = vector.extract_strided_slice %488 {offsets = [18, 0], sizes = [2, 32], strides = [1, 1]} : vector<32x32xf32> to vector<2x32xf32>
    %cst_253 = arith.constant dense<0.000000e+00> : vector<2x32xf32>
    %767 = tpu.matmul %764, %504, %cst_253 {dimension_numbers = #tpu.dot_dimension_numbers<[1], [0], [0], [1], [0, 0, 1, 1], [], []>} : vector<2x32xf32>, vector<32x32xf32>, vector<2x32xf32> -> vector<2x32xf32>
    %768 = arith.addf %766, %767 : vector<2x32xf32>
    %769 = arith.negf %768 : vector<2x32xf32>
    %770 = math.exp %769 : vector<2x32xf32>
    %cst_254 = arith.constant 1.000000e+00 : f32
    %771 = vector.broadcast %cst_254 : f32 to vector<2x32xf32>
    %772 = arith.addf %771, %770 : vector<2x32xf32>
    %773 = arith.divf %771, %772 : vector<2x32xf32>
    %774 = vector.extract_strided_slice %495 {offsets = [18, 0], sizes = [2, 32], strides = [1, 1]} : vector<32x32xf32> to vector<2x32xf32>
    %cst_255 = arith.constant dense<0.000000e+00> : vector<2x32xf32>
    %775 = tpu.matmul %764, %506, %cst_255 {dimension_numbers = #tpu.dot_dimension_numbers<[1], [0], [0], [1], [0, 0, 1, 1], [], []>} : vector<2x32xf32>, vector<32x32xf32>, vector<2x32xf32> -> vector<2x32xf32>
    %776 = arith.addf %774, %775 : vector<2x32xf32>
    %777 = arith.negf %776 : vector<2x32xf32>
    %778 = math.exp %777 : vector<2x32xf32>
    %cst_256 = arith.constant 1.000000e+00 : f32
    %779 = vector.broadcast %cst_256 : f32 to vector<2x32xf32>
    %780 = arith.addf %779, %778 : vector<2x32xf32>
    %781 = arith.divf %779, %780 : vector<2x32xf32>
    %782 = vector.extract_strided_slice %502 {offsets = [18, 0], sizes = [2, 32], strides = [1, 1]} : vector<32x32xf32> to vector<2x32xf32>
    %cst_257 = arith.constant dense<0.000000e+00> : vector<2x32xf32>
    %783 = tpu.matmul %764, %508, %cst_257 {dimension_numbers = #tpu.dot_dimension_numbers<[1], [0], [0], [1], [0, 0, 1, 1], [], []>} : vector<2x32xf32>, vector<32x32xf32>, vector<2x32xf32> -> vector<2x32xf32>
    %784 = arith.addf %783, %512 : vector<2x32xf32>
    %785 = arith.mulf %773, %784 : vector<2x32xf32>
    %786 = arith.addf %782, %785 : vector<2x32xf32>
    %787 = math.tanh %786 : vector<2x32xf32>
    %cst_258 = arith.constant 1.000000e+00 : f32
    %788 = vector.broadcast %cst_258 : f32 to vector<2x32xf32>
    %789 = arith.subf %788, %781 : vector<2x32xf32>
    %790 = arith.mulf %789, %787 : vector<2x32xf32>
    %791 = arith.mulf %781, %764 : vector<2x32xf32>
    %792 = arith.addf %790, %791 : vector<2x32xf32>
    %c18_259 = arith.constant 18 : index
    %c0_260 = arith.constant 0 : index
    %793 = vector.load %arg11[%c18_259, %c0_260] : memref<32x32xf32, #tpu.memory_space<vmem>>, vector<2x32xf32>
    tpu.vector_store %arg11[%c18_259, %c0_260], %792 {strides = array<i32>} : memref<32x32xf32, #tpu.memory_space<vmem>>, vector<2x32xf32>,
    %794 = vector.extract_strided_slice %488 {offsets = [20, 0], sizes = [2, 32], strides = [1, 1]} : vector<32x32xf32> to vector<2x32xf32>
    %cst_261 = arith.constant dense<0.000000e+00> : vector<2x32xf32>
    %795 = tpu.matmul %792, %504, %cst_261 {dimension_numbers = #tpu.dot_dimension_numbers<[1], [0], [0], [1], [0, 0, 1, 1], [], []>} : vector<2x32xf32>, vector<32x32xf32>, vector<2x32xf32> -> vector<2x32xf32>
    %796 = arith.addf %794, %795 : vector<2x32xf32>
    %797 = arith.negf %796 : vector<2x32xf32>
    %798 = math.exp %797 : vector<2x32xf32>
    %cst_262 = arith.constant 1.000000e+00 : f32
    %799 = vector.broadcast %cst_262 : f32 to vector<2x32xf32>
    %800 = arith.addf %799, %798 : vector<2x32xf32>
    %801 = arith.divf %799, %800 : vector<2x32xf32>
    %802 = vector.extract_strided_slice %495 {offsets = [20, 0], sizes = [2, 32], strides = [1, 1]} : vector<32x32xf32> to vector<2x32xf32>
    %cst_263 = arith.constant dense<0.000000e+00> : vector<2x32xf32>
    %803 = tpu.matmul %792, %506, %cst_263 {dimension_numbers = #tpu.dot_dimension_numbers<[1], [0], [0], [1], [0, 0, 1, 1], [], []>} : vector<2x32xf32>, vector<32x32xf32>, vector<2x32xf32> -> vector<2x32xf32>
    %804 = arith.addf %802, %803 : vector<2x32xf32>
    %805 = arith.negf %804 : vector<2x32xf32>
    %806 = math.exp %805 : vector<2x32xf32>
    %cst_264 = arith.constant 1.000000e+00 : f32
    %807 = vector.broadcast %cst_264 : f32 to vector<2x32xf32>
    %808 = arith.addf %807, %806 : vector<2x32xf32>
    %809 = arith.divf %807, %808 : vector<2x32xf32>
    %810 = vector.extract_strided_slice %502 {offsets = [20, 0], sizes = [2, 32], strides = [1, 1]} : vector<32x32xf32> to vector<2x32xf32>
    %cst_265 = arith.constant dense<0.000000e+00> : vector<2x32xf32>
    %811 = tpu.matmul %792, %508, %cst_265 {dimension_numbers = #tpu.dot_dimension_numbers<[1], [0], [0], [1], [0, 0, 1, 1], [], []>} : vector<2x32xf32>, vector<32x32xf32>, vector<2x32xf32> -> vector<2x32xf32>
    %812 = arith.addf %811, %512 : vector<2x32xf32>
    %813 = arith.mulf %801, %812 : vector<2x32xf32>
    %814 = arith.addf %810, %813 : vector<2x32xf32>
    %815 = math.tanh %814 : vector<2x32xf32>
    %cst_266 = arith.constant 1.000000e+00 : f32
    %816 = vector.broadcast %cst_266 : f32 to vector<2x32xf32>
    %817 = arith.subf %816, %809 : vector<2x32xf32>
    %818 = arith.mulf %817, %815 : vector<2x32xf32>
    %819 = arith.mulf %809, %792 : vector<2x32xf32>
    %820 = arith.addf %818, %819 : vector<2x32xf32>
    %c20_267 = arith.constant 20 : index
    %c0_268 = arith.constant 0 : index
    %821 = vector.load %arg11[%c20_267, %c0_268] : memref<32x32xf32, #tpu.memory_space<vmem>>, vector<2x32xf32>
    tpu.vector_store %arg11[%c20_267, %c0_268], %820 {strides = array<i32>} : memref<32x32xf32, #tpu.memory_space<vmem>>, vector<2x32xf32>,
    %822 = vector.extract_strided_slice %488 {offsets = [22, 0], sizes = [2, 32], strides = [1, 1]} : vector<32x32xf32> to vector<2x32xf32>
    %cst_269 = arith.constant dense<0.000000e+00> : vector<2x32xf32>
    %823 = tpu.matmul %820, %504, %cst_269 {dimension_numbers = #tpu.dot_dimension_numbers<[1], [0], [0], [1], [0, 0, 1, 1], [], []>} : vector<2x32xf32>, vector<32x32xf32>, vector<2x32xf32> -> vector<2x32xf32>
    %824 = arith.addf %822, %823 : vector<2x32xf32>
    %825 = arith.negf %824 : vector<2x32xf32>
    %826 = math.exp %825 : vector<2x32xf32>
    %cst_270 = arith.constant 1.000000e+00 : f32
    %827 = vector.broadcast %cst_270 : f32 to vector<2x32xf32>
    %828 = arith.addf %827, %826 : vector<2x32xf32>
    %829 = arith.divf %827, %828 : vector<2x32xf32>
    %830 = vector.extract_strided_slice %495 {offsets = [22, 0], sizes = [2, 32], strides = [1, 1]} : vector<32x32xf32> to vector<2x32xf32>
    %cst_271 = arith.constant dense<0.000000e+00> : vector<2x32xf32>
    %831 = tpu.matmul %820, %506, %cst_271 {dimension_numbers = #tpu.dot_dimension_numbers<[1], [0], [0], [1], [0, 0, 1, 1], [], []>} : vector<2x32xf32>, vector<32x32xf32>, vector<2x32xf32> -> vector<2x32xf32>
    %832 = arith.addf %830, %831 : vector<2x32xf32>
    %833 = arith.negf %832 : vector<2x32xf32>
    %834 = math.exp %833 : vector<2x32xf32>
    %cst_272 = arith.constant 1.000000e+00 : f32
    %835 = vector.broadcast %cst_272 : f32 to vector<2x32xf32>
    %836 = arith.addf %835, %834 : vector<2x32xf32>
    %837 = arith.divf %835, %836 : vector<2x32xf32>
    %838 = vector.extract_strided_slice %502 {offsets = [22, 0], sizes = [2, 32], strides = [1, 1]} : vector<32x32xf32> to vector<2x32xf32>
    %cst_273 = arith.constant dense<0.000000e+00> : vector<2x32xf32>
    %839 = tpu.matmul %820, %508, %cst_273 {dimension_numbers = #tpu.dot_dimension_numbers<[1], [0], [0], [1], [0, 0, 1, 1], [], []>} : vector<2x32xf32>, vector<32x32xf32>, vector<2x32xf32> -> vector<2x32xf32>
    %840 = arith.addf %839, %512 : vector<2x32xf32>
    %841 = arith.mulf %829, %840 : vector<2x32xf32>
    %842 = arith.addf %838, %841 : vector<2x32xf32>
    %843 = math.tanh %842 : vector<2x32xf32>
    %cst_274 = arith.constant 1.000000e+00 : f32
    %844 = vector.broadcast %cst_274 : f32 to vector<2x32xf32>
    %845 = arith.subf %844, %837 : vector<2x32xf32>
    %846 = arith.mulf %845, %843 : vector<2x32xf32>
    %847 = arith.mulf %837, %820 : vector<2x32xf32>
    %848 = arith.addf %846, %847 : vector<2x32xf32>
    %c22_275 = arith.constant 22 : index
    %c0_276 = arith.constant 0 : index
    %849 = vector.load %arg11[%c22_275, %c0_276] : memref<32x32xf32, #tpu.memory_space<vmem>>, vector<2x32xf32>
    tpu.vector_store %arg11[%c22_275, %c0_276], %848 {strides = array<i32>} : memref<32x32xf32, #tpu.memory_space<vmem>>, vector<2x32xf32>,
    %850 = vector.extract_strided_slice %488 {offsets = [24, 0], sizes = [2, 32], strides = [1, 1]} : vector<32x32xf32> to vector<2x32xf32>
    %cst_277 = arith.constant dense<0.000000e+00> : vector<2x32xf32>
    %851 = tpu.matmul %848, %504, %cst_277 {dimension_numbers = #tpu.dot_dimension_numbers<[1], [0], [0], [1], [0, 0, 1, 1], [], []>} : vector<2x32xf32>, vector<32x32xf32>, vector<2x32xf32> -> vector<2x32xf32>
    %852 = arith.addf %850, %851 : vector<2x32xf32>
    %853 = arith.negf %852 : vector<2x32xf32>
    %854 = math.exp %853 : vector<2x32xf32>
    %cst_278 = arith.constant 1.000000e+00 : f32
    %855 = vector.broadcast %cst_278 : f32 to vector<2x32xf32>
    %856 = arith.addf %855, %854 : vector<2x32xf32>
    %857 = arith.divf %855, %856 : vector<2x32xf32>
    %858 = vector.extract_strided_slice %495 {offsets = [24, 0], sizes = [2, 32], strides = [1, 1]} : vector<32x32xf32> to vector<2x32xf32>
    %cst_279 = arith.constant dense<0.000000e+00> : vector<2x32xf32>
    %859 = tpu.matmul %848, %506, %cst_279 {dimension_numbers = #tpu.dot_dimension_numbers<[1], [0], [0], [1], [0, 0, 1, 1], [], []>} : vector<2x32xf32>, vector<32x32xf32>, vector<2x32xf32> -> vector<2x32xf32>
    %860 = arith.addf %858, %859 : vector<2x32xf32>
    %861 = arith.negf %860 : vector<2x32xf32>
    %862 = math.exp %861 : vector<2x32xf32>
    %cst_280 = arith.constant 1.000000e+00 : f32
    %863 = vector.broadcast %cst_280 : f32 to vector<2x32xf32>
    %864 = arith.addf %863, %862 : vector<2x32xf32>
    %865 = arith.divf %863, %864 : vector<2x32xf32>
    %866 = vector.extract_strided_slice %502 {offsets = [24, 0], sizes = [2, 32], strides = [1, 1]} : vector<32x32xf32> to vector<2x32xf32>
    %cst_281 = arith.constant dense<0.000000e+00> : vector<2x32xf32>
    %867 = tpu.matmul %848, %508, %cst_281 {dimension_numbers = #tpu.dot_dimension_numbers<[1], [0], [0], [1], [0, 0, 1, 1], [], []>} : vector<2x32xf32>, vector<32x32xf32>, vector<2x32xf32> -> vector<2x32xf32>
    %868 = arith.addf %867, %512 : vector<2x32xf32>
    %869 = arith.mulf %857, %868 : vector<2x32xf32>
    %870 = arith.addf %866, %869 : vector<2x32xf32>
    %871 = math.tanh %870 : vector<2x32xf32>
    %cst_282 = arith.constant 1.000000e+00 : f32
    %872 = vector.broadcast %cst_282 : f32 to vector<2x32xf32>
    %873 = arith.subf %872, %865 : vector<2x32xf32>
    %874 = arith.mulf %873, %871 : vector<2x32xf32>
    %875 = arith.mulf %865, %848 : vector<2x32xf32>
    %876 = arith.addf %874, %875 : vector<2x32xf32>
    %c24_283 = arith.constant 24 : index
    %c0_284 = arith.constant 0 : index
    %877 = vector.load %arg11[%c24_283, %c0_284] : memref<32x32xf32, #tpu.memory_space<vmem>>, vector<2x32xf32>
    tpu.vector_store %arg11[%c24_283, %c0_284], %876 {strides = array<i32>} : memref<32x32xf32, #tpu.memory_space<vmem>>, vector<2x32xf32>,
    %878 = vector.extract_strided_slice %488 {offsets = [26, 0], sizes = [2, 32], strides = [1, 1]} : vector<32x32xf32> to vector<2x32xf32>
    %cst_285 = arith.constant dense<0.000000e+00> : vector<2x32xf32>
    %879 = tpu.matmul %876, %504, %cst_285 {dimension_numbers = #tpu.dot_dimension_numbers<[1], [0], [0], [1], [0, 0, 1, 1], [], []>} : vector<2x32xf32>, vector<32x32xf32>, vector<2x32xf32> -> vector<2x32xf32>
    %880 = arith.addf %878, %879 : vector<2x32xf32>
    %881 = arith.negf %880 : vector<2x32xf32>
    %882 = math.exp %881 : vector<2x32xf32>
    %cst_286 = arith.constant 1.000000e+00 : f32
    %883 = vector.broadcast %cst_286 : f32 to vector<2x32xf32>
    %884 = arith.addf %883, %882 : vector<2x32xf32>
    %885 = arith.divf %883, %884 : vector<2x32xf32>
    %886 = vector.extract_strided_slice %495 {offsets = [26, 0], sizes = [2, 32], strides = [1, 1]} : vector<32x32xf32> to vector<2x32xf32>
    %cst_287 = arith.constant dense<0.000000e+00> : vector<2x32xf32>
    %887 = tpu.matmul %876, %506, %cst_287 {dimension_numbers = #tpu.dot_dimension_numbers<[1], [0], [0], [1], [0, 0, 1, 1], [], []>} : vector<2x32xf32>, vector<32x32xf32>, vector<2x32xf32> -> vector<2x32xf32>
    %888 = arith.addf %886, %887 : vector<2x32xf32>
    %889 = arith.negf %888 : vector<2x32xf32>
    %890 = math.exp %889 : vector<2x32xf32>
    %cst_288 = arith.constant 1.000000e+00 : f32
    %891 = vector.broadcast %cst_288 : f32 to vector<2x32xf32>
    %892 = arith.addf %891, %890 : vector<2x32xf32>
    %893 = arith.divf %891, %892 : vector<2x32xf32>
    %894 = vector.extract_strided_slice %502 {offsets = [26, 0], sizes = [2, 32], strides = [1, 1]} : vector<32x32xf32> to vector<2x32xf32>
    %cst_289 = arith.constant dense<0.000000e+00> : vector<2x32xf32>
    %895 = tpu.matmul %876, %508, %cst_289 {dimension_numbers = #tpu.dot_dimension_numbers<[1], [0], [0], [1], [0, 0, 1, 1], [], []>} : vector<2x32xf32>, vector<32x32xf32>, vector<2x32xf32> -> vector<2x32xf32>
    %896 = arith.addf %895, %512 : vector<2x32xf32>
    %897 = arith.mulf %885, %896 : vector<2x32xf32>
    %898 = arith.addf %894, %897 : vector<2x32xf32>
    %899 = math.tanh %898 : vector<2x32xf32>
    %cst_290 = arith.constant 1.000000e+00 : f32
    %900 = vector.broadcast %cst_290 : f32 to vector<2x32xf32>
    %901 = arith.subf %900, %893 : vector<2x32xf32>
    %902 = arith.mulf %901, %899 : vector<2x32xf32>
    %903 = arith.mulf %893, %876 : vector<2x32xf32>
    %904 = arith.addf %902, %903 : vector<2x32xf32>
    %c26_291 = arith.constant 26 : index
    %c0_292 = arith.constant 0 : index
    %905 = vector.load %arg11[%c26_291, %c0_292] : memref<32x32xf32, #tpu.memory_space<vmem>>, vector<2x32xf32>
    tpu.vector_store %arg11[%c26_291, %c0_292], %904 {strides = array<i32>} : memref<32x32xf32, #tpu.memory_space<vmem>>, vector<2x32xf32>,
    %906 = vector.extract_strided_slice %488 {offsets = [28, 0], sizes = [2, 32], strides = [1, 1]} : vector<32x32xf32> to vector<2x32xf32>
    %cst_293 = arith.constant dense<0.000000e+00> : vector<2x32xf32>
    %907 = tpu.matmul %904, %504, %cst_293 {dimension_numbers = #tpu.dot_dimension_numbers<[1], [0], [0], [1], [0, 0, 1, 1], [], []>} : vector<2x32xf32>, vector<32x32xf32>, vector<2x32xf32> -> vector<2x32xf32>
    %908 = arith.addf %906, %907 : vector<2x32xf32>
    %909 = arith.negf %908 : vector<2x32xf32>
    %910 = math.exp %909 : vector<2x32xf32>
    %cst_294 = arith.constant 1.000000e+00 : f32
    %911 = vector.broadcast %cst_294 : f32 to vector<2x32xf32>
    %912 = arith.addf %911, %910 : vector<2x32xf32>
    %913 = arith.divf %911, %912 : vector<2x32xf32>
    %914 = vector.extract_strided_slice %495 {offsets = [28, 0], sizes = [2, 32], strides = [1, 1]} : vector<32x32xf32> to vector<2x32xf32>
    %cst_295 = arith.constant dense<0.000000e+00> : vector<2x32xf32>
    %915 = tpu.matmul %904, %506, %cst_295 {dimension_numbers = #tpu.dot_dimension_numbers<[1], [0], [0], [1], [0, 0, 1, 1], [], []>} : vector<2x32xf32>, vector<32x32xf32>, vector<2x32xf32> -> vector<2x32xf32>
    %916 = arith.addf %914, %915 : vector<2x32xf32>
    %917 = arith.negf %916 : vector<2x32xf32>
    %918 = math.exp %917 : vector<2x32xf32>
    %cst_296 = arith.constant 1.000000e+00 : f32
    %919 = vector.broadcast %cst_296 : f32 to vector<2x32xf32>
    %920 = arith.addf %919, %918 : vector<2x32xf32>
    %921 = arith.divf %919, %920 : vector<2x32xf32>
    %922 = vector.extract_strided_slice %502 {offsets = [28, 0], sizes = [2, 32], strides = [1, 1]} : vector<32x32xf32> to vector<2x32xf32>
    %cst_297 = arith.constant dense<0.000000e+00> : vector<2x32xf32>
    %923 = tpu.matmul %904, %508, %cst_297 {dimension_numbers = #tpu.dot_dimension_numbers<[1], [0], [0], [1], [0, 0, 1, 1], [], []>} : vector<2x32xf32>, vector<32x32xf32>, vector<2x32xf32> -> vector<2x32xf32>
    %924 = arith.addf %923, %512 : vector<2x32xf32>
    %925 = arith.mulf %913, %924 : vector<2x32xf32>
    %926 = arith.addf %922, %925 : vector<2x32xf32>
    %927 = math.tanh %926 : vector<2x32xf32>
    %cst_298 = arith.constant 1.000000e+00 : f32
    %928 = vector.broadcast %cst_298 : f32 to vector<2x32xf32>
    %929 = arith.subf %928, %921 : vector<2x32xf32>
    %930 = arith.mulf %929, %927 : vector<2x32xf32>
    %931 = arith.mulf %921, %904 : vector<2x32xf32>
    %932 = arith.addf %930, %931 : vector<2x32xf32>
    %c28_299 = arith.constant 28 : index
    %c0_300 = arith.constant 0 : index
    %933 = vector.load %arg11[%c28_299, %c0_300] : memref<32x32xf32, #tpu.memory_space<vmem>>, vector<2x32xf32>
    tpu.vector_store %arg11[%c28_299, %c0_300], %932 {strides = array<i32>} : memref<32x32xf32, #tpu.memory_space<vmem>>, vector<2x32xf32>,
    %934 = vector.extract_strided_slice %488 {offsets = [30, 0], sizes = [2, 32], strides = [1, 1]} : vector<32x32xf32> to vector<2x32xf32>
    %cst_301 = arith.constant dense<0.000000e+00> : vector<2x32xf32>
    %935 = tpu.matmul %932, %504, %cst_301 {dimension_numbers = #tpu.dot_dimension_numbers<[1], [0], [0], [1], [0, 0, 1, 1], [], []>} : vector<2x32xf32>, vector<32x32xf32>, vector<2x32xf32> -> vector<2x32xf32>
    %936 = arith.addf %934, %935 : vector<2x32xf32>
    %937 = arith.negf %936 : vector<2x32xf32>
    %938 = math.exp %937 : vector<2x32xf32>
    %cst_302 = arith.constant 1.000000e+00 : f32
    %939 = vector.broadcast %cst_302 : f32 to vector<2x32xf32>
    %940 = arith.addf %939, %938 : vector<2x32xf32>
    %941 = arith.divf %939, %940 : vector<2x32xf32>
    %942 = vector.extract_strided_slice %495 {offsets = [30, 0], sizes = [2, 32], strides = [1, 1]} : vector<32x32xf32> to vector<2x32xf32>
    %cst_303 = arith.constant dense<0.000000e+00> : vector<2x32xf32>
    %943 = tpu.matmul %932, %506, %cst_303 {dimension_numbers = #tpu.dot_dimension_numbers<[1], [0], [0], [1], [0, 0, 1, 1], [], []>} : vector<2x32xf32>, vector<32x32xf32>, vector<2x32xf32> -> vector<2x32xf32>
    %944 = arith.addf %942, %943 : vector<2x32xf32>
    %945 = arith.negf %944 : vector<2x32xf32>
    %946 = math.exp %945 : vector<2x32xf32>
    %cst_304 = arith.constant 1.000000e+00 : f32
    %947 = vector.broadcast %cst_304 : f32 to vector<2x32xf32>
    %948 = arith.addf %947, %946 : vector<2x32xf32>
    %949 = arith.divf %947, %948 : vector<2x32xf32>
    %950 = vector.extract_strided_slice %502 {offsets = [30, 0], sizes = [2, 32], strides = [1, 1]} : vector<32x32xf32> to vector<2x32xf32>
    %cst_305 = arith.constant dense<0.000000e+00> : vector<2x32xf32>
    %951 = tpu.matmul %932, %508, %cst_305 {dimension_numbers = #tpu.dot_dimension_numbers<[1], [0], [0], [1], [0, 0, 1, 1], [], []>} : vector<2x32xf32>, vector<32x32xf32>, vector<2x32xf32> -> vector<2x32xf32>
    %952 = arith.addf %951, %512 : vector<2x32xf32>
    %953 = arith.mulf %941, %952 : vector<2x32xf32>
    %954 = arith.addf %950, %953 : vector<2x32xf32>
    %955 = math.tanh %954 : vector<2x32xf32>
    %cst_306 = arith.constant 1.000000e+00 : f32
    %956 = vector.broadcast %cst_306 : f32 to vector<2x32xf32>
    %957 = arith.subf %956, %949 : vector<2x32xf32>
    %958 = arith.mulf %957, %955 : vector<2x32xf32>
    %959 = arith.mulf %949, %932 : vector<2x32xf32>
    %960 = arith.addf %958, %959 : vector<2x32xf32>
    %c30_307 = arith.constant 30 : index
    %c0_308 = arith.constant 0 : index
    %961 = vector.load %arg11[%c30_307, %c0_308] : memref<32x32xf32, #tpu.memory_space<vmem>>, vector<2x32xf32>
    tpu.vector_store %arg11[%c30_307, %c0_308], %960 {strides = array<i32>} : memref<32x32xf32, #tpu.memory_space<vmem>>, vector<2x32xf32>,
    %c0_309 = arith.constant 0 : index
    %c0_310 = arith.constant 0 : index
    %962 = vector.load %arg11[%c0_309, %c0_310] : memref<32x32xf32, #tpu.memory_space<vmem>>, vector<32x32xf32>
    %963 = vector.extract_strided_slice %962 {offsets = [24, 0], sizes = [8, 32], strides = [1, 1]} : vector<32x32xf32> to vector<8x32xf32>
    %c0_311 = arith.constant 0 : index
    %c0_312 = arith.constant 0 : index
    %964 = vector.load %arg8[%c0_311, %c0_312] : memref<32x4xf32, #tpu.memory_space<vmem>>, vector<32x4xf32>
    %cst_313 = arith.constant dense<0.000000e+00> : vector<8x4xf32>
    %965 = tpu.matmul %963, %964, %cst_313 {dimension_numbers = #tpu.dot_dimension_numbers<[1], [0], [0], [1], [0, 0, 1, 1], [], []>} : vector<8x32xf32>, vector<32x4xf32>, vector<8x4xf32> -> vector<8x4xf32>
    %c0_314 = arith.constant 0 : index
    %c0_315 = arith.constant 0 : index
    %966 = vector.load %arg9[%c0_314, %c0_315] : memref<1x4xf32, #tpu.memory_space<vmem>>, vector<1x4xf32>
    %967 = vector.broadcast %966 : vector<1x4xf32> to vector<8x4xf32>
    %968 = arith.addf %965, %967 : vector<8x4xf32>
    %c0_316 = arith.constant 0 : index
    %c0_317 = arith.constant 0 : index
    %969 = vector.load %arg10[%c0_316, %c0_317] : memref<8x4xf32, #tpu.memory_space<vmem>>, vector<8x4xf32>
    tpu.vector_store %arg10[%c0_316, %c0_317], %968 {strides = array<i32>} : memref<8x4xf32, #tpu.memory_space<vmem>>, vector<8x4xf32>,
    return
  }
  func.func @transform_0(%arg0: i32) -> (i32, i32) {
    %c0_i32 = arith.constant 0 : i32
    %c0_i32_0 = arith.constant 0 : i32
    %c0_i32_1 = arith.constant 0 : i32
    return %c0_i32, %c0_i32_0 : i32, i32
  }
  func.func @transform_1(%arg0: i32) -> (i32, i32, i32) {
    %c0_i32 = arith.constant 0 : i32
    %c0_i32_0 = arith.constant 0 : i32
    %c0_i32_1 = arith.constant 0 : i32
    %c0_i32_2 = arith.constant 0 : i32
    return %c0_i32, %c0_i32_0, %c0_i32_1 : i32, i32, i32
  }
  func.func @transform_2(%arg0: i32) -> (i32, i32, i32) {
    %c0_i32 = arith.constant 0 : i32
    %c0_i32_0 = arith.constant 0 : i32
    %c0_i32_1 = arith.constant 0 : i32
    %c0_i32_2 = arith.constant 0 : i32
    return %c0_i32, %c0_i32_0, %c0_i32_1 : i32, i32, i32
  }
  func.func @transform_3(%arg0: i32) -> (i32, i32, i32) {
    %c0_i32 = arith.constant 0 : i32
    %c0_i32_0 = arith.constant 0 : i32
    %c0_i32_1 = arith.constant 0 : i32
    %c0_i32_2 = arith.constant 0 : i32
    return %c0_i32, %c0_i32_0, %c0_i32_1 : i32, i32, i32
  }
  func.func @transform_4(%arg0: i32) -> (i32, i32, i32) {
    %c0_i32 = arith.constant 0 : i32
    %c0_i32_0 = arith.constant 0 : i32
    %c0_i32_1 = arith.constant 0 : i32
    %c0_i32_2 = arith.constant 0 : i32
    return %c0_i32, %c0_i32_0, %c0_i32_1 : i32, i32, i32
  }
  func.func @transform_5(%arg0: i32) -> (i32, i32, i32) {
    %c0_i32 = arith.constant 0 : i32
    %c0_i32_0 = arith.constant 0 : i32
    %c0_i32_1 = arith.constant 0 : i32
    %c0_i32_2 = arith.constant 0 : i32
    return %c0_i32, %c0_i32_0, %c0_i32_1 : i32, i32, i32
  }
  func.func @transform_6(%arg0: i32) -> (i32, i32, i32) {
    %c0_i32 = arith.constant 0 : i32
    %c0_i32_0 = arith.constant 0 : i32
    %c0_i32_1 = arith.constant 0 : i32
    %c0_i32_2 = arith.constant 0 : i32
    return %c0_i32, %c0_i32_0, %c0_i32_1 : i32, i32, i32
  }
  func.func @transform_7(%arg0: i32) -> (i32, i32) {
    %c0_i32 = arith.constant 0 : i32
    %c0_i32_0 = arith.constant 0 : i32
    %c0_i32_1 = arith.constant 0 : i32
    return %c0_i32, %c0_i32_0 : i32, i32
  }
  func.func @transform_8(%arg0: i32) -> (i32, i32) {
    %c0_i32 = arith.constant 0 : i32
    %c0_i32_0 = arith.constant 0 : i32
    %c0_i32_1 = arith.constant 0 : i32
    return %c0_i32, %c0_i32_0 : i32, i32
  }
  func.func @transform_9(%arg0: i32) -> (i32, i32) {
    %c0_i32 = arith.constant 0 : i32
    %c0_i32_0 = arith.constant 0 : i32
    %c0_i32_1 = arith.constant 0 : i32
    return %c0_i32, %c0_i32_0 : i32, i32
  }
}

</mosaic_0001>

<llo_original>
// kernel: tpu_custom_call.1
$region0: #{tpu_custom_call.1}
  #allocation0 [shape = 'u32[]', space=smem, size = 0x4, offset = 0x4, fixed_abs, tag = 'smem constant byte address 0x4 - core index']
  #allocation1 [shape = 'u32[144,128]{1,0:T(1,128)}', space=vmem, size = 0x12000, scoped, tag = 'internal scratch']
  #allocation2 [shape = 'f32[32,32]{1,0:T(8,128)}', space=vmem, size = 0x4000, scoped, tag = 'scratch operand']
  %s0 = inlined_call_operand.vmem [shape: f32[32,8], index: 0, kind: input, shape index: {}]
  %s1 = inlined_call_operand.vmem [shape: f32[3,8,32], index: 1, kind: input, shape index: {}]
  %s2 = inlined_call_operand.hbm [shape: f32[3,32,32], index: 2, kind: input, shape index: {}]
  %s3 = inlined_call_operand.vmem [shape: f32[4,1,32], index: 3, kind: input, shape index: {}]
  %s4 = inlined_call_operand.hbm [shape: f32[3,32,32], index: 4, kind: input, shape index: {}]
  %s5 = inlined_call_operand.hbm [shape: f32[3,32,32], index: 5, kind: input, shape index: {}]
  %s6 = inlined_call_operand.vmem [shape: f32[4,1,32], index: 6, kind: input, shape index: {}]
  %s7 = inlined_call_operand.vmem [shape: f32[32,4], index: 7, kind: input, shape index: {}]
  %s8 = inlined_call_operand.vmem [shape: f32[1,4], index: 8, kind: input, shape index: {}]
  %s9 = inlined_call_operand.vmem [shape: f32[8,4], index: 9, kind: output, shape index: {}]
  %s10 = sld [smem:[#allocation0]]
  $region58: #{tpu_custom_call.1} parent=0
    _
  %s12 = ssub.s32 1, %s10
  %s13 = scalar_select 0, %s12, %s10
  $region1: #{tpu_custom_call.1} parent=0
    #allocation3 [shape = 'u8[49152]{0}', space=vmem, size = 0xc000, scoped, tag = 'input window, operand 2, single buffered']
    #allocation4 [shape = 's32[1]{0}', space=sflag, size = 0x4, scoped, tag = 'scoped memory for tpu_custom_call.1']
    #allocation5 [shape = 'u8[49152]{0}', space=vmem, size = 0xc000, scoped, tag = 'input window, operand 4, single buffered']
    #allocation6 [shape = 's32[1]{0}', space=sflag, size = 0x4, scoped, tag = 'scoped memory for tpu_custom_call.1']
    #allocation7 [shape = 'u8[49152]{0}', space=vmem, size = 0xc000, scoped, tag = 'input window, operand 5, single buffered']
    %14 = vsyncpa [#allocation4], 0
    %15 = vsyncpa [#allocation6], 0
    // Predicated region
    $region2: #{tpu_custom_call.1} parent=1 // pred_check
      _
    $region3: #{tpu_custom_call.1} parent=1 // pred_check_branch
      %17 = sbr.rel (0) target = $region5
    $region4: #{tpu_custom_call.1} parent=1 // pred_region
      _
    $region5: #{tpu_custom_call.1} parent=1 // pred_fallthru
      _
    // Predicated region
    $region6: #{tpu_custom_call.1} parent=1 // pred_check
      _
    $region7: #{tpu_custom_call.1} parent=1 // pred_check_branch
      %19 = sbr.rel (0) target = $region9
    $region8: #{tpu_custom_call.1} parent=1 // pred_region
      _
    $region9: #{tpu_custom_call.1} parent=1 // pred_fallthru
      _
    // Predicated region
    $region10: #{tpu_custom_call.1} parent=1 // pred_check
      _
    $region11: #{tpu_custom_call.1} parent=1 // pred_check_branch
      %21 = sbr.rel (0) target = $region13
    $region12: #{tpu_custom_call.1} parent=1 // pred_region
      %s23 = ssub.s32 1536, 1536
      %24 = vsyncadd [#allocation4], %s23
      %s25 = sshll.u32 [#allocation3], 4
      %s26 = int_to_ptr.vmem [resolvable:$true] %s25
      %31 = dma.hbm_to_vmem [thread:$0]  %s2, 1536, %s26, [#allocation4], 128, 128, 8
    $region13: #{tpu_custom_call.1} parent=1 // pred_fallthru
      _
    // Predicated region
    $region14: #{tpu_custom_call.1} parent=1 // pred_check
      _
    $region15: #{tpu_custom_call.1} parent=1 // pred_check_branch
      %33 = sbr.rel (0) target = $region17
    $region16: #{tpu_custom_call.1} parent=1 // pred_region
      _
    $region17: #{tpu_custom_call.1} parent=1 // pred_fallthru
      _
    // Predicated region
    $region18: #{tpu_custom_call.1} parent=1 // pred_check
      _
    $region19: #{tpu_custom_call.1} parent=1 // pred_check_branch
      %35 = sbr.rel (0) target = $region21
    $region20: #{tpu_custom_call.1} parent=1 // pred_region
      %s37 = ssub.s32 1536, 1536
      %38 = vsyncadd [#allocation6], %s37
      %s39 = sshll.u32 [#allocation5], 4
      %s40 = int_to_ptr.vmem [resolvable:$true] %s39
      %45 = dma.hbm_to_vmem [thread:$0]  %s4, 1536, %s40, [#allocation6], 128, 128, 8
    $region21: #{tpu_custom_call.1} parent=1 // pred_fallthru
      _
    // Predicated region
    $region22: #{tpu_custom_call.1} parent=1 // pred_check
      _
    $region23: #{tpu_custom_call.1} parent=1 // pred_check_branch
      %47 = sbr.rel (0) target = $region25
    $region24: #{tpu_custom_call.1} parent=1 // pred_region
      %s49 = ssub.s32 1536, 1536
      %50 = vsyncadd [#allocation6], %s49
      %s51 = sshll.u32 [#allocation7], 4
      %s52 = int_to_ptr.vmem [resolvable:$true] %s51
      %57 = dma.hbm_to_vmem [thread:$0]  %s5, 1536, %s52, [#allocation6], 128, 128, 8
    $region25: #{tpu_custom_call.1} parent=1 // pred_fallthru
      _
    // Predicated region
    $region26: #{tpu_custom_call.1} parent=1 // pred_check
      _
    $region27: #{tpu_custom_call.1} parent=1 // pred_check_branch
      %59 = sbr.rel (0) target = $region29
    $region28: #{tpu_custom_call.1} parent=1 // pred_region
      _
    $region29: #{tpu_custom_call.1} parent=1 // pred_fallthru
      _
    // Predicated region
    $region30: #{tpu_custom_call.1} parent=1 // pred_check
      _
    $region31: #{tpu_custom_call.1} parent=1 // pred_check_branch
      %61 = sbr.rel (0) target = $region33
    $region32: #{tpu_custom_call.1} parent=1 // pred_region
      _
    $region33: #{tpu_custom_call.1} parent=1 // pred_fallthru
      _
    // Predicated region
    $region34: #{tpu_custom_call.1} parent=1 // pred_check
      _
    $region35: #{tpu_custom_call.1} parent=1 // pred_check_branch
      %63 = sbr.rel (0) target = $region37
    $region36: #{tpu_custom_call.1} parent=1 // pred_region
      _
    $region37: #{tpu_custom_call.1} parent=1 // pred_fallthru
      _
    // Predicated region
    $region38: #{tpu_custom_call.1} parent=1 // pred_check
      _
    $region39: #{tpu_custom_call.1} parent=1 // pred_check_branch
      %65 = sbr.rel (0) target = $region41
    $region40: #{tpu_custom_call.1} parent=1 // pred_region
      %66 = dma.done [#allocation4], 1536
    $region41: #{tpu_custom_call.1} parent=1 // pred_fallthru
      _
    // Predicated region
    $region42: #{tpu_custom_call.1} parent=1 // pred_check
      _
    $region43: #{tpu_custom_call.1} parent=1 // pred_check_branch
      %68 = sbr.rel (0) target = $region45
    $region44: #{tpu_custom_call.1} parent=1 // pred_region
      %69 = dma.done [#allocation6], 1536
    $region45: #{tpu_custom_call.1} parent=1 // pred_fallthru
      _
    // Predicated region
    $region46: #{tpu_custom_call.1} parent=1 // pred_check
      _
    $region47: #{tpu_custom_call.1} parent=1 // pred_check_branch
      %71 = sbr.rel (0) target = $region49
    $region48: #{tpu_custom_call.1} parent=1 // pred_region
      %72 = dma.done [#allocation6], 1536
    $region49: #{tpu_custom_call.1} parent=1 // pred_fallthru
      _
    %v73 = vld [vmem:[%s0] sm:$0xff]
    %v74 = vld [vmem:[%s0 + $0x8] sm:$0xff]
    %v75 = vld [vmem:[%s0 + $0x10] sm:$0xff]
    %v76 = vld [vmem:[%s0 + $0x18] sm:$0xff]
    %v77 = vld [vmem:[%s1] sm:$0xff]
    %v78 = vld [vmem:[%s3] sm:$0x1]
    %v80 = vlaneseq
    %v81 = vshrl.u32 %v80, 7
    %v82 = vsub.s32 0, %v81
    %v83 = vrot.slane %v78, %v82
    %vm85 = vcmask 64512
    %v87 = vsel %vm85, %v73, 0
    %v90 = vsel %vm85, %v74, 0
    %v93 = vsel %vm85, %v75, 0
    %v96 = vsel %vm85, %v76, 0
    %98 = vmatprep.subr.mxu0 0.0
    %99 = vmatpush1.msra.mxu0 %v77
    %100 = vmatprep.subr.mxu0 0.0
    %101 = vmatpush1.msra.mxu0 0.0
    %102 = vmatprep.subr.mxu0 0.0
    %103 = vmatpush1.msra.mxu0 0.0
    %104 = vmatprep.subr.mxu0 0.0
    %105 = vmatpush1.msra.mxu0 0.0
    %106 = vmatprep.subr.mxu0 0.0
    %107 = vmatpush1.msra.mxu0 0.0
    %108 = vmatprep.subr.mxu0 0.0
    %109 = vmatpush1.msra.mxu0 0.0
    %110 = vmatprep.subr.mxu0 0.0
    %111 = vmatpush1.msra.mxu0 0.0
    %112 = vmatprep.subr.mxu0 0.0
    %113 = vmatpush1.msra.mxu0 0.0
    %114 = vmatprep.subr.mxu0 0.0
    %115 = vmatpush1.msra.mxu0 0.0
    %116 = vmatprep.subr.mxu0 0.0
    %117 = vmatpush1.msra.mxu0 0.0
    %118 = vmatprep.subr.mxu0 0.0
    %119 = vmatpush1.msra.mxu0 0.0
    %120 = vmatprep.subr.mxu0 0.0
    %121 = vmatpush1.msra.mxu0 0.0
    %122 = vmatprep.subr.mxu0 0.0
    %123 = vmatpush1.msra.mxu0 0.0
    %124 = vmatprep.subr.mxu0 0.0
    %125 = vmatpush1.msra.mxu0 0.0
    %126 = vmatprep.subr.mxu0 0.0
    %127 = vmatpush1.msra.mxu0 0.0
    %128 = vmatprep.subr.mxu0 0.0
    %129 = vmatpush1.msra.mxu0 0.0
    %130 = vmatprep.subr.mxu0 0.0
    %131 = vmatpush1.msra.mxu0 0.0
    %132 = vmatprep.subr.mxu0 0.0
    %133 = vmatpush1.msra.mxu0 0.0
    %134 = vmatprep.subr.mxu0 0.0
    %135 = vmatpush1.msra.mxu0 0.0
    %136 = vmatprep.subr.mxu0 0.0
    %137 = vmatpush1.msra.mxu0 0.0
    %138 = vmatprep.subr.mxu0 0.0
    %139 = vmatpush1.msra.mxu0 0.0
    %140 = vmatprep.subr.mxu0 0.0
    %141 = vmatpush1.msra.mxu0 0.0
    %142 = vmatprep.subr.mxu0 0.0
    %143 = vmatpush1.msra.mxu0 0.0
    %144 = vmatprep.subr.mxu0 0.0
    %145 = vmatpush1.msra.mxu0 0.0
    %146 = vmatprep.subr.mxu0 0.0
    %147 = vmatpush1.msra.mxu0 0.0
    %148 = vmatprep.subr.mxu0 0.0
    %149 = vmatpush1.msra.mxu0 0.0
    %150 = vmatprep.subr.mxu0 0.0
    %151 = vmatpush1.msra.mxu0 0.0
    %152 = vmatprep.subr.mxu0 0.0
    %153 = vmatpush1.msra.mxu0 0.0
    %154 = vmatprep.subr.mxu0 0.0
    %155 = vmatpush1.msra.mxu0 0.0
    %156 = vmatprep.subr.mxu0 0.0
    %157 = vmatpush1.msra.mxu0 0.0
    %158 = vmatprep.subr.mxu0 0.0
    %159 = vmatpush1.msra.mxu0 0.0
    %160 = vmatprep.subr.mxu0 0.0
    %161 = vmatpush1.msra.mxu0 0.0
    %162 = vmatprep.mubr.f32.mxu0 0.0
    %163 = vmatmul.mubr.f32.gmra.mrb[0].mxu0 %v87
    %v164 = vpop.f32.mrb[0].mxu0
    %v165 = vadd.f32 %v83, %v164
    %v166 = vpop.f32.mrb[0].mxu0
    %167 = vmatprep.mubr.f32.mxu0 0.0
    %168 = vmatmul.mubr.f32.gmra.mrb[0].mxu0 %v90
    %v169 = vpop.f32.mrb[0].mxu0
    %v170 = vadd.f32 %v83, %v169
    %v171 = vpop.f32.mrb[0].mxu0
    %172 = vmatprep.mubr.f32.mxu0 0.0
    %173 = vmatmul.mubr.f32.gmra.mrb[0].mxu0 %v93
    %v174 = vpop.f32.mrb[0].mxu0
    %v175 = vadd.f32 %v83, %v174
    %v176 = vpop.f32.mrb[0].mxu0
    %177 = vmatprep.mubr.f32.mxu0 0.0
    %178 = vmatmul.mubr.f32.gmra.mrb[0].mxu0 %v96
    %v179 = vpop.f32.mrb[0].mxu0
    %v180 = vadd.f32 %v83, %v179
    %v181 = vpop.f32.mrb[0].mxu0
    %182 = vdwg.mxu0
    %s183 = scalar_lea.vmem %s1, 8
    %v184 = vld [vmem:[%s183] sm:$0xff]
    %s185 = scalar_lea.vmem %s3, 1
    %v186 = vld [vmem:[%s185] sm:$0x1]
    %v188 = vlaneseq
    %v189 = vshrl.u32 %v188, 7
    %v190 = vsub.s32 0, %v189
    %v191 = vrot.slane %v186, %v190
    %193 = vmatprep.subr.mxu0 0.0
    %194 = vmatpush1.msra.mxu0 %v184
    %195 = vmatprep.subr.mxu0 0.0
    %196 = vmatpush1.msra.mxu0 0.0
    %197 = vmatprep.subr.mxu0 0.0
    %198 = vmatpush1.msra.mxu0 0.0
    %199 = vmatprep.subr.mxu0 0.0
    %200 = vmatpush1.msra.mxu0 0.0
    %201 = vmatprep.subr.mxu0 0.0
    %202 = vmatpush1.msra.mxu0 0.0
    %203 = vmatprep.subr.mxu0 0.0
    %204 = vmatpush1.msra.mxu0 0.0
    %205 = vmatprep.subr.mxu0 0.0
    %206 = vmatpush1.msra.mxu0 0.0
    %207 = vmatprep.subr.mxu0 0.0
    %208 = vmatpush1.msra.mxu0 0.0
    %209 = vmatprep.subr.mxu0 0.0
    %210 = vmatpush1.msra.mxu0 0.0
    %211 = vmatprep.subr.mxu0 0.0
    %212 = vmatpush1.msra.mxu0 0.0
    %213 = vmatprep.subr.mxu0 0.0
    %214 = vmatpush1.msra.mxu0 0.0
    %215 = vmatprep.subr.mxu0 0.0
    %216 = vmatpush1.msra.mxu0 0.0
    %217 = vmatprep.subr.mxu0 0.0
    %218 = vmatpush1.msra.mxu0 0.0
    %219 = vmatprep.subr.mxu0 0.0
    %220 = vmatpush1.msra.mxu0 0.0
    %221 = vmatprep.subr.mxu0 0.0
    %222 = vmatpush1.msra.mxu0 0.0
    %223 = vmatprep.subr.mxu0 0.0
    %224 = vmatpush1.msra.mxu0 0.0
    %225 = vmatprep.subr.mxu0 0.0
    %226 = vmatpush1.msra.mxu0 0.0
    %227 = vmatprep.subr.mxu0 0.0
    %228 = vmatpush1.msra.mxu0 0.0
    %229 = vmatprep.subr.mxu0 0.0
    %230 = vmatpush1.msra.mxu0 0.0
    %231 = vmatprep.subr.mxu0 0.0
    %232 = vmatpush1.msra.mxu0 0.0
    %233 = vmatprep.subr.mxu0 0.0
    %234 = vmatpush1.msra.mxu0 0.0
    %235 = vmatprep.subr.mxu0 0.0
    %236 = vmatpush1.msra.mxu0 0.0
    %237 = vmatprep.subr.mxu0 0.0
    %238 = vmatpush1.msra.mxu0 0.0
    %239 = vmatprep.subr.mxu0 0.0
    %240 = vmatpush1.msra.mxu0 0.0
    %241 = vmatprep.subr.mxu0 0.0
    %242 = vmatpush1.msra.mxu0 0.0
    %243 = vmatprep.subr.mxu0 0.0
    %244 = vmatpush1.msra.mxu0 0.0
    %245 = vmatprep.subr.mxu0 0.0
    %246 = vmatpush1.msra.mxu0 0.0
    %247 = vmatprep.subr.mxu0 0.0
    %248 = vmatpush1.msra.mxu0 0.0
    %249 = vmatprep.subr.mxu0 0.0
    %250 = vmatpush1.msra.mxu0 0.0
    %251 = vmatprep.subr.mxu0 0.0
    %252 = vmatpush1.msra.mxu0 0.0
    %253 = vmatprep.subr.mxu0 0.0
    %254 = vmatpush1.msra.mxu0 0.0
    %255 = vmatprep.subr.mxu0 0.0
    %256 = vmatpush1.msra.mxu0 0.0
    %257 = vmatprep.mubr.f32.mxu0 0.0
    %258 = vmatmul.mubr.f32.gmra.mrb[0].mxu0 %v87
    %v259 = vpop.f32.mrb[0].mxu0
    %v260 = vadd.f32 %v191, %v259
    %v261 = vpop.f32.mrb[0].mxu0
    %262 = vmatprep.mubr.f32.mxu0 0.0
    %263 = vmatmul.mubr.f32.gmra.mrb[0].mxu0 %v90
    %v264 = vpop.f32.mrb[0].mxu0
    %v265 = vadd.f32 %v191, %v264
    %v266 = vpop.f32.mrb[0].mxu0
    %267 = vmatprep.mubr.f32.mxu0 0.0
    %268 = vmatmul.mubr.f32.gmra.mrb[0].mxu0 %v93
    %v269 = vpop.f32.mrb[0].mxu0
    %v270 = vadd.f32 %v191, %v269
    %v271 = vpop.f32.mrb[0].mxu0
    %272 = vmatprep.mubr.f32.mxu0 0.0
    %273 = vmatmul.mubr.f32.gmra.mrb[0].mxu0 %v96
    %v274 = vpop.f32.mrb[0].mxu0
    %v275 = vadd.f32 %v191, %v274
    %v276 = vpop.f32.mrb[0].mxu0
    %277 = vdwg.mxu0
    %s278 = scalar_lea.vmem %s1, 16
    %v279 = vld [vmem:[%s278] sm:$0xff]
    %s280 = scalar_lea.vmem %s3, 2
    %v281 = vld [vmem:[%s280] sm:$0x1]
    %v283 = vlaneseq
    %v284 = vshrl.u32 %v283, 7
    %v285 = vsub.s32 0, %v284
    %v286 = vrot.slane %v281, %v285
    %288 = vmatprep.subr.mxu0 0.0
    %289 = vmatpush1.msra.mxu0 %v279
    %290 = vmatprep.subr.mxu0 0.0
    %291 = vmatpush1.msra.mxu0 0.0
    %292 = vmatprep.subr.mxu0 0.0
    %293 = vmatpush1.msra.mxu0 0.0
    %294 = vmatprep.subr.mxu0 0.0
    %295 = vmatpush1.msra.mxu0 0.0
    %296 = vmatprep.subr.mxu0 0.0
    %297 = vmatpush1.msra.mxu0 0.0
    %298 = vmatprep.subr.mxu0 0.0
    %299 = vmatpush1.msra.mxu0 0.0
    %300 = vmatprep.subr.mxu0 0.0
    %301 = vmatpush1.msra.mxu0 0.0
    %302 = vmatprep.subr.mxu0 0.0
    %303 = vmatpush1.msra.mxu0 0.0
    %304 = vmatprep.subr.mxu0 0.0
    %305 = vmatpush1.msra.mxu0 0.0
    %306 = vmatprep.subr.mxu0 0.0
    %307 = vmatpush1.msra.mxu0 0.0
    %308 = vmatprep.subr.mxu0 0.0
    %309 = vmatpush1.msra.mxu0 0.0
    %310 = vmatprep.subr.mxu0 0.0
    %311 = vmatpush1.msra.mxu0 0.0
    %312 = vmatprep.subr.mxu0 0.0
    %313 = vmatpush1.msra.mxu0 0.0
    %314 = vmatprep.subr.mxu0 0.0
    %315 = vmatpush1.msra.mxu0 0.0
    %316 = vmatprep.subr.mxu0 0.0
    %317 = vmatpush1.msra.mxu0 0.0
    %318 = vmatprep.subr.mxu0 0.0
    %319 = vmatpush1.msra.mxu0 0.0
    %320 = vmatprep.subr.mxu0 0.0
    %321 = vmatpush1.msra.mxu0 0.0
    %322 = vmatprep.subr.mxu0 0.0
    %323 = vmatpush1.msra.mxu0 0.0
    %324 = vmatprep.subr.mxu0 0.0
    %325 = vmatpush1.msra.mxu0 0.0
    %326 = vmatprep.subr.mxu0 0.0
    %327 = vmatpush1.msra.mxu0 0.0
    %328 = vmatprep.subr.mxu0 0.0
    %329 = vmatpush1.msra.mxu0 0.0
    %330 = vmatprep.subr.mxu0 0.0
    %331 = vmatpush1.msra.mxu0 0.0
    %332 = vmatprep.subr.mxu0 0.0
    %333 = vmatpush1.msra.mxu0 0.0
    %334 = vmatprep.subr.mxu0 0.0
    %335 = vmatpush1.msra.mxu0 0.0
    %336 = vmatprep.subr.mxu0 0.0
    %337 = vmatpush1.msra.mxu0 0.0
    %338 = vmatprep.subr.mxu0 0.0
    %339 = vmatpush1.msra.mxu0 0.0
    %340 = vmatprep.subr.mxu0 0.0
    %341 = vmatpush1.msra.mxu0 0.0
    %342 = vmatprep.subr.mxu0 0.0
    %343 = vmatpush1.msra.mxu0 0.0
    %344 = vmatprep.subr.mxu0 0.0
    %345 = vmatpush1.msra.mxu0 0.0
    %346 = vmatprep.subr.mxu0 0.0
    %347 = vmatpush1.msra.mxu0 0.0
    %348 = vmatprep.subr.mxu0 0.0
    %349 = vmatpush1.msra.mxu0 0.0
    %350 = vmatprep.subr.mxu0 0.0
    %351 = vmatpush1.msra.mxu0 0.0
    %352 = vmatprep.mubr.f32.mxu0 0.0
    %353 = vmatmul.mubr.f32.gmra.mrb[0].mxu0 %v87
    %v354 = vpop.f32.mrb[0].mxu0
    %v355 = vadd.f32 %v286, %v354
    %v356 = vpop.f32.mrb[0].mxu0
    %357 = vmatprep.mubr.f32.mxu0 0.0
    %358 = vmatmul.mubr.f32.gmra.mrb[0].mxu0 %v90
    %v359 = vpop.f32.mrb[0].mxu0
    %v360 = vadd.f32 %v286, %v359
    %v361 = vpop.f32.mrb[0].mxu0
    %362 = vmatprep.mubr.f32.mxu0 0.0
    %363 = vmatmul.mubr.f32.gmra.mrb[0].mxu0 %v93
    %v364 = vpop.f32.mrb[0].mxu0
    %v365 = vadd.f32 %v286, %v364
    %v366 = vpop.f32.mrb[0].mxu0
    %367 = vmatprep.mubr.f32.mxu0 0.0
    %368 = vmatmul.mubr.f32.gmra.mrb[0].mxu0 %v96
    %v369 = vpop.f32.mrb[0].mxu0
    %v370 = vadd.f32 %v286, %v369
    %v371 = vpop.f32.mrb[0].mxu0
    %372 = vdwg.mxu0
    %v373 = vld [vmem:[#allocation3] sm:$0xff]
    %v374 = vld [vmem:[#allocation3 + $0x8] sm:$0xff]
    %v375 = vld [vmem:[#allocation3 + $0x10] sm:$0xff]
    %v376 = vld [vmem:[#allocation3 + $0x18] sm:$0xff]
    %s377 = scalar_lea.vmem [#allocation3], 32
    %v378 = vld [vmem:[%s377] sm:$0xff]
    %v379 = vld [vmem:[%s377 + $0x8] sm:$0xff]
    %v380 = vld [vmem:[%s377 + $0x10] sm:$0xff]
    %v381 = vld [vmem:[%s377 + $0x18] sm:$0xff]
    %s382 = scalar_lea.vmem [#allocation3], 64
    %v383 = vld [vmem:[%s382] sm:$0xff]
    %v384 = vld [vmem:[%s382 + $0x8] sm:$0xff]
    %v385 = vld [vmem:[%s382 + $0x10] sm:$0xff]
    %v386 = vld [vmem:[%s382 + $0x18] sm:$0xff]
    %s387 = scalar_lea.vmem %s3, 3
    %v388 = vld [vmem:[%s387] sm:$0x1]
    %v390 = vlaneseq
    %v391 = vshrl.u32 %v390, 7
    %v392 = vsub.s32 0, %v391
    %v393 = vrot.slane %v388, %v392
    %vm395 = vcmask 261120
    %v397 = vsel %vm395, 0.0, 0
    %399 = vmatprep.subr.mxu0 0.0
    %400 = vmatpush1.msra.mxu0 %v373
    %401 = vmatprep.subr.mxu0 0.0
    %402 = vmatpush1.msra.mxu0 %v374
    %403 = vmatprep.subr.mxu0 0.0
    %404 = vmatpush1.msra.mxu0 %v375
    %405 = vmatprep.subr.mxu0 0.0
    %406 = vmatpush1.msra.mxu0 %v376
    %407 = vmatprep.subr.mxu0 0.0
    %408 = vmatpush1.msra.mxu0 0.0
    %409 = vmatprep.subr.mxu0 0.0
    %410 = vmatpush1.msra.mxu0 0.0
    %411 = vmatprep.subr.mxu0 0.0
    %412 = vmatpush1.msra.mxu0 0.0
    %413 = vmatprep.subr.mxu0 0.0
    %414 = vmatpush1.msra.mxu0 0.0
    %415 = vmatprep.subr.mxu0 0.0
    %416 = vmatpush1.msra.mxu0 0.0
    %417 = vmatprep.subr.mxu0 0.0
    %418 = vmatpush1.msra.mxu0 0.0
    %419 = vmatprep.subr.mxu0 0.0
    %420 = vmatpush1.msra.mxu0 0.0
    %421 = vmatprep.subr.mxu0 0.0
    %422 = vmatpush1.msra.mxu0 0.0
    %423 = vmatprep.subr.mxu0 0.0
    %424 = vmatpush1.msra.mxu0 0.0
    %425 = vmatprep.subr.mxu0 0.0
    %426 = vmatpush1.msra.mxu0 0.0
    %427 = vmatprep.subr.mxu0 0.0
    %428 = vmatpush1.msra.mxu0 0.0
    %429 = vmatprep.subr.mxu0 0.0
    %430 = vmatpush1.msra.mxu0 0.0
    %431 = vmatprep.subr.mxu0 0.0
    %432 = vmatpush1.msra.mxu0 0.0
    %433 = vmatprep.subr.mxu0 0.0
    %434 = vmatpush1.msra.mxu0 0.0
    %435 = vmatprep.subr.mxu0 0.0
    %436 = vmatpush1.msra.mxu0 0.0
    %437 = vmatprep.subr.mxu0 0.0
    %438 = vmatpush1.msra.mxu0 0.0
    %439 = vmatprep.subr.mxu0 0.0
    %440 = vmatpush1.msra.mxu0 0.0
    %441 = vmatprep.subr.mxu0 0.0
    %442 = vmatpush1.msra.mxu0 0.0
    %443 = vmatprep.subr.mxu0 0.0
    %444 = vmatpush1.msra.mxu0 0.0
    %445 = vmatprep.subr.mxu0 0.0
    %446 = vmatpush1.msra.mxu0 0.0
    %447 = vmatprep.subr.mxu0 0.0
    %448 = vmatpush1.msra.mxu0 0.0
    %449 = vmatprep.subr.mxu0 0.0
    %450 = vmatpush1.msra.mxu0 0.0
    %451 = vmatprep.subr.mxu0 0.0
    %452 = vmatpush1.msra.mxu0 0.0
    %453 = vmatprep.subr.mxu0 0.0
    %454 = vmatpush1.msra.mxu0 0.0
    %455 = vmatprep.subr.mxu0 0.0
    %456 = vmatpush1.msra.mxu0 0.0
    %457 = vmatprep.subr.mxu0 0.0
    %458 = vmatpush1.msra.mxu0 0.0
    %459 = vmatprep.subr.mxu0 0.0
    %460 = vmatpush1.msra.mxu0 0.0
    %461 = vmatprep.subr.mxu0 0.0
    %462 = vmatpush1.msra.mxu0 0.0
    %463 = vmatprep.mubr.f32.mxu0 0.0
    %464 = vmatmul.mubr.f32.gmra.mrb[0].mxu0 %v397
    %v465 = vpop.f32.mrb[0].mxu0
    %v466 = vadd.f32 0.0, %v465
    %v467 = vpop.f32.mrb[0].mxu0
    %468 = vdwg.mxu0
    %v469 = vadd.f32 %v165, %v466
    %v470 = vxor.u32 %v469, 2147483648
    %v471 = vmul.f32 %v470, 1.442695
    %v472 = vpow.pop %v471
    %v473 = vadd.f32 %v472, 1.0
    %v474 = vrcp.pop %v473
    %v475 = vmul.f32 1.0, %v474
    %476 = vmatprep.subr.mxu0 0.0
    %477 = vmatpush1.msra.mxu0 %v378
    %478 = vmatprep.subr.mxu0 0.0
    %479 = vmatpush1.msra.mxu0 %v379
    %480 = vmatprep.subr.mxu0 0.0
    %481 = vmatpush1.msra.mxu0 %v380
    %482 = vmatprep.subr.mxu0 0.0
    %483 = vmatpush1.msra.mxu0 %v381
    %484 = vmatprep.subr.mxu0 0.0
    %485 = vmatpush1.msra.mxu0 0.0
    %486 = vmatprep.subr.mxu0 0.0
    %487 = vmatpush1.msra.mxu0 0.0
    %488 = vmatprep.subr.mxu0 0.0
    %489 = vmatpush1.msra.mxu0 0.0
    %490 = vmatprep.subr.mxu0 0.0
    %491 = vmatpush1.msra.mxu0 0.0
    %492 = vmatprep.subr.mxu0 0.0
    %493 = vmatpush1.msra.mxu0 0.0
    %494 = vmatprep.subr.mxu0 0.0
    %495 = vmatpush1.msra.mxu0 0.0
    %496 = vmatprep.subr.mxu0 0.0
    %497 = vmatpush1.msra.mxu0 0.0
    %498 = vmatprep.subr.mxu0 0.0
    %499 = vmatpush1.msra.mxu0 0.0
    %500 = vmatprep.subr.mxu0 0.0
    %501 = vmatpush1.msra.mxu0 0.0
    %502 = vmatprep.subr.mxu0 0.0
    %503 = vmatpush1.msra.mxu0 0.0
    %504 = vmatprep.subr.mxu0 0.0
    %505 = vmatpush1.msra.mxu0 0.0
    %506 = vmatprep.subr.mxu0 0.0
    %507 = vmatpush1.msra.mxu0 0.0
    %508 = vmatprep.subr.mxu0 0.0
    %509 = vmatpush1.msra.mxu0 0.0
    %510 = vmatprep.subr.mxu0 0.0
    %511 = vmatpush1.msra.mxu0 0.0
    %512 = vmatprep.subr.mxu0 0.0
    %513 = vmatpush1.msra.mxu0 0.0
    %514 = vmatprep.subr.mxu0 0.0
    %515 = vmatpush1.msra.mxu0 0.0
    %516 = vmatprep.subr.mxu0 0.0
    %517 = vmatpush1.msra.mxu0 0.0
    %518 = vmatprep.subr.mxu0 0.0
    %519 = vmatpush1.msra.mxu0 0.0
    %520 = vmatprep.subr.mxu0 0.0
    %521 = vmatpush1.msra.mxu0 0.0
    %522 = vmatprep.subr.mxu0 0.0
    %523 = vmatpush1.msra.mxu0 0.0
    %524 = vmatprep.subr.mxu0 0.0
    %525 = vmatpush1.msra.mxu0 0.0
    %526 = vmatprep.subr.mxu0 0.0
    %527 = vmatpush1.msra.mxu0 0.0
    %528 = vmatprep.subr.mxu0 0.0
    %529 = vmatpush1.msra.mxu0 0.0
    %530 = vmatprep.subr.mxu0 0.0
    %531 = vmatpush1.msra.mxu0 0.0
    %532 = vmatprep.subr.mxu0 0.0
    %533 = vmatpush1.msra.mxu0 0.0
    %534 = vmatprep.subr.mxu0 0.0
    %535 = vmatpush1.msra.mxu0 0.0
    %536 = vmatprep.subr.mxu0 0.0
    %537 = vmatpush1.msra.mxu0 0.0
    %538 = vmatprep.subr.mxu0 0.0
    %539 = vmatpush1.msra.mxu0 0.0
    %540 = vmatprep.mubr.f32.mxu0 0.0
    %541 = vmatmul.mubr.f32.gmra.mrb[0].mxu0 %v397
    %v542 = vpop.f32.mrb[0].mxu0
    %v543 = vadd.f32 0.0, %v542
    %v544 = vpop.f32.mrb[0].mxu0
    %545 = vdwg.mxu0
    %v546 = vadd.f32 %v260, %v543
    %v547 = vxor.u32 %v546, 2147483648
    %v548 = vmul.f32 %v547, 1.442695
    %v549 = vpow.pop %v548
    %v550 = vadd.f32 %v549, 1.0
    %v551 = vrcp.pop %v550
    %v552 = vmul.f32 1.0, %v551
    %553 = vmatprep.subr.mxu0 0.0
    %554 = vmatpush1.msra.mxu0 %v383
    %555 = vmatprep.subr.mxu0 0.0
    %556 = vmatpush1.msra.mxu0 %v384
    %557 = vmatprep.subr.mxu0 0.0
    %558 = vmatpush1.msra.mxu0 %v385
    %559 = vmatprep.subr.mxu0 0.0
    %560 = vmatpush1.msra.mxu0 %v386
    %561 = vmatprep.subr.mxu0 0.0
    %562 = vmatpush1.msra.mxu0 0.0
    %563 = vmatprep.subr.mxu0 0.0
    %564 = vmatpush1.msra.mxu0 0.0
    %565 = vmatprep.subr.mxu0 0.0
    %566 = vmatpush1.msra.mxu0 0.0
    %567 = vmatprep.subr.mxu0 0.0
    %568 = vmatpush1.msra.mxu0 0.0
    %569 = vmatprep.subr.mxu0 0.0
    %570 = vmatpush1.msra.mxu0 0.0
    %571 = vmatprep.subr.mxu0 0.0
    %572 = vmatpush1.msra.mxu0 0.0
    %573 = vmatprep.subr.mxu0 0.0
    %574 = vmatpush1.msra.mxu0 0.0
    %575 = vmatprep.subr.mxu0 0.0
    %576 = vmatpush1.msra.mxu0 0.0
    %577 = vmatprep.subr.mxu0 0.0
    %578 = vmatpush1.msra.mxu0 0.0
    %579 = vmatprep.subr.mxu0 0.0
    %580 = vmatpush1.msra.mxu0 0.0
    %581 = vmatprep.subr.mxu0 0.0
    %582 = vmatpush1.msra.mxu0 0.0
    %583 = vmatprep.subr.mxu0 0.0
    %584 = vmatpush1.msra.mxu0 0.0
    %585 = vmatprep.subr.mxu0 0.0
    %586 = vmatpush1.msra.mxu0 0.0
    %587 = vmatprep.subr.mxu0 0.0
    %588 = vmatpush1.msra.mxu0 0.0
    %589 = vmatprep.subr.mxu0 0.0
    %590 = vmatpush1.msra.mxu0 0.0
    %591 = vmatprep.subr.mxu0 0.0
    %592 = vmatpush1.msra.mxu0 0.0
    %593 = vmatprep.subr.mxu0 0.0
    %594 = vmatpush1.msra.mxu0 0.0
    %595 = vmatprep.subr.mxu0 0.0
    %596 = vmatpush1.msra.mxu0 0.0
    %597 = vmatprep.subr.mxu0 0.0
    %598 = vmatpush1.msra.mxu0 0.0
    %599 = vmatprep.subr.mxu0 0.0
    %600 = vmatpush1.msra.mxu0 0.0
    %601 = vmatprep.subr.mxu0 0.0
    %602 = vmatpush1.msra.mxu0 0.0
    %603 = vmatprep.subr.mxu0 0.0
    %604 = vmatpush1.msra.mxu0 0.0
    %605 = vmatprep.subr.mxu0 0.0
    %606 = vmatpush1.msra.mxu0 0.0
    %607 = vmatprep.subr.mxu0 0.0
    %608 = vmatpush1.msra.mxu0 0.0
    %609 = vmatprep.subr.mxu0 0.0
    %610 = vmatpush1.msra.mxu0 0.0
    %611 = vmatprep.subr.mxu0 0.0
    %612 = vmatpush1.msra.mxu0 0.0
    %613 = vmatprep.subr.mxu0 0.0
    %614 = vmatpush1.msra.mxu0 0.0
    %615 = vmatprep.subr.mxu0 0.0
    %616 = vmatpush1.msra.mxu0 0.0
    %617 = vmatprep.mubr.f32.mxu0 0.0
    %618 = vmatmul.mubr.f32.gmra.mrb[0].mxu0 %v397
    %v619 = vpop.f32.mrb[0].mxu0
    %v620 = vadd.f32 %v393, %v619
    %v621 = vpop.f32.mrb[0].mxu0
    %622 = vdwg.mxu0
    %v623 = vmul.f32 %v475, %v620
    %v624 = vadd.f32 %v355, %v623
    %v625 = vtanh.pop %v624
    %v626 = vsub.f32 1.0, %v552
    %v627 = vmul.f32 %v626, %v625
    %v628 = vmul.f32 %v552, 0.0
    %v629 = vadd.f32 %v627, %v628
    %vm630 = vcmask 254976
    %631 = vst.msk [vmem:[#allocation2] sm:$0x3] %vm630, %v629
    %v633 = vsel %vm395, %v629, 0
    %635 = vmatprep.subr.mxu0 0.0
    %636 = vmatpush1.msra.mxu0 %v373
    %637 = vmatprep.subr.mxu0 0.0
    %638 = vmatpush1.msra.mxu0 %v374
    %639 = vmatprep.subr.mxu0 0.0
    %640 = vmatpush1.msra.mxu0 %v375
    %641 = vmatprep.subr.mxu0 0.0
    %642 = vmatpush1.msra.mxu0 %v376
    %643 = vmatprep.subr.mxu0 0.0
    %644 = vmatpush1.msra.mxu0 0.0
    %645 = vmatprep.subr.mxu0 0.0
    %646 = vmatpush1.msra.mxu0 0.0
    %647 = vmatprep.subr.mxu0 0.0
    %648 = vmatpush1.msra.mxu0 0.0
    %649 = vmatprep.subr.mxu0 0.0
    %650 = vmatpush1.msra.mxu0 0.0
    %651 = vmatprep.subr.mxu0 0.0
    %652 = vmatpush1.msra.mxu0 0.0
    %653 = vmatprep.subr.mxu0 0.0
    %654 = vmatpush1.msra.mxu0 0.0
    %655 = vmatprep.subr.mxu0 0.0
    %656 = vmatpush1.msra.mxu0 0.0
    %657 = vmatprep.subr.mxu0 0.0
    %658 = vmatpush1.msra.mxu0 0.0
    %659 = vmatprep.subr.mxu0 0.0
    %660 = vmatpush1.msra.mxu0 0.0
    %661 = vmatprep.subr.mxu0 0.0
    %662 = vmatpush1.msra.mxu0 0.0
    %663 = vmatprep.subr.mxu0 0.0
    %664 = vmatpush1.msra.mxu0 0.0
    %665 = vmatprep.subr.mxu0 0.0
    %666 = vmatpush1.msra.mxu0 0.0
    %667 = vmatprep.subr.mxu0 0.0
    %668 = vmatpush1.msra.mxu0 0.0
    %669 = vmatprep.subr.mxu0 0.0
    %670 = vmatpush1.msra.mxu0 0.0
    %671 = vmatprep.subr.mxu0 0.0
    %672 = vmatpush1.msra.mxu0 0.0
    %673 = vmatprep.subr.mxu0 0.0
    %674 = vmatpush1.msra.mxu0 0.0
    %675 = vmatprep.subr.mxu0 0.0
    %676 = vmatpush1.msra.mxu0 0.0
    %677 = vmatprep.subr.mxu0 0.0
    %678 = vmatpush1.msra.mxu0 0.0
    %679 = vmatprep.subr.mxu0 0.0
    %680 = vmatpush1.msra.mxu0 0.0
    %681 = vmatprep.subr.mxu0 0.0
    %682 = vmatpush1.msra.mxu0 0.0
    %683 = vmatprep.subr.mxu0 0.0
    %684 = vmatpush1.msra.mxu0 0.0
    %685 = vmatprep.subr.mxu0 0.0
    %686 = vmatpush1.msra.mxu0 0.0
    %687 = vmatprep.subr.mxu0 0.0
    %688 = vmatpush1.msra.mxu0 0.0
    %689 = vmatprep.subr.mxu0 0.0
    %690 = vmatpush1.msra.mxu0 0.0
    %691 = vmatprep.subr.mxu0 0.0
    %692 = vmatpush1.msra.mxu0 0.0
    %693 = vmatprep.subr.mxu0 0.0
    %694 = vmatpush1.msra.mxu0 0.0
    %695 = vmatprep.subr.mxu0 0.0
    %696 = vmatpush1.msra.mxu0 0.0
    %697 = vmatprep.subr.mxu0 0.0
    %698 = vmatpush1.msra.mxu0 0.0
    %699 = vmatprep.mubr.f32.mxu0 0.0
    %700 = vmatmul.mubr.f32.gmra.mrb[0].mxu0 %v633
    %v701 = vpop.f32.mrb[0].mxu0
    %v702 = vadd.f32 0.0, %v701
    %v703 = vpop.f32.mrb[0].mxu0
    %704 = vdwg.mxu0
    %v706 = vrot.slane %v702, 6
    %v708 = vadd.f32 %v165, %v706
    %v709 = vxor.u32 %v708, 2147483648
    %v710 = vmul.f32 %v709, 1.442695
    %v711 = vpow.pop %v710
    %v712 = vadd.f32 %v711, 1.0
    %v713 = vrcp.pop %v712
    %v714 = vmul.f32 1.0, %v713
    %715 = vmatprep.subr.mxu0 0.0
    %716 = vmatpush1.msra.mxu0 %v378
    %717 = vmatprep.subr.mxu0 0.0
    %718 = vmatpush1.msra.mxu0 %v379
    %719 = vmatprep.subr.mxu0 0.0
    %720 = vmatpush1.msra.mxu0 %v380
    %721 = vmatprep.subr.mxu0 0.0
    %722 = vmatpush1.msra.mxu0 %v381
    %723 = vmatprep.subr.mxu0 0.0
    %724 = vmatpush1.msra.mxu0 0.0
    %725 = vmatprep.subr.mxu0 0.0
    %726 = vmatpush1.msra.mxu0 0.0
    %727 = vmatprep.subr.mxu0 0.0
    %728 = vmatpush1.msra.mxu0 0.0
    %729 = vmatprep.subr.mxu0 0.0
    %730 = vmatpush1.msra.mxu0 0.0
    %731 = vmatprep.subr.mxu0 0.0
    %732 = vmatpush1.msra.mxu0 0.0
    %733 = vmatprep.subr.mxu0 0.0
    %734 = vmatpush1.msra.mxu0 0.0
    %735 = vmatprep.subr.mxu0 0.0
    %736 = vmatpush1.msra.mxu0 0.0
    %737 = vmatprep.subr.mxu0 0.0
    %738 = vmatpush1.msra.mxu0 0.0
    %739 = vmatprep.subr.mxu0 0.0
    %740 = vmatpush1.msra.mxu0 0.0
    %741 = vmatprep.subr.mxu0 0.0
    %742 = vmatpush1.msra.mxu0 0.0
    %743 = vmatprep.subr.mxu0 0.0
    %744 = vmatpush1.msra.mxu0 0.0
    %745 = vmatprep.subr.mxu0 0.0
    %746 = vmatpush1.msra.mxu0 0.0
    %747 = vmatprep.subr.mxu0 0.0
    %748 = vmatpush1.msra.mxu0 0.0
    %749 = vmatprep.subr.mxu0 0.0
    %750 = vmatpush1.msra.mxu0 0.0
    %751 = vmatprep.subr.mxu0 0.0
    %752 = vmatpush1.msra.mxu0 0.0
    %753 = vmatprep.subr.mxu0 0.0
    %754 = vmatpush1.msra.mxu0 0.0
    %755 = vmatprep.subr.mxu0 0.0
    %756 = vmatpush1.msra.mxu0 0.0
    %757 = vmatprep.subr.mxu0 0.0
    %758 = vmatpush1.msra.mxu0 0.0
    %759 = vmatprep.subr.mxu0 0.0
    %760 = vmatpush1.msra.mxu0 0.0
    %761 = vmatprep.subr.mxu0 0.0
    %762 = vmatpush1.msra.mxu0 0.0
    %763 = vmatprep.subr.mxu0 0.0
    %764 = vmatpush1.msra.mxu0 0.0
    %765 = vmatprep.subr.mxu0 0.0
    %766 = vmatpush1.msra.mxu0 0.0
    %767 = vmatprep.subr.mxu0 0.0
    %768 = vmatpush1.msra.mxu0 0.0
    %769 = vmatprep.subr.mxu0 0.0
    %770 = vmatpush1.msra.mxu0 0.0
    %771 = vmatprep.subr.mxu0 0.0
    %772 = vmatpush1.msra.mxu0 0.0
    %773 = vmatprep.subr.mxu0 0.0
    %774 = vmatpush1.msra.mxu0 0.0
    %775 = vmatprep.subr.mxu0 0.0
    %776 = vmatpush1.msra.mxu0 0.0
    %777 = vmatprep.subr.mxu0 0.0
    %778 = vmatpush1.msra.mxu0 0.0
    %779 = vmatprep.mubr.f32.mxu0 0.0
    %780 = vmatmul.mubr.f32.gmra.mrb[0].mxu0 %v633
    %v781 = vpop.f32.mrb[0].mxu0
    %v782 = vadd.f32 0.0, %v781
    %v783 = vpop.f32.mrb[0].mxu0
    %784 = vdwg.mxu0
    %v786 = vrot.slane %v782, 6
    %v788 = vadd.f32 %v260, %v786
    %v789 = vxor.u32 %v788, 2147483648
    %v790 = vmul.f32 %v789, 1.442695
    %v791 = vpow.pop %v790
    %v792 = vadd.f32 %v791, 1.0
    %v793 = vrcp.pop %v792
    %v794 = vmul.f32 1.0, %v793
    %795 = vmatprep.subr.mxu0 0.0
    %796 = vmatpush1.msra.mxu0 %v383
    %797 = vmatprep.subr.mxu0 0.0
    %798 = vmatpush1.msra.mxu0 %v384
    %799 = vmatprep.subr.mxu0 0.0
    %800 = vmatpush1.msra.mxu0 %v385
    %801 = vmatprep.subr.mxu0 0.0
    %802 = vmatpush1.msra.mxu0 %v386
    %803 = vmatprep.subr.mxu0 0.0
    %804 = vmatpush1.msra.mxu0 0.0
    %805 = vmatprep.subr.mxu0 0.0
    %806 = vmatpush1.msra.mxu0 0.0
    %807 = vmatprep.subr.mxu0 0.0
    %808 = vmatpush1.msra.mxu0 0.0
    %809 = vmatprep.subr.mxu0 0.0
    %810 = vmatpush1.msra.mxu0 0.0
    %811 = vmatprep.subr.mxu0 0.0
    %812 = vmatpush1.msra.mxu0 0.0
    %813 = vmatprep.subr.mxu0 0.0
    %814 = vmatpush1.msra.mxu0 0.0
    %815 = vmatprep.subr.mxu0 0.0
    %816 = vmatpush1.msra.mxu0 0.0
    %817 = vmatprep.subr.mxu0 0.0
    %818 = vmatpush1.msra.mxu0 0.0
    %819 = vmatprep.subr.mxu0 0.0
    %820 = vmatpush1.msra.mxu0 0.0
    %821 = vmatprep.subr.mxu0 0.0
    %822 = vmatpush1.msra.mxu0 0.0
    %823 = vmatprep.subr.mxu0 0.0
    %824 = vmatpush1.msra.mxu0 0.0
    %825 = vmatprep.subr.mxu0 0.0
    %826 = vmatpush1.msra.mxu0 0.0
    %827 = vmatprep.subr.mxu0 0.0
    %828 = vmatpush1.msra.mxu0 0.0
    %829 = vmatprep.subr.mxu0 0.0
    %830 = vmatpush1.msra.mxu0 0.0
    %831 = vmatprep.subr.mxu0 0.0
    %832 = vmatpush1.msra.mxu0 0.0
    %833 = vmatprep.subr.mxu0 0.0
    %834 = vmatpush1.msra.mxu0 0.0
    %835 = vmatprep.subr.mxu0 0.0
    %836 = vmatpush1.msra.mxu0 0.0
    %837 = vmatprep.subr.mxu0 0.0
    %838 = vmatpush1.msra.mxu0 0.0
    %839 = vmatprep.subr.mxu0 0.0
    %840 = vmatpush1.msra.mxu0 0.0
    %841 = vmatprep.subr.mxu0 0.0
    %842 = vmatpush1.msra.mxu0 0.0
    %843 = vmatprep.subr.mxu0 0.0
    %844 = vmatpush1.msra.mxu0 0.0
    %845 = vmatprep.subr.mxu0 0.0
    %846 = vmatpush1.msra.mxu0 0.0
    %847 = vmatprep.subr.mxu0 0.0
    %848 = vmatpush1.msra.mxu0 0.0
    %849 = vmatprep.subr.mxu0 0.0
    %850 = vmatpush1.msra.mxu0 0.0
    %851 = vmatprep.subr.mxu0 0.0
    %852 = vmatpush1.msra.mxu0 0.0
    %853 = vmatprep.subr.mxu0 0.0
    %854 = vmatpush1.msra.mxu0 0.0
    %855 = vmatprep.subr.mxu0 0.0
    %856 = vmatpush1.msra.mxu0 0.0
    %857 = vmatprep.subr.mxu0 0.0
    %858 = vmatpush1.msra.mxu0 0.0
    %859 = vmatprep.mubr.f32.mxu0 0.0
    %860 = vmatmul.mubr.f32.gmra.mrb[0].mxu0 %v633
    %v861 = vpop.f32.mrb[0].mxu0
    %v862 = vadd.f32 %v393, %v861
    %v863 = vpop.f32.mrb[0].mxu0
    %864 = vdwg.mxu0
    %v866 = vrot.slane %v862, 6
    %v868 = vmul.f32 %v714, %v866
    %v869 = vadd.f32 %v355, %v868
    %v870 = vtanh.pop %v869
    %v871 = vsub.f32 1.0, %v794
    %v872 = vmul.f32 %v871, %v870
    %v873 = vrot.slane %v629, 6
    %v875 = vmul.f32 %v794, %v873
    %v876 = vadd.f32 %v872, %v875
    %vm877 = vcmask 257026
    %878 = vst.msk [vmem:[#allocation2] sm:$0xc] %vm877, %v876
    %v880 = vrot.slane %v876, 2
    %v881 = vsel %vm395, %v880, 0
    %883 = vmatprep.subr.mxu0 0.0
    %884 = vmatpush1.msra.mxu0 %v373
    %885 = vmatprep.subr.mxu0 0.0
    %886 = vmatpush1.msra.mxu0 %v374
    %887 = vmatprep.subr.mxu0 0.0
    %888 = vmatpush1.msra.mxu0 %v375
    %889 = vmatprep.subr.mxu0 0.0
    %890 = vmatpush1.msra.mxu0 %v376
    %891 = vmatprep.subr.mxu0 0.0
    %892 = vmatpush1.msra.mxu0 0.0
    %893 = vmatprep.subr.mxu0 0.0
    %894 = vmatpush1.msra.mxu0 0.0
    %895 = vmatprep.subr.mxu0 0.0
    %896 = vmatpush1.msra.mxu0 0.0
    %897 = vmatprep.subr.mxu0 0.0
    %898 = vmatpush1.msra.mxu0 0.0
    %899 = vmatprep.subr.mxu0 0.0
    %900 = vmatpush1.msra.mxu0 0.0
    %901 = vmatprep.subr.mxu0 0.0
    %902 = vmatpush1.msra.mxu0 0.0
    %903 = vmatprep.subr.mxu0 0.0
    %904 = vmatpush1.msra.mxu0 0.0
    %905 = vmatprep.subr.mxu0 0.0
    %906 = vmatpush1.msra.mxu0 0.0
    %907 = vmatprep.subr.mxu0 0.0
    %908 = vmatpush1.msra.mxu0 0.0
    %909 = vmatprep.subr.mxu0 0.0
    %910 = vmatpush1.msra.mxu0 0.0
    %911 = vmatprep.subr.mxu0 0.0
    %912 = vmatpush1.msra.mxu0 0.0
    %913 = vmatprep.subr.mxu0 0.0
    %914 = vmatpush1.msra.mxu0 0.0
    %915 = vmatprep.subr.mxu0 0.0
    %916 = vmatpush1.msra.mxu0 0.0
    %917 = vmatprep.subr.mxu0 0.0
    %918 = vmatpush1.msra.mxu0 0.0
    %919 = vmatprep.subr.mxu0 0.0
    %920 = vmatpush1.msra.mxu0 0.0
    %921 = vmatprep.subr.mxu0 0.0
    %922 = vmatpush1.msra.mxu0 0.0
    %923 = vmatprep.subr.mxu0 0.0
    %924 = vmatpush1.msra.mxu0 0.0
    %925 = vmatprep.subr.mxu0 0.0
    %926 = vmatpush1.msra.mxu0 0.0
    %927 = vmatprep.subr.mxu0 0.0
    %928 = vmatpush1.msra.mxu0 0.0
    %929 = vmatprep.subr.mxu0 0.0
    %930 = vmatpush1.msra.mxu0 0.0
    %931 = vmatprep.subr.mxu0 0.0
    %932 = vmatpush1.msra.mxu0 0.0
    %933 = vmatprep.subr.mxu0 0.0
    %934 = vmatpush1.msra.mxu0 0.0
    %935 = vmatprep.subr.mxu0 0.0
    %936 = vmatpush1.msra.mxu0 0.0
    %937 = vmatprep.subr.mxu0 0.0
    %938 = vmatpush1.msra.mxu0 0.0
    %939 = vmatprep.subr.mxu0 0.0
    %940 = vmatpush1.msra.mxu0 0.0
    %941 = vmatprep.subr.mxu0 0.0
    %942 = vmatpush1.msra.mxu0 0.0
    %943 = vmatprep.subr.mxu0 0.0
    %944 = vmatpush1.msra.mxu0 0.0
    %945 = vmatprep.subr.mxu0 0.0
    %946 = vmatpush1.msra.mxu0 0.0
    %947 = vmatprep.mubr.f32.mxu0 0.0
    %948 = vmatmul.mubr.f32.gmra.mrb[0].mxu0 %v881
    %v949 = vpop.f32.mrb[0].mxu0
    %v950 = vadd.f32 0.0, %v949
    %v951 = vpop.f32.mrb[0].mxu0
    %952 = vdwg.mxu0
    %v954 = vrot.slane %v950, 4
    %v956 = vadd.f32 %v165, %v954
    %v957 = vxor.u32 %v956, 2147483648
    %v958 = vmul.f32 %v957, 1.442695
    %v959 = vpow.pop %v958
    %v960 = vadd.f32 %v959, 1.0
    %v961 = vrcp.pop %v960
    %v962 = vmul.f32 1.0, %v961
    %963 = vmatprep.subr.mxu0 0.0
    %964 = vmatpush1.msra.mxu0 %v378
    %965 = vmatprep.subr.mxu0 0.0
    %966 = vmatpush1.msra.mxu0 %v379
    %967 = vmatprep.subr.mxu0 0.0
    %968 = vmatpush1.msra.mxu0 %v380
    %969 = vmatprep.subr.mxu0 0.0
    %970 = vmatpush1.msra.mxu0 %v381
    %971 = vmatprep.subr.mxu0 0.0
    %972 = vmatpush1.msra.mxu0 0.0
    %973 = vmatprep.subr.mxu0 0.0
    %974 = vmatpush1.msra.mxu0 0.0
    %975 = vmatprep.subr.mxu0 0.0
    %976 = vmatpush1.msra.mxu0 0.0
    %977 = vmatprep.subr.mxu0 0.0
    %978 = vmatpush1.msra.mxu0 0.0
    %979 = vmatprep.subr.mxu0 0.0
    %980 = vmatpush1.msra.mxu0 0.0
    %981 = vmatprep.subr.mxu0 0.0
    %982 = vmatpush1.msra.mxu0 0.0
    %983 = vmatprep.subr.mxu0 0.0
    %984 = vmatpush1.msra.mxu0 0.0
    %985 = vmatprep.subr.mxu0 0.0
    %986 = vmatpush1.msra.mxu0 0.0
    %987 = vmatprep.subr.mxu0 0.0
    %988 = vmatpush1.msra.mxu0 0.0
    %989 = vmatprep.subr.mxu0 0.0
    %990 = vmatpush1.msra.mxu0 0.0
    %991 = vmatprep.subr.mxu0 0.0
    %992 = vmatpush1.msra.mxu0 0.0
    %993 = vmatprep.subr.mxu0 0.0
    %994 = vmatpush1.msra.mxu0 0.0
    %995 = vmatprep.subr.mxu0 0.0
    %996 = vmatpush1.msra.mxu0 0.0
    %997 = vmatprep.subr.mxu0 0.0
    %998 = vmatpush1.msra.mxu0 0.0
    %999 = vmatprep.subr.mxu0 0.0
    %1000 = vmatpush1.msra.mxu0 0.0
    %1001 = vmatprep.subr.mxu0 0.0
    %1002 = vmatpush1.msra.mxu0 0.0
    %1003 = vmatprep.subr.mxu0 0.0
    %1004 = vmatpush1.msra.mxu0 0.0
    %1005 = vmatprep.subr.mxu0 0.0
    %1006 = vmatpush1.msra.mxu0 0.0
    %1007 = vmatprep.subr.mxu0 0.0
    %1008 = vmatpush1.msra.mxu0 0.0
    %1009 = vmatprep.subr.mxu0 0.0
    %1010 = vmatpush1.msra.mxu0 0.0
    %1011 = vmatprep.subr.mxu0 0.0
    %1012 = vmatpush1.msra.mxu0 0.0
    %1013 = vmatprep.subr.mxu0 0.0
    %1014 = vmatpush1.msra.mxu0 0.0
    %1015 = vmatprep.subr.mxu0 0.0
    %1016 = vmatpush1.msra.mxu0 0.0
    %1017 = vmatprep.subr.mxu0 0.0
    %1018 = vmatpush1.msra.mxu0 0.0
    %1019 = vmatprep.subr.mxu0 0.0
    %1020 = vmatpush1.msra.mxu0 0.0
    %1021 = vmatprep.subr.mxu0 0.0
    %1022 = vmatpush1.msra.mxu0 0.0
    %1023 = vmatprep.subr.mxu0 0.0
    %1024 = vmatpush1.msra.mxu0 0.0
    %1025 = vmatprep.subr.mxu0 0.0
    %1026 = vmatpush1.msra.mxu0 0.0
    %1027 = vmatprep.mubr.f32.mxu0 0.0
    %1028 = vmatmul.mubr.f32.gmra.mrb[0].mxu0 %v881
    %v1029 = vpop.f32.mrb[0].mxu0
    %v1030 = vadd.f32 0.0, %v1029
    %v1031 = vpop.f32.mrb[0].mxu0
    %1032 = vdwg.mxu0
    %v1034 = vrot.slane %v1030, 4
    %v1036 = vadd.f32 %v260, %v1034
    %v1037 = vxor.u32 %v1036, 2147483648
    %v1038 = vmul.f32 %v1037, 1.442695
    %v1039 = vpow.pop %v1038
    %v1040 = vadd.f32 %v1039, 1.0
    %v1041 = vrcp.pop %v1040
    %v1042 = vmul.f32 1.0, %v1041
    %1043 = vmatprep.subr.mxu0 0.0
    %1044 = vmatpush1.msra.mxu0 %v383
    %1045 = vmatprep.subr.mxu0 0.0
    %1046 = vmatpush1.msra.mxu0 %v384
    %1047 = vmatprep.subr.mxu0 0.0
    %1048 = vmatpush1.msra.mxu0 %v385
    %1049 = vmatprep.subr.mxu0 0.0
    %1050 = vmatpush1.msra.mxu0 %v386
    %1051 = vmatprep.subr.mxu0 0.0
    %1052 = vmatpush1.msra.mxu0 0.0
    %1053 = vmatprep.subr.mxu0 0.0
    %1054 = vmatpush1.msra.mxu0 0.0
    %1055 = vmatprep.subr.mxu0 0.0
    %1056 = vmatpush1.msra.mxu0 0.0
    %1057 = vmatprep.subr.mxu0 0.0
    %1058 = vmatpush1.msra.mxu0 0.0
    %1059 = vmatprep.subr.mxu0 0.0
    %1060 = vmatpush1.msra.mxu0 0.0
    %1061 = vmatprep.subr.mxu0 0.0
    %1062 = vmatpush1.msra.mxu0 0.0
    %1063 = vmatprep.subr.mxu0 0.0
    %1064 = vmatpush1.msra.mxu0 0.0
    %1065 = vmatprep.subr.mxu0 0.0
    %1066 = vmatpush1.msra.mxu0 0.0
    %1067 = vmatprep.subr.mxu0 0.0
    %1068 = vmatpush1.msra.mxu0 0.0
    %1069 = vmatprep.subr.mxu0 0.0
    %1070 = vmatpush1.msra.mxu0 0.0
    %1071 = vmatprep.subr.mxu0 0.0
    %1072 = vmatpush1.msra.mxu0 0.0
    %1073 = vmatprep.subr.mxu0 0.0
    %1074 = vmatpush1.msra.mxu0 0.0
    %1075 = vmatprep.subr.mxu0 0.0
    %1076 = vmatpush1.msra.mxu0 0.0
    %1077 = vmatprep.subr.mxu0 0.0
    %1078 = vmatpush1.msra.mxu0 0.0
    %1079 = vmatprep.subr.mxu0 0.0
    %1080 = vmatpush1.msra.mxu0 0.0
    %1081 = vmatprep.subr.mxu0 0.0
    %1082 = vmatpush1.msra.mxu0 0.0
    %1083 = vmatprep.subr.mxu0 0.0
    %1084 = vmatpush1.msra.mxu0 0.0
    %1085 = vmatprep.subr.mxu0 0.0
    %1086 = vmatpush1.msra.mxu0 0.0
    %1087 = vmatprep.subr.mxu0 0.0
    %1088 = vmatpush1.msra.mxu0 0.0
    %1089 = vmatprep.subr.mxu0 0.0
    %1090 = vmatpush1.msra.mxu0 0.0
    %1091 = vmatprep.subr.mxu0 0.0
    %1092 = vmatpush1.msra.mxu0 0.0
    %1093 = vmatprep.subr.mxu0 0.0
    %1094 = vmatpush1.msra.mxu0 0.0
    %1095 = vmatprep.subr.mxu0 0.0
    %1096 = vmatpush1.msra.mxu0 0.0
    %1097 = vmatprep.subr.mxu0 0.0
    %1098 = vmatpush1.msra.mxu0 0.0
    %1099 = vmatprep.subr.mxu0 0.0
    %1100 = vmatpush1.msra.mxu0 0.0
    %1101 = vmatprep.subr.mxu0 0.0
    %1102 = vmatpush1.msra.mxu0 0.0
    %1103 = vmatprep.subr.mxu0 0.0
    %1104 = vmatpush1.msra.mxu0 0.0
    %1105 = vmatprep.subr.mxu0 0.0
    %1106 = vmatpush1.msra.mxu0 0.0
    %1107 = vmatprep.mubr.f32.mxu0 0.0
    %1108 = vmatmul.mubr.f32.gmra.mrb[0].mxu0 %v881
    %v1109 = vpop.f32.mrb[0].mxu0
    %v1110 = vadd.f32 %v393, %v1109
    %v1111 = vpop.f32.mrb[0].mxu0
    %1112 = vdwg.mxu0
    %v1114 = vrot.slane %v1110, 4
    %v1116 = vmul.f32 %v962, %v1114
    %v1117 = vadd.f32 %v355, %v1116
    %v1118 = vtanh.pop %v1117
    %v1119 = vsub.f32 1.0, %v1042
    %v1120 = vmul.f32 %v1119, %v1118
    %v1121 = vrot.slane %v876, 6
    %v1123 = vmul.f32 %v1042, %v1121
    %v1124 = vadd.f32 %v1120, %v1123
    %vm1125 = vcmask 259076
    %1126 = vst.msk [vmem:[#allocation2] sm:$0x30] %vm1125, %v1124
    %v1128 = vrot.slane %v1124, 4
    %v1129 = vsel %vm395, %v1128, 0
    %1131 = vmatprep.subr.mxu0 0.0
    %1132 = vmatpush1.msra.mxu0 %v373
    %1133 = vmatprep.subr.mxu0 0.0
    %1134 = vmatpush1.msra.mxu0 %v374
    %1135 = vmatprep.subr.mxu0 0.0
    %1136 = vmatpush1.msra.mxu0 %v375
    %1137 = vmatprep.subr.mxu0 0.0
    %1138 = vmatpush1.msra.mxu0 %v376
    %1139 = vmatprep.subr.mxu0 0.0
    %1140 = vmatpush1.msra.mxu0 0.0
    %1141 = vmatprep.subr.mxu0 0.0
    %1142 = vmatpush1.msra.mxu0 0.0
    %1143 = vmatprep.subr.mxu0 0.0
    %1144 = vmatpush1.msra.mxu0 0.0
    %1145 = vmatprep.subr.mxu0 0.0
    %1146 = vmatpush1.msra.mxu0 0.0
    %1147 = vmatprep.subr.mxu0 0.0
    %1148 = vmatpush1.msra.mxu0 0.0
    %1149 = vmatprep.subr.mxu0 0.0
    %1150 = vmatpush1.msra.mxu0 0.0
    %1151 = vmatprep.subr.mxu0 0.0
    %1152 = vmatpush1.msra.mxu0 0.0
    %1153 = vmatprep.subr.mxu0 0.0
    %1154 = vmatpush1.msra.mxu0 0.0
    %1155 = vmatprep.subr.mxu0 0.0
    %1156 = vmatpush1.msra.mxu0 0.0
    %1157 = vmatprep.subr.mxu0 0.0
    %1158 = vmatpush1.msra.mxu0 0.0
    %1159 = vmatprep.subr.mxu0 0.0
    %1160 = vmatpush1.msra.mxu0 0.0
    %1161 = vmatprep.subr.mxu0 0.0
    %1162 = vmatpush1.msra.mxu0 0.0
    %1163 = vmatprep.subr.mxu0 0.0
    %1164 = vmatpush1.msra.mxu0 0.0
    %1165 = vmatprep.subr.mxu0 0.0
    %1166 = vmatpush1.msra.mxu0 0.0
    %1167 = vmatprep.subr.mxu0 0.0
    %1168 = vmatpush1.msra.mxu0 0.0
    %1169 = vmatprep.subr.mxu0 0.0
    %1170 = vmatpush1.msra.mxu0 0.0
    %1171 = vmatprep.subr.mxu0 0.0
    %1172 = vmatpush1.msra.mxu0 0.0
    %1173 = vmatprep.subr.mxu0 0.0
    %1174 = vmatpush1.msra.mxu0 0.0
    %1175 = vmatprep.subr.mxu0 0.0
    %1176 = vmatpush1.msra.mxu0 0.0
    %1177 = vmatprep.subr.mxu0 0.0
    %1178 = vmatpush1.msra.mxu0 0.0
    %1179 = vmatprep.subr.mxu0 0.0
    %1180 = vmatpush1.msra.mxu0 0.0
    %1181 = vmatprep.subr.mxu0 0.0
    %1182 = vmatpush1.msra.mxu0 0.0
    %1183 = vmatprep.subr.mxu0 0.0
    %1184 = vmatpush1.msra.mxu0 0.0
    %1185 = vmatprep.subr.mxu0 0.0
    %1186 = vmatpush1.msra.mxu0 0.0
    %1187 = vmatprep.subr.mxu0 0.0
    %1188 = vmatpush1.msra.mxu0 0.0
    %1189 = vmatprep.subr.mxu0 0.0
    %1190 = vmatpush1.msra.mxu0 0.0
    %1191 = vmatprep.subr.mxu0 0.0
    %1192 = vmatpush1.msra.mxu0 0.0
    %1193 = vmatprep.subr.mxu0 0.0
    %1194 = vmatpush1.msra.mxu0 0.0
    %1195 = vmatprep.mubr.f32.mxu0 0.0
    %1196 = vmatmul.mubr.f32.gmra.mrb[0].mxu0 %v1129
    %v1197 = vpop.f32.mrb[0].mxu0
    %v1198 = vadd.f32 0.0, %v1197
    %v1199 = vpop.f32.mrb[0].mxu0
    %1200 = vdwg.mxu0
    %v1202 = vrot.slane %v1198, 2
    %v1204 = vadd.f32 %v165, %v1202
    %v1205 = vxor.u32 %v1204, 2147483648
    %v1206 = vmul.f32 %v1205, 1.442695
    %v1207 = vpow.pop %v1206
    %v1208 = vadd.f32 %v1207, 1.0
    %v1209 = vrcp.pop %v1208
    %v1210 = vmul.f32 1.0, %v1209
    %1211 = vmatprep.subr.mxu0 0.0
    %1212 = vmatpush1.msra.mxu0 %v378
    %1213 = vmatprep.subr.mxu0 0.0
    %1214 = vmatpush1.msra.mxu0 %v379
    %1215 = vmatprep.subr.mxu0 0.0
    %1216 = vmatpush1.msra.mxu0 %v380
    %1217 = vmatprep.subr.mxu0 0.0
    %1218 = vmatpush1.msra.mxu0 %v381
    %1219 = vmatprep.subr.mxu0 0.0
    %1220 = vmatpush1.msra.mxu0 0.0
    %1221 = vmatprep.subr.mxu0 0.0
    %1222 = vmatpush1.msra.mxu0 0.0
    %1223 = vmatprep.subr.mxu0 0.0
    %1224 = vmatpush1.msra.mxu0 0.0
    %1225 = vmatprep.subr.mxu0 0.0
    %1226 = vmatpush1.msra.mxu0 0.0
    %1227 = vmatprep.subr.mxu0 0.0
    %1228 = vmatpush1.msra.mxu0 0.0
    %1229 = vmatprep.subr.mxu0 0.0
    %1230 = vmatpush1.msra.mxu0 0.0
    %1231 = vmatprep.subr.mxu0 0.0
    %1232 = vmatpush1.msra.mxu0 0.0
    %1233 = vmatprep.subr.mxu0 0.0
    %1234 = vmatpush1.msra.mxu0 0.0
    %1235 = vmatprep.subr.mxu0 0.0
    %1236 = vmatpush1.msra.mxu0 0.0
    %1237 = vmatprep.subr.mxu0 0.0
    %1238 = vmatpush1.msra.mxu0 0.0
    %1239 = vmatprep.subr.mxu0 0.0
    %1240 = vmatpush1.msra.mxu0 0.0
    %1241 = vmatprep.subr.mxu0 0.0
    %1242 = vmatpush1.msra.mxu0 0.0
    %1243 = vmatprep.subr.mxu0 0.0
    %1244 = vmatpush1.msra.mxu0 0.0
    %1245 = vmatprep.subr.mxu0 0.0
    %1246 = vmatpush1.msra.mxu0 0.0
    %1247 = vmatprep.subr.mxu0 0.0
    %1248 = vmatpush1.msra.mxu0 0.0
    %1249 = vmatprep.subr.mxu0 0.0
    %1250 = vmatpush1.msra.mxu0 0.0
    %1251 = vmatprep.subr.mxu0 0.0
    %1252 = vmatpush1.msra.mxu0 0.0
    %1253 = vmatprep.subr.mxu0 0.0
    %1254 = vmatpush1.msra.mxu0 0.0
    %1255 = vmatprep.subr.mxu0 0.0
    %1256 = vmatpush1.msra.mxu0 0.0
    %1257 = vmatprep.subr.mxu0 0.0
    %1258 = vmatpush1.msra.mxu0 0.0
    %1259 = vmatprep.subr.mxu0 0.0
    %1260 = vmatpush1.msra.mxu0 0.0
    %1261 = vmatprep.subr.mxu0 0.0
    %1262 = vmatpush1.msra.mxu0 0.0
    %1263 = vmatprep.subr.mxu0 0.0
    %1264 = vmatpush1.msra.mxu0 0.0
    %1265 = vmatprep.subr.mxu0 0.0
    %1266 = vmatpush1.msra.mxu0 0.0
    %1267 = vmatprep.subr.mxu0 0.0
    %1268 = vmatpush1.msra.mxu0 0.0
    %1269 = vmatprep.subr.mxu0 0.0
    %1270 = vmatpush1.msra.mxu0 0.0
    %1271 = vmatprep.subr.mxu0 0.0
    %1272 = vmatpush1.msra.mxu0 0.0
    %1273 = vmatprep.subr.mxu0 0.0
    %1274 = vmatpush1.msra.mxu0 0.0
    %1275 = vmatprep.mubr.f32.mxu0 0.0
    %1276 = vmatmul.mubr.f32.gmra.mrb[0].mxu0 %v1129
    %v1277 = vpop.f32.mrb[0].mxu0
    %v1278 = vadd.f32 0.0, %v1277
    %v1279 = vpop.f32.mrb[0].mxu0
    %1280 = vdwg.mxu0
    %v1282 = vrot.slane %v1278, 2
    %v1284 = vadd.f32 %v260, %v1282
    %v1285 = vxor.u32 %v1284, 2147483648
    %v1286 = vmul.f32 %v1285, 1.442695
    %v1287 = vpow.pop %v1286
    %v1288 = vadd.f32 %v1287, 1.0
    %v1289 = vrcp.pop %v1288
    %v1290 = vmul.f32 1.0, %v1289
    %1291 = vmatprep.subr.mxu0 0.0
    %1292 = vmatpush1.msra.mxu0 %v383
    %1293 = vmatprep.subr.mxu0 0.0
    %1294 = vmatpush1.msra.mxu0 %v384
    %1295 = vmatprep.subr.mxu0 0.0
    %1296 = vmatpush1.msra.mxu0 %v385
    %1297 = vmatprep.subr.mxu0 0.0
    %1298 = vmatpush1.msra.mxu0 %v386
    %1299 = vmatprep.subr.mxu0 0.0
    %1300 = vmatpush1.msra.mxu0 0.0
    %1301 = vmatprep.subr.mxu0 0.0
    %1302 = vmatpush1.msra.mxu0 0.0
    %1303 = vmatprep.subr.mxu0 0.0
    %1304 = vmatpush1.msra.mxu0 0.0
    %1305 = vmatprep.subr.mxu0 0.0
    %1306 = vmatpush1.msra.mxu0 0.0
    %1307 = vmatprep.subr.mxu0 0.0
    %1308 = vmatpush1.msra.mxu0 0.0
    %1309 = vmatprep.subr.mxu0 0.0
    %1310 = vmatpush1.msra.mxu0 0.0
    %1311 = vmatprep.subr.mxu0 0.0
    %1312 = vmatpush1.msra.mxu0 0.0
    %1313 = vmatprep.subr.mxu0 0.0
    %1314 = vmatpush1.msra.mxu0 0.0
    %1315 = vmatprep.subr.mxu0 0.0
    %1316 = vmatpush1.msra.mxu0 0.0
    %1317 = vmatprep.subr.mxu0 0.0
    %1318 = vmatpush1.msra.mxu0 0.0
    %1319 = vmatprep.subr.mxu0 0.0
    %1320 = vmatpush1.msra.mxu0 0.0
    %1321 = vmatprep.subr.mxu0 0.0
    %1322 = vmatpush1.msra.mxu0 0.0
    %1323 = vmatprep.subr.mxu0 0.0
    %1324 = vmatpush1.msra.mxu0 0.0
    %1325 = vmatprep.subr.mxu0 0.0
    %1326 = vmatpush1.msra.mxu0 0.0
    %1327 = vmatprep.subr.mxu0 0.0
    %1328 = vmatpush1.msra.mxu0 0.0
    %1329 = vmatprep.subr.mxu0 0.0
    %1330 = vmatpush1.msra.mxu0 0.0
    %1331 = vmatprep.subr.mxu0 0.0
    %1332 = vmatpush1.msra.mxu0 0.0
    %1333 = vmatprep.subr.mxu0 0.0
    %1334 = vmatpush1.msra.mxu0 0.0
    %1335 = vmatprep.subr.mxu0 0.0
    %1336 = vmatpush1.msra.mxu0 0.0
    %1337 = vmatprep.subr.mxu0 0.0
    %1338 = vmatpush1.msra.mxu0 0.0
    %1339 = vmatprep.subr.mxu0 0.0
    %1340 = vmatpush1.msra.mxu0 0.0
    %1341 = vmatprep.subr.mxu0 0.0
    %1342 = vmatpush1.msra.mxu0 0.0
    %1343 = vmatprep.subr.mxu0 0.0
    %1344 = vmatpush1.msra.mxu0 0.0
    %1345 = vmatprep.subr.mxu0 0.0
    %1346 = vmatpush1.msra.mxu0 0.0
    %1347 = vmatprep.subr.mxu0 0.0
    %1348 = vmatpush1.msra.mxu0 0.0
    %1349 = vmatprep.subr.mxu0 0.0
    %1350 = vmatpush1.msra.mxu0 0.0
    %1351 = vmatprep.subr.mxu0 0.0
    %1352 = vmatpush1.msra.mxu0 0.0
    %1353 = vmatprep.subr.mxu0 0.0
    %1354 = vmatpush1.msra.mxu0 0.0
    %1355 = vmatprep.mubr.f32.mxu0 0.0
    %1356 = vmatmul.mubr.f32.gmra.mrb[0].mxu0 %v1129
    %v1357 = vpop.f32.mrb[0].mxu0
    %v1358 = vadd.f32 %v393, %v1357
    %v1359 = vpop.f32.mrb[0].mxu0
    %1360 = vdwg.mxu0
    %v1362 = vrot.slane %v1358, 2
    %v1364 = vmul.f32 %v1210, %v1362
    %v1365 = vadd.f32 %v355, %v1364
    %v1366 = vtanh.pop %v1365
    %v1367 = vsub.f32 1.0, %v1290
    %v1368 = vmul.f32 %v1367, %v1366
    %v1369 = vrot.slane %v1124, 6
    %v1371 = vmul.f32 %v1290, %v1369
    %v1372 = vadd.f32 %v1368, %v1371
    %vm1373 = vcmask 261126
    %1374 = vst.msk [vmem:[#allocation2] sm:$0xc0] %vm1373, %v1372
    %v1376 = vrot.slane %v1372, 6
    %v1377 = vsel %vm395, %v1376, 0
    %1379 = vmatprep.subr.mxu0 0.0
    %1380 = vmatpush1.msra.mxu0 %v373
    %1381 = vmatprep.subr.mxu0 0.0
    %1382 = vmatpush1.msra.mxu0 %v374
    %1383 = vmatprep.subr.mxu0 0.0
    %1384 = vmatpush1.msra.mxu0 %v375
    %1385 = vmatprep.subr.mxu0 0.0
    %1386 = vmatpush1.msra.mxu0 %v376
    %1387 = vmatprep.subr.mxu0 0.0
    %1388 = vmatpush1.msra.mxu0 0.0
    %1389 = vmatprep.subr.mxu0 0.0
    %1390 = vmatpush1.msra.mxu0 0.0
    %1391 = vmatprep.subr.mxu0 0.0
    %1392 = vmatpush1.msra.mxu0 0.0
    %1393 = vmatprep.subr.mxu0 0.0
    %1394 = vmatpush1.msra.mxu0 0.0
    %1395 = vmatprep.subr.mxu0 0.0
    %1396 = vmatpush1.msra.mxu0 0.0
    %1397 = vmatprep.subr.mxu0 0.0
    %1398 = vmatpush1.msra.mxu0 0.0
    %1399 = vmatprep.subr.mxu0 0.0
    %1400 = vmatpush1.msra.mxu0 0.0
    %1401 = vmatprep.subr.mxu0 0.0
    %1402 = vmatpush1.msra.mxu0 0.0
    %1403 = vmatprep.subr.mxu0 0.0
    %1404 = vmatpush1.msra.mxu0 0.0
    %1405 = vmatprep.subr.mxu0 0.0
    %1406 = vmatpush1.msra.mxu0 0.0
    %1407 = vmatprep.subr.mxu0 0.0
    %1408 = vmatpush1.msra.mxu0 0.0
    %1409 = vmatprep.subr.mxu0 0.0
    %1410 = vmatpush1.msra.mxu0 0.0
    %1411 = vmatprep.subr.mxu0 0.0
    %1412 = vmatpush1.msra.mxu0 0.0
    %1413 = vmatprep.subr.mxu0 0.0
    %1414 = vmatpush1.msra.mxu0 0.0
    %1415 = vmatprep.subr.mxu0 0.0
    %1416 = vmatpush1.msra.mxu0 0.0
    %1417 = vmatprep.subr.mxu0 0.0
    %1418 = vmatpush1.msra.mxu0 0.0
    %1419 = vmatprep.subr.mxu0 0.0
    %1420 = vmatpush1.msra.mxu0 0.0
    %1421 = vmatprep.subr.mxu0 0.0
    %1422 = vmatpush1.msra.mxu0 0.0
    %1423 = vmatprep.subr.mxu0 0.0
    %1424 = vmatpush1.msra.mxu0 0.0
    %1425 = vmatprep.subr.mxu0 0.0
    %1426 = vmatpush1.msra.mxu0 0.0
    %1427 = vmatprep.subr.mxu0 0.0
    %1428 = vmatpush1.msra.mxu0 0.0
    %1429 = vmatprep.subr.mxu0 0.0
    %1430 = vmatpush1.msra.mxu0 0.0
    %1431 = vmatprep.subr.mxu0 0.0
    %1432 = vmatpush1.msra.mxu0 0.0
    %1433 = vmatprep.subr.mxu0 0.0
    %1434 = vmatpush1.msra.mxu0 0.0
    %1435 = vmatprep.subr.mxu0 0.0
    %1436 = vmatpush1.msra.mxu0 0.0
    %1437 = vmatprep.subr.mxu0 0.0
    %1438 = vmatpush1.msra.mxu0 0.0
    %1439 = vmatprep.subr.mxu0 0.0
    %1440 = vmatpush1.msra.mxu0 0.0
    %1441 = vmatprep.subr.mxu0 0.0
    %1442 = vmatpush1.msra.mxu0 0.0
    %1443 = vmatprep.mubr.f32.mxu0 0.0
    %1444 = vmatmul.mubr.f32.gmra.mrb[0].mxu0 %v1377
    %v1445 = vpop.f32.mrb[0].mxu0
    %v1446 = vadd.f32 0.0, %v1445
    %v1447 = vpop.f32.mrb[0].mxu0
    %1448 = vdwg.mxu0
    %v1449 = vadd.f32 %v170, %v1446
    %v1450 = vxor.u32 %v1449, 2147483648
    %v1451 = vmul.f32 %v1450, 1.442695
    %v1452 = vpow.pop %v1451
    %v1453 = vadd.f32 %v1452, 1.0
    %v1454 = vrcp.pop %v1453
    %v1455 = vmul.f32 1.0, %v1454
    %1456 = vmatprep.subr.mxu0 0.0
    %1457 = vmatpush1.msra.mxu0 %v378
    %1458 = vmatprep.subr.mxu0 0.0
    %1459 = vmatpush1.msra.mxu0 %v379
    %1460 = vmatprep.subr.mxu0 0.0
    %1461 = vmatpush1.msra.mxu0 %v380
    %1462 = vmatprep.subr.mxu0 0.0
    %1463 = vmatpush1.msra.mxu0 %v381
    %1464 = vmatprep.subr.mxu0 0.0
    %1465 = vmatpush1.msra.mxu0 0.0
    %1466 = vmatprep.subr.mxu0 0.0
    %1467 = vmatpush1.msra.mxu0 0.0
    %1468 = vmatprep.subr.mxu0 0.0
    %1469 = vmatpush1.msra.mxu0 0.0
    %1470 = vmatprep.subr.mxu0 0.0
    %1471 = vmatpush1.msra.mxu0 0.0
    %1472 = vmatprep.subr.mxu0 0.0
    %1473 = vmatpush1.msra.mxu0 0.0
    %1474 = vmatprep.subr.mxu0 0.0
    %1475 = vmatpush1.msra.mxu0 0.0
    %1476 = vmatprep.subr.mxu0 0.0
    %1477 = vmatpush1.msra.mxu0 0.0
    %1478 = vmatprep.subr.mxu0 0.0
    %1479 = vmatpush1.msra.mxu0 0.0
    %1480 = vmatprep.subr.mxu0 0.0
    %1481 = vmatpush1.msra.mxu0 0.0
    %1482 = vmatprep.subr.mxu0 0.0
    %1483 = vmatpush1.msra.mxu0 0.0
    %1484 = vmatprep.subr.mxu0 0.0
    %1485 = vmatpush1.msra.mxu0 0.0
    %1486 = vmatprep.subr.mxu0 0.0
    %1487 = vmatpush1.msra.mxu0 0.0
    %1488 = vmatprep.subr.mxu0 0.0
    %1489 = vmatpush1.msra.mxu0 0.0
    %1490 = vmatprep.subr.mxu0 0.0
    %1491 = vmatpush1.msra.mxu0 0.0
    %1492 = vmatprep.subr.mxu0 0.0
    %1493 = vmatpush1.msra.mxu0 0.0
    %1494 = vmatprep.subr.mxu0 0.0
    %1495 = vmatpush1.msra.mxu0 0.0
    %1496 = vmatprep.subr.mxu0 0.0
    %1497 = vmatpush1.msra.mxu0 0.0
    %1498 = vmatprep.subr.mxu0 0.0
    %1499 = vmatpush1.msra.mxu0 0.0
    %1500 = vmatprep.subr.mxu0 0.0
    %1501 = vmatpush1.msra.mxu0 0.0
    %1502 = vmatprep.subr.mxu0 0.0
    %1503 = vmatpush1.msra.mxu0 0.0
    %1504 = vmatprep.subr.mxu0 0.0
    %1505 = vmatpush1.msra.mxu0 0.0
    %1506 = vmatprep.subr.mxu0 0.0
    %1507 = vmatpush1.msra.mxu0 0.0
    %1508 = vmatprep.subr.mxu0 0.0
    %1509 = vmatpush1.msra.mxu0 0.0
    %1510 = vmatprep.subr.mxu0 0.0
    %1511 = vmatpush1.msra.mxu0 0.0
    %1512 = vmatprep.subr.mxu0 0.0
    %1513 = vmatpush1.msra.mxu0 0.0
    %1514 = vmatprep.subr.mxu0 0.0
    %1515 = vmatpush1.msra.mxu0 0.0
    %1516 = vmatprep.subr.mxu0 0.0
    %1517 = vmatpush1.msra.mxu0 0.0
    %1518 = vmatprep.subr.mxu0 0.0
    %1519 = vmatpush1.msra.mxu0 0.0
    %1520 = vmatprep.mubr.f32.mxu0 0.0
    %1521 = vmatmul.mubr.f32.gmra.mrb[0].mxu0 %v1377
    %v1522 = vpop.f32.mrb[0].mxu0
    %v1523 = vadd.f32 0.0, %v1522
    %v1524 = vpop.f32.mrb[0].mxu0
    %1525 = vdwg.mxu0
    %v1526 = vadd.f32 %v265, %v1523
    %v1527 = vxor.u32 %v1526, 2147483648
    %v1528 = vmul.f32 %v1527, 1.442695
    %v1529 = vpow.pop %v1528
    %v1530 = vadd.f32 %v1529, 1.0
    %v1531 = vrcp.pop %v1530
    %v1532 = vmul.f32 1.0, %v1531
    %1533 = vmatprep.subr.mxu0 0.0
    %1534 = vmatpush1.msra.mxu0 %v383
    %1535 = vmatprep.subr.mxu0 0.0
    %1536 = vmatpush1.msra.mxu0 %v384
    %1537 = vmatprep.subr.mxu0 0.0
    %1538 = vmatpush1.msra.mxu0 %v385
    %1539 = vmatprep.subr.mxu0 0.0
    %1540 = vmatpush1.msra.mxu0 %v386
    %1541 = vmatprep.subr.mxu0 0.0
    %1542 = vmatpush1.msra.mxu0 0.0
    %1543 = vmatprep.subr.mxu0 0.0
    %1544 = vmatpush1.msra.mxu0 0.0
    %1545 = vmatprep.subr.mxu0 0.0
    %1546 = vmatpush1.msra.mxu0 0.0
    %1547 = vmatprep.subr.mxu0 0.0
    %1548 = vmatpush1.msra.mxu0 0.0
    %1549 = vmatprep.subr.mxu0 0.0
    %1550 = vmatpush1.msra.mxu0 0.0
    %1551 = vmatprep.subr.mxu0 0.0
    %1552 = vmatpush1.msra.mxu0 0.0
    %1553 = vmatprep.subr.mxu0 0.0
    %1554 = vmatpush1.msra.mxu0 0.0
    %1555 = vmatprep.subr.mxu0 0.0
    %1556 = vmatpush1.msra.mxu0 0.0
    %1557 = vmatprep.subr.mxu0 0.0
    %1558 = vmatpush1.msra.mxu0 0.0
    %1559 = vmatprep.subr.mxu0 0.0
    %1560 = vmatpush1.msra.mxu0 0.0
    %1561 = vmatprep.subr.mxu0 0.0
    %1562 = vmatpush1.msra.mxu0 0.0
    %1563 = vmatprep.subr.mxu0 0.0
    %1564 = vmatpush1.msra.mxu0 0.0
    %1565 = vmatprep.subr.mxu0 0.0
    %1566 = vmatpush1.msra.mxu0 0.0
    %1567 = vmatprep.subr.mxu0 0.0
    %1568 = vmatpush1.msra.mxu0 0.0
    %1569 = vmatprep.subr.mxu0 0.0
    %1570 = vmatpush1.msra.mxu0 0.0
    %1571 = vmatprep.subr.mxu0 0.0
    %1572 = vmatpush1.msra.mxu0 0.0
    %1573 = vmatprep.subr.mxu0 0.0
    %1574 = vmatpush1.msra.mxu0 0.0
    %1575 = vmatprep.subr.mxu0 0.0
    %1576 = vmatpush1.msra.mxu0 0.0
    %1577 = vmatprep.subr.mxu0 0.0
    %1578 = vmatpush1.msra.mxu0 0.0
    %1579 = vmatprep.subr.mxu0 0.0
    %1580 = vmatpush1.msra.mxu0 0.0
    %1581 = vmatprep.subr.mxu0 0.0
    %1582 = vmatpush1.msra.mxu0 0.0
    %1583 = vmatprep.subr.mxu0 0.0
    %1584 = vmatpush1.msra.mxu0 0.0
    %1585 = vmatprep.subr.mxu0 0.0
    %1586 = vmatpush1.msra.mxu0 0.0
    %1587 = vmatprep.subr.mxu0 0.0
    %1588 = vmatpush1.msra.mxu0 0.0
    %1589 = vmatprep.subr.mxu0 0.0
    %1590 = vmatpush1.msra.mxu0 0.0
    %1591 = vmatprep.subr.mxu0 0.0
    %1592 = vmatpush1.msra.mxu0 0.0
    %1593 = vmatprep.subr.mxu0 0.0
    %1594 = vmatpush1.msra.mxu0 0.0
    %1595 = vmatprep.subr.mxu0 0.0
    %1596 = vmatpush1.msra.mxu0 0.0
    %1597 = vmatprep.mubr.f32.mxu0 0.0
    %1598 = vmatmul.mubr.f32.gmra.mrb[0].mxu0 %v1377
    %v1599 = vpop.f32.mrb[0].mxu0
    %v1600 = vadd.f32 %v393, %v1599
    %v1601 = vpop.f32.mrb[0].mxu0
    %1602 = vdwg.mxu0
    %v1603 = vmul.f32 %v1455, %v1600
    %v1604 = vadd.f32 %v360, %v1603
    %v1605 = vtanh.pop %v1604
    %v1606 = vsub.f32 1.0, %v1532
    %v1607 = vmul.f32 %v1606, %v1605
    %v1609 = vmul.f32 %v1532, %v1376
    %v1610 = vadd.f32 %v1607, %v1609
    %1611 = vst.msk [vmem:[#allocation2 + $0x8] sm:$0x3] %vm630, %v1610
    %v1613 = vsel %vm395, %v1610, 0
    %1615 = vmatprep.subr.mxu0 0.0
    %1616 = vmatpush1.msra.mxu0 %v373
    %1617 = vmatprep.subr.mxu0 0.0
    %1618 = vmatpush1.msra.mxu0 %v374
    %1619 = vmatprep.subr.mxu0 0.0
    %1620 = vmatpush1.msra.mxu0 %v375
    %1621 = vmatprep.subr.mxu0 0.0
    %1622 = vmatpush1.msra.mxu0 %v376
    %1623 = vmatprep.subr.mxu0 0.0
    %1624 = vmatpush1.msra.mxu0 0.0
    %1625 = vmatprep.subr.mxu0 0.0
    %1626 = vmatpush1.msra.mxu0 0.0
    %1627 = vmatprep.subr.mxu0 0.0
    %1628 = vmatpush1.msra.mxu0 0.0
    %1629 = vmatprep.subr.mxu0 0.0
    %1630 = vmatpush1.msra.mxu0 0.0
    %1631 = vmatprep.subr.mxu0 0.0
    %1632 = vmatpush1.msra.mxu0 0.0
    %1633 = vmatprep.subr.mxu0 0.0
    %1634 = vmatpush1.msra.mxu0 0.0
    %1635 = vmatprep.subr.mxu0 0.0
    %1636 = vmatpush1.msra.mxu0 0.0
    %1637 = vmatprep.subr.mxu0 0.0
    %1638 = vmatpush1.msra.mxu0 0.0
    %1639 = vmatprep.subr.mxu0 0.0
    %1640 = vmatpush1.msra.mxu0 0.0
    %1641 = vmatprep.subr.mxu0 0.0
    %1642 = vmatpush1.msra.mxu0 0.0
    %1643 = vmatprep.subr.mxu0 0.0
    %1644 = vmatpush1.msra.mxu0 0.0
    %1645 = vmatprep.subr.mxu0 0.0
    %1646 = vmatpush1.msra.mxu0 0.0
    %1647 = vmatprep.subr.mxu0 0.0
    %1648 = vmatpush1.msra.mxu0 0.0
    %1649 = vmatprep.subr.mxu0 0.0
    %1650 = vmatpush1.msra.mxu0 0.0
    %1651 = vmatprep.subr.mxu0 0.0
    %1652 = vmatpush1.msra.mxu0 0.0
    %1653 = vmatprep.subr.mxu0 0.0
    %1654 = vmatpush1.msra.mxu0 0.0
    %1655 = vmatprep.subr.mxu0 0.0
    %1656 = vmatpush1.msra.mxu0 0.0
    %1657 = vmatprep.subr.mxu0 0.0
    %1658 = vmatpush1.msra.mxu0 0.0
    %1659 = vmatprep.subr.mxu0 0.0
    %1660 = vmatpush1.msra.mxu0 0.0
    %1661 = vmatprep.subr.mxu0 0.0
    %1662 = vmatpush1.msra.mxu0 0.0
    %1663 = vmatprep.subr.mxu0 0.0
    %1664 = vmatpush1.msra.mxu0 0.0
    %1665 = vmatprep.subr.mxu0 0.0
    %1666 = vmatpush1.msra.mxu0 0.0
    %1667 = vmatprep.subr.mxu0 0.0
    %1668 = vmatpush1.msra.mxu0 0.0
    %1669 = vmatprep.subr.mxu0 0.0
    %1670 = vmatpush1.msra.mxu0 0.0
    %1671 = vmatprep.subr.mxu0 0.0
    %1672 = vmatpush1.msra.mxu0 0.0
    %1673 = vmatprep.subr.mxu0 0.0
    %1674 = vmatpush1.msra.mxu0 0.0
    %1675 = vmatprep.subr.mxu0 0.0
    %1676 = vmatpush1.msra.mxu0 0.0
    %1677 = vmatprep.subr.mxu0 0.0
    %1678 = vmatpush1.msra.mxu0 0.0
    %1679 = vmatprep.mubr.f32.mxu0 0.0
    %1680 = vmatmul.mubr.f32.gmra.mrb[0].mxu0 %v1613
    %v1681 = vpop.f32.mrb[0].mxu0
    %v1682 = vadd.f32 0.0, %v1681
    %v1683 = vpop.f32.mrb[0].mxu0
    %1684 = vdwg.mxu0
    %v1686 = vrot.slane %v1682, 6
    %v1688 = vadd.f32 %v170, %v1686
    %v1689 = vxor.u32 %v1688, 2147483648
    %v1690 = vmul.f32 %v1689, 1.442695
    %v1691 = vpow.pop %v1690
    %v1692 = vadd.f32 %v1691, 1.0
    %v1693 = vrcp.pop %v1692
    %v1694 = vmul.f32 1.0, %v1693
    %1695 = vmatprep.subr.mxu0 0.0
    %1696 = vmatpush1.msra.mxu0 %v378
    %1697 = vmatprep.subr.mxu0 0.0
    %1698 = vmatpush1.msra.mxu0 %v379
    %1699 = vmatprep.subr.mxu0 0.0
    %1700 = vmatpush1.msra.mxu0 %v380
    %1701 = vmatprep.subr.mxu0 0.0
    %1702 = vmatpush1.msra.mxu0 %v381
    %1703 = vmatprep.subr.mxu0 0.0
    %1704 = vmatpush1.msra.mxu0 0.0
    %1705 = vmatprep.subr.mxu0 0.0
    %1706 = vmatpush1.msra.mxu0 0.0
    %1707 = vmatprep.subr.mxu0 0.0
    %1708 = vmatpush1.msra.mxu0 0.0
    %1709 = vmatprep.subr.mxu0 0.0
    %1710 = vmatpush1.msra.mxu0 0.0
    %1711 = vmatprep.subr.mxu0 0.0
    %1712 = vmatpush1.msra.mxu0 0.0
    %1713 = vmatprep.subr.mxu0 0.0
    %1714 = vmatpush1.msra.mxu0 0.0
    %1715 = vmatprep.subr.mxu0 0.0
    %1716 = vmatpush1.msra.mxu0 0.0
    %1717 = vmatprep.subr.mxu0 0.0
    %1718 = vmatpush1.msra.mxu0 0.0
    %1719 = vmatprep.subr.mxu0 0.0
    %1720 = vmatpush1.msra.mxu0 0.0
    %1721 = vmatprep.subr.mxu0 0.0
    %1722 = vmatpush1.msra.mxu0 0.0
    %1723 = vmatprep.subr.mxu0 0.0
    %1724 = vmatpush1.msra.mxu0 0.0
    %1725 = vmatprep.subr.mxu0 0.0
    %1726 = vmatpush1.msra.mxu0 0.0
    %1727 = vmatprep.subr.mxu0 0.0
    %1728 = vmatpush1.msra.mxu0 0.0
    %1729 = vmatprep.subr.mxu0 0.0
    %1730 = vmatpush1.msra.mxu0 0.0
    %1731 = vmatprep.subr.mxu0 0.0
    %1732 = vmatpush1.msra.mxu0 0.0
    %1733 = vmatprep.subr.mxu0 0.0
    %1734 = vmatpush1.msra.mxu0 0.0
    %1735 = vmatprep.subr.mxu0 0.0
    %1736 = vmatpush1.msra.mxu0 0.0
    %1737 = vmatprep.subr.mxu0 0.0
    %1738 = vmatpush1.msra.mxu0 0.0
    %1739 = vmatprep.subr.mxu0 0.0
    %1740 = vmatpush1.msra.mxu0 0.0
    %1741 = vmatprep.subr.mxu0 0.0
    %1742 = vmatpush1.msra.mxu0 0.0
    %1743 = vmatprep.subr.mxu0 0.0
    %1744 = vmatpush1.msra.mxu0 0.0
    %1745 = vmatprep.subr.mxu0 0.0
    %1746 = vmatpush1.msra.mxu0 0.0
    %1747 = vmatprep.subr.mxu0 0.0
    %1748 = vmatpush1.msra.mxu0 0.0
    %1749 = vmatprep.subr.mxu0 0.0
    %1750 = vmatpush1.msra.mxu0 0.0
    %1751 = vmatprep.subr.mxu0 0.0
    %1752 = vmatpush1.msra.mxu0 0.0
    %1753 = vmatprep.subr.mxu0 0.0
    %1754 = vmatpush1.msra.mxu0 0.0
    %1755 = vmatprep.subr.mxu0 0.0
    %1756 = vmatpush1.msra.mxu0 0.0
    %1757 = vmatprep.subr.mxu0 0.0
    %1758 = vmatpush1.msra.mxu0 0.0
    %1759 = vmatprep.mubr.f32.mxu0 0.0
    %1760 = vmatmul.mubr.f32.gmra.mrb[0].mxu0 %v1613
    %v1761 = vpop.f32.mrb[0].mxu0
    %v1762 = vadd.f32 0.0, %v1761
    %v1763 = vpop.f32.mrb[0].mxu0
    %1764 = vdwg.mxu0
    %v1766 = vrot.slane %v1762, 6
    %v1768 = vadd.f32 %v265, %v1766
    %v1769 = vxor.u32 %v1768, 2147483648
    %v1770 = vmul.f32 %v1769, 1.442695
    %v1771 = vpow.pop %v1770
    %v1772 = vadd.f32 %v1771, 1.0
    %v1773 = vrcp.pop %v1772
    %v1774 = vmul.f32 1.0, %v1773
    %1775 = vmatprep.subr.mxu0 0.0
    %1776 = vmatpush1.msra.mxu0 %v383
    %1777 = vmatprep.subr.mxu0 0.0
    %1778 = vmatpush1.msra.mxu0 %v384
    %1779 = vmatprep.subr.mxu0 0.0
    %1780 = vmatpush1.msra.mxu0 %v385
    %1781 = vmatprep.subr.mxu0 0.0
    %1782 = vmatpush1.msra.mxu0 %v386
    %1783 = vmatprep.subr.mxu0 0.0
    %1784 = vmatpush1.msra.mxu0 0.0
    %1785 = vmatprep.subr.mxu0 0.0
    %1786 = vmatpush1.msra.mxu0 0.0
    %1787 = vmatprep.subr.mxu0 0.0
    %1788 = vmatpush1.msra.mxu0 0.0
    %1789 = vmatprep.subr.mxu0 0.0
    %1790 = vmatpush1.msra.mxu0 0.0
    %1791 = vmatprep.subr.mxu0 0.0
    %1792 = vmatpush1.msra.mxu0 0.0
    %1793 = vmatprep.subr.mxu0 0.0
    %1794 = vmatpush1.msra.mxu0 0.0
    %1795 = vmatprep.subr.mxu0 0.0
    %1796 = vmatpush1.msra.mxu0 0.0
    %1797 = vmatprep.subr.mxu0 0.0
    %1798 = vmatpush1.msra.mxu0 0.0
    %1799 = vmatprep.subr.mxu0 0.0
    %1800 = vmatpush1.msra.mxu0 0.0
    %1801 = vmatprep.subr.mxu0 0.0
    %1802 = vmatpush1.msra.mxu0 0.0
    %1803 = vmatprep.subr.mxu0 0.0
    %1804 = vmatpush1.msra.mxu0 0.0
    %1805 = vmatprep.subr.mxu0 0.0
    %1806 = vmatpush1.msra.mxu0 0.0
    %1807 = vmatprep.subr.mxu0 0.0
    %1808 = vmatpush1.msra.mxu0 0.0
    %1809 = vmatprep.subr.mxu0 0.0
    %1810 = vmatpush1.msra.mxu0 0.0
    %1811 = vmatprep.subr.mxu0 0.0
    %1812 = vmatpush1.msra.mxu0 0.0
    %1813 = vmatprep.subr.mxu0 0.0
    %1814 = vmatpush1.msra.mxu0 0.0
    %1815 = vmatprep.subr.mxu0 0.0
    %1816 = vmatpush1.msra.mxu0 0.0
    %1817 = vmatprep.subr.mxu0 0.0
    %1818 = vmatpush1.msra.mxu0 0.0
    %1819 = vmatprep.subr.mxu0 0.0
    %1820 = vmatpush1.msra.mxu0 0.0
    %1821 = vmatprep.subr.mxu0 0.0
    %1822 = vmatpush1.msra.mxu0 0.0
    %1823 = vmatprep.subr.mxu0 0.0
    %1824 = vmatpush1.msra.mxu0 0.0
    %1825 = vmatprep.subr.mxu0 0.0
    %1826 = vmatpush1.msra.mxu0 0.0
    %1827 = vmatprep.subr.mxu0 0.0
    %1828 = vmatpush1.msra.mxu0 0.0
    %1829 = vmatprep.subr.mxu0 0.0
    %1830 = vmatpush1.msra.mxu0 0.0
    %1831 = vmatprep.subr.mxu0 0.0
    %1832 = vmatpush1.msra.mxu0 0.0
    %1833 = vmatprep.subr.mxu0 0.0
    %1834 = vmatpush1.msra.mxu0 0.0
    %1835 = vmatprep.subr.mxu0 0.0
    %1836 = vmatpush1.msra.mxu0 0.0
    %1837 = vmatprep.subr.mxu0 0.0
    %1838 = vmatpush1.msra.mxu0 0.0
    %1839 = vmatprep.mubr.f32.mxu0 0.0
    %1840 = vmatmul.mubr.f32.gmra.mrb[0].mxu0 %v1613
    %v1841 = vpop.f32.mrb[0].mxu0
    %v1842 = vadd.f32 %v393, %v1841
    %v1843 = vpop.f32.mrb[0].mxu0
    %1844 = vdwg.mxu0
    %v1846 = vrot.slane %v1842, 6
    %v1848 = vmul.f32 %v1694, %v1846
    %v1849 = vadd.f32 %v360, %v1848
    %v1850 = vtanh.pop %v1849
    %v1851 = vsub.f32 1.0, %v1774
    %v1852 = vmul.f32 %v1851, %v1850
    %v1853 = vrot.slane %v1610, 6
    %v1855 = vmul.f32 %v1774, %v1853
    %v1856 = vadd.f32 %v1852, %v1855
    %1857 = vst.msk [vmem:[#allocation2 + $0x8] sm:$0xc] %vm877, %v1856
    %v1859 = vrot.slane %v1856, 2
    %v1860 = vsel %vm395, %v1859, 0
    %1862 = vmatprep.subr.mxu0 0.0
    %1863 = vmatpush1.msra.mxu0 %v373
    %1864 = vmatprep.subr.mxu0 0.0
    %1865 = vmatpush1.msra.mxu0 %v374
    %1866 = vmatprep.subr.mxu0 0.0
    %1867 = vmatpush1.msra.mxu0 %v375
    %1868 = vmatprep.subr.mxu0 0.0
    %1869 = vmatpush1.msra.mxu0 %v376
    %1870 = vmatprep.subr.mxu0 0.0
    %1871 = vmatpush1.msra.mxu0 0.0
    %1872 = vmatprep.subr.mxu0 0.0
    %1873 = vmatpush1.msra.mxu0 0.0
    %1874 = vmatprep.subr.mxu0 0.0
    %1875 = vmatpush1.msra.mxu0 0.0
    %1876 = vmatprep.subr.mxu0 0.0
    %1877 = vmatpush1.msra.mxu0 0.0
    %1878 = vmatprep.subr.mxu0 0.0
    %1879 = vmatpush1.msra.mxu0 0.0
    %1880 = vmatprep.subr.mxu0 0.0
    %1881 = vmatpush1.msra.mxu0 0.0
    %1882 = vmatprep.subr.mxu0 0.0
    %1883 = vmatpush1.msra.mxu0 0.0
    %1884 = vmatprep.subr.mxu0 0.0
    %1885 = vmatpush1.msra.mxu0 0.0
    %1886 = vmatprep.subr.mxu0 0.0
    %1887 = vmatpush1.msra.mxu0 0.0
    %1888 = vmatprep.subr.mxu0 0.0
    %1889 = vmatpush1.msra.mxu0 0.0
    %1890 = vmatprep.subr.mxu0 0.0
    %1891 = vmatpush1.msra.mxu0 0.0
    %1892 = vmatprep.subr.mxu0 0.0
    %1893 = vmatpush1.msra.mxu0 0.0
    %1894 = vmatprep.subr.mxu0 0.0
    %1895 = vmatpush1.msra.mxu0 0.0
    %1896 = vmatprep.subr.mxu0 0.0
    %1897 = vmatpush1.msra.mxu0 0.0
    %1898 = vmatprep.subr.mxu0 0.0
    %1899 = vmatpush1.msra.mxu0 0.0
    %1900 = vmatprep.subr.mxu0 0.0
    %1901 = vmatpush1.msra.mxu0 0.0
    %1902 = vmatprep.subr.mxu0 0.0
    %1903 = vmatpush1.msra.mxu0 0.0
    %1904 = vmatprep.subr.mxu0 0.0
    %1905 = vmatpush1.msra.mxu0 0.0
    %1906 = vmatprep.subr.mxu0 0.0
    %1907 = vmatpush1.msra.mxu0 0.0
    %1908 = vmatprep.subr.mxu0 0.0
    %1909 = vmatpush1.msra.mxu0 0.0
    %1910 = vmatprep.subr.mxu0 0.0
    %1911 = vmatpush1.msra.mxu0 0.0
    %1912 = vmatprep.subr.mxu0 0.0
    %1913 = vmatpush1.msra.mxu0 0.0
    %1914 = vmatprep.subr.mxu0 0.0
    %1915 = vmatpush1.msra.mxu0 0.0
    %1916 = vmatprep.subr.mxu0 0.0
    %1917 = vmatpush1.msra.mxu0 0.0
    %1918 = vmatprep.subr.mxu0 0.0
    %1919 = vmatpush1.msra.mxu0 0.0
    %1920 = vmatprep.subr.mxu0 0.0
    %1921 = vmatpush1.msra.mxu0 0.0
    %1922 = vmatprep.subr.mxu0 0.0
    %1923 = vmatpush1.msra.mxu0 0.0
    %1924 = vmatprep.subr.mxu0 0.0
    %1925 = vmatpush1.msra.mxu0 0.0
    %1926 = vmatprep.mubr.f32.mxu0 0.0
    %1927 = vmatmul.mubr.f32.gmra.mrb[0].mxu0 %v1860
    %v1928 = vpop.f32.mrb[0].mxu0
    %v1929 = vadd.f32 0.0, %v1928
    %v1930 = vpop.f32.mrb[0].mxu0
    %1931 = vdwg.mxu0
    %v1933 = vrot.slane %v1929, 4
    %v1935 = vadd.f32 %v170, %v1933
    %v1936 = vxor.u32 %v1935, 2147483648
    %v1937 = vmul.f32 %v1936, 1.442695
    %v1938 = vpow.pop %v1937
    %v1939 = vadd.f32 %v1938, 1.0
    %v1940 = vrcp.pop %v1939
    %v1941 = vmul.f32 1.0, %v1940
    %1942 = vmatprep.subr.mxu0 0.0
    %1943 = vmatpush1.msra.mxu0 %v378
    %1944 = vmatprep.subr.mxu0 0.0
    %1945 = vmatpush1.msra.mxu0 %v379
    %1946 = vmatprep.subr.mxu0 0.0
    %1947 = vmatpush1.msra.mxu0 %v380
    %1948 = vmatprep.subr.mxu0 0.0
    %1949 = vmatpush1.msra.mxu0 %v381
    %1950 = vmatprep.subr.mxu0 0.0
    %1951 = vmatpush1.msra.mxu0 0.0
    %1952 = vmatprep.subr.mxu0 0.0
    %1953 = vmatpush1.msra.mxu0 0.0
    %1954 = vmatprep.subr.mxu0 0.0
    %1955 = vmatpush1.msra.mxu0 0.0
    %1956 = vmatprep.subr.mxu0 0.0
    %1957 = vmatpush1.msra.mxu0 0.0
    %1958 = vmatprep.subr.mxu0 0.0
    %1959 = vmatpush1.msra.mxu0 0.0
    %1960 = vmatprep.subr.mxu0 0.0
    %1961 = vmatpush1.msra.mxu0 0.0
    %1962 = vmatprep.subr.mxu0 0.0
    %1963 = vmatpush1.msra.mxu0 0.0
    %1964 = vmatprep.subr.mxu0 0.0
    %1965 = vmatpush1.msra.mxu0 0.0
    %1966 = vmatprep.subr.mxu0 0.0
    %1967 = vmatpush1.msra.mxu0 0.0
    %1968 = vmatprep.subr.mxu0 0.0
    %1969 = vmatpush1.msra.mxu0 0.0
    %1970 = vmatprep.subr.mxu0 0.0
    %1971 = vmatpush1.msra.mxu0 0.0
    %1972 = vmatprep.subr.mxu0 0.0
    %1973 = vmatpush1.msra.mxu0 0.0
    %1974 = vmatprep.subr.mxu0 0.0
    %1975 = vmatpush1.msra.mxu0 0.0
    %1976 = vmatprep.subr.mxu0 0.0
    %1977 = vmatpush1.msra.mxu0 0.0
    %1978 = vmatprep.subr.mxu0 0.0
    %1979 = vmatpush1.msra.mxu0 0.0
    %1980 = vmatprep.subr.mxu0 0.0
    %1981 = vmatpush1.msra.mxu0 0.0
    %1982 = vmatprep.subr.mxu0 0.0
    %1983 = vmatpush1.msra.mxu0 0.0
    %1984 = vmatprep.subr.mxu0 0.0
    %1985 = vmatpush1.msra.mxu0 0.0
    %1986 = vmatprep.subr.mxu0 0.0
    %1987 = vmatpush1.msra.mxu0 0.0
    %1988 = vmatprep.subr.mxu0 0.0
    %1989 = vmatpush1.msra.mxu0 0.0
    %1990 = vmatprep.subr.mxu0 0.0
    %1991 = vmatpush1.msra.mxu0 0.0
    %1992 = vmatprep.subr.mxu0 0.0
    %1993 = vmatpush1.msra.mxu0 0.0
    %1994 = vmatprep.subr.mxu0 0.0
    %1995 = vmatpush1.msra.mxu0 0.0
    %1996 = vmatprep.subr.mxu0 0.0
    %1997 = vmatpush1.msra.mxu0 0.0
    %1998 = vmatprep.subr.mxu0 0.0
    %1999 = vmatpush1.msra.mxu0 0.0
    %2000 = vmatprep.subr.mxu0 0.0
    %2001 = vmatpush1.msra.mxu0 0.0
    %2002 = vmatprep.subr.mxu0 0.0
    %2003 = vmatpush1.msra.mxu0 0.0
    %2004 = vmatprep.subr.mxu0 0.0
    %2005 = vmatpush1.msra.mxu0 0.0
    %2006 = vmatprep.mubr.f32.mxu0 0.0
    %2007 = vmatmul.mubr.f32.gmra.mrb[0].mxu0 %v1860
    %v2008 = vpop.f32.mrb[0].mxu0
    %v2009 = vadd.f32 0.0, %v2008
    %v2010 = vpop.f32.mrb[0].mxu0
    %2011 = vdwg.mxu0
    %v2013 = vrot.slane %v2009, 4
    %v2015 = vadd.f32 %v265, %v2013
    %v2016 = vxor.u32 %v2015, 2147483648
    %v2017 = vmul.f32 %v2016, 1.442695
    %v2018 = vpow.pop %v2017
    %v2019 = vadd.f32 %v2018, 1.0
    %v2020 = vrcp.pop %v2019
    %v2021 = vmul.f32 1.0, %v2020
    %2022 = vmatprep.subr.mxu0 0.0
    %2023 = vmatpush1.msra.mxu0 %v383
    %2024 = vmatprep.subr.mxu0 0.0
    %2025 = vmatpush1.msra.mxu0 %v384
    %2026 = vmatprep.subr.mxu0 0.0
    %2027 = vmatpush1.msra.mxu0 %v385
    %2028 = vmatprep.subr.mxu0 0.0
    %2029 = vmatpush1.msra.mxu0 %v386
    %2030 = vmatprep.subr.mxu0 0.0
    %2031 = vmatpush1.msra.mxu0 0.0
    %2032 = vmatprep.subr.mxu0 0.0
    %2033 = vmatpush1.msra.mxu0 0.0
    %2034 = vmatprep.subr.mxu0 0.0
    %2035 = vmatpush1.msra.mxu0 0.0
    %2036 = vmatprep.subr.mxu0 0.0
    %2037 = vmatpush1.msra.mxu0 0.0
    %2038 = vmatprep.subr.mxu0 0.0
    %2039 = vmatpush1.msra.mxu0 0.0
    %2040 = vmatprep.subr.mxu0 0.0
    %2041 = vmatpush1.msra.mxu0 0.0
    %2042 = vmatprep.subr.mxu0 0.0
    %2043 = vmatpush1.msra.mxu0 0.0
    %2044 = vmatprep.subr.mxu0 0.0
    %2045 = vmatpush1.msra.mxu0 0.0
    %2046 = vmatprep.subr.mxu0 0.0
    %2047 = vmatpush1.msra.mxu0 0.0
    %2048 = vmatprep.subr.mxu0 0.0
    %2049 = vmatpush1.msra.mxu0 0.0
    %2050 = vmatprep.subr.mxu0 0.0
    %2051 = vmatpush1.msra.mxu0 0.0
    %2052 = vmatprep.subr.mxu0 0.0
    %2053 = vmatpush1.msra.mxu0 0.0
    %2054 = vmatprep.subr.mxu0 0.0
    %2055 = vmatpush1.msra.mxu0 0.0
    %2056 = vmatprep.subr.mxu0 0.0
    %2057 = vmatpush1.msra.mxu0 0.0
    %2058 = vmatprep.subr.mxu0 0.0
    %2059 = vmatpush1.msra.mxu0 0.0
    %2060 = vmatprep.subr.mxu0 0.0
    %2061 = vmatpush1.msra.mxu0 0.0
    %2062 = vmatprep.subr.mxu0 0.0
    %2063 = vmatpush1.msra.mxu0 0.0
    %2064 = vmatprep.subr.mxu0 0.0
    %2065 = vmatpush1.msra.mxu0 0.0
    %2066 = vmatprep.subr.mxu0 0.0
    %2067 = vmatpush1.msra.mxu0 0.0
    %2068 = vmatprep.subr.mxu0 0.0
    %2069 = vmatpush1.msra.mxu0 0.0
    %2070 = vmatprep.subr.mxu0 0.0
    %2071 = vmatpush1.msra.mxu0 0.0
    %2072 = vmatprep.subr.mxu0 0.0
    %2073 = vmatpush1.msra.mxu0 0.0
    %2074 = vmatprep.subr.mxu0 0.0
    %2075 = vmatpush1.msra.mxu0 0.0
    %2076 = vmatprep.subr.mxu0 0.0
    %2077 = vmatpush1.msra.mxu0 0.0
    %2078 = vmatprep.subr.mxu0 0.0
    %2079 = vmatpush1.msra.mxu0 0.0
    %2080 = vmatprep.subr.mxu0 0.0
    %2081 = vmatpush1.msra.mxu0 0.0
    %2082 = vmatprep.subr.mxu0 0.0
    %2083 = vmatpush1.msra.mxu0 0.0
    %2084 = vmatprep.subr.mxu0 0.0
    %2085 = vmatpush1.msra.mxu0 0.0
    %2086 = vmatprep.mubr.f32.mxu0 0.0
    %2087 = vmatmul.mubr.f32.gmra.mrb[0].mxu0 %v1860
    %v2088 = vpop.f32.mrb[0].mxu0
    %v2089 = vadd.f32 %v393, %v2088
    %v2090 = vpop.f32.mrb[0].mxu0
    %2091 = vdwg.mxu0
    %v2093 = vrot.slane %v2089, 4
    %v2095 = vmul.f32 %v1941, %v2093
    %v2096 = vadd.f32 %v360, %v2095
    %v2097 = vtanh.pop %v2096
    %v2098 = vsub.f32 1.0, %v2021
    %v2099 = vmul.f32 %v2098, %v2097
    %v2100 = vrot.slane %v1856, 6
    %v2102 = vmul.f32 %v2021, %v2100
    %v2103 = vadd.f32 %v2099, %v2102
    %2104 = vst.msk [vmem:[#allocation2 + $0x8] sm:$0x30] %vm1125, %v2103
    %v2106 = vrot.slane %v2103, 4
    %v2107 = vsel %vm395, %v2106, 0
    %2109 = vmatprep.subr.mxu0 0.0
    %2110 = vmatpush1.msra.mxu0 %v373
    %2111 = vmatprep.subr.mxu0 0.0
    %2112 = vmatpush1.msra.mxu0 %v374
    %2113 = vmatprep.subr.mxu0 0.0
    %2114 = vmatpush1.msra.mxu0 %v375
    %2115 = vmatprep.subr.mxu0 0.0
    %2116 = vmatpush1.msra.mxu0 %v376
    %2117 = vmatprep.subr.mxu0 0.0
    %2118 = vmatpush1.msra.mxu0 0.0
    %2119 = vmatprep.subr.mxu0 0.0
    %2120 = vmatpush1.msra.mxu0 0.0
    %2121 = vmatprep.subr.mxu0 0.0
    %2122 = vmatpush1.msra.mxu0 0.0
    %2123 = vmatprep.subr.mxu0 0.0
    %2124 = vmatpush1.msra.mxu0 0.0
    %2125 = vmatprep.subr.mxu0 0.0
    %2126 = vmatpush1.msra.mxu0 0.0
    %2127 = vmatprep.subr.mxu0 0.0
    %2128 = vmatpush1.msra.mxu0 0.0
    %2129 = vmatprep.subr.mxu0 0.0
    %2130 = vmatpush1.msra.mxu0 0.0
    %2131 = vmatprep.subr.mxu0 0.0
    %2132 = vmatpush1.msra.mxu0 0.0
    %2133 = vmatprep.subr.mxu0 0.0
    %2134 = vmatpush1.msra.mxu0 0.0
    %2135 = vmatprep.subr.mxu0 0.0
    %2136 = vmatpush1.msra.mxu0 0.0
    %2137 = vmatprep.subr.mxu0 0.0
    %2138 = vmatpush1.msra.mxu0 0.0
    %2139 = vmatprep.subr.mxu0 0.0
    %2140 = vmatpush1.msra.mxu0 0.0
    %2141 = vmatprep.subr.mxu0 0.0
    %2142 = vmatpush1.msra.mxu0 0.0
    %2143 = vmatprep.subr.mxu0 0.0
    %2144 = vmatpush1.msra.mxu0 0.0
    %2145 = vmatprep.subr.mxu0 0.0
    %2146 = vmatpush1.msra.mxu0 0.0
    %2147 = vmatprep.subr.mxu0 0.0
    %2148 = vmatpush1.msra.mxu0 0.0
    %2149 = vmatprep.subr.mxu0 0.0
    %2150 = vmatpush1.msra.mxu0 0.0
    %2151 = vmatprep.subr.mxu0 0.0
    %2152 = vmatpush1.msra.mxu0 0.0
    %2153 = vmatprep.subr.mxu0 0.0
    %2154 = vmatpush1.msra.mxu0 0.0
    %2155 = vmatprep.subr.mxu0 0.0
    %2156 = vmatpush1.msra.mxu0 0.0
    %2157 = vmatprep.subr.mxu0 0.0
    %2158 = vmatpush1.msra.mxu0 0.0
    %2159 = vmatprep.subr.mxu0 0.0
    %2160 = vmatpush1.msra.mxu0 0.0
    %2161 = vmatprep.subr.mxu0 0.0
    %2162 = vmatpush1.msra.mxu0 0.0
    %2163 = vmatprep.subr.mxu0 0.0
    %2164 = vmatpush1.msra.mxu0 0.0
    %2165 = vmatprep.subr.mxu0 0.0
    %2166 = vmatpush1.msra.mxu0 0.0
    %2167 = vmatprep.subr.mxu0 0.0
    %2168 = vmatpush1.msra.mxu0 0.0
    %2169 = vmatprep.subr.mxu0 0.0
    %2170 = vmatpush1.msra.mxu0 0.0
    %2171 = vmatprep.subr.mxu0 0.0
    %2172 = vmatpush1.msra.mxu0 0.0
    %2173 = vmatprep.mubr.f32.mxu0 0.0
    %2174 = vmatmul.mubr.f32.gmra.mrb[0].mxu0 %v2107
    %v2175 = vpop.f32.mrb[0].mxu0
    %v2176 = vadd.f32 0.0, %v2175
    %v2177 = vpop.f32.mrb[0].mxu0
    %2178 = vdwg.mxu0
    %v2180 = vrot.slane %v2176, 2
    %v2182 = vadd.f32 %v170, %v2180
    %v2183 = vxor.u32 %v2182, 2147483648
    %v2184 = vmul.f32 %v2183, 1.442695
    %v2185 = vpow.pop %v2184
    %v2186 = vadd.f32 %v2185, 1.0
    %v2187 = vrcp.pop %v2186
    %v2188 = vmul.f32 1.0, %v2187
    %2189 = vmatprep.subr.mxu0 0.0
    %2190 = vmatpush1.msra.mxu0 %v378
    %2191 = vmatprep.subr.mxu0 0.0
    %2192 = vmatpush1.msra.mxu0 %v379
    %2193 = vmatprep.subr.mxu0 0.0
    %2194 = vmatpush1.msra.mxu0 %v380
    %2195 = vmatprep.subr.mxu0 0.0
    %2196 = vmatpush1.msra.mxu0 %v381
    %2197 = vmatprep.subr.mxu0 0.0
    %2198 = vmatpush1.msra.mxu0 0.0
    %2199 = vmatprep.subr.mxu0 0.0
    %2200 = vmatpush1.msra.mxu0 0.0
    %2201 = vmatprep.subr.mxu0 0.0
    %2202 = vmatpush1.msra.mxu0 0.0
    %2203 = vmatprep.subr.mxu0 0.0
    %2204 = vmatpush1.msra.mxu0 0.0
    %2205 = vmatprep.subr.mxu0 0.0
    %2206 = vmatpush1.msra.mxu0 0.0
    %2207 = vmatprep.subr.mxu0 0.0
    %2208 = vmatpush1.msra.mxu0 0.0
    %2209 = vmatprep.subr.mxu0 0.0
    %2210 = vmatpush1.msra.mxu0 0.0
    %2211 = vmatprep.subr.mxu0 0.0
    %2212 = vmatpush1.msra.mxu0 0.0
    %2213 = vmatprep.subr.mxu0 0.0
    %2214 = vmatpush1.msra.mxu0 0.0
    %2215 = vmatprep.subr.mxu0 0.0
    %2216 = vmatpush1.msra.mxu0 0.0
    %2217 = vmatprep.subr.mxu0 0.0
    %2218 = vmatpush1.msra.mxu0 0.0
    %2219 = vmatprep.subr.mxu0 0.0
    %2220 = vmatpush1.msra.mxu0 0.0
    %2221 = vmatprep.subr.mxu0 0.0
    %2222 = vmatpush1.msra.mxu0 0.0
    %2223 = vmatprep.subr.mxu0 0.0
    %2224 = vmatpush1.msra.mxu0 0.0
    %2225 = vmatprep.subr.mxu0 0.0
    %2226 = vmatpush1.msra.mxu0 0.0
    %2227 = vmatprep.subr.mxu0 0.0
    %2228 = vmatpush1.msra.mxu0 0.0
    %2229 = vmatprep.subr.mxu0 0.0
    %2230 = vmatpush1.msra.mxu0 0.0
    %2231 = vmatprep.subr.mxu0 0.0
    %2232 = vmatpush1.msra.mxu0 0.0
    %2233 = vmatprep.subr.mxu0 0.0
    %2234 = vmatpush1.msra.mxu0 0.0
    %2235 = vmatprep.subr.mxu0 0.0
    %2236 = vmatpush1.msra.mxu0 0.0
    %2237 = vmatprep.subr.mxu0 0.0
    %2238 = vmatpush1.msra.mxu0 0.0
    %2239 = vmatprep.subr.mxu0 0.0
    %2240 = vmatpush1.msra.mxu0 0.0
    %2241 = vmatprep.subr.mxu0 0.0
    %2242 = vmatpush1.msra.mxu0 0.0
    %2243 = vmatprep.subr.mxu0 0.0
    %2244 = vmatpush1.msra.mxu0 0.0
    %2245 = vmatprep.subr.mxu0 0.0
    %2246 = vmatpush1.msra.mxu0 0.0
    %2247 = vmatprep.subr.mxu0 0.0
    %2248 = vmatpush1.msra.mxu0 0.0
    %2249 = vmatprep.subr.mxu0 0.0
    %2250 = vmatpush1.msra.mxu0 0.0
    %2251 = vmatprep.subr.mxu0 0.0
    %2252 = vmatpush1.msra.mxu0 0.0
    %2253 = vmatprep.mubr.f32.mxu0 0.0
    %2254 = vmatmul.mubr.f32.gmra.mrb[0].mxu0 %v2107
    %v2255 = vpop.f32.mrb[0].mxu0
    %v2256 = vadd.f32 0.0, %v2255
    %v2257 = vpop.f32.mrb[0].mxu0
    %2258 = vdwg.mxu0
    %v2260 = vrot.slane %v2256, 2
    %v2262 = vadd.f32 %v265, %v2260
    %v2263 = vxor.u32 %v2262, 2147483648
    %v2264 = vmul.f32 %v2263, 1.442695
    %v2265 = vpow.pop %v2264
    %v2266 = vadd.f32 %v2265, 1.0
    %v2267 = vrcp.pop %v2266
    %v2268 = vmul.f32 1.0, %v2267
    %2269 = vmatprep.subr.mxu0 0.0
    %2270 = vmatpush1.msra.mxu0 %v383
    %2271 = vmatprep.subr.mxu0 0.0
    %2272 = vmatpush1.msra.mxu0 %v384
    %2273 = vmatprep.subr.mxu0 0.0
    %2274 = vmatpush1.msra.mxu0 %v385
    %2275 = vmatprep.subr.mxu0 0.0
    %2276 = vmatpush1.msra.mxu0 %v386
    %2277 = vmatprep.subr.mxu0 0.0
    %2278 = vmatpush1.msra.mxu0 0.0
    %2279 = vmatprep.subr.mxu0 0.0
    %2280 = vmatpush1.msra.mxu0 0.0
    %2281 = vmatprep.subr.mxu0 0.0
    %2282 = vmatpush1.msra.mxu0 0.0
    %2283 = vmatprep.subr.mxu0 0.0
    %2284 = vmatpush1.msra.mxu0 0.0
    %2285 = vmatprep.subr.mxu0 0.0
    %2286 = vmatpush1.msra.mxu0 0.0
    %2287 = vmatprep.subr.mxu0 0.0
    %2288 = vmatpush1.msra.mxu0 0.0
    %2289 = vmatprep.subr.mxu0 0.0
    %2290 = vmatpush1.msra.mxu0 0.0
    %2291 = vmatprep.subr.mxu0 0.0
    %2292 = vmatpush1.msra.mxu0 0.0
    %2293 = vmatprep.subr.mxu0 0.0
    %2294 = vmatpush1.msra.mxu0 0.0
    %2295 = vmatprep.subr.mxu0 0.0
    %2296 = vmatpush1.msra.mxu0 0.0
    %2297 = vmatprep.subr.mxu0 0.0
    %2298 = vmatpush1.msra.mxu0 0.0
    %2299 = vmatprep.subr.mxu0 0.0
    %2300 = vmatpush1.msra.mxu0 0.0
    %2301 = vmatprep.subr.mxu0 0.0
    %2302 = vmatpush1.msra.mxu0 0.0
    %2303 = vmatprep.subr.mxu0 0.0
    %2304 = vmatpush1.msra.mxu0 0.0
    %2305 = vmatprep.subr.mxu0 0.0
    %2306 = vmatpush1.msra.mxu0 0.0
    %2307 = vmatprep.subr.mxu0 0.0
    %2308 = vmatpush1.msra.mxu0 0.0
    %2309 = vmatprep.subr.mxu0 0.0
    %2310 = vmatpush1.msra.mxu0 0.0
    %2311 = vmatprep.subr.mxu0 0.0
    %2312 = vmatpush1.msra.mxu0 0.0
    %2313 = vmatprep.subr.mxu0 0.0
    %2314 = vmatpush1.msra.mxu0 0.0
    %2315 = vmatprep.subr.mxu0 0.0
    %2316 = vmatpush1.msra.mxu0 0.0
    %2317 = vmatprep.subr.mxu0 0.0
    %2318 = vmatpush1.msra.mxu0 0.0
    %2319 = vmatprep.subr.mxu0 0.0
    %2320 = vmatpush1.msra.mxu0 0.0
    %2321 = vmatprep.subr.mxu0 0.0
    %2322 = vmatpush1.msra.mxu0 0.0
    %2323 = vmatprep.subr.mxu0 0.0
    %2324 = vmatpush1.msra.mxu0 0.0
    %2325 = vmatprep.subr.mxu0 0.0
    %2326 = vmatpush1.msra.mxu0 0.0
    %2327 = vmatprep.subr.mxu0 0.0
    %2328 = vmatpush1.msra.mxu0 0.0
    %2329 = vmatprep.subr.mxu0 0.0
    %2330 = vmatpush1.msra.mxu0 0.0
    %2331 = vmatprep.subr.mxu0 0.0
    %2332 = vmatpush1.msra.mxu0 0.0
    %2333 = vmatprep.mubr.f32.mxu0 0.0
    %2334 = vmatmul.mubr.f32.gmra.mrb[0].mxu0 %v2107
    %v2335 = vpop.f32.mrb[0].mxu0
    %v2336 = vadd.f32 %v393, %v2335
    %v2337 = vpop.f32.mrb[0].mxu0
    %2338 = vdwg.mxu0
    %v2340 = vrot.slane %v2336, 2
    %v2342 = vmul.f32 %v2188, %v2340
    %v2343 = vadd.f32 %v360, %v2342
    %v2344 = vtanh.pop %v2343
    %v2345 = vsub.f32 1.0, %v2268
    %v2346 = vmul.f32 %v2345, %v2344
    %v2347 = vrot.slane %v2103, 6
    %v2349 = vmul.f32 %v2268, %v2347
    %v2350 = vadd.f32 %v2346, %v2349
    %2351 = vst.msk [vmem:[#allocation2 + $0x8] sm:$0xc0] %vm1373, %v2350
    %v2353 = vrot.slane %v2350, 6
    %v2354 = vsel %vm395, %v2353, 0
    %2356 = vmatprep.subr.mxu0 0.0
    %2357 = vmatpush1.msra.mxu0 %v373
    %2358 = vmatprep.subr.mxu0 0.0
    %2359 = vmatpush1.msra.mxu0 %v374
    %2360 = vmatprep.subr.mxu0 0.0
    %2361 = vmatpush1.msra.mxu0 %v375
    %2362 = vmatprep.subr.mxu0 0.0
    %2363 = vmatpush1.msra.mxu0 %v376
    %2364 = vmatprep.subr.mxu0 0.0
    %2365 = vmatpush1.msra.mxu0 0.0
    %2366 = vmatprep.subr.mxu0 0.0
    %2367 = vmatpush1.msra.mxu0 0.0
    %2368 = vmatprep.subr.mxu0 0.0
    %2369 = vmatpush1.msra.mxu0 0.0
    %2370 = vmatprep.subr.mxu0 0.0
    %2371 = vmatpush1.msra.mxu0 0.0
    %2372 = vmatprep.subr.mxu0 0.0
    %2373 = vmatpush1.msra.mxu0 0.0
    %2374 = vmatprep.subr.mxu0 0.0
    %2375 = vmatpush1.msra.mxu0 0.0
    %2376 = vmatprep.subr.mxu0 0.0
    %2377 = vmatpush1.msra.mxu0 0.0
    %2378 = vmatprep.subr.mxu0 0.0
    %2379 = vmatpush1.msra.mxu0 0.0
    %2380 = vmatprep.subr.mxu0 0.0
    %2381 = vmatpush1.msra.mxu0 0.0
    %2382 = vmatprep.subr.mxu0 0.0
    %2383 = vmatpush1.msra.mxu0 0.0
    %2384 = vmatprep.subr.mxu0 0.0
    %2385 = vmatpush1.msra.mxu0 0.0
    %2386 = vmatprep.subr.mxu0 0.0
    %2387 = vmatpush1.msra.mxu0 0.0
    %2388 = vmatprep.subr.mxu0 0.0
    %2389 = vmatpush1.msra.mxu0 0.0
    %2390 = vmatprep.subr.mxu0 0.0
    %2391 = vmatpush1.msra.mxu0 0.0
    %2392 = vmatprep.subr.mxu0 0.0
    %2393 = vmatpush1.msra.mxu0 0.0
    %2394 = vmatprep.subr.mxu0 0.0
    %2395 = vmatpush1.msra.mxu0 0.0
    %2396 = vmatprep.subr.mxu0 0.0
    %2397 = vmatpush1.msra.mxu0 0.0
    %2398 = vmatprep.subr.mxu0 0.0
    %2399 = vmatpush1.msra.mxu0 0.0
    %2400 = vmatprep.subr.mxu0 0.0
    %2401 = vmatpush1.msra.mxu0 0.0
    %2402 = vmatprep.subr.mxu0 0.0
    %2403 = vmatpush1.msra.mxu0 0.0
    %2404 = vmatprep.subr.mxu0 0.0
    %2405 = vmatpush1.msra.mxu0 0.0
    %2406 = vmatprep.subr.mxu0 0.0
    %2407 = vmatpush1.msra.mxu0 0.0
    %2408 = vmatprep.subr.mxu0 0.0
    %2409 = vmatpush1.msra.mxu0 0.0
    %2410 = vmatprep.subr.mxu0 0.0
    %2411 = vmatpush1.msra.mxu0 0.0
    %2412 = vmatprep.subr.mxu0 0.0
    %2413 = vmatpush1.msra.mxu0 0.0
    %2414 = vmatprep.subr.mxu0 0.0
    %2415 = vmatpush1.msra.mxu0 0.0
    %2416 = vmatprep.subr.mxu0 0.0
    %2417 = vmatpush1.msra.mxu0 0.0
    %2418 = vmatprep.subr.mxu0 0.0
    %2419 = vmatpush1.msra.mxu0 0.0
    %2420 = vmatprep.mubr.f32.mxu0 0.0
    %2421 = vmatmul.mubr.f32.gmra.mrb[0].mxu0 %v2354
    %v2422 = vpop.f32.mrb[0].mxu0
    %v2423 = vadd.f32 0.0, %v2422
    %v2424 = vpop.f32.mrb[0].mxu0
    %2425 = vdwg.mxu0
    %v2426 = vadd.f32 %v175, %v2423
    %v2427 = vxor.u32 %v2426, 2147483648
    %v2428 = vmul.f32 %v2427, 1.442695
    %v2429 = vpow.pop %v2428
    %v2430 = vadd.f32 %v2429, 1.0
    %v2431 = vrcp.pop %v2430
    %v2432 = vmul.f32 1.0, %v2431
    %2433 = vmatprep.subr.mxu0 0.0
    %2434 = vmatpush1.msra.mxu0 %v378
    %2435 = vmatprep.subr.mxu0 0.0
    %2436 = vmatpush1.msra.mxu0 %v379
    %2437 = vmatprep.subr.mxu0 0.0
    %2438 = vmatpush1.msra.mxu0 %v380
    %2439 = vmatprep.subr.mxu0 0.0
    %2440 = vmatpush1.msra.mxu0 %v381
    %2441 = vmatprep.subr.mxu0 0.0
    %2442 = vmatpush1.msra.mxu0 0.0
    %2443 = vmatprep.subr.mxu0 0.0
    %2444 = vmatpush1.msra.mxu0 0.0
    %2445 = vmatprep.subr.mxu0 0.0
    %2446 = vmatpush1.msra.mxu0 0.0
    %2447 = vmatprep.subr.mxu0 0.0
    %2448 = vmatpush1.msra.mxu0 0.0
    %2449 = vmatprep.subr.mxu0 0.0
    %2450 = vmatpush1.msra.mxu0 0.0
    %2451 = vmatprep.subr.mxu0 0.0
    %2452 = vmatpush1.msra.mxu0 0.0
    %2453 = vmatprep.subr.mxu0 0.0
    %2454 = vmatpush1.msra.mxu0 0.0
    %2455 = vmatprep.subr.mxu0 0.0
    %2456 = vmatpush1.msra.mxu0 0.0
    %2457 = vmatprep.subr.mxu0 0.0
    %2458 = vmatpush1.msra.mxu0 0.0
    %2459 = vmatprep.subr.mxu0 0.0
    %2460 = vmatpush1.msra.mxu0 0.0
    %2461 = vmatprep.subr.mxu0 0.0
    %2462 = vmatpush1.msra.mxu0 0.0
    %2463 = vmatprep.subr.mxu0 0.0
    %2464 = vmatpush1.msra.mxu0 0.0
    %2465 = vmatprep.subr.mxu0 0.0
    %2466 = vmatpush1.msra.mxu0 0.0
    %2467 = vmatprep.subr.mxu0 0.0
    %2468 = vmatpush1.msra.mxu0 0.0
    %2469 = vmatprep.subr.mxu0 0.0
    %2470 = vmatpush1.msra.mxu0 0.0
    %2471 = vmatprep.subr.mxu0 0.0
    %2472 = vmatpush1.msra.mxu0 0.0
    %2473 = vmatprep.subr.mxu0 0.0
    %2474 = vmatpush1.msra.mxu0 0.0
    %2475 = vmatprep.subr.mxu0 0.0
    %2476 = vmatpush1.msra.mxu0 0.0
    %2477 = vmatprep.subr.mxu0 0.0
    %2478 = vmatpush1.msra.mxu0 0.0
    %2479 = vmatprep.subr.mxu0 0.0
    %2480 = vmatpush1.msra.mxu0 0.0
    %2481 = vmatprep.subr.mxu0 0.0
    %2482 = vmatpush1.msra.mxu0 0.0
    %2483 = vmatprep.subr.mxu0 0.0
    %2484 = vmatpush1.msra.mxu0 0.0
    %2485 = vmatprep.subr.mxu0 0.0
    %2486 = vmatpush1.msra.mxu0 0.0
    %2487 = vmatprep.subr.mxu0 0.0
    %2488 = vmatpush1.msra.mxu0 0.0
    %2489 = vmatprep.subr.mxu0 0.0
    %2490 = vmatpush1.msra.mxu0 0.0
    %2491 = vmatprep.subr.mxu0 0.0
    %2492 = vmatpush1.msra.mxu0 0.0
    %2493 = vmatprep.subr.mxu0 0.0
    %2494 = vmatpush1.msra.mxu0 0.0
    %2495 = vmatprep.subr.mxu0 0.0
    %2496 = vmatpush1.msra.mxu0 0.0
    %2497 = vmatprep.mubr.f32.mxu0 0.0
    %2498 = vmatmul.mubr.f32.gmra.mrb[0].mxu0 %v2354
    %v2499 = vpop.f32.mrb[0].mxu0
    %v2500 = vadd.f32 0.0, %v2499
    %v2501 = vpop.f32.mrb[0].mxu0
    %2502 = vdwg.mxu0
    %v2503 = vadd.f32 %v270, %v2500
    %v2504 = vxor.u32 %v2503, 2147483648
    %v2505 = vmul.f32 %v2504, 1.442695
    %v2506 = vpow.pop %v2505
    %v2507 = vadd.f32 %v2506, 1.0
    %v2508 = vrcp.pop %v2507
    %v2509 = vmul.f32 1.0, %v2508
    %2510 = vmatprep.subr.mxu0 0.0
    %2511 = vmatpush1.msra.mxu0 %v383
    %2512 = vmatprep.subr.mxu0 0.0
    %2513 = vmatpush1.msra.mxu0 %v384
    %2514 = vmatprep.subr.mxu0 0.0
    %2515 = vmatpush1.msra.mxu0 %v385
    %2516 = vmatprep.subr.mxu0 0.0
    %2517 = vmatpush1.msra.mxu0 %v386
    %2518 = vmatprep.subr.mxu0 0.0
    %2519 = vmatpush1.msra.mxu0 0.0
    %2520 = vmatprep.subr.mxu0 0.0
    %2521 = vmatpush1.msra.mxu0 0.0
    %2522 = vmatprep.subr.mxu0 0.0
    %2523 = vmatpush1.msra.mxu0 0.0
    %2524 = vmatprep.subr.mxu0 0.0
    %2525 = vmatpush1.msra.mxu0 0.0
    %2526 = vmatprep.subr.mxu0 0.0
    %2527 = vmatpush1.msra.mxu0 0.0
    %2528 = vmatprep.subr.mxu0 0.0
    %2529 = vmatpush1.msra.mxu0 0.0
    %2530 = vmatprep.subr.mxu0 0.0
    %2531 = vmatpush1.msra.mxu0 0.0
    %2532 = vmatprep.subr.mxu0 0.0
    %2533 = vmatpush1.msra.mxu0 0.0
    %2534 = vmatprep.subr.mxu0 0.0
    %2535 = vmatpush1.msra.mxu0 0.0
    %2536 = vmatprep.subr.mxu0 0.0
    %2537 = vmatpush1.msra.mxu0 0.0
    %2538 = vmatprep.subr.mxu0 0.0
    %2539 = vmatpush1.msra.mxu0 0.0
    %2540 = vmatprep.subr.mxu0 0.0
    %2541 = vmatpush1.msra.mxu0 0.0
    %2542 = vmatprep.subr.mxu0 0.0
    %2543 = vmatpush1.msra.mxu0 0.0
    %2544 = vmatprep.subr.mxu0 0.0
    %2545 = vmatpush1.msra.mxu0 0.0
    %2546 = vmatprep.subr.mxu0 0.0
    %2547 = vmatpush1.msra.mxu0 0.0
    %2548 = vmatprep.subr.mxu0 0.0
    %2549 = vmatpush1.msra.mxu0 0.0
    %2550 = vmatprep.subr.mxu0 0.0
    %2551 = vmatpush1.msra.mxu0 0.0
    %2552 = vmatprep.subr.mxu0 0.0
    %2553 = vmatpush1.msra.mxu0 0.0
    %2554 = vmatprep.subr.mxu0 0.0
    %2555 = vmatpush1.msra.mxu0 0.0
    %2556 = vmatprep.subr.mxu0 0.0
    %2557 = vmatpush1.msra.mxu0 0.0
    %2558 = vmatprep.subr.mxu0 0.0
    %2559 = vmatpush1.msra.mxu0 0.0
    %2560 = vmatprep.subr.mxu0 0.0
    %2561 = vmatpush1.msra.mxu0 0.0
    %2562 = vmatprep.subr.mxu0 0.0
    %2563 = vmatpush1.msra.mxu0 0.0
    %2564 = vmatprep.subr.mxu0 0.0
    %2565 = vmatpush1.msra.mxu0 0.0
    %2566 = vmatprep.subr.mxu0 0.0
    %2567 = vmatpush1.msra.mxu0 0.0
    %2568 = vmatprep.subr.mxu0 0.0
    %2569 = vmatpush1.msra.mxu0 0.0
    %2570 = vmatprep.subr.mxu0 0.0
    %2571 = vmatpush1.msra.mxu0 0.0
    %2572 = vmatprep.subr.mxu0 0.0
    %2573 = vmatpush1.msra.mxu0 0.0
    %2574 = vmatprep.mubr.f32.mxu0 0.0
    %2575 = vmatmul.mubr.f32.gmra.mrb[0].mxu0 %v2354
    %v2576 = vpop.f32.mrb[0].mxu0
    %v2577 = vadd.f32 %v393, %v2576
    %v2578 = vpop.f32.mrb[0].mxu0
    %2579 = vdwg.mxu0
    %v2580 = vmul.f32 %v2432, %v2577
    %v2581 = vadd.f32 %v365, %v2580
    %v2582 = vtanh.pop %v2581
    %v2583 = vsub.f32 1.0, %v2509
    %v2584 = vmul.f32 %v2583, %v2582
    %v2586 = vmul.f32 %v2509, %v2353
    %v2587 = vadd.f32 %v2584, %v2586
    %2588 = vst.msk [vmem:[#allocation2 + $0x10] sm:$0x3] %vm630, %v2587
    %v2590 = vsel %vm395, %v2587, 0
    %2592 = vmatprep.subr.mxu0 0.0
    %2593 = vmatpush1.msra.mxu0 %v373
    %2594 = vmatprep.subr.mxu0 0.0
    %2595 = vmatpush1.msra.mxu0 %v374
    %2596 = vmatprep.subr.mxu0 0.0
    %2597 = vmatpush1.msra.mxu0 %v375
    %2598 = vmatprep.subr.mxu0 0.0
    %2599 = vmatpush1.msra.mxu0 %v376
    %2600 = vmatprep.subr.mxu0 0.0
    %2601 = vmatpush1.msra.mxu0 0.0
    %2602 = vmatprep.subr.mxu0 0.0
    %2603 = vmatpush1.msra.mxu0 0.0
    %2604 = vmatprep.subr.mxu0 0.0
    %2605 = vmatpush1.msra.mxu0 0.0
    %2606 = vmatprep.subr.mxu0 0.0
    %2607 = vmatpush1.msra.mxu0 0.0
    %2608 = vmatprep.subr.mxu0 0.0
    %2609 = vmatpush1.msra.mxu0 0.0
    %2610 = vmatprep.subr.mxu0 0.0
    %2611 = vmatpush1.msra.mxu0 0.0
    %2612 = vmatprep.subr.mxu0 0.0
    %2613 = vmatpush1.msra.mxu0 0.0
    %2614 = vmatprep.subr.mxu0 0.0
    %2615 = vmatpush1.msra.mxu0 0.0
    %2616 = vmatprep.subr.mxu0 0.0
    %2617 = vmatpush1.msra.mxu0 0.0
    %2618 = vmatprep.subr.mxu0 0.0
    %2619 = vmatpush1.msra.mxu0 0.0
    %2620 = vmatprep.subr.mxu0 0.0
    %2621 = vmatpush1.msra.mxu0 0.0
    %2622 = vmatprep.subr.mxu0 0.0
    %2623 = vmatpush1.msra.mxu0 0.0
    %2624 = vmatprep.subr.mxu0 0.0
    %2625 = vmatpush1.msra.mxu0 0.0
    %2626 = vmatprep.subr.mxu0 0.0
    %2627 = vmatpush1.msra.mxu0 0.0
    %2628 = vmatprep.subr.mxu0 0.0
    %2629 = vmatpush1.msra.mxu0 0.0
    %2630 = vmatprep.subr.mxu0 0.0
    %2631 = vmatpush1.msra.mxu0 0.0
    %2632 = vmatprep.subr.mxu0 0.0
    %2633 = vmatpush1.msra.mxu0 0.0
    %2634 = vmatprep.subr.mxu0 0.0
    %2635 = vmatpush1.msra.mxu0 0.0
    %2636 = vmatprep.subr.mxu0 0.0
    %2637 = vmatpush1.msra.mxu0 0.0
    %2638 = vmatprep.subr.mxu0 0.0
    %2639 = vmatpush1.msra.mxu0 0.0
    %2640 = vmatprep.subr.mxu0 0.0
    %2641 = vmatpush1.msra.mxu0 0.0
    %2642 = vmatprep.subr.mxu0 0.0
    %2643 = vmatpush1.msra.mxu0 0.0
    %2644 = vmatprep.subr.mxu0 0.0
    %2645 = vmatpush1.msra.mxu0 0.0
    %2646 = vmatprep.subr.mxu0 0.0
    %2647 = vmatpush1.msra.mxu0 0.0
    %2648 = vmatprep.subr.mxu0 0.0
    %2649 = vmatpush1.msra.mxu0 0.0
    %2650 = vmatprep.subr.mxu0 0.0
    %2651 = vmatpush1.msra.mxu0 0.0
    %2652 = vmatprep.subr.mxu0 0.0
    %2653 = vmatpush1.msra.mxu0 0.0
    %2654 = vmatprep.subr.mxu0 0.0
    %2655 = vmatpush1.msra.mxu0 0.0
    %2656 = vmatprep.mubr.f32.mxu0 0.0
    %2657 = vmatmul.mubr.f32.gmra.mrb[0].mxu0 %v2590
    %v2658 = vpop.f32.mrb[0].mxu0
    %v2659 = vadd.f32 0.0, %v2658
    %v2660 = vpop.f32.mrb[0].mxu0
    %2661 = vdwg.mxu0
    %v2663 = vrot.slane %v2659, 6
    %v2665 = vadd.f32 %v175, %v2663
    %v2666 = vxor.u32 %v2665, 2147483648
    %v2667 = vmul.f32 %v2666, 1.442695
    %v2668 = vpow.pop %v2667
    %v2669 = vadd.f32 %v2668, 1.0
    %v2670 = vrcp.pop %v2669
    %v2671 = vmul.f32 1.0, %v2670
    %2672 = vmatprep.subr.mxu0 0.0
    %2673 = vmatpush1.msra.mxu0 %v378
    %2674 = vmatprep.subr.mxu0 0.0
    %2675 = vmatpush1.msra.mxu0 %v379
    %2676 = vmatprep.subr.mxu0 0.0
    %2677 = vmatpush1.msra.mxu0 %v380
    %2678 = vmatprep.subr.mxu0 0.0
    %2679 = vmatpush1.msra.mxu0 %v381
    %2680 = vmatprep.subr.mxu0 0.0
    %2681 = vmatpush1.msra.mxu0 0.0
    %2682 = vmatprep.subr.mxu0 0.0
    %2683 = vmatpush1.msra.mxu0 0.0
    %2684 = vmatprep.subr.mxu0 0.0
    %2685 = vmatpush1.msra.mxu0 0.0
    %2686 = vmatprep.subr.mxu0 0.0
    %2687 = vmatpush1.msra.mxu0 0.0
    %2688 = vmatprep.subr.mxu0 0.0
    %2689 = vmatpush1.msra.mxu0 0.0
    %2690 = vmatprep.subr.mxu0 0.0
    %2691 = vmatpush1.msra.mxu0 0.0
    %2692 = vmatprep.subr.mxu0 0.0
    %2693 = vmatpush1.msra.mxu0 0.0
    %2694 = vmatprep.subr.mxu0 0.0
    %2695 = vmatpush1.msra.mxu0 0.0
    %2696 = vmatprep.subr.mxu0 0.0
    %2697 = vmatpush1.msra.mxu0 0.0
    %2698 = vmatprep.subr.mxu0 0.0
    %2699 = vmatpush1.msra.mxu0 0.0
    %2700 = vmatprep.subr.mxu0 0.0
    %2701 = vmatpush1.msra.mxu0 0.0
    %2702 = vmatprep.subr.mxu0 0.0
    %2703 = vmatpush1.msra.mxu0 0.0
    %2704 = vmatprep.subr.mxu0 0.0
    %2705 = vmatpush1.msra.mxu0 0.0
    %2706 = vmatprep.subr.mxu0 0.0
    %2707 = vmatpush1.msra.mxu0 0.0
    %2708 = vmatprep.subr.mxu0 0.0
    %2709 = vmatpush1.msra.mxu0 0.0
    %2710 = vmatprep.subr.mxu0 0.0
    %2711 = vmatpush1.msra.mxu0 0.0
    %2712 = vmatprep.subr.mxu0 0.0
    %2713 = vmatpush1.msra.mxu0 0.0
    %2714 = vmatprep.subr.mxu0 0.0
    %2715 = vmatpush1.msra.mxu0 0.0
    %2716 = vmatprep.subr.mxu0 0.0
    %2717 = vmatpush1.msra.mxu0 0.0
    %2718 = vmatprep.subr.mxu0 0.0
    %2719 = vmatpush1.msra.mxu0 0.0
    %2720 = vmatprep.subr.mxu0 0.0
    %2721 = vmatpush1.msra.mxu0 0.0
    %2722 = vmatprep.subr.mxu0 0.0
    %2723 = vmatpush1.msra.mxu0 0.0
    %2724 = vmatprep.subr.mxu0 0.0
    %2725 = vmatpush1.msra.mxu0 0.0
    %2726 = vmatprep.subr.mxu0 0.0
    %2727 = vmatpush1.msra.mxu0 0.0
    %2728 = vmatprep.subr.mxu0 0.0
    %2729 = vmatpush1.msra.mxu0 0.0
    %2730 = vmatprep.subr.mxu0 0.0
    %2731 = vmatpush1.msra.mxu0 0.0
    %2732 = vmatprep.subr.mxu0 0.0
    %2733 = vmatpush1.msra.mxu0 0.0
    %2734 = vmatprep.subr.mxu0 0.0
    %2735 = vmatpush1.msra.mxu0 0.0
    %2736 = vmatprep.mubr.f32.mxu0 0.0
    %2737 = vmatmul.mubr.f32.gmra.mrb[0].mxu0 %v2590
    %v2738 = vpop.f32.mrb[0].mxu0
    %v2739 = vadd.f32 0.0, %v2738
    %v2740 = vpop.f32.mrb[0].mxu0
    %2741 = vdwg.mxu0
    %v2743 = vrot.slane %v2739, 6
    %v2745 = vadd.f32 %v270, %v2743
    %v2746 = vxor.u32 %v2745, 2147483648
    %v2747 = vmul.f32 %v2746, 1.442695
    %v2748 = vpow.pop %v2747
    %v2749 = vadd.f32 %v2748, 1.0
    %v2750 = vrcp.pop %v2749
    %v2751 = vmul.f32 1.0, %v2750
    %2752 = vmatprep.subr.mxu0 0.0
    %2753 = vmatpush1.msra.mxu0 %v383
    %2754 = vmatprep.subr.mxu0 0.0
    %2755 = vmatpush1.msra.mxu0 %v384
    %2756 = vmatprep.subr.mxu0 0.0
    %2757 = vmatpush1.msra.mxu0 %v385
    %2758 = vmatprep.subr.mxu0 0.0
    %2759 = vmatpush1.msra.mxu0 %v386
    %2760 = vmatprep.subr.mxu0 0.0
    %2761 = vmatpush1.msra.mxu0 0.0
    %2762 = vmatprep.subr.mxu0 0.0
    %2763 = vmatpush1.msra.mxu0 0.0
    %2764 = vmatprep.subr.mxu0 0.0
    %2765 = vmatpush1.msra.mxu0 0.0
    %2766 = vmatprep.subr.mxu0 0.0
    %2767 = vmatpush1.msra.mxu0 0.0
    %2768 = vmatprep.subr.mxu0 0.0
    %2769 = vmatpush1.msra.mxu0 0.0
    %2770 = vmatprep.subr.mxu0 0.0
    %2771 = vmatpush1.msra.mxu0 0.0
    %2772 = vmatprep.subr.mxu0 0.0
    %2773 = vmatpush1.msra.mxu0 0.0
    %2774 = vmatprep.subr.mxu0 0.0
    %2775 = vmatpush1.msra.mxu0 0.0
    %2776 = vmatprep.subr.mxu0 0.0
    %2777 = vmatpush1.msra.mxu0 0.0
    %2778 = vmatprep.subr.mxu0 0.0
    %2779 = vmatpush1.msra.mxu0 0.0
    %2780 = vmatprep.subr.mxu0 0.0
    %2781 = vmatpush1.msra.mxu0 0.0
    %2782 = vmatprep.subr.mxu0 0.0
    %2783 = vmatpush1.msra.mxu0 0.0
    %2784 = vmatprep.subr.mxu0 0.0
    %2785 = vmatpush1.msra.mxu0 0.0
    %2786 = vmatprep.subr.mxu0 0.0
    %2787 = vmatpush1.msra.mxu0 0.0
    %2788 = vmatprep.subr.mxu0 0.0
    %2789 = vmatpush1.msra.mxu0 0.0
    %2790 = vmatprep.subr.mxu0 0.0
    %2791 = vmatpush1.msra.mxu0 0.0
    %2792 = vmatprep.subr.mxu0 0.0
    %2793 = vmatpush1.msra.mxu0 0.0
    %2794 = vmatprep.subr.mxu0 0.0
    %2795 = vmatpush1.msra.mxu0 0.0
    %2796 = vmatprep.subr.mxu0 0.0
    %2797 = vmatpush1.msra.mxu0 0.0
    %2798 = vmatprep.subr.mxu0 0.0
    %2799 = vmatpush1.msra.mxu0 0.0
    %2800 = vmatprep.subr.mxu0 0.0
    %2801 = vmatpush1.msra.mxu0 0.0
    %2802 = vmatprep.subr.mxu0 0.0
    %2803 = vmatpush1.msra.mxu0 0.0
    %2804 = vmatprep.subr.mxu0 0.0
    %2805 = vmatpush1.msra.mxu0 0.0
    %2806 = vmatprep.subr.mxu0 0.0
    %2807 = vmatpush1.msra.mxu0 0.0
    %2808 = vmatprep.subr.mxu0 0.0
    %2809 = vmatpush1.msra.mxu0 0.0
    %2810 = vmatprep.subr.mxu0 0.0
    %2811 = vmatpush1.msra.mxu0 0.0
    %2812 = vmatprep.subr.mxu0 0.0
    %2813 = vmatpush1.msra.mxu0 0.0
    %2814 = vmatprep.subr.mxu0 0.0
    %2815 = vmatpush1.msra.mxu0 0.0
    %2816 = vmatprep.mubr.f32.mxu0 0.0
    %2817 = vmatmul.mubr.f32.gmra.mrb[0].mxu0 %v2590
    %v2818 = vpop.f32.mrb[0].mxu0
    %v2819 = vadd.f32 %v393, %v2818
    %v2820 = vpop.f32.mrb[0].mxu0
    %2821 = vdwg.mxu0
    %v2823 = vrot.slane %v2819, 6
    %v2825 = vmul.f32 %v2671, %v2823
    %v2826 = vadd.f32 %v365, %v2825
    %v2827 = vtanh.pop %v2826
    %v2828 = vsub.f32 1.0, %v2751
    %v2829 = vmul.f32 %v2828, %v2827
    %v2830 = vrot.slane %v2587, 6
    %v2832 = vmul.f32 %v2751, %v2830
    %v2833 = vadd.f32 %v2829, %v2832
    %2834 = vst.msk [vmem:[#allocation2 + $0x10] sm:$0xc] %vm877, %v2833
    %v2836 = vrot.slane %v2833, 2
    %v2837 = vsel %vm395, %v2836, 0
    %2839 = vmatprep.subr.mxu0 0.0
    %2840 = vmatpush1.msra.mxu0 %v373
    %2841 = vmatprep.subr.mxu0 0.0
    %2842 = vmatpush1.msra.mxu0 %v374
    %2843 = vmatprep.subr.mxu0 0.0
    %2844 = vmatpush1.msra.mxu0 %v375
    %2845 = vmatprep.subr.mxu0 0.0
    %2846 = vmatpush1.msra.mxu0 %v376
    %2847 = vmatprep.subr.mxu0 0.0
    %2848 = vmatpush1.msra.mxu0 0.0
    %2849 = vmatprep.subr.mxu0 0.0
    %2850 = vmatpush1.msra.mxu0 0.0
    %2851 = vmatprep.subr.mxu0 0.0
    %2852 = vmatpush1.msra.mxu0 0.0
    %2853 = vmatprep.subr.mxu0 0.0
    %2854 = vmatpush1.msra.mxu0 0.0
    %2855 = vmatprep.subr.mxu0 0.0
    %2856 = vmatpush1.msra.mxu0 0.0
    %2857 = vmatprep.subr.mxu0 0.0
    %2858 = vmatpush1.msra.mxu0 0.0
    %2859 = vmatprep.subr.mxu0 0.0
    %2860 = vmatpush1.msra.mxu0 0.0
    %2861 = vmatprep.subr.mxu0 0.0
    %2862 = vmatpush1.msra.mxu0 0.0
    %2863 = vmatprep.subr.mxu0 0.0
    %2864 = vmatpush1.msra.mxu0 0.0
    %2865 = vmatprep.subr.mxu0 0.0
    %2866 = vmatpush1.msra.mxu0 0.0
    %2867 = vmatprep.subr.mxu0 0.0
    %2868 = vmatpush1.msra.mxu0 0.0
    %2869 = vmatprep.subr.mxu0 0.0
    %2870 = vmatpush1.msra.mxu0 0.0
    %2871 = vmatprep.subr.mxu0 0.0
    %2872 = vmatpush1.msra.mxu0 0.0
    %2873 = vmatprep.subr.mxu0 0.0
    %2874 = vmatpush1.msra.mxu0 0.0
    %2875 = vmatprep.subr.mxu0 0.0
    %2876 = vmatpush1.msra.mxu0 0.0
    %2877 = vmatprep.subr.mxu0 0.0
    %2878 = vmatpush1.msra.mxu0 0.0
    %2879 = vmatprep.subr.mxu0 0.0
    %2880 = vmatpush1.msra.mxu0 0.0
    %2881 = vmatprep.subr.mxu0 0.0
    %2882 = vmatpush1.msra.mxu0 0.0
    %2883 = vmatprep.subr.mxu0 0.0
    %2884 = vmatpush1.msra.mxu0 0.0
    %2885 = vmatprep.subr.mxu0 0.0
    %2886 = vmatpush1.msra.mxu0 0.0
    %2887 = vmatprep.subr.mxu0 0.0
    %2888 = vmatpush1.msra.mxu0 0.0
    %2889 = vmatprep.subr.mxu0 0.0
    %2890 = vmatpush1.msra.mxu0 0.0
    %2891 = vmatprep.subr.mxu0 0.0
    %2892 = vmatpush1.msra.mxu0 0.0
    %2893 = vmatprep.subr.mxu0 0.0
    %2894 = vmatpush1.msra.mxu0 0.0
    %2895 = vmatprep.subr.mxu0 0.0
    %2896 = vmatpush1.msra.mxu0 0.0
    %2897 = vmatprep.subr.mxu0 0.0
    %2898 = vmatpush1.msra.mxu0 0.0
    %2899 = vmatprep.subr.mxu0 0.0
    %2900 = vmatpush1.msra.mxu0 0.0
    %2901 = vmatprep.subr.mxu0 0.0
    %2902 = vmatpush1.msra.mxu0 0.0
    %2903 = vmatprep.mubr.f32.mxu0 0.0
    %2904 = vmatmul.mubr.f32.gmra.mrb[0].mxu0 %v2837
    %v2905 = vpop.f32.mrb[0].mxu0
    %v2906 = vadd.f32 0.0, %v2905
    %v2907 = vpop.f32.mrb[0].mxu0
    %2908 = vdwg.mxu0
    %v2910 = vrot.slane %v2906, 4
    %v2912 = vadd.f32 %v175, %v2910
    %v2913 = vxor.u32 %v2912, 2147483648
    %v2914 = vmul.f32 %v2913, 1.442695
    %v2915 = vpow.pop %v2914
    %v2916 = vadd.f32 %v2915, 1.0
    %v2917 = vrcp.pop %v2916
    %v2918 = vmul.f32 1.0, %v2917
    %2919 = vmatprep.subr.mxu0 0.0
    %2920 = vmatpush1.msra.mxu0 %v378
    %2921 = vmatprep.subr.mxu0 0.0
    %2922 = vmatpush1.msra.mxu0 %v379
    %2923 = vmatprep.subr.mxu0 0.0
    %2924 = vmatpush1.msra.mxu0 %v380
    %2925 = vmatprep.subr.mxu0 0.0
    %2926 = vmatpush1.msra.mxu0 %v381
    %2927 = vmatprep.subr.mxu0 0.0
    %2928 = vmatpush1.msra.mxu0 0.0
    %2929 = vmatprep.subr.mxu0 0.0
    %2930 = vmatpush1.msra.mxu0 0.0
    %2931 = vmatprep.subr.mxu0 0.0
    %2932 = vmatpush1.msra.mxu0 0.0
    %2933 = vmatprep.subr.mxu0 0.0
    %2934 = vmatpush1.msra.mxu0 0.0
    %2935 = vmatprep.subr.mxu0 0.0
    %2936 = vmatpush1.msra.mxu0 0.0
    %2937 = vmatprep.subr.mxu0 0.0
    %2938 = vmatpush1.msra.mxu0 0.0
    %2939 = vmatprep.subr.mxu0 0.0
    %2940 = vmatpush1.msra.mxu0 0.0
    %2941 = vmatprep.subr.mxu0 0.0
    %2942 = vmatpush1.msra.mxu0 0.0
    %2943 = vmatprep.subr.mxu0 0.0
    %2944 = vmatpush1.msra.mxu0 0.0
    %2945 = vmatprep.subr.mxu0 0.0
    %2946 = vmatpush1.msra.mxu0 0.0
    %2947 = vmatprep.subr.mxu0 0.0
    %2948 = vmatpush1.msra.mxu0 0.0
    %2949 = vmatprep.subr.mxu0 0.0
    %2950 = vmatpush1.msra.mxu0 0.0
    %2951 = vmatprep.subr.mxu0 0.0
    %2952 = vmatpush1.msra.mxu0 0.0
    %2953 = vmatprep.subr.mxu0 0.0
    %2954 = vmatpush1.msra.mxu0 0.0
    %2955 = vmatprep.subr.mxu0 0.0
    %2956 = vmatpush1.msra.mxu0 0.0
    %2957 = vmatprep.subr.mxu0 0.0
    %2958 = vmatpush1.msra.mxu0 0.0
    %2959 = vmatprep.subr.mxu0 0.0
    %2960 = vmatpush1.msra.mxu0 0.0
    %2961 = vmatprep.subr.mxu0 0.0
    %2962 = vmatpush1.msra.mxu0 0.0
    %2963 = vmatprep.subr.mxu0 0.0
    %2964 = vmatpush1.msra.mxu0 0.0
    %2965 = vmatprep.subr.mxu0 0.0
    %2966 = vmatpush1.msra.mxu0 0.0
    %2967 = vmatprep.subr.mxu0 0.0
    %2968 = vmatpush1.msra.mxu0 0.0
    %2969 = vmatprep.subr.mxu0 0.0
    %2970 = vmatpush1.msra.mxu0 0.0
    %2971 = vmatprep.subr.mxu0 0.0
    %2972 = vmatpush1.msra.mxu0 0.0
    %2973 = vmatprep.subr.mxu0 0.0
    %2974 = vmatpush1.msra.mxu0 0.0
    %2975 = vmatprep.subr.mxu0 0.0
    %2976 = vmatpush1.msra.mxu0 0.0
    %2977 = vmatprep.subr.mxu0 0.0
    %2978 = vmatpush1.msra.mxu0 0.0
    %2979 = vmatprep.subr.mxu0 0.0
    %2980 = vmatpush1.msra.mxu0 0.0
    %2981 = vmatprep.subr.mxu0 0.0
    %2982 = vmatpush1.msra.mxu0 0.0
    %2983 = vmatprep.mubr.f32.mxu0 0.0
    %2984 = vmatmul.mubr.f32.gmra.mrb[0].mxu0 %v2837
    %v2985 = vpop.f32.mrb[0].mxu0
    %v2986 = vadd.f32 0.0, %v2985
    %v2987 = vpop.f32.mrb[0].mxu0
    %2988 = vdwg.mxu0
    %v2990 = vrot.slane %v2986, 4
    %v2992 = vadd.f32 %v270, %v2990
    %v2993 = vxor.u32 %v2992, 2147483648
    %v2994 = vmul.f32 %v2993, 1.442695
    %v2995 = vpow.pop %v2994
    %v2996 = vadd.f32 %v2995, 1.0
    %v2997 = vrcp.pop %v2996
    %v2998 = vmul.f32 1.0, %v2997
    %2999 = vmatprep.subr.mxu0 0.0
    %3000 = vmatpush1.msra.mxu0 %v383
    %3001 = vmatprep.subr.mxu0 0.0
    %3002 = vmatpush1.msra.mxu0 %v384
    %3003 = vmatprep.subr.mxu0 0.0
    %3004 = vmatpush1.msra.mxu0 %v385
    %3005 = vmatprep.subr.mxu0 0.0
    %3006 = vmatpush1.msra.mxu0 %v386
    %3007 = vmatprep.subr.mxu0 0.0
    %3008 = vmatpush1.msra.mxu0 0.0
    %3009 = vmatprep.subr.mxu0 0.0
    %3010 = vmatpush1.msra.mxu0 0.0
    %3011 = vmatprep.subr.mxu0 0.0
    %3012 = vmatpush1.msra.mxu0 0.0
    %3013 = vmatprep.subr.mxu0 0.0
    %3014 = vmatpush1.msra.mxu0 0.0
    %3015 = vmatprep.subr.mxu0 0.0
    %3016 = vmatpush1.msra.mxu0 0.0
    %3017 = vmatprep.subr.mxu0 0.0
    %3018 = vmatpush1.msra.mxu0 0.0
    %3019 = vmatprep.subr.mxu0 0.0
    %3020 = vmatpush1.msra.mxu0 0.0
    %3021 = vmatprep.subr.mxu0 0.0
    %3022 = vmatpush1.msra.mxu0 0.0
    %3023 = vmatprep.subr.mxu0 0.0
    %3024 = vmatpush1.msra.mxu0 0.0
    %3025 = vmatprep.subr.mxu0 0.0
    %3026 = vmatpush1.msra.mxu0 0.0
    %3027 = vmatprep.subr.mxu0 0.0
    %3028 = vmatpush1.msra.mxu0 0.0
    %3029 = vmatprep.subr.mxu0 0.0
    %3030 = vmatpush1.msra.mxu0 0.0
    %3031 = vmatprep.subr.mxu0 0.0
    %3032 = vmatpush1.msra.mxu0 0.0
    %3033 = vmatprep.subr.mxu0 0.0
    %3034 = vmatpush1.msra.mxu0 0.0
    %3035 = vmatprep.subr.mxu0 0.0
    %3036 = vmatpush1.msra.mxu0 0.0
    %3037 = vmatprep.subr.mxu0 0.0
    %3038 = vmatpush1.msra.mxu0 0.0
    %3039 = vmatprep.subr.mxu0 0.0
    %3040 = vmatpush1.msra.mxu0 0.0
    %3041 = vmatprep.subr.mxu0 0.0
    %3042 = vmatpush1.msra.mxu0 0.0
    %3043 = vmatprep.subr.mxu0 0.0
    %3044 = vmatpush1.msra.mxu0 0.0
    %3045 = vmatprep.subr.mxu0 0.0
    %3046 = vmatpush1.msra.mxu0 0.0
    %3047 = vmatprep.subr.mxu0 0.0
    %3048 = vmatpush1.msra.mxu0 0.0
    %3049 = vmatprep.subr.mxu0 0.0
    %3050 = vmatpush1.msra.mxu0 0.0
    %3051 = vmatprep.subr.mxu0 0.0
    %3052 = vmatpush1.msra.mxu0 0.0
    %3053 = vmatprep.subr.mxu0 0.0
    %3054 = vmatpush1.msra.mxu0 0.0
    %3055 = vmatprep.subr.mxu0 0.0
    %3056 = vmatpush1.msra.mxu0 0.0
    %3057 = vmatprep.subr.mxu0 0.0
    %3058 = vmatpush1.msra.mxu0 0.0
    %3059 = vmatprep.subr.mxu0 0.0
    %3060 = vmatpush1.msra.mxu0 0.0
    %3061 = vmatprep.subr.mxu0 0.0
    %3062 = vmatpush1.msra.mxu0 0.0
    %3063 = vmatprep.mubr.f32.mxu0 0.0
    %3064 = vmatmul.mubr.f32.gmra.mrb[0].mxu0 %v2837
    %v3065 = vpop.f32.mrb[0].mxu0
    %v3066 = vadd.f32 %v393, %v3065
    %v3067 = vpop.f32.mrb[0].mxu0
    %3068 = vdwg.mxu0
    %v3070 = vrot.slane %v3066, 4
    %v3072 = vmul.f32 %v2918, %v3070
    %v3073 = vadd.f32 %v365, %v3072
    %v3074 = vtanh.pop %v3073
    %v3075 = vsub.f32 1.0, %v2998
    %v3076 = vmul.f32 %v3075, %v3074
    %v3077 = vrot.slane %v2833, 6
    %v3079 = vmul.f32 %v2998, %v3077
    %v3080 = vadd.f32 %v3076, %v3079
    %3081 = vst.msk [vmem:[#allocation2 + $0x10] sm:$0x30] %vm1125, %v3080
    %v3083 = vrot.slane %v3080, 4
    %v3084 = vsel %vm395, %v3083, 0
    %3086 = vmatprep.subr.mxu0 0.0
    %3087 = vmatpush1.msra.mxu0 %v373
    %3088 = vmatprep.subr.mxu0 0.0
    %3089 = vmatpush1.msra.mxu0 %v374
    %3090 = vmatprep.subr.mxu0 0.0
    %3091 = vmatpush1.msra.mxu0 %v375
    %3092 = vmatprep.subr.mxu0 0.0
    %3093 = vmatpush1.msra.mxu0 %v376
    %3094 = vmatprep.subr.mxu0 0.0
    %3095 = vmatpush1.msra.mxu0 0.0
    %3096 = vmatprep.subr.mxu0 0.0
    %3097 = vmatpush1.msra.mxu0 0.0
    %3098 = vmatprep.subr.mxu0 0.0
    %3099 = vmatpush1.msra.mxu0 0.0
    %3100 = vmatprep.subr.mxu0 0.0
    %3101 = vmatpush1.msra.mxu0 0.0
    %3102 = vmatprep.subr.mxu0 0.0
    %3103 = vmatpush1.msra.mxu0 0.0
    %3104 = vmatprep.subr.mxu0 0.0
    %3105 = vmatpush1.msra.mxu0 0.0
    %3106 = vmatprep.subr.mxu0 0.0
    %3107 = vmatpush1.msra.mxu0 0.0
    %3108 = vmatprep.subr.mxu0 0.0
    %3109 = vmatpush1.msra.mxu0 0.0
    %3110 = vmatprep.subr.mxu0 0.0
    %3111 = vmatpush1.msra.mxu0 0.0
    %3112 = vmatprep.subr.mxu0 0.0
    %3113 = vmatpush1.msra.mxu0 0.0
    %3114 = vmatprep.subr.mxu0 0.0
    %3115 = vmatpush1.msra.mxu0 0.0
    %3116 = vmatprep.subr.mxu0 0.0
    %3117 = vmatpush1.msra.mxu0 0.0
    %3118 = vmatprep.subr.mxu0 0.0
    %3119 = vmatpush1.msra.mxu0 0.0
    %3120 = vmatprep.subr.mxu0 0.0
    %3121 = vmatpush1.msra.mxu0 0.0
    %3122 = vmatprep.subr.mxu0 0.0
    %3123 = vmatpush1.msra.mxu0 0.0
    %3124 = vmatprep.subr.mxu0 0.0
    %3125 = vmatpush1.msra.mxu0 0.0
    %3126 = vmatprep.subr.mxu0 0.0
    %3127 = vmatpush1.msra.mxu0 0.0
    %3128 = vmatprep.subr.mxu0 0.0
    %3129 = vmatpush1.msra.mxu0 0.0
    %3130 = vmatprep.subr.mxu0 0.0
    %3131 = vmatpush1.msra.mxu0 0.0
    %3132 = vmatprep.subr.mxu0 0.0
    %3133 = vmatpush1.msra.mxu0 0.0
    %3134 = vmatprep.subr.mxu0 0.0
    %3135 = vmatpush1.msra.mxu0 0.0
    %3136 = vmatprep.subr.mxu0 0.0
    %3137 = vmatpush1.msra.mxu0 0.0
    %3138 = vmatprep.subr.mxu0 0.0
    %3139 = vmatpush1.msra.mxu0 0.0
    %3140 = vmatprep.subr.mxu0 0.0
    %3141 = vmatpush1.msra.mxu0 0.0
    %3142 = vmatprep.subr.mxu0 0.0
    %3143 = vmatpush1.msra.mxu0 0.0
    %3144 = vmatprep.subr.mxu0 0.0
    %3145 = vmatpush1.msra.mxu0 0.0
    %3146 = vmatprep.subr.mxu0 0.0
    %3147 = vmatpush1.msra.mxu0 0.0
    %3148 = vmatprep.subr.mxu0 0.0
    %3149 = vmatpush1.msra.mxu0 0.0
    %3150 = vmatprep.mubr.f32.mxu0 0.0
    %3151 = vmatmul.mubr.f32.gmra.mrb[0].mxu0 %v3084
    %v3152 = vpop.f32.mrb[0].mxu0
    %v3153 = vadd.f32 0.0, %v3152
    %v3154 = vpop.f32.mrb[0].mxu0
    %3155 = vdwg.mxu0
    %v3157 = vrot.slane %v3153, 2
    %v3159 = vadd.f32 %v175, %v3157
    %v3160 = vxor.u32 %v3159, 2147483648
    %v3161 = vmul.f32 %v3160, 1.442695
    %v3162 = vpow.pop %v3161
    %v3163 = vadd.f32 %v3162, 1.0
    %v3164 = vrcp.pop %v3163
    %v3165 = vmul.f32 1.0, %v3164
    %3166 = vmatprep.subr.mxu0 0.0
    %3167 = vmatpush1.msra.mxu0 %v378
    %3168 = vmatprep.subr.mxu0 0.0
    %3169 = vmatpush1.msra.mxu0 %v379
    %3170 = vmatprep.subr.mxu0 0.0
    %3171 = vmatpush1.msra.mxu0 %v380
    %3172 = vmatprep.subr.mxu0 0.0
    %3173 = vmatpush1.msra.mxu0 %v381
    %3174 = vmatprep.subr.mxu0 0.0
    %3175 = vmatpush1.msra.mxu0 0.0
    %3176 = vmatprep.subr.mxu0 0.0
    %3177 = vmatpush1.msra.mxu0 0.0
    %3178 = vmatprep.subr.mxu0 0.0
    %3179 = vmatpush1.msra.mxu0 0.0
    %3180 = vmatprep.subr.mxu0 0.0
    %3181 = vmatpush1.msra.mxu0 0.0
    %3182 = vmatprep.subr.mxu0 0.0
    %3183 = vmatpush1.msra.mxu0 0.0
    %3184 = vmatprep.subr.mxu0 0.0
    %3185 = vmatpush1.msra.mxu0 0.0
    %3186 = vmatprep.subr.mxu0 0.0
    %3187 = vmatpush1.msra.mxu0 0.0
    %3188 = vmatprep.subr.mxu0 0.0
    %3189 = vmatpush1.msra.mxu0 0.0
    %3190 = vmatprep.subr.mxu0 0.0
    %3191 = vmatpush1.msra.mxu0 0.0
    %3192 = vmatprep.subr.mxu0 0.0
    %3193 = vmatpush1.msra.mxu0 0.0
    %3194 = vmatprep.subr.mxu0 0.0
    %3195 = vmatpush1.msra.mxu0 0.0
    %3196 = vmatprep.subr.mxu0 0.0
    %3197 = vmatpush1.msra.mxu0 0.0
    %3198 = vmatprep.subr.mxu0 0.0
    %3199 = vmatpush1.msra.mxu0 0.0
    %3200 = vmatprep.subr.mxu0 0.0
    %3201 = vmatpush1.msra.mxu0 0.0
    %3202 = vmatprep.subr.mxu0 0.0
    %3203 = vmatpush1.msra.mxu0 0.0
    %3204 = vmatprep.subr.mxu0 0.0
    %3205 = vmatpush1.msra.mxu0 0.0
    %3206 = vmatprep.subr.mxu0 0.0
    %3207 = vmatpush1.msra.mxu0 0.0
    %3208 = vmatprep.subr.mxu0 0.0
    %3209 = vmatpush1.msra.mxu0 0.0
    %3210 = vmatprep.subr.mxu0 0.0
    %3211 = vmatpush1.msra.mxu0 0.0
    %3212 = vmatprep.subr.mxu0 0.0
    %3213 = vmatpush1.msra.mxu0 0.0
    %3214 = vmatprep.subr.mxu0 0.0
    %3215 = vmatpush1.msra.mxu0 0.0
    %3216 = vmatprep.subr.mxu0 0.0
    %3217 = vmatpush1.msra.mxu0 0.0
    %3218 = vmatprep.subr.mxu0 0.0
    %3219 = vmatpush1.msra.mxu0 0.0
    %3220 = vmatprep.subr.mxu0 0.0
    %3221 = vmatpush1.msra.mxu0 0.0
    %3222 = vmatprep.subr.mxu0 0.0
    %3223 = vmatpush1.msra.mxu0 0.0
    %3224 = vmatprep.subr.mxu0 0.0
    %3225 = vmatpush1.msra.mxu0 0.0
    %3226 = vmatprep.subr.mxu0 0.0
    %3227 = vmatpush1.msra.mxu0 0.0
    %3228 = vmatprep.subr.mxu0 0.0
    %3229 = vmatpush1.msra.mxu0 0.0
    %3230 = vmatprep.mubr.f32.mxu0 0.0
    %3231 = vmatmul.mubr.f32.gmra.mrb[0].mxu0 %v3084
    %v3232 = vpop.f32.mrb[0].mxu0
    %v3233 = vadd.f32 0.0, %v3232
    %v3234 = vpop.f32.mrb[0].mxu0
    %3235 = vdwg.mxu0
    %v3237 = vrot.slane %v3233, 2
    %v3239 = vadd.f32 %v270, %v3237
    %v3240 = vxor.u32 %v3239, 2147483648
    %v3241 = vmul.f32 %v3240, 1.442695
    %v3242 = vpow.pop %v3241
    %v3243 = vadd.f32 %v3242, 1.0
    %v3244 = vrcp.pop %v3243
    %v3245 = vmul.f32 1.0, %v3244
    %3246 = vmatprep.subr.mxu0 0.0
    %3247 = vmatpush1.msra.mxu0 %v383
    %3248 = vmatprep.subr.mxu0 0.0
    %3249 = vmatpush1.msra.mxu0 %v384
    %3250 = vmatprep.subr.mxu0 0.0
    %3251 = vmatpush1.msra.mxu0 %v385
    %3252 = vmatprep.subr.mxu0 0.0
    %3253 = vmatpush1.msra.mxu0 %v386
    %3254 = vmatprep.subr.mxu0 0.0
    %3255 = vmatpush1.msra.mxu0 0.0
    %3256 = vmatprep.subr.mxu0 0.0
    %3257 = vmatpush1.msra.mxu0 0.0
    %3258 = vmatprep.subr.mxu0 0.0
    %3259 = vmatpush1.msra.mxu0 0.0
    %3260 = vmatprep.subr.mxu0 0.0
    %3261 = vmatpush1.msra.mxu0 0.0
    %3262 = vmatprep.subr.mxu0 0.0
    %3263 = vmatpush1.msra.mxu0 0.0
    %3264 = vmatprep.subr.mxu0 0.0
    %3265 = vmatpush1.msra.mxu0 0.0
    %3266 = vmatprep.subr.mxu0 0.0
    %3267 = vmatpush1.msra.mxu0 0.0
    %3268 = vmatprep.subr.mxu0 0.0
    %3269 = vmatpush1.msra.mxu0 0.0
    %3270 = vmatprep.subr.mxu0 0.0
    %3271 = vmatpush1.msra.mxu0 0.0
    %3272 = vmatprep.subr.mxu0 0.0
    %3273 = vmatpush1.msra.mxu0 0.0
    %3274 = vmatprep.subr.mxu0 0.0
    %3275 = vmatpush1.msra.mxu0 0.0
    %3276 = vmatprep.subr.mxu0 0.0
    %3277 = vmatpush1.msra.mxu0 0.0
    %3278 = vmatprep.subr.mxu0 0.0
    %3279 = vmatpush1.msra.mxu0 0.0
    %3280 = vmatprep.subr.mxu0 0.0
    %3281 = vmatpush1.msra.mxu0 0.0
    %3282 = vmatprep.subr.mxu0 0.0
    %3283 = vmatpush1.msra.mxu0 0.0
    %3284 = vmatprep.subr.mxu0 0.0
    %3285 = vmatpush1.msra.mxu0 0.0
    %3286 = vmatprep.subr.mxu0 0.0
    %3287 = vmatpush1.msra.mxu0 0.0
    %3288 = vmatprep.subr.mxu0 0.0
    %3289 = vmatpush1.msra.mxu0 0.0
    %3290 = vmatprep.subr.mxu0 0.0
    %3291 = vmatpush1.msra.mxu0 0.0
    %3292 = vmatprep.subr.mxu0 0.0
    %3293 = vmatpush1.msra.mxu0 0.0
    %3294 = vmatprep.subr.mxu0 0.0
    %3295 = vmatpush1.msra.mxu0 0.0
    %3296 = vmatprep.subr.mxu0 0.0
    %3297 = vmatpush1.msra.mxu0 0.0
    %3298 = vmatprep.subr.mxu0 0.0
    %3299 = vmatpush1.msra.mxu0 0.0
    %3300 = vmatprep.subr.mxu0 0.0
    %3301 = vmatpush1.msra.mxu0 0.0
    %3302 = vmatprep.subr.mxu0 0.0
    %3303 = vmatpush1.msra.mxu0 0.0
    %3304 = vmatprep.subr.mxu0 0.0
    %3305 = vmatpush1.msra.mxu0 0.0
    %3306 = vmatprep.subr.mxu0 0.0
    %3307 = vmatpush1.msra.mxu0 0.0
    %3308 = vmatprep.subr.mxu0 0.0
    %3309 = vmatpush1.msra.mxu0 0.0
    %3310 = vmatprep.mubr.f32.mxu0 0.0
    %3311 = vmatmul.mubr.f32.gmra.mrb[0].mxu0 %v3084
    %v3312 = vpop.f32.mrb[0].mxu0
    %v3313 = vadd.f32 %v393, %v3312
    %v3314 = vpop.f32.mrb[0].mxu0
    %3315 = vdwg.mxu0
    %v3317 = vrot.slane %v3313, 2
    %v3319 = vmul.f32 %v3165, %v3317
    %v3320 = vadd.f32 %v365, %v3319
    %v3321 = vtanh.pop %v3320
    %v3322 = vsub.f32 1.0, %v3245
    %v3323 = vmul.f32 %v3322, %v3321
    %v3324 = vrot.slane %v3080, 6
    %v3326 = vmul.f32 %v3245, %v3324
    %v3327 = vadd.f32 %v3323, %v3326
    %3328 = vst.msk [vmem:[#allocation2 + $0x10] sm:$0xc0] %vm1373, %v3327
    %v3330 = vrot.slane %v3327, 6
    %v3331 = vsel %vm395, %v3330, 0
    %3333 = vmatprep.subr.mxu0 0.0
    %3334 = vmatpush1.msra.mxu0 %v373
    %3335 = vmatprep.subr.mxu0 0.0
    %3336 = vmatpush1.msra.mxu0 %v374
    %3337 = vmatprep.subr.mxu0 0.0
    %3338 = vmatpush1.msra.mxu0 %v375
    %3339 = vmatprep.subr.mxu0 0.0
    %3340 = vmatpush1.msra.mxu0 %v376
    %3341 = vmatprep.subr.mxu0 0.0
    %3342 = vmatpush1.msra.mxu0 0.0
    %3343 = vmatprep.subr.mxu0 0.0
    %3344 = vmatpush1.msra.mxu0 0.0
    %3345 = vmatprep.subr.mxu0 0.0
    %3346 = vmatpush1.msra.mxu0 0.0
    %3347 = vmatprep.subr.mxu0 0.0
    %3348 = vmatpush1.msra.mxu0 0.0
    %3349 = vmatprep.subr.mxu0 0.0
    %3350 = vmatpush1.msra.mxu0 0.0
    %3351 = vmatprep.subr.mxu0 0.0
    %3352 = vmatpush1.msra.mxu0 0.0
    %3353 = vmatprep.subr.mxu0 0.0
    %3354 = vmatpush1.msra.mxu0 0.0
    %3355 = vmatprep.subr.mxu0 0.0
    %3356 = vmatpush1.msra.mxu0 0.0
    %3357 = vmatprep.subr.mxu0 0.0
    %3358 = vmatpush1.msra.mxu0 0.0
    %3359 = vmatprep.subr.mxu0 0.0
    %3360 = vmatpush1.msra.mxu0 0.0
    %3361 = vmatprep.subr.mxu0 0.0
    %3362 = vmatpush1.msra.mxu0 0.0
    %3363 = vmatprep.subr.mxu0 0.0
    %3364 = vmatpush1.msra.mxu0 0.0
    %3365 = vmatprep.subr.mxu0 0.0
    %3366 = vmatpush1.msra.mxu0 0.0
    %3367 = vmatprep.subr.mxu0 0.0
    %3368 = vmatpush1.msra.mxu0 0.0
    %3369 = vmatprep.subr.mxu0 0.0
    %3370 = vmatpush1.msra.mxu0 0.0
    %3371 = vmatprep.subr.mxu0 0.0
    %3372 = vmatpush1.msra.mxu0 0.0
    %3373 = vmatprep.subr.mxu0 0.0
    %3374 = vmatpush1.msra.mxu0 0.0
    %3375 = vmatprep.subr.mxu0 0.0
    %3376 = vmatpush1.msra.mxu0 0.0
    %3377 = vmatprep.subr.mxu0 0.0
    %3378 = vmatpush1.msra.mxu0 0.0
    %3379 = vmatprep.subr.mxu0 0.0
    %3380 = vmatpush1.msra.mxu0 0.0
    %3381 = vmatprep.subr.mxu0 0.0
    %3382 = vmatpush1.msra.mxu0 0.0
    %3383 = vmatprep.subr.mxu0 0.0
    %3384 = vmatpush1.msra.mxu0 0.0
    %3385 = vmatprep.subr.mxu0 0.0
    %3386 = vmatpush1.msra.mxu0 0.0
    %3387 = vmatprep.subr.mxu0 0.0
    %3388 = vmatpush1.msra.mxu0 0.0
    %3389 = vmatprep.subr.mxu0 0.0
    %3390 = vmatpush1.msra.mxu0 0.0
    %3391 = vmatprep.subr.mxu0 0.0
    %3392 = vmatpush1.msra.mxu0 0.0
    %3393 = vmatprep.subr.mxu0 0.0
    %3394 = vmatpush1.msra.mxu0 0.0
    %3395 = vmatprep.subr.mxu0 0.0
    %3396 = vmatpush1.msra.mxu0 0.0
    %3397 = vmatprep.mubr.f32.mxu0 0.0
    %3398 = vmatmul.mubr.f32.gmra.mrb[0].mxu0 %v3331
    %v3399 = vpop.f32.mrb[0].mxu0
    %v3400 = vadd.f32 0.0, %v3399
    %v3401 = vpop.f32.mrb[0].mxu0
    %3402 = vdwg.mxu0
    %v3403 = vadd.f32 %v180, %v3400
    %v3404 = vxor.u32 %v3403, 2147483648
    %v3405 = vmul.f32 %v3404, 1.442695
    %v3406 = vpow.pop %v3405
    %v3407 = vadd.f32 %v3406, 1.0
    %v3408 = vrcp.pop %v3407
    %v3409 = vmul.f32 1.0, %v3408
    %3410 = vmatprep.subr.mxu0 0.0
    %3411 = vmatpush1.msra.mxu0 %v378
    %3412 = vmatprep.subr.mxu0 0.0
    %3413 = vmatpush1.msra.mxu0 %v379
    %3414 = vmatprep.subr.mxu0 0.0
    %3415 = vmatpush1.msra.mxu0 %v380
    %3416 = vmatprep.subr.mxu0 0.0
    %3417 = vmatpush1.msra.mxu0 %v381
    %3418 = vmatprep.subr.mxu0 0.0
    %3419 = vmatpush1.msra.mxu0 0.0
    %3420 = vmatprep.subr.mxu0 0.0
    %3421 = vmatpush1.msra.mxu0 0.0
    %3422 = vmatprep.subr.mxu0 0.0
    %3423 = vmatpush1.msra.mxu0 0.0
    %3424 = vmatprep.subr.mxu0 0.0
    %3425 = vmatpush1.msra.mxu0 0.0
    %3426 = vmatprep.subr.mxu0 0.0
    %3427 = vmatpush1.msra.mxu0 0.0
    %3428 = vmatprep.subr.mxu0 0.0
    %3429 = vmatpush1.msra.mxu0 0.0
    %3430 = vmatprep.subr.mxu0 0.0
    %3431 = vmatpush1.msra.mxu0 0.0
    %3432 = vmatprep.subr.mxu0 0.0
    %3433 = vmatpush1.msra.mxu0 0.0
    %3434 = vmatprep.subr.mxu0 0.0
    %3435 = vmatpush1.msra.mxu0 0.0
    %3436 = vmatprep.subr.mxu0 0.0
    %3437 = vmatpush1.msra.mxu0 0.0
    %3438 = vmatprep.subr.mxu0 0.0
    %3439 = vmatpush1.msra.mxu0 0.0
    %3440 = vmatprep.subr.mxu0 0.0
    %3441 = vmatpush1.msra.mxu0 0.0
    %3442 = vmatprep.subr.mxu0 0.0
    %3443 = vmatpush1.msra.mxu0 0.0
    %3444 = vmatprep.subr.mxu0 0.0
    %3445 = vmatpush1.msra.mxu0 0.0
    %3446 = vmatprep.subr.mxu0 0.0
    %3447 = vmatpush1.msra.mxu0 0.0
    %3448 = vmatprep.subr.mxu0 0.0
    %3449 = vmatpush1.msra.mxu0 0.0
    %3450 = vmatprep.subr.mxu0 0.0
    %3451 = vmatpush1.msra.mxu0 0.0
    %3452 = vmatprep.subr.mxu0 0.0
    %3453 = vmatpush1.msra.mxu0 0.0
    %3454 = vmatprep.subr.mxu0 0.0
    %3455 = vmatpush1.msra.mxu0 0.0
    %3456 = vmatprep.subr.mxu0 0.0
    %3457 = vmatpush1.msra.mxu0 0.0
    %3458 = vmatprep.subr.mxu0 0.0
    %3459 = vmatpush1.msra.mxu0 0.0
    %3460 = vmatprep.subr.mxu0 0.0
    %3461 = vmatpush1.msra.mxu0 0.0
    %3462 = vmatprep.subr.mxu0 0.0
    %3463 = vmatpush1.msra.mxu0 0.0
    %3464 = vmatprep.subr.mxu0 0.0
    %3465 = vmatpush1.msra.mxu0 0.0
    %3466 = vmatprep.subr.mxu0 0.0
    %3467 = vmatpush1.msra.mxu0 0.0
    %3468 = vmatprep.subr.mxu0 0.0
    %3469 = vmatpush1.msra.mxu0 0.0
    %3470 = vmatprep.subr.mxu0 0.0
    %3471 = vmatpush1.msra.mxu0 0.0
    %3472 = vmatprep.subr.mxu0 0.0
    %3473 = vmatpush1.msra.mxu0 0.0
    %3474 = vmatprep.mubr.f32.mxu0 0.0
    %3475 = vmatmul.mubr.f32.gmra.mrb[0].mxu0 %v3331
    %v3476 = vpop.f32.mrb[0].mxu0
    %v3477 = vadd.f32 0.0, %v3476
    %v3478 = vpop.f32.mrb[0].mxu0
    %3479 = vdwg.mxu0
    %v3480 = vadd.f32 %v275, %v3477
    %v3481 = vxor.u32 %v3480, 2147483648
    %v3482 = vmul.f32 %v3481, 1.442695
    %v3483 = vpow.pop %v3482
    %v3484 = vadd.f32 %v3483, 1.0
    %v3485 = vrcp.pop %v3484
    %v3486 = vmul.f32 1.0, %v3485
    %3487 = vmatprep.subr.mxu0 0.0
    %3488 = vmatpush1.msra.mxu0 %v383
    %3489 = vmatprep.subr.mxu0 0.0
    %3490 = vmatpush1.msra.mxu0 %v384
    %3491 = vmatprep.subr.mxu0 0.0
    %3492 = vmatpush1.msra.mxu0 %v385
    %3493 = vmatprep.subr.mxu0 0.0
    %3494 = vmatpush1.msra.mxu0 %v386
    %3495 = vmatprep.subr.mxu0 0.0
    %3496 = vmatpush1.msra.mxu0 0.0
    %3497 = vmatprep.subr.mxu0 0.0
    %3498 = vmatpush1.msra.mxu0 0.0
    %3499 = vmatprep.subr.mxu0 0.0
    %3500 = vmatpush1.msra.mxu0 0.0
    %3501 = vmatprep.subr.mxu0 0.0
    %3502 = vmatpush1.msra.mxu0 0.0
    %3503 = vmatprep.subr.mxu0 0.0
    %3504 = vmatpush1.msra.mxu0 0.0
    %3505 = vmatprep.subr.mxu0 0.0
    %3506 = vmatpush1.msra.mxu0 0.0
    %3507 = vmatprep.subr.mxu0 0.0
    %3508 = vmatpush1.msra.mxu0 0.0
    %3509 = vmatprep.subr.mxu0 0.0
    %3510 = vmatpush1.msra.mxu0 0.0
    %3511 = vmatprep.subr.mxu0 0.0
    %3512 = vmatpush1.msra.mxu0 0.0
    %3513 = vmatprep.subr.mxu0 0.0
    %3514 = vmatpush1.msra.mxu0 0.0
    %3515 = vmatprep.subr.mxu0 0.0
    %3516 = vmatpush1.msra.mxu0 0.0
    %3517 = vmatprep.subr.mxu0 0.0
    %3518 = vmatpush1.msra.mxu0 0.0
    %3519 = vmatprep.subr.mxu0 0.0
    %3520 = vmatpush1.msra.mxu0 0.0
    %3521 = vmatprep.subr.mxu0 0.0
    %3522 = vmatpush1.msra.mxu0 0.0
    %3523 = vmatprep.subr.mxu0 0.0
    %3524 = vmatpush1.msra.mxu0 0.0
    %3525 = vmatprep.subr.mxu0 0.0
    %3526 = vmatpush1.msra.mxu0 0.0
    %3527 = vmatprep.subr.mxu0 0.0
    %3528 = vmatpush1.msra.mxu0 0.0
    %3529 = vmatprep.subr.mxu0 0.0
    %3530 = vmatpush1.msra.mxu0 0.0
    %3531 = vmatprep.subr.mxu0 0.0
    %3532 = vmatpush1.msra.mxu0 0.0
    %3533 = vmatprep.subr.mxu0 0.0
    %3534 = vmatpush1.msra.mxu0 0.0
    %3535 = vmatprep.subr.mxu0 0.0
    %3536 = vmatpush1.msra.mxu0 0.0
    %3537 = vmatprep.subr.mxu0 0.0
    %3538 = vmatpush1.msra.mxu0 0.0
    %3539 = vmatprep.subr.mxu0 0.0
    %3540 = vmatpush1.msra.mxu0 0.0
    %3541 = vmatprep.subr.mxu0 0.0
    %3542 = vmatpush1.msra.mxu0 0.0
    %3543 = vmatprep.subr.mxu0 0.0
    %3544 = vmatpush1.msra.mxu0 0.0
    %3545 = vmatprep.subr.mxu0 0.0
    %3546 = vmatpush1.msra.mxu0 0.0
    %3547 = vmatprep.subr.mxu0 0.0
    %3548 = vmatpush1.msra.mxu0 0.0
    %3549 = vmatprep.subr.mxu0 0.0
    %3550 = vmatpush1.msra.mxu0 0.0
    %3551 = vmatprep.mubr.f32.mxu0 0.0
    %3552 = vmatmul.mubr.f32.gmra.mrb[0].mxu0 %v3331
    %v3553 = vpop.f32.mrb[0].mxu0
    %v3554 = vadd.f32 %v393, %v3553
    %v3555 = vpop.f32.mrb[0].mxu0
    %3556 = vdwg.mxu0
    %v3557 = vmul.f32 %v3409, %v3554
    %v3558 = vadd.f32 %v370, %v3557
    %v3559 = vtanh.pop %v3558
    %v3560 = vsub.f32 1.0, %v3486
    %v3561 = vmul.f32 %v3560, %v3559
    %v3563 = vmul.f32 %v3486, %v3330
    %v3564 = vadd.f32 %v3561, %v3563
    %3565 = vst.msk [vmem:[#allocation2 + $0x18] sm:$0x3] %vm630, %v3564
    %v3567 = vsel %vm395, %v3564, 0
    %3569 = vmatprep.subr.mxu0 0.0
    %3570 = vmatpush1.msra.mxu0 %v373
    %3571 = vmatprep.subr.mxu0 0.0
    %3572 = vmatpush1.msra.mxu0 %v374
    %3573 = vmatprep.subr.mxu0 0.0
    %3574 = vmatpush1.msra.mxu0 %v375
    %3575 = vmatprep.subr.mxu0 0.0
    %3576 = vmatpush1.msra.mxu0 %v376
    %3577 = vmatprep.subr.mxu0 0.0
    %3578 = vmatpush1.msra.mxu0 0.0
    %3579 = vmatprep.subr.mxu0 0.0
    %3580 = vmatpush1.msra.mxu0 0.0
    %3581 = vmatprep.subr.mxu0 0.0
    %3582 = vmatpush1.msra.mxu0 0.0
    %3583 = vmatprep.subr.mxu0 0.0
    %3584 = vmatpush1.msra.mxu0 0.0
    %3585 = vmatprep.subr.mxu0 0.0
    %3586 = vmatpush1.msra.mxu0 0.0
    %3587 = vmatprep.subr.mxu0 0.0
    %3588 = vmatpush1.msra.mxu0 0.0
    %3589 = vmatprep.subr.mxu0 0.0
    %3590 = vmatpush1.msra.mxu0 0.0
    %3591 = vmatprep.subr.mxu0 0.0
    %3592 = vmatpush1.msra.mxu0 0.0
    %3593 = vmatprep.subr.mxu0 0.0
    %3594 = vmatpush1.msra.mxu0 0.0
    %3595 = vmatprep.subr.mxu0 0.0
    %3596 = vmatpush1.msra.mxu0 0.0
    %3597 = vmatprep.subr.mxu0 0.0
    %3598 = vmatpush1.msra.mxu0 0.0
    %3599 = vmatprep.subr.mxu0 0.0
    %3600 = vmatpush1.msra.mxu0 0.0
    %3601 = vmatprep.subr.mxu0 0.0
    %3602 = vmatpush1.msra.mxu0 0.0
    %3603 = vmatprep.subr.mxu0 0.0
    %3604 = vmatpush1.msra.mxu0 0.0
    %3605 = vmatprep.subr.mxu0 0.0
    %3606 = vmatpush1.msra.mxu0 0.0
    %3607 = vmatprep.subr.mxu0 0.0
    %3608 = vmatpush1.msra.mxu0 0.0
    %3609 = vmatprep.subr.mxu0 0.0
    %3610 = vmatpush1.msra.mxu0 0.0
    %3611 = vmatprep.subr.mxu0 0.0
    %3612 = vmatpush1.msra.mxu0 0.0
    %3613 = vmatprep.subr.mxu0 0.0
    %3614 = vmatpush1.msra.mxu0 0.0
    %3615 = vmatprep.subr.mxu0 0.0
    %3616 = vmatpush1.msra.mxu0 0.0
    %3617 = vmatprep.subr.mxu0 0.0
    %3618 = vmatpush1.msra.mxu0 0.0
    %3619 = vmatprep.subr.mxu0 0.0
    %3620 = vmatpush1.msra.mxu0 0.0
    %3621 = vmatprep.subr.mxu0 0.0
    %3622 = vmatpush1.msra.mxu0 0.0
    %3623 = vmatprep.subr.mxu0 0.0
    %3624 = vmatpush1.msra.mxu0 0.0
    %3625 = vmatprep.subr.mxu0 0.0
    %3626 = vmatpush1.msra.mxu0 0.0
    %3627 = vmatprep.subr.mxu0 0.0
    %3628 = vmatpush1.msra.mxu0 0.0
    %3629 = vmatprep.subr.mxu0 0.0
    %3630 = vmatpush1.msra.mxu0 0.0
    %3631 = vmatprep.subr.mxu0 0.0
    %3632 = vmatpush1.msra.mxu0 0.0
    %3633 = vmatprep.mubr.f32.mxu0 0.0
    %3634 = vmatmul.mubr.f32.gmra.mrb[0].mxu0 %v3567
    %v3635 = vpop.f32.mrb[0].mxu0
    %v3636 = vadd.f32 0.0, %v3635
    %v3637 = vpop.f32.mrb[0].mxu0
    %3638 = vdwg.mxu0
    %v3640 = vrot.slane %v3636, 6
    %v3642 = vadd.f32 %v180, %v3640
    %v3643 = vxor.u32 %v3642, 2147483648
    %v3644 = vmul.f32 %v3643, 1.442695
    %v3645 = vpow.pop %v3644
    %v3646 = vadd.f32 %v3645, 1.0
    %v3647 = vrcp.pop %v3646
    %v3648 = vmul.f32 1.0, %v3647
    %3649 = vmatprep.subr.mxu0 0.0
    %3650 = vmatpush1.msra.mxu0 %v378
    %3651 = vmatprep.subr.mxu0 0.0
    %3652 = vmatpush1.msra.mxu0 %v379
    %3653 = vmatprep.subr.mxu0 0.0
    %3654 = vmatpush1.msra.mxu0 %v380
    %3655 = vmatprep.subr.mxu0 0.0
    %3656 = vmatpush1.msra.mxu0 %v381
    %3657 = vmatprep.subr.mxu0 0.0
    %3658 = vmatpush1.msra.mxu0 0.0
    %3659 = vmatprep.subr.mxu0 0.0
    %3660 = vmatpush1.msra.mxu0 0.0
    %3661 = vmatprep.subr.mxu0 0.0
    %3662 = vmatpush1.msra.mxu0 0.0
    %3663 = vmatprep.subr.mxu0 0.0
    %3664 = vmatpush1.msra.mxu0 0.0
    %3665 = vmatprep.subr.mxu0 0.0
    %3666 = vmatpush1.msra.mxu0 0.0
    %3667 = vmatprep.subr.mxu0 0.0
    %3668 = vmatpush1.msra.mxu0 0.0
    %3669 = vmatprep.subr.mxu0 0.0
    %3670 = vmatpush1.msra.mxu0 0.0
    %3671 = vmatprep.subr.mxu0 0.0
    %3672 = vmatpush1.msra.mxu0 0.0
    %3673 = vmatprep.subr.mxu0 0.0
    %3674 = vmatpush1.msra.mxu0 0.0
    %3675 = vmatprep.subr.mxu0 0.0
    %3676 = vmatpush1.msra.mxu0 0.0
    %3677 = vmatprep.subr.mxu0 0.0
    %3678 = vmatpush1.msra.mxu0 0.0
    %3679 = vmatprep.subr.mxu0 0.0
    %3680 = vmatpush1.msra.mxu0 0.0
    %3681 = vmatprep.subr.mxu0 0.0
    %3682 = vmatpush1.msra.mxu0 0.0
    %3683 = vmatprep.subr.mxu0 0.0
    %3684 = vmatpush1.msra.mxu0 0.0
    %3685 = vmatprep.subr.mxu0 0.0
    %3686 = vmatpush1.msra.mxu0 0.0
    %3687 = vmatprep.subr.mxu0 0.0
    %3688 = vmatpush1.msra.mxu0 0.0
    %3689 = vmatprep.subr.mxu0 0.0
    %3690 = vmatpush1.msra.mxu0 0.0
    %3691 = vmatprep.subr.mxu0 0.0
    %3692 = vmatpush1.msra.mxu0 0.0
    %3693 = vmatprep.subr.mxu0 0.0
    %3694 = vmatpush1.msra.mxu0 0.0
    %3695 = vmatprep.subr.mxu0 0.0
    %3696 = vmatpush1.msra.mxu0 0.0
    %3697 = vmatprep.subr.mxu0 0.0
    %3698 = vmatpush1.msra.mxu0 0.0
    %3699 = vmatprep.subr.mxu0 0.0
    %3700 = vmatpush1.msra.mxu0 0.0
    %3701 = vmatprep.subr.mxu0 0.0
    %3702 = vmatpush1.msra.mxu0 0.0
    %3703 = vmatprep.subr.mxu0 0.0
    %3704 = vmatpush1.msra.mxu0 0.0
    %3705 = vmatprep.subr.mxu0 0.0
    %3706 = vmatpush1.msra.mxu0 0.0
    %3707 = vmatprep.subr.mxu0 0.0
    %3708 = vmatpush1.msra.mxu0 0.0
    %3709 = vmatprep.subr.mxu0 0.0
    %3710 = vmatpush1.msra.mxu0 0.0
    %3711 = vmatprep.subr.mxu0 0.0
    %3712 = vmatpush1.msra.mxu0 0.0
    %3713 = vmatprep.mubr.f32.mxu0 0.0
    %3714 = vmatmul.mubr.f32.gmra.mrb[0].mxu0 %v3567
    %v3715 = vpop.f32.mrb[0].mxu0
    %v3716 = vadd.f32 0.0, %v3715
    %v3717 = vpop.f32.mrb[0].mxu0
    %3718 = vdwg.mxu0
    %v3720 = vrot.slane %v3716, 6
    %v3722 = vadd.f32 %v275, %v3720
    %v3723 = vxor.u32 %v3722, 2147483648
    %v3724 = vmul.f32 %v3723, 1.442695
    %v3725 = vpow.pop %v3724
    %v3726 = vadd.f32 %v3725, 1.0
    %v3727 = vrcp.pop %v3726
    %v3728 = vmul.f32 1.0, %v3727
    %3729 = vmatprep.subr.mxu0 0.0
    %3730 = vmatpush1.msra.mxu0 %v383
    %3731 = vmatprep.subr.mxu0 0.0
    %3732 = vmatpush1.msra.mxu0 %v384
    %3733 = vmatprep.subr.mxu0 0.0
    %3734 = vmatpush1.msra.mxu0 %v385
    %3735 = vmatprep.subr.mxu0 0.0
    %3736 = vmatpush1.msra.mxu0 %v386
    %3737 = vmatprep.subr.mxu0 0.0
    %3738 = vmatpush1.msra.mxu0 0.0
    %3739 = vmatprep.subr.mxu0 0.0
    %3740 = vmatpush1.msra.mxu0 0.0
    %3741 = vmatprep.subr.mxu0 0.0
    %3742 = vmatpush1.msra.mxu0 0.0
    %3743 = vmatprep.subr.mxu0 0.0
    %3744 = vmatpush1.msra.mxu0 0.0
    %3745 = vmatprep.subr.mxu0 0.0
    %3746 = vmatpush1.msra.mxu0 0.0
    %3747 = vmatprep.subr.mxu0 0.0
    %3748 = vmatpush1.msra.mxu0 0.0
    %3749 = vmatprep.subr.mxu0 0.0
    %3750 = vmatpush1.msra.mxu0 0.0
    %3751 = vmatprep.subr.mxu0 0.0
    %3752 = vmatpush1.msra.mxu0 0.0
    %3753 = vmatprep.subr.mxu0 0.0
    %3754 = vmatpush1.msra.mxu0 0.0
    %3755 = vmatprep.subr.mxu0 0.0
    %3756 = vmatpush1.msra.mxu0 0.0
    %3757 = vmatprep.subr.mxu0 0.0
    %3758 = vmatpush1.msra.mxu0 0.0
    %3759 = vmatprep.subr.mxu0 0.0
    %3760 = vmatpush1.msra.mxu0 0.0
    %3761 = vmatprep.subr.mxu0 0.0
    %3762 = vmatpush1.msra.mxu0 0.0
    %3763 = vmatprep.subr.mxu0 0.0
    %3764 = vmatpush1.msra.mxu0 0.0
    %3765 = vmatprep.subr.mxu0 0.0
    %3766 = vmatpush1.msra.mxu0 0.0
    %3767 = vmatprep.subr.mxu0 0.0
    %3768 = vmatpush1.msra.mxu0 0.0
    %3769 = vmatprep.subr.mxu0 0.0
    %3770 = vmatpush1.msra.mxu0 0.0
    %3771 = vmatprep.subr.mxu0 0.0
    %3772 = vmatpush1.msra.mxu0 0.0
    %3773 = vmatprep.subr.mxu0 0.0
    %3774 = vmatpush1.msra.mxu0 0.0
    %3775 = vmatprep.subr.mxu0 0.0
    %3776 = vmatpush1.msra.mxu0 0.0
    %3777 = vmatprep.subr.mxu0 0.0
    %3778 = vmatpush1.msra.mxu0 0.0
    %3779 = vmatprep.subr.mxu0 0.0
    %3780 = vmatpush1.msra.mxu0 0.0
    %3781 = vmatprep.subr.mxu0 0.0
    %3782 = vmatpush1.msra.mxu0 0.0
    %3783 = vmatprep.subr.mxu0 0.0
    %3784 = vmatpush1.msra.mxu0 0.0
    %3785 = vmatprep.subr.mxu0 0.0
    %3786 = vmatpush1.msra.mxu0 0.0
    %3787 = vmatprep.subr.mxu0 0.0
    %3788 = vmatpush1.msra.mxu0 0.0
    %3789 = vmatprep.subr.mxu0 0.0
    %3790 = vmatpush1.msra.mxu0 0.0
    %3791 = vmatprep.subr.mxu0 0.0
    %3792 = vmatpush1.msra.mxu0 0.0
    %3793 = vmatprep.mubr.f32.mxu0 0.0
    %3794 = vmatmul.mubr.f32.gmra.mrb[0].mxu0 %v3567
    %v3795 = vpop.f32.mrb[0].mxu0
    %v3796 = vadd.f32 %v393, %v3795
    %v3797 = vpop.f32.mrb[0].mxu0
    %3798 = vdwg.mxu0
    %v3800 = vrot.slane %v3796, 6
    %v3802 = vmul.f32 %v3648, %v3800
    %v3803 = vadd.f32 %v370, %v3802
    %v3804 = vtanh.pop %v3803
    %v3805 = vsub.f32 1.0, %v3728
    %v3806 = vmul.f32 %v3805, %v3804
    %v3807 = vrot.slane %v3564, 6
    %v3809 = vmul.f32 %v3728, %v3807
    %v3810 = vadd.f32 %v3806, %v3809
    %3811 = vst.msk [vmem:[#allocation2 + $0x18] sm:$0xc] %vm877, %v3810
    %v3813 = vrot.slane %v3810, 2
    %v3814 = vsel %vm395, %v3813, 0
    %3816 = vmatprep.subr.mxu0 0.0
    %3817 = vmatpush1.msra.mxu0 %v373
    %3818 = vmatprep.subr.mxu0 0.0
    %3819 = vmatpush1.msra.mxu0 %v374
    %3820 = vmatprep.subr.mxu0 0.0
    %3821 = vmatpush1.msra.mxu0 %v375
    %3822 = vmatprep.subr.mxu0 0.0
    %3823 = vmatpush1.msra.mxu0 %v376
    %3824 = vmatprep.subr.mxu0 0.0
    %3825 = vmatpush1.msra.mxu0 0.0
    %3826 = vmatprep.subr.mxu0 0.0
    %3827 = vmatpush1.msra.mxu0 0.0
    %3828 = vmatprep.subr.mxu0 0.0
    %3829 = vmatpush1.msra.mxu0 0.0
    %3830 = vmatprep.subr.mxu0 0.0
    %3831 = vmatpush1.msra.mxu0 0.0
    %3832 = vmatprep.subr.mxu0 0.0
    %3833 = vmatpush1.msra.mxu0 0.0
    %3834 = vmatprep.subr.mxu0 0.0
    %3835 = vmatpush1.msra.mxu0 0.0
    %3836 = vmatprep.subr.mxu0 0.0
    %3837 = vmatpush1.msra.mxu0 0.0
    %3838 = vmatprep.subr.mxu0 0.0
    %3839 = vmatpush1.msra.mxu0 0.0
    %3840 = vmatprep.subr.mxu0 0.0
    %3841 = vmatpush1.msra.mxu0 0.0
    %3842 = vmatprep.subr.mxu0 0.0
    %3843 = vmatpush1.msra.mxu0 0.0
    %3844 = vmatprep.subr.mxu0 0.0
    %3845 = vmatpush1.msra.mxu0 0.0
    %3846 = vmatprep.subr.mxu0 0.0
    %3847 = vmatpush1.msra.mxu0 0.0
    %3848 = vmatprep.subr.mxu0 0.0
    %3849 = vmatpush1.msra.mxu0 0.0
    %3850 = vmatprep.subr.mxu0 0.0
    %3851 = vmatpush1.msra.mxu0 0.0
    %3852 = vmatprep.subr.mxu0 0.0
    %3853 = vmatpush1.msra.mxu0 0.0
    %3854 = vmatprep.subr.mxu0 0.0
    %3855 = vmatpush1.msra.mxu0 0.0
    %3856 = vmatprep.subr.mxu0 0.0
    %3857 = vmatpush1.msra.mxu0 0.0
    %3858 = vmatprep.subr.mxu0 0.0
    %3859 = vmatpush1.msra.mxu0 0.0
    %3860 = vmatprep.subr.mxu0 0.0
    %3861 = vmatpush1.msra.mxu0 0.0
    %3862 = vmatprep.subr.mxu0 0.0
    %3863 = vmatpush1.msra.mxu0 0.0
    %3864 = vmatprep.subr.mxu0 0.0
    %3865 = vmatpush1.msra.mxu0 0.0
    %3866 = vmatprep.subr.mxu0 0.0
    %3867 = vmatpush1.msra.mxu0 0.0
    %3868 = vmatprep.subr.mxu0 0.0
    %3869 = vmatpush1.msra.mxu0 0.0
    %3870 = vmatprep.subr.mxu0 0.0
    %3871 = vmatpush1.msra.mxu0 0.0
    %3872 = vmatprep.subr.mxu0 0.0
    %3873 = vmatpush1.msra.mxu0 0.0
    %3874 = vmatprep.subr.mxu0 0.0
    %3875 = vmatpush1.msra.mxu0 0.0
    %3876 = vmatprep.subr.mxu0 0.0
    %3877 = vmatpush1.msra.mxu0 0.0
    %3878 = vmatprep.subr.mxu0 0.0
    %3879 = vmatpush1.msra.mxu0 0.0
    %3880 = vmatprep.mubr.f32.mxu0 0.0
    %3881 = vmatmul.mubr.f32.gmra.mrb[0].mxu0 %v3814
    %v3882 = vpop.f32.mrb[0].mxu0
    %v3883 = vadd.f32 0.0, %v3882
    %v3884 = vpop.f32.mrb[0].mxu0
    %3885 = vdwg.mxu0
    %v3887 = vrot.slane %v3883, 4
    %v3889 = vadd.f32 %v180, %v3887
    %v3890 = vxor.u32 %v3889, 2147483648
    %v3891 = vmul.f32 %v3890, 1.442695
    %v3892 = vpow.pop %v3891
    %v3893 = vadd.f32 %v3892, 1.0
    %v3894 = vrcp.pop %v3893
    %v3895 = vmul.f32 1.0, %v3894
    %3896 = vmatprep.subr.mxu0 0.0
    %3897 = vmatpush1.msra.mxu0 %v378
    %3898 = vmatprep.subr.mxu0 0.0
    %3899 = vmatpush1.msra.mxu0 %v379
    %3900 = vmatprep.subr.mxu0 0.0
    %3901 = vmatpush1.msra.mxu0 %v380
    %3902 = vmatprep.subr.mxu0 0.0
    %3903 = vmatpush1.msra.mxu0 %v381
    %3904 = vmatprep.subr.mxu0 0.0
    %3905 = vmatpush1.msra.mxu0 0.0
    %3906 = vmatprep.subr.mxu0 0.0
    %3907 = vmatpush1.msra.mxu0 0.0
    %3908 = vmatprep.subr.mxu0 0.0
    %3909 = vmatpush1.msra.mxu0 0.0
    %3910 = vmatprep.subr.mxu0 0.0
    %3911 = vmatpush1.msra.mxu0 0.0
    %3912 = vmatprep.subr.mxu0 0.0
    %3913 = vmatpush1.msra.mxu0 0.0
    %3914 = vmatprep.subr.mxu0 0.0
    %3915 = vmatpush1.msra.mxu0 0.0
    %3916 = vmatprep.subr.mxu0 0.0
    %3917 = vmatpush1.msra.mxu0 0.0
    %3918 = vmatprep.subr.mxu0 0.0
    %3919 = vmatpush1.msra.mxu0 0.0
    %3920 = vmatprep.subr.mxu0 0.0
    %3921 = vmatpush1.msra.mxu0 0.0
    %3922 = vmatprep.subr.mxu0 0.0
    %3923 = vmatpush1.msra.mxu0 0.0
    %3924 = vmatprep.subr.mxu0 0.0
    %3925 = vmatpush1.msra.mxu0 0.0
    %3926 = vmatprep.subr.mxu0 0.0
    %3927 = vmatpush1.msra.mxu0 0.0
    %3928 = vmatprep.subr.mxu0 0.0
    %3929 = vmatpush1.msra.mxu0 0.0
    %3930 = vmatprep.subr.mxu0 0.0
    %3931 = vmatpush1.msra.mxu0 0.0
    %3932 = vmatprep.subr.mxu0 0.0
    %3933 = vmatpush1.msra.mxu0 0.0
    %3934 = vmatprep.subr.mxu0 0.0
    %3935 = vmatpush1.msra.mxu0 0.0
    %3936 = vmatprep.subr.mxu0 0.0
    %3937 = vmatpush1.msra.mxu0 0.0
    %3938 = vmatprep.subr.mxu0 0.0
    %3939 = vmatpush1.msra.mxu0 0.0
    %3940 = vmatprep.subr.mxu0 0.0
    %3941 = vmatpush1.msra.mxu0 0.0
    %3942 = vmatprep.subr.mxu0 0.0
    %3943 = vmatpush1.msra.mxu0 0.0
    %3944 = vmatprep.subr.mxu0 0.0
    %3945 = vmatpush1.msra.mxu0 0.0
    %3946 = vmatprep.subr.mxu0 0.0
    %3947 = vmatpush1.msra.mxu0 0.0
    %3948 = vmatprep.subr.mxu0 0.0
    %3949 = vmatpush1.msra.mxu0 0.0
    %3950 = vmatprep.subr.mxu0 0.0
    %3951 = vmatpush1.msra.mxu0 0.0
    %3952 = vmatprep.subr.mxu0 0.0
    %3953 = vmatpush1.msra.mxu0 0.0
    %3954 = vmatprep.subr.mxu0 0.0
    %3955 = vmatpush1.msra.mxu0 0.0
    %3956 = vmatprep.subr.mxu0 0.0
    %3957 = vmatpush1.msra.mxu0 0.0
    %3958 = vmatprep.subr.mxu0 0.0
    %3959 = vmatpush1.msra.mxu0 0.0
    %3960 = vmatprep.mubr.f32.mxu0 0.0
    %3961 = vmatmul.mubr.f32.gmra.mrb[0].mxu0 %v3814
    %v3962 = vpop.f32.mrb[0].mxu0
    %v3963 = vadd.f32 0.0, %v3962
    %v3964 = vpop.f32.mrb[0].mxu0
    %3965 = vdwg.mxu0
    %v3967 = vrot.slane %v3963, 4
    %v3969 = vadd.f32 %v275, %v3967
    %v3970 = vxor.u32 %v3969, 2147483648
    %v3971 = vmul.f32 %v3970, 1.442695
    %v3972 = vpow.pop %v3971
    %v3973 = vadd.f32 %v3972, 1.0
    %v3974 = vrcp.pop %v3973
    %v3975 = vmul.f32 1.0, %v3974
    %3976 = vmatprep.subr.mxu0 0.0
    %3977 = vmatpush1.msra.mxu0 %v383
    %3978 = vmatprep.subr.mxu0 0.0
    %3979 = vmatpush1.msra.mxu0 %v384
    %3980 = vmatprep.subr.mxu0 0.0
    %3981 = vmatpush1.msra.mxu0 %v385
    %3982 = vmatprep.subr.mxu0 0.0
    %3983 = vmatpush1.msra.mxu0 %v386
    %3984 = vmatprep.subr.mxu0 0.0
    %3985 = vmatpush1.msra.mxu0 0.0
    %3986 = vmatprep.subr.mxu0 0.0
    %3987 = vmatpush1.msra.mxu0 0.0
    %3988 = vmatprep.subr.mxu0 0.0
    %3989 = vmatpush1.msra.mxu0 0.0
    %3990 = vmatprep.subr.mxu0 0.0
    %3991 = vmatpush1.msra.mxu0 0.0
    %3992 = vmatprep.subr.mxu0 0.0
    %3993 = vmatpush1.msra.mxu0 0.0
    %3994 = vmatprep.subr.mxu0 0.0
    %3995 = vmatpush1.msra.mxu0 0.0
    %3996 = vmatprep.subr.mxu0 0.0
    %3997 = vmatpush1.msra.mxu0 0.0
    %3998 = vmatprep.subr.mxu0 0.0
    %3999 = vmatpush1.msra.mxu0 0.0
    %4000 = vmatprep.subr.mxu0 0.0
    %4001 = vmatpush1.msra.mxu0 0.0
    %4002 = vmatprep.subr.mxu0 0.0
    %4003 = vmatpush1.msra.mxu0 0.0
    %4004 = vmatprep.subr.mxu0 0.0
    %4005 = vmatpush1.msra.mxu0 0.0
    %4006 = vmatprep.subr.mxu0 0.0
    %4007 = vmatpush1.msra.mxu0 0.0
    %4008 = vmatprep.subr.mxu0 0.0
    %4009 = vmatpush1.msra.mxu0 0.0
    %4010 = vmatprep.subr.mxu0 0.0
    %4011 = vmatpush1.msra.mxu0 0.0
    %4012 = vmatprep.subr.mxu0 0.0
    %4013 = vmatpush1.msra.mxu0 0.0
    %4014 = vmatprep.subr.mxu0 0.0
    %4015 = vmatpush1.msra.mxu0 0.0
    %4016 = vmatprep.subr.mxu0 0.0
    %4017 = vmatpush1.msra.mxu0 0.0
    %4018 = vmatprep.subr.mxu0 0.0
    %4019 = vmatpush1.msra.mxu0 0.0
    %4020 = vmatprep.subr.mxu0 0.0
    %4021 = vmatpush1.msra.mxu0 0.0
    %4022 = vmatprep.subr.mxu0 0.0
    %4023 = vmatpush1.msra.mxu0 0.0
    %4024 = vmatprep.subr.mxu0 0.0
    %4025 = vmatpush1.msra.mxu0 0.0
    %4026 = vmatprep.subr.mxu0 0.0
    %4027 = vmatpush1.msra.mxu0 0.0
    %4028 = vmatprep.subr.mxu0 0.0
    %4029 = vmatpush1.msra.mxu0 0.0
    %4030 = vmatprep.subr.mxu0 0.0
    %4031 = vmatpush1.msra.mxu0 0.0
    %4032 = vmatprep.subr.mxu0 0.0
    %4033 = vmatpush1.msra.mxu0 0.0
    %4034 = vmatprep.subr.mxu0 0.0
    %4035 = vmatpush1.msra.mxu0 0.0
    %4036 = vmatprep.subr.mxu0 0.0
    %4037 = vmatpush1.msra.mxu0 0.0
    %4038 = vmatprep.subr.mxu0 0.0
    %4039 = vmatpush1.msra.mxu0 0.0
    %4040 = vmatprep.mubr.f32.mxu0 0.0
    %4041 = vmatmul.mubr.f32.gmra.mrb[0].mxu0 %v3814
    %v4042 = vpop.f32.mrb[0].mxu0
    %v4043 = vadd.f32 %v393, %v4042
    %v4044 = vpop.f32.mrb[0].mxu0
    %4045 = vdwg.mxu0
    %v4047 = vrot.slane %v4043, 4
    %v4049 = vmul.f32 %v3895, %v4047
    %v4050 = vadd.f32 %v370, %v4049
    %v4051 = vtanh.pop %v4050
    %v4052 = vsub.f32 1.0, %v3975
    %v4053 = vmul.f32 %v4052, %v4051
    %v4054 = vrot.slane %v3810, 6
    %v4056 = vmul.f32 %v3975, %v4054
    %v4057 = vadd.f32 %v4053, %v4056
    %4058 = vst.msk [vmem:[#allocation2 + $0x18] sm:$0x30] %vm1125, %v4057
    %v4060 = vrot.slane %v4057, 4
    %v4061 = vsel %vm395, %v4060, 0
    %4063 = vmatprep.subr.mxu0 0.0
    %4064 = vmatpush1.msra.mxu0 %v373
    %4065 = vmatprep.subr.mxu0 0.0
    %4066 = vmatpush1.msra.mxu0 %v374
    %4067 = vmatprep.subr.mxu0 0.0
    %4068 = vmatpush1.msra.mxu0 %v375
    %4069 = vmatprep.subr.mxu0 0.0
    %4070 = vmatpush1.msra.mxu0 %v376
    %4071 = vmatprep.subr.mxu0 0.0
    %4072 = vmatpush1.msra.mxu0 0.0
    %4073 = vmatprep.subr.mxu0 0.0
    %4074 = vmatpush1.msra.mxu0 0.0
    %4075 = vmatprep.subr.mxu0 0.0
    %4076 = vmatpush1.msra.mxu0 0.0
    %4077 = vmatprep.subr.mxu0 0.0
    %4078 = vmatpush1.msra.mxu0 0.0
    %4079 = vmatprep.subr.mxu0 0.0
    %4080 = vmatpush1.msra.mxu0 0.0
    %4081 = vmatprep.subr.mxu0 0.0
    %4082 = vmatpush1.msra.mxu0 0.0
    %4083 = vmatprep.subr.mxu0 0.0
    %4084 = vmatpush1.msra.mxu0 0.0
    %4085 = vmatprep.subr.mxu0 0.0
    %4086 = vmatpush1.msra.mxu0 0.0
    %4087 = vmatprep.subr.mxu0 0.0
    %4088 = vmatpush1.msra.mxu0 0.0
    %4089 = vmatprep.subr.mxu0 0.0
    %4090 = vmatpush1.msra.mxu0 0.0
    %4091 = vmatprep.subr.mxu0 0.0
    %4092 = vmatpush1.msra.mxu0 0.0
    %4093 = vmatprep.subr.mxu0 0.0
    %4094 = vmatpush1.msra.mxu0 0.0
    %4095 = vmatprep.subr.mxu0 0.0
    %4096 = vmatpush1.msra.mxu0 0.0
    %4097 = vmatprep.subr.mxu0 0.0
    %4098 = vmatpush1.msra.mxu0 0.0
    %4099 = vmatprep.subr.mxu0 0.0
    %4100 = vmatpush1.msra.mxu0 0.0
    %4101 = vmatprep.subr.mxu0 0.0
    %4102 = vmatpush1.msra.mxu0 0.0
    %4103 = vmatprep.subr.mxu0 0.0
    %4104 = vmatpush1.msra.mxu0 0.0
    %4105 = vmatprep.subr.mxu0 0.0
    %4106 = vmatpush1.msra.mxu0 0.0
    %4107 = vmatprep.subr.mxu0 0.0
    %4108 = vmatpush1.msra.mxu0 0.0
    %4109 = vmatprep.subr.mxu0 0.0
    %4110 = vmatpush1.msra.mxu0 0.0
    %4111 = vmatprep.subr.mxu0 0.0
    %4112 = vmatpush1.msra.mxu0 0.0
    %4113 = vmatprep.subr.mxu0 0.0
    %4114 = vmatpush1.msra.mxu0 0.0
    %4115 = vmatprep.subr.mxu0 0.0
    %4116 = vmatpush1.msra.mxu0 0.0
    %4117 = vmatprep.subr.mxu0 0.0
    %4118 = vmatpush1.msra.mxu0 0.0
    %4119 = vmatprep.subr.mxu0 0.0
    %4120 = vmatpush1.msra.mxu0 0.0
    %4121 = vmatprep.subr.mxu0 0.0
    %4122 = vmatpush1.msra.mxu0 0.0
    %4123 = vmatprep.subr.mxu0 0.0
    %4124 = vmatpush1.msra.mxu0 0.0
    %4125 = vmatprep.subr.mxu0 0.0
    %4126 = vmatpush1.msra.mxu0 0.0
    %4127 = vmatprep.mubr.f32.mxu0 0.0
    %4128 = vmatmul.mubr.f32.gmra.mrb[0].mxu0 %v4061
    %v4129 = vpop.f32.mrb[0].mxu0
    %v4130 = vadd.f32 0.0, %v4129
    %v4131 = vpop.f32.mrb[0].mxu0
    %4132 = vdwg.mxu0
    %v4134 = vrot.slane %v4130, 2
    %v4136 = vadd.f32 %v180, %v4134
    %v4137 = vxor.u32 %v4136, 2147483648
    %v4138 = vmul.f32 %v4137, 1.442695
    %v4139 = vpow.pop %v4138
    %v4140 = vadd.f32 %v4139, 1.0
    %v4141 = vrcp.pop %v4140
    %v4142 = vmul.f32 1.0, %v4141
    %4143 = vmatprep.subr.mxu0 0.0
    %4144 = vmatpush1.msra.mxu0 %v378
    %4145 = vmatprep.subr.mxu0 0.0
    %4146 = vmatpush1.msra.mxu0 %v379
    %4147 = vmatprep.subr.mxu0 0.0
    %4148 = vmatpush1.msra.mxu0 %v380
    %4149 = vmatprep.subr.mxu0 0.0
    %4150 = vmatpush1.msra.mxu0 %v381
    %4151 = vmatprep.subr.mxu0 0.0
    %4152 = vmatpush1.msra.mxu0 0.0
    %4153 = vmatprep.subr.mxu0 0.0
    %4154 = vmatpush1.msra.mxu0 0.0
    %4155 = vmatprep.subr.mxu0 0.0
    %4156 = vmatpush1.msra.mxu0 0.0
    %4157 = vmatprep.subr.mxu0 0.0
    %4158 = vmatpush1.msra.mxu0 0.0
    %4159 = vmatprep.subr.mxu0 0.0
    %4160 = vmatpush1.msra.mxu0 0.0
    %4161 = vmatprep.subr.mxu0 0.0
    %4162 = vmatpush1.msra.mxu0 0.0
    %4163 = vmatprep.subr.mxu0 0.0
    %4164 = vmatpush1.msra.mxu0 0.0
    %4165 = vmatprep.subr.mxu0 0.0
    %4166 = vmatpush1.msra.mxu0 0.0
    %4167 = vmatprep.subr.mxu0 0.0
    %4168 = vmatpush1.msra.mxu0 0.0
    %4169 = vmatprep.subr.mxu0 0.0
    %4170 = vmatpush1.msra.mxu0 0.0
    %4171 = vmatprep.subr.mxu0 0.0
    %4172 = vmatpush1.msra.mxu0 0.0
    %4173 = vmatprep.subr.mxu0 0.0
    %4174 = vmatpush1.msra.mxu0 0.0
    %4175 = vmatprep.subr.mxu0 0.0
    %4176 = vmatpush1.msra.mxu0 0.0
    %4177 = vmatprep.subr.mxu0 0.0
    %4178 = vmatpush1.msra.mxu0 0.0
    %4179 = vmatprep.subr.mxu0 0.0
    %4180 = vmatpush1.msra.mxu0 0.0
    %4181 = vmatprep.subr.mxu0 0.0
    %4182 = vmatpush1.msra.mxu0 0.0
    %4183 = vmatprep.subr.mxu0 0.0
    %4184 = vmatpush1.msra.mxu0 0.0
    %4185 = vmatprep.subr.mxu0 0.0
    %4186 = vmatpush1.msra.mxu0 0.0
    %4187 = vmatprep.subr.mxu0 0.0
    %4188 = vmatpush1.msra.mxu0 0.0
    %4189 = vmatprep.subr.mxu0 0.0
    %4190 = vmatpush1.msra.mxu0 0.0
    %4191 = vmatprep.subr.mxu0 0.0
    %4192 = vmatpush1.msra.mxu0 0.0
    %4193 = vmatprep.subr.mxu0 0.0
    %4194 = vmatpush1.msra.mxu0 0.0
    %4195 = vmatprep.subr.mxu0 0.0
    %4196 = vmatpush1.msra.mxu0 0.0
    %4197 = vmatprep.subr.mxu0 0.0
    %4198 = vmatpush1.msra.mxu0 0.0
    %4199 = vmatprep.subr.mxu0 0.0
    %4200 = vmatpush1.msra.mxu0 0.0
    %4201 = vmatprep.subr.mxu0 0.0
    %4202 = vmatpush1.msra.mxu0 0.0
    %4203 = vmatprep.subr.mxu0 0.0
    %4204 = vmatpush1.msra.mxu0 0.0
    %4205 = vmatprep.subr.mxu0 0.0
    %4206 = vmatpush1.msra.mxu0 0.0
    %4207 = vmatprep.mubr.f32.mxu0 0.0
    %4208 = vmatmul.mubr.f32.gmra.mrb[0].mxu0 %v4061
    %v4209 = vpop.f32.mrb[0].mxu0
    %v4210 = vadd.f32 0.0, %v4209
    %v4211 = vpop.f32.mrb[0].mxu0
    %4212 = vdwg.mxu0
    %v4214 = vrot.slane %v4210, 2
    %v4216 = vadd.f32 %v275, %v4214
    %v4217 = vxor.u32 %v4216, 2147483648
    %v4218 = vmul.f32 %v4217, 1.442695
    %v4219 = vpow.pop %v4218
    %v4220 = vadd.f32 %v4219, 1.0
    %v4221 = vrcp.pop %v4220
    %v4222 = vmul.f32 1.0, %v4221
    %4223 = vmatprep.subr.mxu0 0.0
    %4224 = vmatpush1.msra.mxu0 %v383
    %4225 = vmatprep.subr.mxu0 0.0
    %4226 = vmatpush1.msra.mxu0 %v384
    %4227 = vmatprep.subr.mxu0 0.0
    %4228 = vmatpush1.msra.mxu0 %v385
    %4229 = vmatprep.subr.mxu0 0.0
    %4230 = vmatpush1.msra.mxu0 %v386
    %4231 = vmatprep.subr.mxu0 0.0
    %4232 = vmatpush1.msra.mxu0 0.0
    %4233 = vmatprep.subr.mxu0 0.0
    %4234 = vmatpush1.msra.mxu0 0.0
    %4235 = vmatprep.subr.mxu0 0.0
    %4236 = vmatpush1.msra.mxu0 0.0
    %4237 = vmatprep.subr.mxu0 0.0
    %4238 = vmatpush1.msra.mxu0 0.0
    %4239 = vmatprep.subr.mxu0 0.0
    %4240 = vmatpush1.msra.mxu0 0.0
    %4241 = vmatprep.subr.mxu0 0.0
    %4242 = vmatpush1.msra.mxu0 0.0
    %4243 = vmatprep.subr.mxu0 0.0
    %4244 = vmatpush1.msra.mxu0 0.0
    %4245 = vmatprep.subr.mxu0 0.0
    %4246 = vmatpush1.msra.mxu0 0.0
    %4247 = vmatprep.subr.mxu0 0.0
    %4248 = vmatpush1.msra.mxu0 0.0
    %4249 = vmatprep.subr.mxu0 0.0
    %4250 = vmatpush1.msra.mxu0 0.0
    %4251 = vmatprep.subr.mxu0 0.0
    %4252 = vmatpush1.msra.mxu0 0.0
    %4253 = vmatprep.subr.mxu0 0.0
    %4254 = vmatpush1.msra.mxu0 0.0
    %4255 = vmatprep.subr.mxu0 0.0
    %4256 = vmatpush1.msra.mxu0 0.0
    %4257 = vmatprep.subr.mxu0 0.0
    %4258 = vmatpush1.msra.mxu0 0.0
    %4259 = vmatprep.subr.mxu0 0.0
    %4260 = vmatpush1.msra.mxu0 0.0
    %4261 = vmatprep.subr.mxu0 0.0
    %4262 = vmatpush1.msra.mxu0 0.0
    %4263 = vmatprep.subr.mxu0 0.0
    %4264 = vmatpush1.msra.mxu0 0.0
    %4265 = vmatprep.subr.mxu0 0.0
    %4266 = vmatpush1.msra.mxu0 0.0
    %4267 = vmatprep.subr.mxu0 0.0
    %4268 = vmatpush1.msra.mxu0 0.0
    %4269 = vmatprep.subr.mxu0 0.0
    %4270 = vmatpush1.msra.mxu0 0.0
    %4271 = vmatprep.subr.mxu0 0.0
    %4272 = vmatpush1.msra.mxu0 0.0
    %4273 = vmatprep.subr.mxu0 0.0
    %4274 = vmatpush1.msra.mxu0 0.0
    %4275 = vmatprep.subr.mxu0 0.0
    %4276 = vmatpush1.msra.mxu0 0.0
    %4277 = vmatprep.subr.mxu0 0.0
    %4278 = vmatpush1.msra.mxu0 0.0
    %4279 = vmatprep.subr.mxu0 0.0
    %4280 = vmatpush1.msra.mxu0 0.0
    %4281 = vmatprep.subr.mxu0 0.0
    %4282 = vmatpush1.msra.mxu0 0.0
    %4283 = vmatprep.subr.mxu0 0.0
    %4284 = vmatpush1.msra.mxu0 0.0
    %4285 = vmatprep.subr.mxu0 0.0
    %4286 = vmatpush1.msra.mxu0 0.0
    %4287 = vmatprep.mubr.f32.mxu0 0.0
    %4288 = vmatmul.mubr.f32.gmra.mrb[0].mxu0 %v4061
    %v4289 = vpop.f32.mrb[0].mxu0
    %v4290 = vadd.f32 %v393, %v4289
    %v4291 = vpop.f32.mrb[0].mxu0
    %4292 = vdwg.mxu0
    %v4294 = vrot.slane %v4290, 2
    %v4296 = vmul.f32 %v4142, %v4294
    %v4297 = vadd.f32 %v370, %v4296
    %v4298 = vtanh.pop %v4297
    %v4299 = vsub.f32 1.0, %v4222
    %v4300 = vmul.f32 %v4299, %v4298
    %v4301 = vrot.slane %v4057, 6
    %v4303 = vmul.f32 %v4222, %v4301
    %v4304 = vadd.f32 %v4300, %v4303
    %4305 = vst.msk [vmem:[#allocation2 + $0x18] sm:$0xc0] %vm1373, %v4304
    %v4306 = vld [vmem:[#allocation2] sm:$0xff]
    %v4307 = vld [vmem:[#allocation2 + $0x8] sm:$0xff]
    %v4308 = vld [vmem:[#allocation2 + $0x10] sm:$0xff]
    %v4309 = vld [vmem:[#allocation2 + $0x18] sm:$0xff]
    %v4310 = vld [vmem:[#allocation5] sm:$0xff]
    %v4311 = vld [vmem:[#allocation5 + $0x8] sm:$0xff]
    %v4312 = vld [vmem:[#allocation5 + $0x10] sm:$0xff]
    %v4313 = vld [vmem:[#allocation5 + $0x18] sm:$0xff]
    %v4314 = vld [vmem:[%s6] sm:$0x1]
    %v4316 = vlaneseq
    %v4317 = vshrl.u32 %v4316, 7
    %v4318 = vsub.s32 0, %v4317
    %v4319 = vrot.slane %v4314, %v4318
    %v4322 = vsel %vm395, %v4306, 0
    %v4325 = vsel %vm395, %v4307, 0
    %v4328 = vsel %vm395, %v4308, 0
    %v4331 = vsel %vm395, %v4309, 0
    %4333 = vmatprep.subr.mxu0 0.0
    %4334 = vmatpush1.msra.mxu0 %v4310
    %4335 = vmatprep.subr.mxu0 0.0
    %4336 = vmatpush1.msra.mxu0 %v4311
    %4337 = vmatprep.subr.mxu0 0.0
    %4338 = vmatpush1.msra.mxu0 %v4312
    %4339 = vmatprep.subr.mxu0 0.0
    %4340 = vmatpush1.msra.mxu0 %v4313
    %4341 = vmatprep.subr.mxu0 0.0
    %4342 = vmatpush1.msra.mxu0 0.0
    %4343 = vmatprep.subr.mxu0 0.0
    %4344 = vmatpush1.msra.mxu0 0.0
    %4345 = vmatprep.subr.mxu0 0.0
    %4346 = vmatpush1.msra.mxu0 0.0
    %4347 = vmatprep.subr.mxu0 0.0
    %4348 = vmatpush1.msra.mxu0 0.0
    %4349 = vmatprep.subr.mxu0 0.0
    %4350 = vmatpush1.msra.mxu0 0.0
    %4351 = vmatprep.subr.mxu0 0.0
    %4352 = vmatpush1.msra.mxu0 0.0
    %4353 = vmatprep.subr.mxu0 0.0
    %4354 = vmatpush1.msra.mxu0 0.0
    %4355 = vmatprep.subr.mxu0 0.0
    %4356 = vmatpush1.msra.mxu0 0.0
    %4357 = vmatprep.subr.mxu0 0.0
    %4358 = vmatpush1.msra.mxu0 0.0
    %4359 = vmatprep.subr.mxu0 0.0
    %4360 = vmatpush1.msra.mxu0 0.0
    %4361 = vmatprep.subr.mxu0 0.0
    %4362 = vmatpush1.msra.mxu0 0.0
    %4363 = vmatprep.subr.mxu0 0.0
    %4364 = vmatpush1.msra.mxu0 0.0
    %4365 = vmatprep.subr.mxu0 0.0
    %4366 = vmatpush1.msra.mxu0 0.0
    %4367 = vmatprep.subr.mxu0 0.0
    %4368 = vmatpush1.msra.mxu0 0.0
    %4369 = vmatprep.subr.mxu0 0.0
    %4370 = vmatpush1.msra.mxu0 0.0
    %4371 = vmatprep.subr.mxu0 0.0
    %4372 = vmatpush1.msra.mxu0 0.0
    %4373 = vmatprep.subr.mxu0 0.0
    %4374 = vmatpush1.msra.mxu0 0.0
    %4375 = vmatprep.subr.mxu0 0.0
    %4376 = vmatpush1.msra.mxu0 0.0
    %4377 = vmatprep.subr.mxu0 0.0
    %4378 = vmatpush1.msra.mxu0 0.0
    %4379 = vmatprep.subr.mxu0 0.0
    %4380 = vmatpush1.msra.mxu0 0.0
    %4381 = vmatprep.subr.mxu0 0.0
    %4382 = vmatpush1.msra.mxu0 0.0
    %4383 = vmatprep.subr.mxu0 0.0
    %4384 = vmatpush1.msra.mxu0 0.0
    %4385 = vmatprep.subr.mxu0 0.0
    %4386 = vmatpush1.msra.mxu0 0.0
    %4387 = vmatprep.subr.mxu0 0.0
    %4388 = vmatpush1.msra.mxu0 0.0
    %4389 = vmatprep.subr.mxu0 0.0
    %4390 = vmatpush1.msra.mxu0 0.0
    %4391 = vmatprep.subr.mxu0 0.0
    %4392 = vmatpush1.msra.mxu0 0.0
    %4393 = vmatprep.subr.mxu0 0.0
    %4394 = vmatpush1.msra.mxu0 0.0
    %4395 = vmatprep.subr.mxu0 0.0
    %4396 = vmatpush1.msra.mxu0 0.0
    %4397 = vmatprep.mubr.f32.mxu0 0.0
    %4398 = vmatmul.mubr.f32.gmra.mrb[0].mxu0 %v4322
    %v4399 = vpop.f32.mrb[0].mxu0
    %v4400 = vadd.f32 %v4319, %v4399
    %v4401 = vpop.f32.mrb[0].mxu0
    %4402 = vmatprep.mubr.f32.mxu0 0.0
    %4403 = vmatmul.mubr.f32.gmra.mrb[0].mxu0 %v4325
    %v4404 = vpop.f32.mrb[0].mxu0
    %v4405 = vadd.f32 %v4319, %v4404
    %v4406 = vpop.f32.mrb[0].mxu0
    %4407 = vmatprep.mubr.f32.mxu0 0.0
    %4408 = vmatmul.mubr.f32.gmra.mrb[0].mxu0 %v4328
    %v4409 = vpop.f32.mrb[0].mxu0
    %v4410 = vadd.f32 %v4319, %v4409
    %v4411 = vpop.f32.mrb[0].mxu0
    %4412 = vmatprep.mubr.f32.mxu0 0.0
    %4413 = vmatmul.mubr.f32.gmra.mrb[0].mxu0 %v4331
    %v4414 = vpop.f32.mrb[0].mxu0
    %v4415 = vadd.f32 %v4319, %v4414
    %v4416 = vpop.f32.mrb[0].mxu0
    %4417 = vdwg.mxu0
    %s4418 = scalar_lea.vmem [#allocation5], 32
    %v4419 = vld [vmem:[%s4418] sm:$0xff]
    %v4420 = vld [vmem:[%s4418 + $0x8] sm:$0xff]
    %v4421 = vld [vmem:[%s4418 + $0x10] sm:$0xff]
    %v4422 = vld [vmem:[%s4418 + $0x18] sm:$0xff]
    %s4423 = scalar_lea.vmem %s6, 1
    %v4424 = vld [vmem:[%s4423] sm:$0x1]
    %v4426 = vlaneseq
    %v4427 = vshrl.u32 %v4426, 7
    %v4428 = vsub.s32 0, %v4427
    %v4429 = vrot.slane %v4424, %v4428
    %4431 = vmatprep.subr.mxu0 0.0
    %4432 = vmatpush1.msra.mxu0 %v4419
    %4433 = vmatprep.subr.mxu0 0.0
    %4434 = vmatpush1.msra.mxu0 %v4420
    %4435 = vmatprep.subr.mxu0 0.0
    %4436 = vmatpush1.msra.mxu0 %v4421
    %4437 = vmatprep.subr.mxu0 0.0
    %4438 = vmatpush1.msra.mxu0 %v4422
    %4439 = vmatprep.subr.mxu0 0.0
    %4440 = vmatpush1.msra.mxu0 0.0
    %4441 = vmatprep.subr.mxu0 0.0
    %4442 = vmatpush1.msra.mxu0 0.0
    %4443 = vmatprep.subr.mxu0 0.0
    %4444 = vmatpush1.msra.mxu0 0.0
    %4445 = vmatprep.subr.mxu0 0.0
    %4446 = vmatpush1.msra.mxu0 0.0
    %4447 = vmatprep.subr.mxu0 0.0
    %4448 = vmatpush1.msra.mxu0 0.0
    %4449 = vmatprep.subr.mxu0 0.0
    %4450 = vmatpush1.msra.mxu0 0.0
    %4451 = vmatprep.subr.mxu0 0.0
    %4452 = vmatpush1.msra.mxu0 0.0
    %4453 = vmatprep.subr.mxu0 0.0
    %4454 = vmatpush1.msra.mxu0 0.0
    %4455 = vmatprep.subr.mxu0 0.0
    %4456 = vmatpush1.msra.mxu0 0.0
    %4457 = vmatprep.subr.mxu0 0.0
    %4458 = vmatpush1.msra.mxu0 0.0
    %4459 = vmatprep.subr.mxu0 0.0
    %4460 = vmatpush1.msra.mxu0 0.0
    %4461 = vmatprep.subr.mxu0 0.0
    %4462 = vmatpush1.msra.mxu0 0.0
    %4463 = vmatprep.subr.mxu0 0.0
    %4464 = vmatpush1.msra.mxu0 0.0
    %4465 = vmatprep.subr.mxu0 0.0
    %4466 = vmatpush1.msra.mxu0 0.0
    %4467 = vmatprep.subr.mxu0 0.0
    %4468 = vmatpush1.msra.mxu0 0.0
    %4469 = vmatprep.subr.mxu0 0.0
    %4470 = vmatpush1.msra.mxu0 0.0
    %4471 = vmatprep.subr.mxu0 0.0
    %4472 = vmatpush1.msra.mxu0 0.0
    %4473 = vmatprep.subr.mxu0 0.0
    %4474 = vmatpush1.msra.mxu0 0.0
    %4475 = vmatprep.subr.mxu0 0.0
    %4476 = vmatpush1.msra.mxu0 0.0
    %4477 = vmatprep.subr.mxu0 0.0
    %4478 = vmatpush1.msra.mxu0 0.0
    %4479 = vmatprep.subr.mxu0 0.0
    %4480 = vmatpush1.msra.mxu0 0.0
    %4481 = vmatprep.subr.mxu0 0.0
    %4482 = vmatpush1.msra.mxu0 0.0
    %4483 = vmatprep.subr.mxu0 0.0
    %4484 = vmatpush1.msra.mxu0 0.0
    %4485 = vmatprep.subr.mxu0 0.0
    %4486 = vmatpush1.msra.mxu0 0.0
    %4487 = vmatprep.subr.mxu0 0.0
    %4488 = vmatpush1.msra.mxu0 0.0
    %4489 = vmatprep.subr.mxu0 0.0
    %4490 = vmatpush1.msra.mxu0 0.0
    %4491 = vmatprep.subr.mxu0 0.0
    %4492 = vmatpush1.msra.mxu0 0.0
    %4493 = vmatprep.subr.mxu0 0.0
    %4494 = vmatpush1.msra.mxu0 0.0
    %4495 = vmatprep.mubr.f32.mxu0 0.0
    %4496 = vmatmul.mubr.f32.gmra.mrb[0].mxu0 %v4322
    %v4497 = vpop.f32.mrb[0].mxu0
    %v4498 = vadd.f32 %v4429, %v4497
    %v4499 = vpop.f32.mrb[0].mxu0
    %4500 = vmatprep.mubr.f32.mxu0 0.0
    %4501 = vmatmul.mubr.f32.gmra.mrb[0].mxu0 %v4325
    %v4502 = vpop.f32.mrb[0].mxu0
    %v4503 = vadd.f32 %v4429, %v4502
    %v4504 = vpop.f32.mrb[0].mxu0
    %4505 = vmatprep.mubr.f32.mxu0 0.0
    %4506 = vmatmul.mubr.f32.gmra.mrb[0].mxu0 %v4328
    %v4507 = vpop.f32.mrb[0].mxu0
    %v4508 = vadd.f32 %v4429, %v4507
    %v4509 = vpop.f32.mrb[0].mxu0
    %4510 = vmatprep.mubr.f32.mxu0 0.0
    %4511 = vmatmul.mubr.f32.gmra.mrb[0].mxu0 %v4331
    %v4512 = vpop.f32.mrb[0].mxu0
    %v4513 = vadd.f32 %v4429, %v4512
    %v4514 = vpop.f32.mrb[0].mxu0
    %4515 = vdwg.mxu0
    %s4516 = scalar_lea.vmem [#allocation5], 64
    %v4517 = vld [vmem:[%s4516] sm:$0xff]
    %v4518 = vld [vmem:[%s4516 + $0x8] sm:$0xff]
    %v4519 = vld [vmem:[%s4516 + $0x10] sm:$0xff]
    %v4520 = vld [vmem:[%s4516 + $0x18] sm:$0xff]
    %s4521 = scalar_lea.vmem %s6, 2
    %v4522 = vld [vmem:[%s4521] sm:$0x1]
    %v4524 = vlaneseq
    %v4525 = vshrl.u32 %v4524, 7
    %v4526 = vsub.s32 0, %v4525
    %v4527 = vrot.slane %v4522, %v4526
    %4529 = vmatprep.subr.mxu0 0.0
    %4530 = vmatpush1.msra.mxu0 %v4517
    %4531 = vmatprep.subr.mxu0 0.0
    %4532 = vmatpush1.msra.mxu0 %v4518
    %4533 = vmatprep.subr.mxu0 0.0
    %4534 = vmatpush1.msra.mxu0 %v4519
    %4535 = vmatprep.subr.mxu0 0.0
    %4536 = vmatpush1.msra.mxu0 %v4520
    %4537 = vmatprep.subr.mxu0 0.0
    %4538 = vmatpush1.msra.mxu0 0.0
    %4539 = vmatprep.subr.mxu0 0.0
    %4540 = vmatpush1.msra.mxu0 0.0
    %4541 = vmatprep.subr.mxu0 0.0
    %4542 = vmatpush1.msra.mxu0 0.0
    %4543 = vmatprep.subr.mxu0 0.0
    %4544 = vmatpush1.msra.mxu0 0.0
    %4545 = vmatprep.subr.mxu0 0.0
    %4546 = vmatpush1.msra.mxu0 0.0
    %4547 = vmatprep.subr.mxu0 0.0
    %4548 = vmatpush1.msra.mxu0 0.0
    %4549 = vmatprep.subr.mxu0 0.0
    %4550 = vmatpush1.msra.mxu0 0.0
    %4551 = vmatprep.subr.mxu0 0.0
    %4552 = vmatpush1.msra.mxu0 0.0
    %4553 = vmatprep.subr.mxu0 0.0
    %4554 = vmatpush1.msra.mxu0 0.0
    %4555 = vmatprep.subr.mxu0 0.0
    %4556 = vmatpush1.msra.mxu0 0.0
    %4557 = vmatprep.subr.mxu0 0.0
    %4558 = vmatpush1.msra.mxu0 0.0
    %4559 = vmatprep.subr.mxu0 0.0
    %4560 = vmatpush1.msra.mxu0 0.0
    %4561 = vmatprep.subr.mxu0 0.0
    %4562 = vmatpush1.msra.mxu0 0.0
    %4563 = vmatprep.subr.mxu0 0.0
    %4564 = vmatpush1.msra.mxu0 0.0
    %4565 = vmatprep.subr.mxu0 0.0
    %4566 = vmatpush1.msra.mxu0 0.0
    %4567 = vmatprep.subr.mxu0 0.0
    %4568 = vmatpush1.msra.mxu0 0.0
    %4569 = vmatprep.subr.mxu0 0.0
    %4570 = vmatpush1.msra.mxu0 0.0
    %4571 = vmatprep.subr.mxu0 0.0
    %4572 = vmatpush1.msra.mxu0 0.0
    %4573 = vmatprep.subr.mxu0 0.0
    %4574 = vmatpush1.msra.mxu0 0.0
    %4575 = vmatprep.subr.mxu0 0.0
    %4576 = vmatpush1.msra.mxu0 0.0
    %4577 = vmatprep.subr.mxu0 0.0
    %4578 = vmatpush1.msra.mxu0 0.0
    %4579 = vmatprep.subr.mxu0 0.0
    %4580 = vmatpush1.msra.mxu0 0.0
    %4581 = vmatprep.subr.mxu0 0.0
    %4582 = vmatpush1.msra.mxu0 0.0
    %4583 = vmatprep.subr.mxu0 0.0
    %4584 = vmatpush1.msra.mxu0 0.0
    %4585 = vmatprep.subr.mxu0 0.0
    %4586 = vmatpush1.msra.mxu0 0.0
    %4587 = vmatprep.subr.mxu0 0.0
    %4588 = vmatpush1.msra.mxu0 0.0
    %4589 = vmatprep.subr.mxu0 0.0
    %4590 = vmatpush1.msra.mxu0 0.0
    %4591 = vmatprep.subr.mxu0 0.0
    %4592 = vmatpush1.msra.mxu0 0.0
    %4593 = vmatprep.mubr.f32.mxu0 0.0
    %4594 = vmatmul.mubr.f32.gmra.mrb[0].mxu0 %v4322
    %v4595 = vpop.f32.mrb[0].mxu0
    %v4596 = vadd.f32 %v4527, %v4595
    %v4597 = vpop.f32.mrb[0].mxu0
    %4598 = vmatprep.mubr.f32.mxu0 0.0
    %4599 = vmatmul.mubr.f32.gmra.mrb[0].mxu0 %v4325
    %v4600 = vpop.f32.mrb[0].mxu0
    %v4601 = vadd.f32 %v4527, %v4600
    %v4602 = vpop.f32.mrb[0].mxu0
    %4603 = vmatprep.mubr.f32.mxu0 0.0
    %4604 = vmatmul.mubr.f32.gmra.mrb[0].mxu0 %v4328
    %v4605 = vpop.f32.mrb[0].mxu0
    %v4606 = vadd.f32 %v4527, %v4605
    %v4607 = vpop.f32.mrb[0].mxu0
    %4608 = vmatprep.mubr.f32.mxu0 0.0
    %4609 = vmatmul.mubr.f32.gmra.mrb[0].mxu0 %v4331
    %v4610 = vpop.f32.mrb[0].mxu0
    %v4611 = vadd.f32 %v4527, %v4610
    %v4612 = vpop.f32.mrb[0].mxu0
    %4613 = vdwg.mxu0
    %v4614 = vld [vmem:[#allocation7] sm:$0xff]
    %v4615 = vld [vmem:[#allocation7 + $0x8] sm:$0xff]
    %v4616 = vld [vmem:[#allocation7 + $0x10] sm:$0xff]
    %v4617 = vld [vmem:[#allocation7 + $0x18] sm:$0xff]
    %s4618 = scalar_lea.vmem [#allocation7], 32
    %v4619 = vld [vmem:[%s4618] sm:$0xff]
    %v4620 = vld [vmem:[%s4618 + $0x8] sm:$0xff]
    %v4621 = vld [vmem:[%s4618 + $0x10] sm:$0xff]
    %v4622 = vld [vmem:[%s4618 + $0x18] sm:$0xff]
    %s4623 = scalar_lea.vmem [#allocation7], 64
    %v4624 = vld [vmem:[%s4623] sm:$0xff]
    %v4625 = vld [vmem:[%s4623 + $0x8] sm:$0xff]
    %v4626 = vld [vmem:[%s4623 + $0x10] sm:$0xff]
    %v4627 = vld [vmem:[%s4623 + $0x18] sm:$0xff]
    %s4628 = scalar_lea.vmem %s6, 3
    %v4629 = vld [vmem:[%s4628] sm:$0x1]
    %v4631 = vlaneseq
    %v4632 = vshrl.u32 %v4631, 7
    %v4633 = vsub.s32 0, %v4632
    %v4634 = vrot.slane %v4629, %v4633
    %4636 = vmatprep.subr.mxu0 0.0
    %4637 = vmatpush1.msra.mxu0 %v4614
    %4638 = vmatprep.subr.mxu0 0.0
    %4639 = vmatpush1.msra.mxu0 %v4615
    %4640 = vmatprep.subr.mxu0 0.0
    %4641 = vmatpush1.msra.mxu0 %v4616
    %4642 = vmatprep.subr.mxu0 0.0
    %4643 = vmatpush1.msra.mxu0 %v4617
    %4644 = vmatprep.subr.mxu0 0.0
    %4645 = vmatpush1.msra.mxu0 0.0
    %4646 = vmatprep.subr.mxu0 0.0
    %4647 = vmatpush1.msra.mxu0 0.0
    %4648 = vmatprep.subr.mxu0 0.0
    %4649 = vmatpush1.msra.mxu0 0.0
    %4650 = vmatprep.subr.mxu0 0.0
    %4651 = vmatpush1.msra.mxu0 0.0
    %4652 = vmatprep.subr.mxu0 0.0
    %4653 = vmatpush1.msra.mxu0 0.0
    %4654 = vmatprep.subr.mxu0 0.0
    %4655 = vmatpush1.msra.mxu0 0.0
    %4656 = vmatprep.subr.mxu0 0.0
    %4657 = vmatpush1.msra.mxu0 0.0
    %4658 = vmatprep.subr.mxu0 0.0
    %4659 = vmatpush1.msra.mxu0 0.0
    %4660 = vmatprep.subr.mxu0 0.0
    %4661 = vmatpush1.msra.mxu0 0.0
    %4662 = vmatprep.subr.mxu0 0.0
    %4663 = vmatpush1.msra.mxu0 0.0
    %4664 = vmatprep.subr.mxu0 0.0
    %4665 = vmatpush1.msra.mxu0 0.0
    %4666 = vmatprep.subr.mxu0 0.0
    %4667 = vmatpush1.msra.mxu0 0.0
    %4668 = vmatprep.subr.mxu0 0.0
    %4669 = vmatpush1.msra.mxu0 0.0
    %4670 = vmatprep.subr.mxu0 0.0
    %4671 = vmatpush1.msra.mxu0 0.0
    %4672 = vmatprep.subr.mxu0 0.0
    %4673 = vmatpush1.msra.mxu0 0.0
    %4674 = vmatprep.subr.mxu0 0.0
    %4675 = vmatpush1.msra.mxu0 0.0
    %4676 = vmatprep.subr.mxu0 0.0
    %4677 = vmatpush1.msra.mxu0 0.0
    %4678 = vmatprep.subr.mxu0 0.0
    %4679 = vmatpush1.msra.mxu0 0.0
    %4680 = vmatprep.subr.mxu0 0.0
    %4681 = vmatpush1.msra.mxu0 0.0
    %4682 = vmatprep.subr.mxu0 0.0
    %4683 = vmatpush1.msra.mxu0 0.0
    %4684 = vmatprep.subr.mxu0 0.0
    %4685 = vmatpush1.msra.mxu0 0.0
    %4686 = vmatprep.subr.mxu0 0.0
    %4687 = vmatpush1.msra.mxu0 0.0
    %4688 = vmatprep.subr.mxu0 0.0
    %4689 = vmatpush1.msra.mxu0 0.0
    %4690 = vmatprep.subr.mxu0 0.0
    %4691 = vmatpush1.msra.mxu0 0.0
    %4692 = vmatprep.subr.mxu0 0.0
    %4693 = vmatpush1.msra.mxu0 0.0
    %4694 = vmatprep.subr.mxu0 0.0
    %4695 = vmatpush1.msra.mxu0 0.0
    %4696 = vmatprep.subr.mxu0 0.0
    %4697 = vmatpush1.msra.mxu0 0.0
    %4698 = vmatprep.subr.mxu0 0.0
    %4699 = vmatpush1.msra.mxu0 0.0
    %4700 = vmatprep.mubr.f32.mxu0 0.0
    %4701 = vmatmul.mubr.f32.gmra.mrb[0].mxu0 %v397
    %v4702 = vpop.f32.mrb[0].mxu0
    %v4703 = vadd.f32 0.0, %v4702
    %v4704 = vpop.f32.mrb[0].mxu0
    %4705 = vdwg.mxu0
    %v4706 = vadd.f32 %v4400, %v4703
    %v4707 = vxor.u32 %v4706, 2147483648
    %v4708 = vmul.f32 %v4707, 1.442695
    %v4709 = vpow.pop %v4708
    %v4710 = vadd.f32 %v4709, 1.0
    %v4711 = vrcp.pop %v4710
    %v4712 = vmul.f32 1.0, %v4711
    %4713 = vmatprep.subr.mxu0 0.0
    %4714 = vmatpush1.msra.mxu0 %v4619
    %4715 = vmatprep.subr.mxu0 0.0
    %4716 = vmatpush1.msra.mxu0 %v4620
    %4717 = vmatprep.subr.mxu0 0.0
    %4718 = vmatpush1.msra.mxu0 %v4621
    %4719 = vmatprep.subr.mxu0 0.0
    %4720 = vmatpush1.msra.mxu0 %v4622
    %4721 = vmatprep.subr.mxu0 0.0
    %4722 = vmatpush1.msra.mxu0 0.0
    %4723 = vmatprep.subr.mxu0 0.0
    %4724 = vmatpush1.msra.mxu0 0.0
    %4725 = vmatprep.subr.mxu0 0.0
    %4726 = vmatpush1.msra.mxu0 0.0
    %4727 = vmatprep.subr.mxu0 0.0
    %4728 = vmatpush1.msra.mxu0 0.0
    %4729 = vmatprep.subr.mxu0 0.0
    %4730 = vmatpush1.msra.mxu0 0.0
    %4731 = vmatprep.subr.mxu0 0.0
    %4732 = vmatpush1.msra.mxu0 0.0
    %4733 = vmatprep.subr.mxu0 0.0
    %4734 = vmatpush1.msra.mxu0 0.0
    %4735 = vmatprep.subr.mxu0 0.0
    %4736 = vmatpush1.msra.mxu0 0.0
    %4737 = vmatprep.subr.mxu0 0.0
    %4738 = vmatpush1.msra.mxu0 0.0
    %4739 = vmatprep.subr.mxu0 0.0
    %4740 = vmatpush1.msra.mxu0 0.0
    %4741 = vmatprep.subr.mxu0 0.0
    %4742 = vmatpush1.msra.mxu0 0.0
    %4743 = vmatprep.subr.mxu0 0.0
    %4744 = vmatpush1.msra.mxu0 0.0
    %4745 = vmatprep.subr.mxu0 0.0
    %4746 = vmatpush1.msra.mxu0 0.0
    %4747 = vmatprep.subr.mxu0 0.0
    %4748 = vmatpush1.msra.mxu0 0.0
    %4749 = vmatprep.subr.mxu0 0.0
    %4750 = vmatpush1.msra.mxu0 0.0
    %4751 = vmatprep.subr.mxu0 0.0
    %4752 = vmatpush1.msra.mxu0 0.0
    %4753 = vmatprep.subr.mxu0 0.0
    %4754 = vmatpush1.msra.mxu0 0.0
    %4755 = vmatprep.subr.mxu0 0.0
    %4756 = vmatpush1.msra.mxu0 0.0
    %4757 = vmatprep.subr.mxu0 0.0
    %4758 = vmatpush1.msra.mxu0 0.0
    %4759 = vmatprep.subr.mxu0 0.0
    %4760 = vmatpush1.msra.mxu0 0.0
    %4761 = vmatprep.subr.mxu0 0.0
    %4762 = vmatpush1.msra.mxu0 0.0
    %4763 = vmatprep.subr.mxu0 0.0
    %4764 = vmatpush1.msra.mxu0 0.0
    %4765 = vmatprep.subr.mxu0 0.0
    %4766 = vmatpush1.msra.mxu0 0.0
    %4767 = vmatprep.subr.mxu0 0.0
    %4768 = vmatpush1.msra.mxu0 0.0
    %4769 = vmatprep.subr.mxu0 0.0
    %4770 = vmatpush1.msra.mxu0 0.0
    %4771 = vmatprep.subr.mxu0 0.0
    %4772 = vmatpush1.msra.mxu0 0.0
    %4773 = vmatprep.subr.mxu0 0.0
    %4774 = vmatpush1.msra.mxu0 0.0
    %4775 = vmatprep.subr.mxu0 0.0
    %4776 = vmatpush1.msra.mxu0 0.0
    %4777 = vmatprep.mubr.f32.mxu0 0.0
    %4778 = vmatmul.mubr.f32.gmra.mrb[0].mxu0 %v397
    %v4779 = vpop.f32.mrb[0].mxu0
    %v4780 = vadd.f32 0.0, %v4779
    %v4781 = vpop.f32.mrb[0].mxu0
    %4782 = vdwg.mxu0
    %v4783 = vadd.f32 %v4498, %v4780
    %v4784 = vxor.u32 %v4783, 2147483648
    %v4785 = vmul.f32 %v4784, 1.442695
    %v4786 = vpow.pop %v4785
    %v4787 = vadd.f32 %v4786, 1.0
    %v4788 = vrcp.pop %v4787
    %v4789 = vmul.f32 1.0, %v4788
    %4790 = vmatprep.subr.mxu0 0.0
    %4791 = vmatpush1.msra.mxu0 %v4624
    %4792 = vmatprep.subr.mxu0 0.0
    %4793 = vmatpush1.msra.mxu0 %v4625
    %4794 = vmatprep.subr.mxu0 0.0
    %4795 = vmatpush1.msra.mxu0 %v4626
    %4796 = vmatprep.subr.mxu0 0.0
    %4797 = vmatpush1.msra.mxu0 %v4627
    %4798 = vmatprep.subr.mxu0 0.0
    %4799 = vmatpush1.msra.mxu0 0.0
    %4800 = vmatprep.subr.mxu0 0.0
    %4801 = vmatpush1.msra.mxu0 0.0
    %4802 = vmatprep.subr.mxu0 0.0
    %4803 = vmatpush1.msra.mxu0 0.0
    %4804 = vmatprep.subr.mxu0 0.0
    %4805 = vmatpush1.msra.mxu0 0.0
    %4806 = vmatprep.subr.mxu0 0.0
    %4807 = vmatpush1.msra.mxu0 0.0
    %4808 = vmatprep.subr.mxu0 0.0
    %4809 = vmatpush1.msra.mxu0 0.0
    %4810 = vmatprep.subr.mxu0 0.0
    %4811 = vmatpush1.msra.mxu0 0.0
    %4812 = vmatprep.subr.mxu0 0.0
    %4813 = vmatpush1.msra.mxu0 0.0
    %4814 = vmatprep.subr.mxu0 0.0
    %4815 = vmatpush1.msra.mxu0 0.0
    %4816 = vmatprep.subr.mxu0 0.0
    %4817 = vmatpush1.msra.mxu0 0.0
    %4818 = vmatprep.subr.mxu0 0.0
    %4819 = vmatpush1.msra.mxu0 0.0
    %4820 = vmatprep.subr.mxu0 0.0
    %4821 = vmatpush1.msra.mxu0 0.0
    %4822 = vmatprep.subr.mxu0 0.0
    %4823 = vmatpush1.msra.mxu0 0.0
    %4824 = vmatprep.subr.mxu0 0.0
    %4825 = vmatpush1.msra.mxu0 0.0
    %4826 = vmatprep.subr.mxu0 0.0
    %4827 = vmatpush1.msra.mxu0 0.0
    %4828 = vmatprep.subr.mxu0 0.0
    %4829 = vmatpush1.msra.mxu0 0.0
    %4830 = vmatprep.subr.mxu0 0.0
    %4831 = vmatpush1.msra.mxu0 0.0
    %4832 = vmatprep.subr.mxu0 0.0
    %4833 = vmatpush1.msra.mxu0 0.0
    %4834 = vmatprep.subr.mxu0 0.0
    %4835 = vmatpush1.msra.mxu0 0.0
    %4836 = vmatprep.subr.mxu0 0.0
    %4837 = vmatpush1.msra.mxu0 0.0
    %4838 = vmatprep.subr.mxu0 0.0
    %4839 = vmatpush1.msra.mxu0 0.0
    %4840 = vmatprep.subr.mxu0 0.0
    %4841 = vmatpush1.msra.mxu0 0.0
    %4842 = vmatprep.subr.mxu0 0.0
    %4843 = vmatpush1.msra.mxu0 0.0
    %4844 = vmatprep.subr.mxu0 0.0
    %4845 = vmatpush1.msra.mxu0 0.0
    %4846 = vmatprep.subr.mxu0 0.0
    %4847 = vmatpush1.msra.mxu0 0.0
    %4848 = vmatprep.subr.mxu0 0.0
    %4849 = vmatpush1.msra.mxu0 0.0
    %4850 = vmatprep.subr.mxu0 0.0
    %4851 = vmatpush1.msra.mxu0 0.0
    %4852 = vmatprep.subr.mxu0 0.0
    %4853 = vmatpush1.msra.mxu0 0.0
    %4854 = vmatprep.mubr.f32.mxu0 0.0
    %4855 = vmatmul.mubr.f32.gmra.mrb[0].mxu0 %v397
    %v4856 = vpop.f32.mrb[0].mxu0
    %v4857 = vadd.f32 %v4634, %v4856
    %v4858 = vpop.f32.mrb[0].mxu0
    %4859 = vdwg.mxu0
    %v4860 = vmul.f32 %v4712, %v4857
    %v4861 = vadd.f32 %v4596, %v4860
    %v4862 = vtanh.pop %v4861
    %v4863 = vsub.f32 1.0, %v4789
    %v4864 = vmul.f32 %v4863, %v4862
    %v4865 = vmul.f32 %v4789, 0.0
    %v4866 = vadd.f32 %v4864, %v4865
    %4867 = vst.msk [vmem:[#allocation2] sm:$0x3] %vm630, %v4866
    %v4869 = vsel %vm395, %v4866, 0
    %4871 = vmatprep.subr.mxu0 0.0
    %4872 = vmatpush1.msra.mxu0 %v4614
    %4873 = vmatprep.subr.mxu0 0.0
    %4874 = vmatpush1.msra.mxu0 %v4615
    %4875 = vmatprep.subr.mxu0 0.0
    %4876 = vmatpush1.msra.mxu0 %v4616
    %4877 = vmatprep.subr.mxu0 0.0
    %4878 = vmatpush1.msra.mxu0 %v4617
    %4879 = vmatprep.subr.mxu0 0.0
    %4880 = vmatpush1.msra.mxu0 0.0
    %4881 = vmatprep.subr.mxu0 0.0
    %4882 = vmatpush1.msra.mxu0 0.0
    %4883 = vmatprep.subr.mxu0 0.0
    %4884 = vmatpush1.msra.mxu0 0.0
    %4885 = vmatprep.subr.mxu0 0.0
    %4886 = vmatpush1.msra.mxu0 0.0
    %4887 = vmatprep.subr.mxu0 0.0
    %4888 = vmatpush1.msra.mxu0 0.0
    %4889 = vmatprep.subr.mxu0 0.0
    %4890 = vmatpush1.msra.mxu0 0.0
    %4891 = vmatprep.subr.mxu0 0.0
    %4892 = vmatpush1.msra.mxu0 0.0
    %4893 = vmatprep.subr.mxu0 0.0
    %4894 = vmatpush1.msra.mxu0 0.0
    %4895 = vmatprep.subr.mxu0 0.0
    %4896 = vmatpush1.msra.mxu0 0.0
    %4897 = vmatprep.subr.mxu0 0.0
    %4898 = vmatpush1.msra.mxu0 0.0
    %4899 = vmatprep.subr.mxu0 0.0
    %4900 = vmatpush1.msra.mxu0 0.0
    %4901 = vmatprep.subr.mxu0 0.0
    %4902 = vmatpush1.msra.mxu0 0.0
    %4903 = vmatprep.subr.mxu0 0.0
    %4904 = vmatpush1.msra.mxu0 0.0
    %4905 = vmatprep.subr.mxu0 0.0
    %4906 = vmatpush1.msra.mxu0 0.0
    %4907 = vmatprep.subr.mxu0 0.0
    %4908 = vmatpush1.msra.mxu0 0.0
    %4909 = vmatprep.subr.mxu0 0.0
    %4910 = vmatpush1.msra.mxu0 0.0
    %4911 = vmatprep.subr.mxu0 0.0
    %4912 = vmatpush1.msra.mxu0 0.0
    %4913 = vmatprep.subr.mxu0 0.0
    %4914 = vmatpush1.msra.mxu0 0.0
    %4915 = vmatprep.subr.mxu0 0.0
    %4916 = vmatpush1.msra.mxu0 0.0
    %4917 = vmatprep.subr.mxu0 0.0
    %4918 = vmatpush1.msra.mxu0 0.0
    %4919 = vmatprep.subr.mxu0 0.0
    %4920 = vmatpush1.msra.mxu0 0.0
    %4921 = vmatprep.subr.mxu0 0.0
    %4922 = vmatpush1.msra.mxu0 0.0
    %4923 = vmatprep.subr.mxu0 0.0
    %4924 = vmatpush1.msra.mxu0 0.0
    %4925 = vmatprep.subr.mxu0 0.0
    %4926 = vmatpush1.msra.mxu0 0.0
    %4927 = vmatprep.subr.mxu0 0.0
    %4928 = vmatpush1.msra.mxu0 0.0
    %4929 = vmatprep.subr.mxu0 0.0
    %4930 = vmatpush1.msra.mxu0 0.0
    %4931 = vmatprep.subr.mxu0 0.0
    %4932 = vmatpush1.msra.mxu0 0.0
    %4933 = vmatprep.subr.mxu0 0.0
    %4934 = vmatpush1.msra.mxu0 0.0
    %4935 = vmatprep.mubr.f32.mxu0 0.0
    %4936 = vmatmul.mubr.f32.gmra.mrb[0].mxu0 %v4869
    %v4937 = vpop.f32.mrb[0].mxu0
    %v4938 = vadd.f32 0.0, %v4937
    %v4939 = vpop.f32.mrb[0].mxu0
    %4940 = vdwg.mxu0
    %v4942 = vrot.slane %v4938, 6
    %v4944 = vadd.f32 %v4400, %v4942
    %v4945 = vxor.u32 %v4944, 2147483648
    %v4946 = vmul.f32 %v4945, 1.442695
    %v4947 = vpow.pop %v4946
    %v4948 = vadd.f32 %v4947, 1.0
    %v4949 = vrcp.pop %v4948
    %v4950 = vmul.f32 1.0, %v4949
    %4951 = vmatprep.subr.mxu0 0.0
    %4952 = vmatpush1.msra.mxu0 %v4619
    %4953 = vmatprep.subr.mxu0 0.0
    %4954 = vmatpush1.msra.mxu0 %v4620
    %4955 = vmatprep.subr.mxu0 0.0
    %4956 = vmatpush1.msra.mxu0 %v4621
    %4957 = vmatprep.subr.mxu0 0.0
    %4958 = vmatpush1.msra.mxu0 %v4622
    %4959 = vmatprep.subr.mxu0 0.0
    %4960 = vmatpush1.msra.mxu0 0.0
    %4961 = vmatprep.subr.mxu0 0.0
    %4962 = vmatpush1.msra.mxu0 0.0
    %4963 = vmatprep.subr.mxu0 0.0
    %4964 = vmatpush1.msra.mxu0 0.0
    %4965 = vmatprep.subr.mxu0 0.0
    %4966 = vmatpush1.msra.mxu0 0.0
    %4967 = vmatprep.subr.mxu0 0.0
    %4968 = vmatpush1.msra.mxu0 0.0
    %4969 = vmatprep.subr.mxu0 0.0
    %4970 = vmatpush1.msra.mxu0 0.0
    %4971 = vmatprep.subr.mxu0 0.0
    %4972 = vmatpush1.msra.mxu0 0.0
    %4973 = vmatprep.subr.mxu0 0.0
    %4974 = vmatpush1.msra.mxu0 0.0
    %4975 = vmatprep.subr.mxu0 0.0
    %4976 = vmatpush1.msra.mxu0 0.0
    %4977 = vmatprep.subr.mxu0 0.0
    %4978 = vmatpush1.msra.mxu0 0.0
    %4979 = vmatprep.subr.mxu0 0.0
    %4980 = vmatpush1.msra.mxu0 0.0
    %4981 = vmatprep.subr.mxu0 0.0
    %4982 = vmatpush1.msra.mxu0 0.0
    %4983 = vmatprep.subr.mxu0 0.0
    %4984 = vmatpush1.msra.mxu0 0.0
    %4985 = vmatprep.subr.mxu0 0.0
    %4986 = vmatpush1.msra.mxu0 0.0
    %4987 = vmatprep.subr.mxu0 0.0
    %4988 = vmatpush1.msra.mxu0 0.0
    %4989 = vmatprep.subr.mxu0 0.0
    %4990 = vmatpush1.msra.mxu0 0.0
    %4991 = vmatprep.subr.mxu0 0.0
    %4992 = vmatpush1.msra.mxu0 0.0
    %4993 = vmatprep.subr.mxu0 0.0
    %4994 = vmatpush1.msra.mxu0 0.0
    %4995 = vmatprep.subr.mxu0 0.0
    %4996 = vmatpush1.msra.mxu0 0.0
    %4997 = vmatprep.subr.mxu0 0.0
    %4998 = vmatpush1.msra.mxu0 0.0
    %4999 = vmatprep.subr.mxu0 0.0
    %5000 = vmatpush1.msra.mxu0 0.0
    %5001 = vmatprep.subr.mxu0 0.0
    %5002 = vmatpush1.msra.mxu0 0.0
    %5003 = vmatprep.subr.mxu0 0.0
    %5004 = vmatpush1.msra.mxu0 0.0
    %5005 = vmatprep.subr.mxu0 0.0
    %5006 = vmatpush1.msra.mxu0 0.0
    %5007 = vmatprep.subr.mxu0 0.0
    %5008 = vmatpush1.msra.mxu0 0.0
    %5009 = vmatprep.subr.mxu0 0.0
    %5010 = vmatpush1.msra.mxu0 0.0
    %5011 = vmatprep.subr.mxu0 0.0
    %5012 = vmatpush1.msra.mxu0 0.0
    %5013 = vmatprep.subr.mxu0 0.0
    %5014 = vmatpush1.msra.mxu0 0.0
    %5015 = vmatprep.mubr.f32.mxu0 0.0
    %5016 = vmatmul.mubr.f32.gmra.mrb[0].mxu0 %v4869
    %v5017 = vpop.f32.mrb[0].mxu0
    %v5018 = vadd.f32 0.0, %v5017
    %v5019 = vpop.f32.mrb[0].mxu0
    %5020 = vdwg.mxu0
    %v5022 = vrot.slane %v5018, 6
    %v5024 = vadd.f32 %v4498, %v5022
    %v5025 = vxor.u32 %v5024, 2147483648
    %v5026 = vmul.f32 %v5025, 1.442695
    %v5027 = vpow.pop %v5026
    %v5028 = vadd.f32 %v5027, 1.0
    %v5029 = vrcp.pop %v5028
    %v5030 = vmul.f32 1.0, %v5029
    %5031 = vmatprep.subr.mxu0 0.0
    %5032 = vmatpush1.msra.mxu0 %v4624
    %5033 = vmatprep.subr.mxu0 0.0
    %5034 = vmatpush1.msra.mxu0 %v4625
    %5035 = vmatprep.subr.mxu0 0.0
    %5036 = vmatpush1.msra.mxu0 %v4626
    %5037 = vmatprep.subr.mxu0 0.0
    %5038 = vmatpush1.msra.mxu0 %v4627
    %5039 = vmatprep.subr.mxu0 0.0
    %5040 = vmatpush1.msra.mxu0 0.0
    %5041 = vmatprep.subr.mxu0 0.0
    %5042 = vmatpush1.msra.mxu0 0.0
    %5043 = vmatprep.subr.mxu0 0.0
    %5044 = vmatpush1.msra.mxu0 0.0
    %5045 = vmatprep.subr.mxu0 0.0
    %5046 = vmatpush1.msra.mxu0 0.0
    %5047 = vmatprep.subr.mxu0 0.0
    %5048 = vmatpush1.msra.mxu0 0.0
    %5049 = vmatprep.subr.mxu0 0.0
    %5050 = vmatpush1.msra.mxu0 0.0
    %5051 = vmatprep.subr.mxu0 0.0
    %5052 = vmatpush1.msra.mxu0 0.0
    %5053 = vmatprep.subr.mxu0 0.0
    %5054 = vmatpush1.msra.mxu0 0.0
    %5055 = vmatprep.subr.mxu0 0.0
    %5056 = vmatpush1.msra.mxu0 0.0
    %5057 = vmatprep.subr.mxu0 0.0
    %5058 = vmatpush1.msra.mxu0 0.0
    %5059 = vmatprep.subr.mxu0 0.0
    %5060 = vmatpush1.msra.mxu0 0.0
    %5061 = vmatprep.subr.mxu0 0.0
    %5062 = vmatpush1.msra.mxu0 0.0
    %5063 = vmatprep.subr.mxu0 0.0
    %5064 = vmatpush1.msra.mxu0 0.0
    %5065 = vmatprep.subr.mxu0 0.0
    %5066 = vmatpush1.msra.mxu0 0.0
    %5067 = vmatprep.subr.mxu0 0.0
    %5068 = vmatpush1.msra.mxu0 0.0
    %5069 = vmatprep.subr.mxu0 0.0
    %5070 = vmatpush1.msra.mxu0 0.0
    %5071 = vmatprep.subr.mxu0 0.0
    %5072 = vmatpush1.msra.mxu0 0.0
    %5073 = vmatprep.subr.mxu0 0.0
    %5074 = vmatpush1.msra.mxu0 0.0
    %5075 = vmatprep.subr.mxu0 0.0
    %5076 = vmatpush1.msra.mxu0 0.0
    %5077 = vmatprep.subr.mxu0 0.0
    %5078 = vmatpush1.msra.mxu0 0.0
    %5079 = vmatprep.subr.mxu0 0.0
    %5080 = vmatpush1.msra.mxu0 0.0
    %5081 = vmatprep.subr.mxu0 0.0
    %5082 = vmatpush1.msra.mxu0 0.0
    %5083 = vmatprep.subr.mxu0 0.0
    %5084 = vmatpush1.msra.mxu0 0.0
    %5085 = vmatprep.subr.mxu0 0.0
    %5086 = vmatpush1.msra.mxu0 0.0
    %5087 = vmatprep.subr.mxu0 0.0
    %5088 = vmatpush1.msra.mxu0 0.0
    %5089 = vmatprep.subr.mxu0 0.0
    %5090 = vmatpush1.msra.mxu0 0.0
    %5091 = vmatprep.subr.mxu0 0.0
    %5092 = vmatpush1.msra.mxu0 0.0
    %5093 = vmatprep.subr.mxu0 0.0
    %5094 = vmatpush1.msra.mxu0 0.0
    %5095 = vmatprep.mubr.f32.mxu0 0.0
    %5096 = vmatmul.mubr.f32.gmra.mrb[0].mxu0 %v4869
    %v5097 = vpop.f32.mrb[0].mxu0
    %v5098 = vadd.f32 %v4634, %v5097
    %v5099 = vpop.f32.mrb[0].mxu0
    %5100 = vdwg.mxu0
    %v5102 = vrot.slane %v5098, 6
    %v5104 = vmul.f32 %v4950, %v5102
    %v5105 = vadd.f32 %v4596, %v5104
    %v5106 = vtanh.pop %v5105
    %v5107 = vsub.f32 1.0, %v5030
    %v5108 = vmul.f32 %v5107, %v5106
    %v5109 = vrot.slane %v4866, 6
    %v5111 = vmul.f32 %v5030, %v5109
    %v5112 = vadd.f32 %v5108, %v5111
    %5113 = vst.msk [vmem:[#allocation2] sm:$0xc] %vm877, %v5112
    %v5115 = vrot.slane %v5112, 2
    %v5116 = vsel %vm395, %v5115, 0
    %5118 = vmatprep.subr.mxu0 0.0
    %5119 = vmatpush1.msra.mxu0 %v4614
    %5120 = vmatprep.subr.mxu0 0.0
    %5121 = vmatpush1.msra.mxu0 %v4615
    %5122 = vmatprep.subr.mxu0 0.0
    %5123 = vmatpush1.msra.mxu0 %v4616
    %5124 = vmatprep.subr.mxu0 0.0
    %5125 = vmatpush1.msra.mxu0 %v4617
    %5126 = vmatprep.subr.mxu0 0.0
    %5127 = vmatpush1.msra.mxu0 0.0
    %5128 = vmatprep.subr.mxu0 0.0
    %5129 = vmatpush1.msra.mxu0 0.0
    %5130 = vmatprep.subr.mxu0 0.0
    %5131 = vmatpush1.msra.mxu0 0.0
    %5132 = vmatprep.subr.mxu0 0.0
    %5133 = vmatpush1.msra.mxu0 0.0
    %5134 = vmatprep.subr.mxu0 0.0
    %5135 = vmatpush1.msra.mxu0 0.0
    %5136 = vmatprep.subr.mxu0 0.0
    %5137 = vmatpush1.msra.mxu0 0.0
    %5138 = vmatprep.subr.mxu0 0.0
    %5139 = vmatpush1.msra.mxu0 0.0
    %5140 = vmatprep.subr.mxu0 0.0
    %5141 = vmatpush1.msra.mxu0 0.0
    %5142 = vmatprep.subr.mxu0 0.0
    %5143 = vmatpush1.msra.mxu0 0.0
    %5144 = vmatprep.subr.mxu0 0.0
    %5145 = vmatpush1.msra.mxu0 0.0
    %5146 = vmatprep.subr.mxu0 0.0
    %5147 = vmatpush1.msra.mxu0 0.0
    %5148 = vmatprep.subr.mxu0 0.0
    %5149 = vmatpush1.msra.mxu0 0.0
    %5150 = vmatprep.subr.mxu0 0.0
    %5151 = vmatpush1.msra.mxu0 0.0
    %5152 = vmatprep.subr.mxu0 0.0
    %5153 = vmatpush1.msra.mxu0 0.0
    %5154 = vmatprep.subr.mxu0 0.0
    %5155 = vmatpush1.msra.mxu0 0.0
    %5156 = vmatprep.subr.mxu0 0.0
    %5157 = vmatpush1.msra.mxu0 0.0
    %5158 = vmatprep.subr.mxu0 0.0
    %5159 = vmatpush1.msra.mxu0 0.0
    %5160 = vmatprep.subr.mxu0 0.0
    %5161 = vmatpush1.msra.mxu0 0.0
    %5162 = vmatprep.subr.mxu0 0.0
    %5163 = vmatpush1.msra.mxu0 0.0
    %5164 = vmatprep.subr.mxu0 0.0
    %5165 = vmatpush1.msra.mxu0 0.0
    %5166 = vmatprep.subr.mxu0 0.0
    %5167 = vmatpush1.msra.mxu0 0.0
    %5168 = vmatprep.subr.mxu0 0.0
    %5169 = vmatpush1.msra.mxu0 0.0
    %5170 = vmatprep.subr.mxu0 0.0
    %5171 = vmatpush1.msra.mxu0 0.0
    %5172 = vmatprep.subr.mxu0 0.0
    %5173 = vmatpush1.msra.mxu0 0.0
    %5174 = vmatprep.subr.mxu0 0.0
    %5175 = vmatpush1.msra.mxu0 0.0
    %5176 = vmatprep.subr.mxu0 0.0
    %5177 = vmatpush1.msra.mxu0 0.0
    %5178 = vmatprep.subr.mxu0 0.0
    %5179 = vmatpush1.msra.mxu0 0.0
    %5180 = vmatprep.subr.mxu0 0.0
    %5181 = vmatpush1.msra.mxu0 0.0
    %5182 = vmatprep.mubr.f32.mxu0 0.0
    %5183 = vmatmul.mubr.f32.gmra.mrb[0].mxu0 %v5116
    %v5184 = vpop.f32.mrb[0].mxu0
    %v5185 = vadd.f32 0.0, %v5184
    %v5186 = vpop.f32.mrb[0].mxu0
    %5187 = vdwg.mxu0
    %v5189 = vrot.slane %v5185, 4
    %v5191 = vadd.f32 %v4400, %v5189
    %v5192 = vxor.u32 %v5191, 2147483648
    %v5193 = vmul.f32 %v5192, 1.442695
    %v5194 = vpow.pop %v5193
    %v5195 = vadd.f32 %v5194, 1.0
    %v5196 = vrcp.pop %v5195
    %v5197 = vmul.f32 1.0, %v5196
    %5198 = vmatprep.subr.mxu0 0.0
    %5199 = vmatpush1.msra.mxu0 %v4619
    %5200 = vmatprep.subr.mxu0 0.0
    %5201 = vmatpush1.msra.mxu0 %v4620
    %5202 = vmatprep.subr.mxu0 0.0
    %5203 = vmatpush1.msra.mxu0 %v4621
    %5204 = vmatprep.subr.mxu0 0.0
    %5205 = vmatpush1.msra.mxu0 %v4622
    %5206 = vmatprep.subr.mxu0 0.0
    %5207 = vmatpush1.msra.mxu0 0.0
    %5208 = vmatprep.subr.mxu0 0.0
    %5209 = vmatpush1.msra.mxu0 0.0
    %5210 = vmatprep.subr.mxu0 0.0
    %5211 = vmatpush1.msra.mxu0 0.0
    %5212 = vmatprep.subr.mxu0 0.0
    %5213 = vmatpush1.msra.mxu0 0.0
    %5214 = vmatprep.subr.mxu0 0.0
    %5215 = vmatpush1.msra.mxu0 0.0
    %5216 = vmatprep.subr.mxu0 0.0
    %5217 = vmatpush1.msra.mxu0 0.0
    %5218 = vmatprep.subr.mxu0 0.0
    %5219 = vmatpush1.msra.mxu0 0.0
    %5220 = vmatprep.subr.mxu0 0.0
    %5221 = vmatpush1.msra.mxu0 0.0
    %5222 = vmatprep.subr.mxu0 0.0
    %5223 = vmatpush1.msra.mxu0 0.0
    %5224 = vmatprep.subr.mxu0 0.0
    %5225 = vmatpush1.msra.mxu0 0.0
    %5226 = vmatprep.subr.mxu0 0.0
    %5227 = vmatpush1.msra.mxu0 0.0
    %5228 = vmatprep.subr.mxu0 0.0
    %5229 = vmatpush1.msra.mxu0 0.0
    %5230 = vmatprep.subr.mxu0 0.0
    %5231 = vmatpush1.msra.mxu0 0.0
    %5232 = vmatprep.subr.mxu0 0.0
    %5233 = vmatpush1.msra.mxu0 0.0
    %5234 = vmatprep.subr.mxu0 0.0
    %5235 = vmatpush1.msra.mxu0 0.0
    %5236 = vmatprep.subr.mxu0 0.0
    %5237 = vmatpush1.msra.mxu0 0.0
    %5238 = vmatprep.subr.mxu0 0.0
    %5239 = vmatpush1.msra.mxu0 0.0
    %5240 = vmatprep.subr.mxu0 0.0
    %5241 = vmatpush1.msra.mxu0 0.0
    %5242 = vmatprep.subr.mxu0 0.0
    %5243 = vmatpush1.msra.mxu0 0.0
    %5244 = vmatprep.subr.mxu0 0.0
    %5245 = vmatpush1.msra.mxu0 0.0
    %5246 = vmatprep.subr.mxu0 0.0
    %5247 = vmatpush1.msra.mxu0 0.0
    %5248 = vmatprep.subr.mxu0 0.0
    %5249 = vmatpush1.msra.mxu0 0.0
    %5250 = vmatprep.subr.mxu0 0.0
    %5251 = vmatpush1.msra.mxu0 0.0
    %5252 = vmatprep.subr.mxu0 0.0
    %5253 = vmatpush1.msra.mxu0 0.0
    %5254 = vmatprep.subr.mxu0 0.0
    %5255 = vmatpush1.msra.mxu0 0.0
    %5256 = vmatprep.subr.mxu0 0.0
    %5257 = vmatpush1.msra.mxu0 0.0
    %5258 = vmatprep.subr.mxu0 0.0
    %5259 = vmatpush1.msra.mxu0 0.0
    %5260 = vmatprep.subr.mxu0 0.0
    %5261 = vmatpush1.msra.mxu0 0.0
    %5262 = vmatprep.mubr.f32.mxu0 0.0
    %5263 = vmatmul.mubr.f32.gmra.mrb[0].mxu0 %v5116
    %v5264 = vpop.f32.mrb[0].mxu0
    %v5265 = vadd.f32 0.0, %v5264
    %v5266 = vpop.f32.mrb[0].mxu0
    %5267 = vdwg.mxu0
    %v5269 = vrot.slane %v5265, 4
    %v5271 = vadd.f32 %v4498, %v5269
    %v5272 = vxor.u32 %v5271, 2147483648
    %v5273 = vmul.f32 %v5272, 1.442695
    %v5274 = vpow.pop %v5273
    %v5275 = vadd.f32 %v5274, 1.0
    %v5276 = vrcp.pop %v5275
    %v5277 = vmul.f32 1.0, %v5276
    %5278 = vmatprep.subr.mxu0 0.0
    %5279 = vmatpush1.msra.mxu0 %v4624
    %5280 = vmatprep.subr.mxu0 0.0
    %5281 = vmatpush1.msra.mxu0 %v4625
    %5282 = vmatprep.subr.mxu0 0.0
    %5283 = vmatpush1.msra.mxu0 %v4626
    %5284 = vmatprep.subr.mxu0 0.0
    %5285 = vmatpush1.msra.mxu0 %v4627
    %5286 = vmatprep.subr.mxu0 0.0
    %5287 = vmatpush1.msra.mxu0 0.0
    %5288 = vmatprep.subr.mxu0 0.0
    %5289 = vmatpush1.msra.mxu0 0.0
    %5290 = vmatprep.subr.mxu0 0.0
    %5291 = vmatpush1.msra.mxu0 0.0
    %5292 = vmatprep.subr.mxu0 0.0
    %5293 = vmatpush1.msra.mxu0 0.0
    %5294 = vmatprep.subr.mxu0 0.0
    %5295 = vmatpush1.msra.mxu0 0.0
    %5296 = vmatprep.subr.mxu0 0.0
    %5297 = vmatpush1.msra.mxu0 0.0
    %5298 = vmatprep.subr.mxu0 0.0
    %5299 = vmatpush1.msra.mxu0 0.0
    %5300 = vmatprep.subr.mxu0 0.0
    %5301 = vmatpush1.msra.mxu0 0.0
    %5302 = vmatprep.subr.mxu0 0.0
    %5303 = vmatpush1.msra.mxu0 0.0
    %5304 = vmatprep.subr.mxu0 0.0
    %5305 = vmatpush1.msra.mxu0 0.0
    %5306 = vmatprep.subr.mxu0 0.0
    %5307 = vmatpush1.msra.mxu0 0.0
    %5308 = vmatprep.subr.mxu0 0.0
    %5309 = vmatpush1.msra.mxu0 0.0
    %5310 = vmatprep.subr.mxu0 0.0
    %5311 = vmatpush1.msra.mxu0 0.0
    %5312 = vmatprep.subr.mxu0 0.0
    %5313 = vmatpush1.msra.mxu0 0.0
    %5314 = vmatprep.subr.mxu0 0.0
    %5315 = vmatpush1.msra.mxu0 0.0
    %5316 = vmatprep.subr.mxu0 0.0
    %5317 = vmatpush1.msra.mxu0 0.0
    %5318 = vmatprep.subr.mxu0 0.0
    %5319 = vmatpush1.msra.mxu0 0.0
    %5320 = vmatprep.subr.mxu0 0.0
    %5321 = vmatpush1.msra.mxu0 0.0
    %5322 = vmatprep.subr.mxu0 0.0
    %5323 = vmatpush1.msra.mxu0 0.0
    %5324 = vmatprep.subr.mxu0 0.0
    %5325 = vmatpush1.msra.mxu0 0.0
    %5326 = vmatprep.subr.mxu0 0.0
    %5327 = vmatpush1.msra.mxu0 0.0
    %5328 = vmatprep.subr.mxu0 0.0
    %5329 = vmatpush1.msra.mxu0 0.0
    %5330 = vmatprep.subr.mxu0 0.0
    %5331 = vmatpush1.msra.mxu0 0.0
    %5332 = vmatprep.subr.mxu0 0.0
    %5333 = vmatpush1.msra.mxu0 0.0
    %5334 = vmatprep.subr.mxu0 0.0
    %5335 = vmatpush1.msra.mxu0 0.0
    %5336 = vmatprep.subr.mxu0 0.0
    %5337 = vmatpush1.msra.mxu0 0.0
    %5338 = vmatprep.subr.mxu0 0.0
    %5339 = vmatpush1.msra.mxu0 0.0
    %5340 = vmatprep.subr.mxu0 0.0
    %5341 = vmatpush1.msra.mxu0 0.0
    %5342 = vmatprep.mubr.f32.mxu0 0.0
    %5343 = vmatmul.mubr.f32.gmra.mrb[0].mxu0 %v5116
    %v5344 = vpop.f32.mrb[0].mxu0
    %v5345 = vadd.f32 %v4634, %v5344
    %v5346 = vpop.f32.mrb[0].mxu0
    %5347 = vdwg.mxu0
    %v5349 = vrot.slane %v5345, 4
    %v5351 = vmul.f32 %v5197, %v5349
    %v5352 = vadd.f32 %v4596, %v5351
    %v5353 = vtanh.pop %v5352
    %v5354 = vsub.f32 1.0, %v5277
    %v5355 = vmul.f32 %v5354, %v5353
    %v5356 = vrot.slane %v5112, 6
    %v5358 = vmul.f32 %v5277, %v5356
    %v5359 = vadd.f32 %v5355, %v5358
    %5360 = vst.msk [vmem:[#allocation2] sm:$0x30] %vm1125, %v5359
    %v5362 = vrot.slane %v5359, 4
    %v5363 = vsel %vm395, %v5362, 0
    %5365 = vmatprep.subr.mxu0 0.0
    %5366 = vmatpush1.msra.mxu0 %v4614
    %5367 = vmatprep.subr.mxu0 0.0
    %5368 = vmatpush1.msra.mxu0 %v4615
    %5369 = vmatprep.subr.mxu0 0.0
    %5370 = vmatpush1.msra.mxu0 %v4616
    %5371 = vmatprep.subr.mxu0 0.0
    %5372 = vmatpush1.msra.mxu0 %v4617
    %5373 = vmatprep.subr.mxu0 0.0
    %5374 = vmatpush1.msra.mxu0 0.0
    %5375 = vmatprep.subr.mxu0 0.0
    %5376 = vmatpush1.msra.mxu0 0.0
    %5377 = vmatprep.subr.mxu0 0.0
    %5378 = vmatpush1.msra.mxu0 0.0
    %5379 = vmatprep.subr.mxu0 0.0
    %5380 = vmatpush1.msra.mxu0 0.0
    %5381 = vmatprep.subr.mxu0 0.0
    %5382 = vmatpush1.msra.mxu0 0.0
    %5383 = vmatprep.subr.mxu0 0.0
    %5384 = vmatpush1.msra.mxu0 0.0
    %5385 = vmatprep.subr.mxu0 0.0
    %5386 = vmatpush1.msra.mxu0 0.0
    %5387 = vmatprep.subr.mxu0 0.0
    %5388 = vmatpush1.msra.mxu0 0.0
    %5389 = vmatprep.subr.mxu0 0.0
    %5390 = vmatpush1.msra.mxu0 0.0
    %5391 = vmatprep.subr.mxu0 0.0
    %5392 = vmatpush1.msra.mxu0 0.0
    %5393 = vmatprep.subr.mxu0 0.0
    %5394 = vmatpush1.msra.mxu0 0.0
    %5395 = vmatprep.subr.mxu0 0.0
    %5396 = vmatpush1.msra.mxu0 0.0
    %5397 = vmatprep.subr.mxu0 0.0
    %5398 = vmatpush1.msra.mxu0 0.0
    %5399 = vmatprep.subr.mxu0 0.0
    %5400 = vmatpush1.msra.mxu0 0.0
    %5401 = vmatprep.subr.mxu0 0.0
    %5402 = vmatpush1.msra.mxu0 0.0
    %5403 = vmatprep.subr.mxu0 0.0
    %5404 = vmatpush1.msra.mxu0 0.0
    %5405 = vmatprep.subr.mxu0 0.0
    %5406 = vmatpush1.msra.mxu0 0.0
    %5407 = vmatprep.subr.mxu0 0.0
    %5408 = vmatpush1.msra.mxu0 0.0
    %5409 = vmatprep.subr.mxu0 0.0
    %5410 = vmatpush1.msra.mxu0 0.0
    %5411 = vmatprep.subr.mxu0 0.0
    %5412 = vmatpush1.msra.mxu0 0.0
    %5413 = vmatprep.subr.mxu0 0.0
    %5414 = vmatpush1.msra.mxu0 0.0
    %5415 = vmatprep.subr.mxu0 0.0
    %5416 = vmatpush1.msra.mxu0 0.0
    %5417 = vmatprep.subr.mxu0 0.0
    %5418 = vmatpush1.msra.mxu0 0.0
    %5419 = vmatprep.subr.mxu0 0.0
    %5420 = vmatpush1.msra.mxu0 0.0
    %5421 = vmatprep.subr.mxu0 0.0
    %5422 = vmatpush1.msra.mxu0 0.0
    %5423 = vmatprep.subr.mxu0 0.0
    %5424 = vmatpush1.msra.mxu0 0.0
    %5425 = vmatprep.subr.mxu0 0.0
    %5426 = vmatpush1.msra.mxu0 0.0
    %5427 = vmatprep.subr.mxu0 0.0
    %5428 = vmatpush1.msra.mxu0 0.0
    %5429 = vmatprep.mubr.f32.mxu0 0.0
    %5430 = vmatmul.mubr.f32.gmra.mrb[0].mxu0 %v5363
    %v5431 = vpop.f32.mrb[0].mxu0
    %v5432 = vadd.f32 0.0, %v5431
    %v5433 = vpop.f32.mrb[0].mxu0
    %5434 = vdwg.mxu0
    %v5436 = vrot.slane %v5432, 2
    %v5438 = vadd.f32 %v4400, %v5436
    %v5439 = vxor.u32 %v5438, 2147483648
    %v5440 = vmul.f32 %v5439, 1.442695
    %v5441 = vpow.pop %v5440
    %v5442 = vadd.f32 %v5441, 1.0
    %v5443 = vrcp.pop %v5442
    %v5444 = vmul.f32 1.0, %v5443
    %5445 = vmatprep.subr.mxu0 0.0
    %5446 = vmatpush1.msra.mxu0 %v4619
    %5447 = vmatprep.subr.mxu0 0.0
    %5448 = vmatpush1.msra.mxu0 %v4620
    %5449 = vmatprep.subr.mxu0 0.0
    %5450 = vmatpush1.msra.mxu0 %v4621
    %5451 = vmatprep.subr.mxu0 0.0
    %5452 = vmatpush1.msra.mxu0 %v4622
    %5453 = vmatprep.subr.mxu0 0.0
    %5454 = vmatpush1.msra.mxu0 0.0
    %5455 = vmatprep.subr.mxu0 0.0
    %5456 = vmatpush1.msra.mxu0 0.0
    %5457 = vmatprep.subr.mxu0 0.0
    %5458 = vmatpush1.msra.mxu0 0.0
    %5459 = vmatprep.subr.mxu0 0.0
    %5460 = vmatpush1.msra.mxu0 0.0
    %5461 = vmatprep.subr.mxu0 0.0
    %5462 = vmatpush1.msra.mxu0 0.0
    %5463 = vmatprep.subr.mxu0 0.0
    %5464 = vmatpush1.msra.mxu0 0.0
    %5465 = vmatprep.subr.mxu0 0.0
    %5466 = vmatpush1.msra.mxu0 0.0
    %5467 = vmatprep.subr.mxu0 0.0
    %5468 = vmatpush1.msra.mxu0 0.0
    %5469 = vmatprep.subr.mxu0 0.0
    %5470 = vmatpush1.msra.mxu0 0.0
    %5471 = vmatprep.subr.mxu0 0.0
    %5472 = vmatpush1.msra.mxu0 0.0
    %5473 = vmatprep.subr.mxu0 0.0
    %5474 = vmatpush1.msra.mxu0 0.0
    %5475 = vmatprep.subr.mxu0 0.0
    %5476 = vmatpush1.msra.mxu0 0.0
    %5477 = vmatprep.subr.mxu0 0.0
    %5478 = vmatpush1.msra.mxu0 0.0
    %5479 = vmatprep.subr.mxu0 0.0
    %5480 = vmatpush1.msra.mxu0 0.0
    %5481 = vmatprep.subr.mxu0 0.0
    %5482 = vmatpush1.msra.mxu0 0.0
    %5483 = vmatprep.subr.mxu0 0.0
    %5484 = vmatpush1.msra.mxu0 0.0
    %5485 = vmatprep.subr.mxu0 0.0
    %5486 = vmatpush1.msra.mxu0 0.0
    %5487 = vmatprep.subr.mxu0 0.0
    %5488 = vmatpush1.msra.mxu0 0.0
    %5489 = vmatprep.subr.mxu0 0.0
    %5490 = vmatpush1.msra.mxu0 0.0
    %5491 = vmatprep.subr.mxu0 0.0
    %5492 = vmatpush1.msra.mxu0 0.0
    %5493 = vmatprep.subr.mxu0 0.0
    %5494 = vmatpush1.msra.mxu0 0.0
    %5495 = vmatprep.subr.mxu0 0.0
    %5496 = vmatpush1.msra.mxu0 0.0
    %5497 = vmatprep.subr.mxu0 0.0
    %5498 = vmatpush1.msra.mxu0 0.0
    %5499 = vmatprep.subr.mxu0 0.0
    %5500 = vmatpush1.msra.mxu0 0.0
    %5501 = vmatprep.subr.mxu0 0.0
    %5502 = vmatpush1.msra.mxu0 0.0
    %5503 = vmatprep.subr.mxu0 0.0
    %5504 = vmatpush1.msra.mxu0 0.0
    %5505 = vmatprep.subr.mxu0 0.0
    %5506 = vmatpush1.msra.mxu0 0.0
    %5507 = vmatprep.subr.mxu0 0.0
    %5508 = vmatpush1.msra.mxu0 0.0
    %5509 = vmatprep.mubr.f32.mxu0 0.0
    %5510 = vmatmul.mubr.f32.gmra.mrb[0].mxu0 %v5363
    %v5511 = vpop.f32.mrb[0].mxu0
    %v5512 = vadd.f32 0.0, %v5511
    %v5513 = vpop.f32.mrb[0].mxu0
    %5514 = vdwg.mxu0
    %v5516 = vrot.slane %v5512, 2
    %v5518 = vadd.f32 %v4498, %v5516
    %v5519 = vxor.u32 %v5518, 2147483648
    %v5520 = vmul.f32 %v5519, 1.442695
    %v5521 = vpow.pop %v5520
    %v5522 = vadd.f32 %v5521, 1.0
    %v5523 = vrcp.pop %v5522
    %v5524 = vmul.f32 1.0, %v5523
    %5525 = vmatprep.subr.mxu0 0.0
    %5526 = vmatpush1.msra.mxu0 %v4624
    %5527 = vmatprep.subr.mxu0 0.0
    %5528 = vmatpush1.msra.mxu0 %v4625
    %5529 = vmatprep.subr.mxu0 0.0
    %5530 = vmatpush1.msra.mxu0 %v4626
    %5531 = vmatprep.subr.mxu0 0.0
    %5532 = vmatpush1.msra.mxu0 %v4627
    %5533 = vmatprep.subr.mxu0 0.0
    %5534 = vmatpush1.msra.mxu0 0.0
    %5535 = vmatprep.subr.mxu0 0.0
    %5536 = vmatpush1.msra.mxu0 0.0
    %5537 = vmatprep.subr.mxu0 0.0
    %5538 = vmatpush1.msra.mxu0 0.0
    %5539 = vmatprep.subr.mxu0 0.0
    %5540 = vmatpush1.msra.mxu0 0.0
    %5541 = vmatprep.subr.mxu0 0.0
    %5542 = vmatpush1.msra.mxu0 0.0
    %5543 = vmatprep.subr.mxu0 0.0
    %5544 = vmatpush1.msra.mxu0 0.0
    %5545 = vmatprep.subr.mxu0 0.0
    %5546 = vmatpush1.msra.mxu0 0.0
    %5547 = vmatprep.subr.mxu0 0.0
    %5548 = vmatpush1.msra.mxu0 0.0
    %5549 = vmatprep.subr.mxu0 0.0
    %5550 = vmatpush1.msra.mxu0 0.0
    %5551 = vmatprep.subr.mxu0 0.0
    %5552 = vmatpush1.msra.mxu0 0.0
    %5553 = vmatprep.subr.mxu0 0.0
    %5554 = vmatpush1.msra.mxu0 0.0
    %5555 = vmatprep.subr.mxu0 0.0
    %5556 = vmatpush1.msra.mxu0 0.0
    %5557 = vmatprep.subr.mxu0 0.0
    %5558 = vmatpush1.msra.mxu0 0.0
    %5559 = vmatprep.subr.mxu0 0.0
    %5560 = vmatpush1.msra.mxu0 0.0
    %5561 = vmatprep.subr.mxu0 0.0
    %5562 = vmatpush1.msra.mxu0 0.0
    %5563 = vmatprep.subr.mxu0 0.0
    %5564 = vmatpush1.msra.mxu0 0.0
    %5565 = vmatprep.subr.mxu0 0.0
    %5566 = vmatpush1.msra.mxu0 0.0
    %5567 = vmatprep.subr.mxu0 0.0
    %5568 = vmatpush1.msra.mxu0 0.0
    %5569 = vmatprep.subr.mxu0 0.0
    %5570 = vmatpush1.msra.mxu0 0.0
    %5571 = vmatprep.subr.mxu0 0.0
    %5572 = vmatpush1.msra.mxu0 0.0
    %5573 = vmatprep.subr.mxu0 0.0
    %5574 = vmatpush1.msra.mxu0 0.0
    %5575 = vmatprep.subr.mxu0 0.0
    %5576 = vmatpush1.msra.mxu0 0.0
    %5577 = vmatprep.subr.mxu0 0.0
    %5578 = vmatpush1.msra.mxu0 0.0
    %5579 = vmatprep.subr.mxu0 0.0
    %5580 = vmatpush1.msra.mxu0 0.0
    %5581 = vmatprep.subr.mxu0 0.0
    %5582 = vmatpush1.msra.mxu0 0.0
    %5583 = vmatprep.subr.mxu0 0.0
    %5584 = vmatpush1.msra.mxu0 0.0
    %5585 = vmatprep.subr.mxu0 0.0
    %5586 = vmatpush1.msra.mxu0 0.0
    %5587 = vmatprep.subr.mxu0 0.0
    %5588 = vmatpush1.msra.mxu0 0.0
    %5589 = vmatprep.mubr.f32.mxu0 0.0
    %5590 = vmatmul.mubr.f32.gmra.mrb[0].mxu0 %v5363
    %v5591 = vpop.f32.mrb[0].mxu0
    %v5592 = vadd.f32 %v4634, %v5591
    %v5593 = vpop.f32.mrb[0].mxu0
    %5594 = vdwg.mxu0
    %v5596 = vrot.slane %v5592, 2
    %v5598 = vmul.f32 %v5444, %v5596
    %v5599 = vadd.f32 %v4596, %v5598
    %v5600 = vtanh.pop %v5599
    %v5601 = vsub.f32 1.0, %v5524
    %v5602 = vmul.f32 %v5601, %v5600
    %v5603 = vrot.slane %v5359, 6
    %v5605 = vmul.f32 %v5524, %v5603
    %v5606 = vadd.f32 %v5602, %v5605
    %5607 = vst.msk [vmem:[#allocation2] sm:$0xc0] %vm1373, %v5606
    %v5609 = vrot.slane %v5606, 6
    %v5610 = vsel %vm395, %v5609, 0
    %5612 = vmatprep.subr.mxu0 0.0
    %5613 = vmatpush1.msra.mxu0 %v4614
    %5614 = vmatprep.subr.mxu0 0.0
    %5615 = vmatpush1.msra.mxu0 %v4615
    %5616 = vmatprep.subr.mxu0 0.0
    %5617 = vmatpush1.msra.mxu0 %v4616
    %5618 = vmatprep.subr.mxu0 0.0
    %5619 = vmatpush1.msra.mxu0 %v4617
    %5620 = vmatprep.subr.mxu0 0.0
    %5621 = vmatpush1.msra.mxu0 0.0
    %5622 = vmatprep.subr.mxu0 0.0
    %5623 = vmatpush1.msra.mxu0 0.0
    %5624 = vmatprep.subr.mxu0 0.0
    %5625 = vmatpush1.msra.mxu0 0.0
    %5626 = vmatprep.subr.mxu0 0.0
    %5627 = vmatpush1.msra.mxu0 0.0
    %5628 = vmatprep.subr.mxu0 0.0
    %5629 = vmatpush1.msra.mxu0 0.0
    %5630 = vmatprep.subr.mxu0 0.0
    %5631 = vmatpush1.msra.mxu0 0.0
    %5632 = vmatprep.subr.mxu0 0.0
    %5633 = vmatpush1.msra.mxu0 0.0
    %5634 = vmatprep.subr.mxu0 0.0
    %5635 = vmatpush1.msra.mxu0 0.0
    %5636 = vmatprep.subr.mxu0 0.0
    %5637 = vmatpush1.msra.mxu0 0.0
    %5638 = vmatprep.subr.mxu0 0.0
    %5639 = vmatpush1.msra.mxu0 0.0
    %5640 = vmatprep.subr.mxu0 0.0
    %5641 = vmatpush1.msra.mxu0 0.0
    %5642 = vmatprep.subr.mxu0 0.0
    %5643 = vmatpush1.msra.mxu0 0.0
    %5644 = vmatprep.subr.mxu0 0.0
    %5645 = vmatpush1.msra.mxu0 0.0
    %5646 = vmatprep.subr.mxu0 0.0
    %5647 = vmatpush1.msra.mxu0 0.0
    %5648 = vmatprep.subr.mxu0 0.0
    %5649 = vmatpush1.msra.mxu0 0.0
    %5650 = vmatprep.subr.mxu0 0.0
    %5651 = vmatpush1.msra.mxu0 0.0
    %5652 = vmatprep.subr.mxu0 0.0
    %5653 = vmatpush1.msra.mxu0 0.0
    %5654 = vmatprep.subr.mxu0 0.0
    %5655 = vmatpush1.msra.mxu0 0.0
    %5656 = vmatprep.subr.mxu0 0.0
    %5657 = vmatpush1.msra.mxu0 0.0
    %5658 = vmatprep.subr.mxu0 0.0
    %5659 = vmatpush1.msra.mxu0 0.0
    %5660 = vmatprep.subr.mxu0 0.0
    %5661 = vmatpush1.msra.mxu0 0.0
    %5662 = vmatprep.subr.mxu0 0.0
    %5663 = vmatpush1.msra.mxu0 0.0
    %5664 = vmatprep.subr.mxu0 0.0
    %5665 = vmatpush1.msra.mxu0 0.0
    %5666 = vmatprep.subr.mxu0 0.0
    %5667 = vmatpush1.msra.mxu0 0.0
    %5668 = vmatprep.subr.mxu0 0.0
    %5669 = vmatpush1.msra.mxu0 0.0
    %5670 = vmatprep.subr.mxu0 0.0
    %5671 = vmatpush1.msra.mxu0 0.0
    %5672 = vmatprep.subr.mxu0 0.0
    %5673 = vmatpush1.msra.mxu0 0.0
    %5674 = vmatprep.subr.mxu0 0.0
    %5675 = vmatpush1.msra.mxu0 0.0
    %5676 = vmatprep.mubr.f32.mxu0 0.0
    %5677 = vmatmul.mubr.f32.gmra.mrb[0].mxu0 %v5610
    %v5678 = vpop.f32.mrb[0].mxu0
    %v5679 = vadd.f32 0.0, %v5678
    %v5680 = vpop.f32.mrb[0].mxu0
    %5681 = vdwg.mxu0
    %v5682 = vadd.f32 %v4405, %v5679
    %v5683 = vxor.u32 %v5682, 2147483648
    %v5684 = vmul.f32 %v5683, 1.442695
    %v5685 = vpow.pop %v5684
    %v5686 = vadd.f32 %v5685, 1.0
    %v5687 = vrcp.pop %v5686
    %v5688 = vmul.f32 1.0, %v5687
    %5689 = vmatprep.subr.mxu0 0.0
    %5690 = vmatpush1.msra.mxu0 %v4619
    %5691 = vmatprep.subr.mxu0 0.0
    %5692 = vmatpush1.msra.mxu0 %v4620
    %5693 = vmatprep.subr.mxu0 0.0
    %5694 = vmatpush1.msra.mxu0 %v4621
    %5695 = vmatprep.subr.mxu0 0.0
    %5696 = vmatpush1.msra.mxu0 %v4622
    %5697 = vmatprep.subr.mxu0 0.0
    %5698 = vmatpush1.msra.mxu0 0.0
    %5699 = vmatprep.subr.mxu0 0.0
    %5700 = vmatpush1.msra.mxu0 0.0
    %5701 = vmatprep.subr.mxu0 0.0
    %5702 = vmatpush1.msra.mxu0 0.0
    %5703 = vmatprep.subr.mxu0 0.0
    %5704 = vmatpush1.msra.mxu0 0.0
    %5705 = vmatprep.subr.mxu0 0.0
    %5706 = vmatpush1.msra.mxu0 0.0
    %5707 = vmatprep.subr.mxu0 0.0
    %5708 = vmatpush1.msra.mxu0 0.0
    %5709 = vmatprep.subr.mxu0 0.0
    %5710 = vmatpush1.msra.mxu0 0.0
    %5711 = vmatprep.subr.mxu0 0.0
    %5712 = vmatpush1.msra.mxu0 0.0
    %5713 = vmatprep.subr.mxu0 0.0
    %5714 = vmatpush1.msra.mxu0 0.0
    %5715 = vmatprep.subr.mxu0 0.0
    %5716 = vmatpush1.msra.mxu0 0.0
    %5717 = vmatprep.subr.mxu0 0.0
    %5718 = vmatpush1.msra.mxu0 0.0
    %5719 = vmatprep.subr.mxu0 0.0
    %5720 = vmatpush1.msra.mxu0 0.0
    %5721 = vmatprep.subr.mxu0 0.0
    %5722 = vmatpush1.msra.mxu0 0.0
    %5723 = vmatprep.subr.mxu0 0.0
    %5724 = vmatpush1.msra.mxu0 0.0
    %5725 = vmatprep.subr.mxu0 0.0
    %5726 = vmatpush1.msra.mxu0 0.0
    %5727 = vmatprep.subr.mxu0 0.0
    %5728 = vmatpush1.msra.mxu0 0.0
    %5729 = vmatprep.subr.mxu0 0.0
    %5730 = vmatpush1.msra.mxu0 0.0
    %5731 = vmatprep.subr.mxu0 0.0
    %5732 = vmatpush1.msra.mxu0 0.0
    %5733 = vmatprep.subr.mxu0 0.0
    %5734 = vmatpush1.msra.mxu0 0.0
    %5735 = vmatprep.subr.mxu0 0.0
    %5736 = vmatpush1.msra.mxu0 0.0
    %5737 = vmatprep.subr.mxu0 0.0
    %5738 = vmatpush1.msra.mxu0 0.0
    %5739 = vmatprep.subr.mxu0 0.0
    %5740 = vmatpush1.msra.mxu0 0.0
    %5741 = vmatprep.subr.mxu0 0.0
    %5742 = vmatpush1.msra.mxu0 0.0
    %5743 = vmatprep.subr.mxu0 0.0
    %5744 = vmatpush1.msra.mxu0 0.0
    %5745 = vmatprep.subr.mxu0 0.0
    %5746 = vmatpush1.msra.mxu0 0.0
    %5747 = vmatprep.subr.mxu0 0.0
    %5748 = vmatpush1.msra.mxu0 0.0
    %5749 = vmatprep.subr.mxu0 0.0
    %5750 = vmatpush1.msra.mxu0 0.0
    %5751 = vmatprep.subr.mxu0 0.0
    %5752 = vmatpush1.msra.mxu0 0.0
    %5753 = vmatprep.mubr.f32.mxu0 0.0
    %5754 = vmatmul.mubr.f32.gmra.mrb[0].mxu0 %v5610
    %v5755 = vpop.f32.mrb[0].mxu0
    %v5756 = vadd.f32 0.0, %v5755
    %v5757 = vpop.f32.mrb[0].mxu0
    %5758 = vdwg.mxu0
    %v5759 = vadd.f32 %v4503, %v5756
    %v5760 = vxor.u32 %v5759, 2147483648
    %v5761 = vmul.f32 %v5760, 1.442695
    %v5762 = vpow.pop %v5761
    %v5763 = vadd.f32 %v5762, 1.0
    %v5764 = vrcp.pop %v5763
    %v5765 = vmul.f32 1.0, %v5764
    %5766 = vmatprep.subr.mxu0 0.0
    %5767 = vmatpush1.msra.mxu0 %v4624
    %5768 = vmatprep.subr.mxu0 0.0
    %5769 = vmatpush1.msra.mxu0 %v4625
    %5770 = vmatprep.subr.mxu0 0.0
    %5771 = vmatpush1.msra.mxu0 %v4626
    %5772 = vmatprep.subr.mxu0 0.0
    %5773 = vmatpush1.msra.mxu0 %v4627
    %5774 = vmatprep.subr.mxu0 0.0
    %5775 = vmatpush1.msra.mxu0 0.0
    %5776 = vmatprep.subr.mxu0 0.0
    %5777 = vmatpush1.msra.mxu0 0.0
    %5778 = vmatprep.subr.mxu0 0.0
    %5779 = vmatpush1.msra.mxu0 0.0
    %5780 = vmatprep.subr.mxu0 0.0
    %5781 = vmatpush1.msra.mxu0 0.0
    %5782 = vmatprep.subr.mxu0 0.0
    %5783 = vmatpush1.msra.mxu0 0.0
    %5784 = vmatprep.subr.mxu0 0.0
    %5785 = vmatpush1.msra.mxu0 0.0
    %5786 = vmatprep.subr.mxu0 0.0
    %5787 = vmatpush1.msra.mxu0 0.0
    %5788 = vmatprep.subr.mxu0 0.0
    %5789 = vmatpush1.msra.mxu0 0.0
    %5790 = vmatprep.subr.mxu0 0.0
    %5791 = vmatpush1.msra.mxu0 0.0
    %5792 = vmatprep.subr.mxu0 0.0
    %5793 = vmatpush1.msra.mxu0 0.0
    %5794 = vmatprep.subr.mxu0 0.0
    %5795 = vmatpush1.msra.mxu0 0.0
    %5796 = vmatprep.subr.mxu0 0.0
    %5797 = vmatpush1.msra.mxu0 0.0
    %5798 = vmatprep.subr.mxu0 0.0
    %5799 = vmatpush1.msra.mxu0 0.0
    %5800 = vmatprep.subr.mxu0 0.0
    %5801 = vmatpush1.msra.mxu0 0.0
    %5802 = vmatprep.subr.mxu0 0.0
    %5803 = vmatpush1.msra.mxu0 0.0
    %5804 = vmatprep.subr.mxu0 0.0
    %5805 = vmatpush1.msra.mxu0 0.0
    %5806 = vmatprep.subr.mxu0 0.0
    %5807 = vmatpush1.msra.mxu0 0.0
    %5808 = vmatprep.subr.mxu0 0.0
    %5809 = vmatpush1.msra.mxu0 0.0
    %5810 = vmatprep.subr.mxu0 0.0
    %5811 = vmatpush1.msra.mxu0 0.0
    %5812 = vmatprep.subr.mxu0 0.0
    %5813 = vmatpush1.msra.mxu0 0.0
    %5814 = vmatprep.subr.mxu0 0.0
    %5815 = vmatpush1.msra.mxu0 0.0
    %5816 = vmatprep.subr.mxu0 0.0
    %5817 = vmatpush1.msra.mxu0 0.0
    %5818 = vmatprep.subr.mxu0 0.0
    %5819 = vmatpush1.msra.mxu0 0.0
    %5820 = vmatprep.subr.mxu0 0.0
    %5821 = vmatpush1.msra.mxu0 0.0
    %5822 = vmatprep.subr.mxu0 0.0
    %5823 = vmatpush1.msra.mxu0 0.0
    %5824 = vmatprep.subr.mxu0 0.0
    %5825 = vmatpush1.msra.mxu0 0.0
    %5826 = vmatprep.subr.mxu0 0.0
    %5827 = vmatpush1.msra.mxu0 0.0
    %5828 = vmatprep.subr.mxu0 0.0
    %5829 = vmatpush1.msra.mxu0 0.0
    %5830 = vmatprep.mubr.f32.mxu0 0.0
    %5831 = vmatmul.mubr.f32.gmra.mrb[0].mxu0 %v5610
    %v5832 = vpop.f32.mrb[0].mxu0
    %v5833 = vadd.f32 %v4634, %v5832
    %v5834 = vpop.f32.mrb[0].mxu0
    %5835 = vdwg.mxu0
    %v5836 = vmul.f32 %v5688, %v5833
    %v5837 = vadd.f32 %v4601, %v5836
    %v5838 = vtanh.pop %v5837
    %v5839 = vsub.f32 1.0, %v5765
    %v5840 = vmul.f32 %v5839, %v5838
    %v5842 = vmul.f32 %v5765, %v5609
    %v5843 = vadd.f32 %v5840, %v5842
    %5844 = vst.msk [vmem:[#allocation2 + $0x8] sm:$0x3] %vm630, %v5843
    %v5846 = vsel %vm395, %v5843, 0
    %5848 = vmatprep.subr.mxu0 0.0
    %5849 = vmatpush1.msra.mxu0 %v4614
    %5850 = vmatprep.subr.mxu0 0.0
    %5851 = vmatpush1.msra.mxu0 %v4615
    %5852 = vmatprep.subr.mxu0 0.0
    %5853 = vmatpush1.msra.mxu0 %v4616
    %5854 = vmatprep.subr.mxu0 0.0
    %5855 = vmatpush1.msra.mxu0 %v4617
    %5856 = vmatprep.subr.mxu0 0.0
    %5857 = vmatpush1.msra.mxu0 0.0
    %5858 = vmatprep.subr.mxu0 0.0
    %5859 = vmatpush1.msra.mxu0 0.0
    %5860 = vmatprep.subr.mxu0 0.0
    %5861 = vmatpush1.msra.mxu0 0.0
    %5862 = vmatprep.subr.mxu0 0.0
    %5863 = vmatpush1.msra.mxu0 0.0
    %5864 = vmatprep.subr.mxu0 0.0
    %5865 = vmatpush1.msra.mxu0 0.0
    %5866 = vmatprep.subr.mxu0 0.0
    %5867 = vmatpush1.msra.mxu0 0.0
    %5868 = vmatprep.subr.mxu0 0.0
    %5869 = vmatpush1.msra.mxu0 0.0
    %5870 = vmatprep.subr.mxu0 0.0
    %5871 = vmatpush1.msra.mxu0 0.0
    %5872 = vmatprep.subr.mxu0 0.0
    %5873 = vmatpush1.msra.mxu0 0.0
    %5874 = vmatprep.subr.mxu0 0.0
    %5875 = vmatpush1.msra.mxu0 0.0
    %5876 = vmatprep.subr.mxu0 0.0
    %5877 = vmatpush1.msra.mxu0 0.0
    %5878 = vmatprep.subr.mxu0 0.0
    %5879 = vmatpush1.msra.mxu0 0.0
    %5880 = vmatprep.subr.mxu0 0.0
    %5881 = vmatpush1.msra.mxu0 0.0
    %5882 = vmatprep.subr.mxu0 0.0
    %5883 = vmatpush1.msra.mxu0 0.0
    %5884 = vmatprep.subr.mxu0 0.0
    %5885 = vmatpush1.msra.mxu0 0.0
    %5886 = vmatprep.subr.mxu0 0.0
    %5887 = vmatpush1.msra.mxu0 0.0
    %5888 = vmatprep.subr.mxu0 0.0
    %5889 = vmatpush1.msra.mxu0 0.0
    %5890 = vmatprep.subr.mxu0 0.0
    %5891 = vmatpush1.msra.mxu0 0.0
    %5892 = vmatprep.subr.mxu0 0.0
    %5893 = vmatpush1.msra.mxu0 0.0
    %5894 = vmatprep.subr.mxu0 0.0
    %5895 = vmatpush1.msra.mxu0 0.0
    %5896 = vmatprep.subr.mxu0 0.0
    %5897 = vmatpush1.msra.mxu0 0.0
    %5898 = vmatprep.subr.mxu0 0.0
    %5899 = vmatpush1.msra.mxu0 0.0
    %5900 = vmatprep.subr.mxu0 0.0
    %5901 = vmatpush1.msra.mxu0 0.0
    %5902 = vmatprep.subr.mxu0 0.0
    %5903 = vmatpush1.msra.mxu0 0.0
    %5904 = vmatprep.subr.mxu0 0.0
    %5905 = vmatpush1.msra.mxu0 0.0
    %5906 = vmatprep.subr.mxu0 0.0
    %5907 = vmatpush1.msra.mxu0 0.0
    %5908 = vmatprep.subr.mxu0 0.0
    %5909 = vmatpush1.msra.mxu0 0.0
    %5910 = vmatprep.subr.mxu0 0.0
    %5911 = vmatpush1.msra.mxu0 0.0
    %5912 = vmatprep.mubr.f32.mxu0 0.0
    %5913 = vmatmul.mubr.f32.gmra.mrb[0].mxu0 %v5846
    %v5914 = vpop.f32.mrb[0].mxu0
    %v5915 = vadd.f32 0.0, %v5914
    %v5916 = vpop.f32.mrb[0].mxu0
    %5917 = vdwg.mxu0
    %v5919 = vrot.slane %v5915, 6
    %v5921 = vadd.f32 %v4405, %v5919
    %v5922 = vxor.u32 %v5921, 2147483648
    %v5923 = vmul.f32 %v5922, 1.442695
    %v5924 = vpow.pop %v5923
    %v5925 = vadd.f32 %v5924, 1.0
    %v5926 = vrcp.pop %v5925
    %v5927 = vmul.f32 1.0, %v5926
    %5928 = vmatprep.subr.mxu0 0.0
    %5929 = vmatpush1.msra.mxu0 %v4619
    %5930 = vmatprep.subr.mxu0 0.0
    %5931 = vmatpush1.msra.mxu0 %v4620
    %5932 = vmatprep.subr.mxu0 0.0
    %5933 = vmatpush1.msra.mxu0 %v4621
    %5934 = vmatprep.subr.mxu0 0.0
    %5935 = vmatpush1.msra.mxu0 %v4622
    %5936 = vmatprep.subr.mxu0 0.0
    %5937 = vmatpush1.msra.mxu0 0.0
    %5938 = vmatprep.subr.mxu0 0.0
    %5939 = vmatpush1.msra.mxu0 0.0
    %5940 = vmatprep.subr.mxu0 0.0
    %5941 = vmatpush1.msra.mxu0 0.0
    %5942 = vmatprep.subr.mxu0 0.0
    %5943 = vmatpush1.msra.mxu0 0.0
    %5944 = vmatprep.subr.mxu0 0.0
    %5945 = vmatpush1.msra.mxu0 0.0
    %5946 = vmatprep.subr.mxu0 0.0
    %5947 = vmatpush1.msra.mxu0 0.0
    %5948 = vmatprep.subr.mxu0 0.0
    %5949 = vmatpush1.msra.mxu0 0.0
    %5950 = vmatprep.subr.mxu0 0.0
    %5951 = vmatpush1.msra.mxu0 0.0
    %5952 = vmatprep.subr.mxu0 0.0
    %5953 = vmatpush1.msra.mxu0 0.0
    %5954 = vmatprep.subr.mxu0 0.0
    %5955 = vmatpush1.msra.mxu0 0.0
    %5956 = vmatprep.subr.mxu0 0.0
    %5957 = vmatpush1.msra.mxu0 0.0
    %5958 = vmatprep.subr.mxu0 0.0
    %5959 = vmatpush1.msra.mxu0 0.0
    %5960 = vmatprep.subr.mxu0 0.0
    %5961 = vmatpush1.msra.mxu0 0.0
    %5962 = vmatprep.subr.mxu0 0.0
    %5963 = vmatpush1.msra.mxu0 0.0
    %5964 = vmatprep.subr.mxu0 0.0
    %5965 = vmatpush1.msra.mxu0 0.0
    %5966 = vmatprep.subr.mxu0 0.0
    %5967 = vmatpush1.msra.mxu0 0.0
    %5968 = vmatprep.subr.mxu0 0.0
    %5969 = vmatpush1.msra.mxu0 0.0
    %5970 = vmatprep.subr.mxu0 0.0
    %5971 = vmatpush1.msra.mxu0 0.0
    %5972 = vmatprep.subr.mxu0 0.0
    %5973 = vmatpush1.msra.mxu0 0.0
    %5974 = vmatprep.subr.mxu0 0.0
    %5975 = vmatpush1.msra.mxu0 0.0
    %5976 = vmatprep.subr.mxu0 0.0
    %5977 = vmatpush1.msra.mxu0 0.0
    %5978 = vmatprep.subr.mxu0 0.0
    %5979 = vmatpush1.msra.mxu0 0.0
    %5980 = vmatprep.subr.mxu0 0.0
    %5981 = vmatpush1.msra.mxu0 0.0
    %5982 = vmatprep.subr.mxu0 0.0
    %5983 = vmatpush1.msra.mxu0 0.0
    %5984 = vmatprep.subr.mxu0 0.0
    %5985 = vmatpush1.msra.mxu0 0.0
    %5986 = vmatprep.subr.mxu0 0.0
    %5987 = vmatpush1.msra.mxu0 0.0
    %5988 = vmatprep.subr.mxu0 0.0
    %5989 = vmatpush1.msra.mxu0 0.0
    %5990 = vmatprep.subr.mxu0 0.0
    %5991 = vmatpush1.msra.mxu0 0.0
    %5992 = vmatprep.mubr.f32.mxu0 0.0
    %5993 = vmatmul.mubr.f32.gmra.mrb[0].mxu0 %v5846
    %v5994 = vpop.f32.mrb[0].mxu0
    %v5995 = vadd.f32 0.0, %v5994
    %v5996 = vpop.f32.mrb[0].mxu0
    %5997 = vdwg.mxu0
    %v5999 = vrot.slane %v5995, 6
    %v6001 = vadd.f32 %v4503, %v5999
    %v6002 = vxor.u32 %v6001, 2147483648
    %v6003 = vmul.f32 %v6002, 1.442695
    %v6004 = vpow.pop %v6003
    %v6005 = vadd.f32 %v6004, 1.0
    %v6006 = vrcp.pop %v6005
    %v6007 = vmul.f32 1.0, %v6006
    %6008 = vmatprep.subr.mxu0 0.0
    %6009 = vmatpush1.msra.mxu0 %v4624
    %6010 = vmatprep.subr.mxu0 0.0
    %6011 = vmatpush1.msra.mxu0 %v4625
    %6012 = vmatprep.subr.mxu0 0.0
    %6013 = vmatpush1.msra.mxu0 %v4626
    %6014 = vmatprep.subr.mxu0 0.0
    %6015 = vmatpush1.msra.mxu0 %v4627
    %6016 = vmatprep.subr.mxu0 0.0
    %6017 = vmatpush1.msra.mxu0 0.0
    %6018 = vmatprep.subr.mxu0 0.0
    %6019 = vmatpush1.msra.mxu0 0.0
    %6020 = vmatprep.subr.mxu0 0.0
    %6021 = vmatpush1.msra.mxu0 0.0
    %6022 = vmatprep.subr.mxu0 0.0
    %6023 = vmatpush1.msra.mxu0 0.0
    %6024 = vmatprep.subr.mxu0 0.0
    %6025 = vmatpush1.msra.mxu0 0.0
    %6026 = vmatprep.subr.mxu0 0.0
    %6027 = vmatpush1.msra.mxu0 0.0
    %6028 = vmatprep.subr.mxu0 0.0
    %6029 = vmatpush1.msra.mxu0 0.0
    %6030 = vmatprep.subr.mxu0 0.0
    %6031 = vmatpush1.msra.mxu0 0.0
    %6032 = vmatprep.subr.mxu0 0.0
    %6033 = vmatpush1.msra.mxu0 0.0
    %6034 = vmatprep.subr.mxu0 0.0
    %6035 = vmatpush1.msra.mxu0 0.0
    %6036 = vmatprep.subr.mxu0 0.0
    %6037 = vmatpush1.msra.mxu0 0.0
    %6038 = vmatprep.subr.mxu0 0.0
    %6039 = vmatpush1.msra.mxu0 0.0
    %6040 = vmatprep.subr.mxu0 0.0
    %6041 = vmatpush1.msra.mxu0 0.0
    %6042 = vmatprep.subr.mxu0 0.0
    %6043 = vmatpush1.msra.mxu0 0.0
    %6044 = vmatprep.subr.mxu0 0.0
    %6045 = vmatpush1.msra.mxu0 0.0
    %6046 = vmatprep.subr.mxu0 0.0
    %6047 = vmatpush1.msra.mxu0 0.0
    %6048 = vmatprep.subr.mxu0 0.0
    %6049 = vmatpush1.msra.mxu0 0.0
    %6050 = vmatprep.subr.mxu0 0.0
    %6051 = vmatpush1.msra.mxu0 0.0
    %6052 = vmatprep.subr.mxu0 0.0
    %6053 = vmatpush1.msra.mxu0 0.0
    %6054 = vmatprep.subr.mxu0 0.0
    %6055 = vmatpush1.msra.mxu0 0.0
    %6056 = vmatprep.subr.mxu0 0.0
    %6057 = vmatpush1.msra.mxu0 0.0
    %6058 = vmatprep.subr.mxu0 0.0
    %6059 = vmatpush1.msra.mxu0 0.0
    %6060 = vmatprep.subr.mxu0 0.0
    %6061 = vmatpush1.msra.mxu0 0.0
    %6062 = vmatprep.subr.mxu0 0.0
    %6063 = vmatpush1.msra.mxu0 0.0
    %6064 = vmatprep.subr.mxu0 0.0
    %6065 = vmatpush1.msra.mxu0 0.0
    %6066 = vmatprep.subr.mxu0 0.0
    %6067 = vmatpush1.msra.mxu0 0.0
    %6068 = vmatprep.subr.mxu0 0.0
    %6069 = vmatpush1.msra.mxu0 0.0
    %6070 = vmatprep.subr.mxu0 0.0
    %6071 = vmatpush1.msra.mxu0 0.0
    %6072 = vmatprep.mubr.f32.mxu0 0.0
    %6073 = vmatmul.mubr.f32.gmra.mrb[0].mxu0 %v5846
    %v6074 = vpop.f32.mrb[0].mxu0
    %v6075 = vadd.f32 %v4634, %v6074
    %v6076 = vpop.f32.mrb[0].mxu0
    %6077 = vdwg.mxu0
    %v6079 = vrot.slane %v6075, 6
    %v6081 = vmul.f32 %v5927, %v6079
    %v6082 = vadd.f32 %v4601, %v6081
    %v6083 = vtanh.pop %v6082
    %v6084 = vsub.f32 1.0, %v6007
    %v6085 = vmul.f32 %v6084, %v6083
    %v6086 = vrot.slane %v5843, 6
    %v6088 = vmul.f32 %v6007, %v6086
    %v6089 = vadd.f32 %v6085, %v6088
    %6090 = vst.msk [vmem:[#allocation2 + $0x8] sm:$0xc] %vm877, %v6089
    %v6092 = vrot.slane %v6089, 2
    %v6093 = vsel %vm395, %v6092, 0
    %6095 = vmatprep.subr.mxu0 0.0
    %6096 = vmatpush1.msra.mxu0 %v4614
    %6097 = vmatprep.subr.mxu0 0.0
    %6098 = vmatpush1.msra.mxu0 %v4615
    %6099 = vmatprep.subr.mxu0 0.0
    %6100 = vmatpush1.msra.mxu0 %v4616
    %6101 = vmatprep.subr.mxu0 0.0
    %6102 = vmatpush1.msra.mxu0 %v4617
    %6103 = vmatprep.subr.mxu0 0.0
    %6104 = vmatpush1.msra.mxu0 0.0
    %6105 = vmatprep.subr.mxu0 0.0
    %6106 = vmatpush1.msra.mxu0 0.0
    %6107 = vmatprep.subr.mxu0 0.0
    %6108 = vmatpush1.msra.mxu0 0.0
    %6109 = vmatprep.subr.mxu0 0.0
    %6110 = vmatpush1.msra.mxu0 0.0
    %6111 = vmatprep.subr.mxu0 0.0
    %6112 = vmatpush1.msra.mxu0 0.0
    %6113 = vmatprep.subr.mxu0 0.0
    %6114 = vmatpush1.msra.mxu0 0.0
    %6115 = vmatprep.subr.mxu0 0.0
    %6116 = vmatpush1.msra.mxu0 0.0
    %6117 = vmatprep.subr.mxu0 0.0
    %6118 = vmatpush1.msra.mxu0 0.0
    %6119 = vmatprep.subr.mxu0 0.0
    %6120 = vmatpush1.msra.mxu0 0.0
    %6121 = vmatprep.subr.mxu0 0.0
    %6122 = vmatpush1.msra.mxu0 0.0
    %6123 = vmatprep.subr.mxu0 0.0
    %6124 = vmatpush1.msra.mxu0 0.0
    %6125 = vmatprep.subr.mxu0 0.0
    %6126 = vmatpush1.msra.mxu0 0.0
    %6127 = vmatprep.subr.mxu0 0.0
    %6128 = vmatpush1.msra.mxu0 0.0
    %6129 = vmatprep.subr.mxu0 0.0
    %6130 = vmatpush1.msra.mxu0 0.0
    %6131 = vmatprep.subr.mxu0 0.0
    %6132 = vmatpush1.msra.mxu0 0.0
    %6133 = vmatprep.subr.mxu0 0.0
    %6134 = vmatpush1.msra.mxu0 0.0
    %6135 = vmatprep.subr.mxu0 0.0
    %6136 = vmatpush1.msra.mxu0 0.0
    %6137 = vmatprep.subr.mxu0 0.0
    %6138 = vmatpush1.msra.mxu0 0.0
    %6139 = vmatprep.subr.mxu0 0.0
    %6140 = vmatpush1.msra.mxu0 0.0
    %6141 = vmatprep.subr.mxu0 0.0
    %6142 = vmatpush1.msra.mxu0 0.0
    %6143 = vmatprep.subr.mxu0 0.0
    %6144 = vmatpush1.msra.mxu0 0.0
    %6145 = vmatprep.subr.mxu0 0.0
    %6146 = vmatpush1.msra.mxu0 0.0
    %6147 = vmatprep.subr.mxu0 0.0
    %6148 = vmatpush1.msra.mxu0 0.0
    %6149 = vmatprep.subr.mxu0 0.0
    %6150 = vmatpush1.msra.mxu0 0.0
    %6151 = vmatprep.subr.mxu0 0.0
    %6152 = vmatpush1.msra.mxu0 0.0
    %6153 = vmatprep.subr.mxu0 0.0
    %6154 = vmatpush1.msra.mxu0 0.0
    %6155 = vmatprep.subr.mxu0 0.0
    %6156 = vmatpush1.msra.mxu0 0.0
    %6157 = vmatprep.subr.mxu0 0.0
    %6158 = vmatpush1.msra.mxu0 0.0
    %6159 = vmatprep.mubr.f32.mxu0 0.0
    %6160 = vmatmul.mubr.f32.gmra.mrb[0].mxu0 %v6093
    %v6161 = vpop.f32.mrb[0].mxu0
    %v6162 = vadd.f32 0.0, %v6161
    %v6163 = vpop.f32.mrb[0].mxu0
    %6164 = vdwg.mxu0
    %v6166 = vrot.slane %v6162, 4
    %v6168 = vadd.f32 %v4405, %v6166
    %v6169 = vxor.u32 %v6168, 2147483648
    %v6170 = vmul.f32 %v6169, 1.442695
    %v6171 = vpow.pop %v6170
    %v6172 = vadd.f32 %v6171, 1.0
    %v6173 = vrcp.pop %v6172
    %v6174 = vmul.f32 1.0, %v6173
    %6175 = vmatprep.subr.mxu0 0.0
    %6176 = vmatpush1.msra.mxu0 %v4619
    %6177 = vmatprep.subr.mxu0 0.0
    %6178 = vmatpush1.msra.mxu0 %v4620
    %6179 = vmatprep.subr.mxu0 0.0
    %6180 = vmatpush1.msra.mxu0 %v4621
    %6181 = vmatprep.subr.mxu0 0.0
    %6182 = vmatpush1.msra.mxu0 %v4622
    %6183 = vmatprep.subr.mxu0 0.0
    %6184 = vmatpush1.msra.mxu0 0.0
    %6185 = vmatprep.subr.mxu0 0.0
    %6186 = vmatpush1.msra.mxu0 0.0
    %6187 = vmatprep.subr.mxu0 0.0
    %6188 = vmatpush1.msra.mxu0 0.0
    %6189 = vmatprep.subr.mxu0 0.0
    %6190 = vmatpush1.msra.mxu0 0.0
    %6191 = vmatprep.subr.mxu0 0.0
    %6192 = vmatpush1.msra.mxu0 0.0
    %6193 = vmatprep.subr.mxu0 0.0
    %6194 = vmatpush1.msra.mxu0 0.0
    %6195 = vmatprep.subr.mxu0 0.0
    %6196 = vmatpush1.msra.mxu0 0.0
    %6197 = vmatprep.subr.mxu0 0.0
    %6198 = vmatpush1.msra.mxu0 0.0
    %6199 = vmatprep.subr.mxu0 0.0
    %6200 = vmatpush1.msra.mxu0 0.0
    %6201 = vmatprep.subr.mxu0 0.0
    %6202 = vmatpush1.msra.mxu0 0.0
    %6203 = vmatprep.subr.mxu0 0.0
    %6204 = vmatpush1.msra.mxu0 0.0
    %6205 = vmatprep.subr.mxu0 0.0
    %6206 = vmatpush1.msra.mxu0 0.0
    %6207 = vmatprep.subr.mxu0 0.0
    %6208 = vmatpush1.msra.mxu0 0.0
    %6209 = vmatprep.subr.mxu0 0.0
    %6210 = vmatpush1.msra.mxu0 0.0
    %6211 = vmatprep.subr.mxu0 0.0
    %6212 = vmatpush1.msra.mxu0 0.0
    %6213 = vmatprep.subr.mxu0 0.0
    %6214 = vmatpush1.msra.mxu0 0.0
    %6215 = vmatprep.subr.mxu0 0.0
    %6216 = vmatpush1.msra.mxu0 0.0
    %6217 = vmatprep.subr.mxu0 0.0
    %6218 = vmatpush1.msra.mxu0 0.0
    %6219 = vmatprep.subr.mxu0 0.0
    %6220 = vmatpush1.msra.mxu0 0.0
    %6221 = vmatprep.subr.mxu0 0.0
    %6222 = vmatpush1.msra.mxu0 0.0
    %6223 = vmatprep.subr.mxu0 0.0
    %6224 = vmatpush1.msra.mxu0 0.0
    %6225 = vmatprep.subr.mxu0 0.0
    %6226 = vmatpush1.msra.mxu0 0.0
    %6227 = vmatprep.subr.mxu0 0.0
    %6228 = vmatpush1.msra.mxu0 0.0
    %6229 = vmatprep.subr.mxu0 0.0
    %6230 = vmatpush1.msra.mxu0 0.0
    %6231 = vmatprep.subr.mxu0 0.0
    %6232 = vmatpush1.msra.mxu0 0.0
    %6233 = vmatprep.subr.mxu0 0.0
    %6234 = vmatpush1.msra.mxu0 0.0
    %6235 = vmatprep.subr.mxu0 0.0
    %6236 = vmatpush1.msra.mxu0 0.0
    %6237 = vmatprep.subr.mxu0 0.0
    %6238 = vmatpush1.msra.mxu0 0.0
    %6239 = vmatprep.mubr.f32.mxu0 0.0
    %6240 = vmatmul.mubr.f32.gmra.mrb[0].mxu0 %v6093
    %v6241 = vpop.f32.mrb[0].mxu0
    %v6242 = vadd.f32 0.0, %v6241
    %v6243 = vpop.f32.mrb[0].mxu0
    %6244 = vdwg.mxu0
    %v6246 = vrot.slane %v6242, 4
    %v6248 = vadd.f32 %v4503, %v6246
    %v6249 = vxor.u32 %v6248, 2147483648
    %v6250 = vmul.f32 %v6249, 1.442695
    %v6251 = vpow.pop %v6250
    %v6252 = vadd.f32 %v6251, 1.0
    %v6253 = vrcp.pop %v6252
    %v6254 = vmul.f32 1.0, %v6253
    %6255 = vmatprep.subr.mxu0 0.0
    %6256 = vmatpush1.msra.mxu0 %v4624
    %6257 = vmatprep.subr.mxu0 0.0
    %6258 = vmatpush1.msra.mxu0 %v4625
    %6259 = vmatprep.subr.mxu0 0.0
    %6260 = vmatpush1.msra.mxu0 %v4626
    %6261 = vmatprep.subr.mxu0 0.0
    %6262 = vmatpush1.msra.mxu0 %v4627
    %6263 = vmatprep.subr.mxu0 0.0
    %6264 = vmatpush1.msra.mxu0 0.0
    %6265 = vmatprep.subr.mxu0 0.0
    %6266 = vmatpush1.msra.mxu0 0.0
    %6267 = vmatprep.subr.mxu0 0.0
    %6268 = vmatpush1.msra.mxu0 0.0
    %6269 = vmatprep.subr.mxu0 0.0
    %6270 = vmatpush1.msra.mxu0 0.0
    %6271 = vmatprep.subr.mxu0 0.0
    %6272 = vmatpush1.msra.mxu0 0.0
    %6273 = vmatprep.subr.mxu0 0.0
    %6274 = vmatpush1.msra.mxu0 0.0
    %6275 = vmatprep.subr.mxu0 0.0
    %6276 = vmatpush1.msra.mxu0 0.0
    %6277 = vmatprep.subr.mxu0 0.0
    %6278 = vmatpush1.msra.mxu0 0.0
    %6279 = vmatprep.subr.mxu0 0.0
    %6280 = vmatpush1.msra.mxu0 0.0
    %6281 = vmatprep.subr.mxu0 0.0
    %6282 = vmatpush1.msra.mxu0 0.0
    %6283 = vmatprep.subr.mxu0 0.0
    %6284 = vmatpush1.msra.mxu0 0.0
    %6285 = vmatprep.subr.mxu0 0.0
    %6286 = vmatpush1.msra.mxu0 0.0
    %6287 = vmatprep.subr.mxu0 0.0
    %6288 = vmatpush1.msra.mxu0 0.0
    %6289 = vmatprep.subr.mxu0 0.0
    %6290 = vmatpush1.msra.mxu0 0.0
    %6291 = vmatprep.subr.mxu0 0.0
    %6292 = vmatpush1.msra.mxu0 0.0
    %6293 = vmatprep.subr.mxu0 0.0
    %6294 = vmatpush1.msra.mxu0 0.0
    %6295 = vmatprep.subr.mxu0 0.0
    %6296 = vmatpush1.msra.mxu0 0.0
    %6297 = vmatprep.subr.mxu0 0.0
    %6298 = vmatpush1.msra.mxu0 0.0
    %6299 = vmatprep.subr.mxu0 0.0
    %6300 = vmatpush1.msra.mxu0 0.0
    %6301 = vmatprep.subr.mxu0 0.0
    %6302 = vmatpush1.msra.mxu0 0.0
    %6303 = vmatprep.subr.mxu0 0.0
    %6304 = vmatpush1.msra.mxu0 0.0
    %6305 = vmatprep.subr.mxu0 0.0
    %6306 = vmatpush1.msra.mxu0 0.0
    %6307 = vmatprep.subr.mxu0 0.0
    %6308 = vmatpush1.msra.mxu0 0.0
    %6309 = vmatprep.subr.mxu0 0.0
    %6310 = vmatpush1.msra.mxu0 0.0
    %6311 = vmatprep.subr.mxu0 0.0
    %6312 = vmatpush1.msra.mxu0 0.0
    %6313 = vmatprep.subr.mxu0 0.0
    %6314 = vmatpush1.msra.mxu0 0.0
    %6315 = vmatprep.subr.mxu0 0.0
    %6316 = vmatpush1.msra.mxu0 0.0
    %6317 = vmatprep.subr.mxu0 0.0
    %6318 = vmatpush1.msra.mxu0 0.0
    %6319 = vmatprep.mubr.f32.mxu0 0.0
    %6320 = vmatmul.mubr.f32.gmra.mrb[0].mxu0 %v6093
    %v6321 = vpop.f32.mrb[0].mxu0
    %v6322 = vadd.f32 %v4634, %v6321
    %v6323 = vpop.f32.mrb[0].mxu0
    %6324 = vdwg.mxu0
    %v6326 = vrot.slane %v6322, 4
    %v6328 = vmul.f32 %v6174, %v6326
    %v6329 = vadd.f32 %v4601, %v6328
    %v6330 = vtanh.pop %v6329
    %v6331 = vsub.f32 1.0, %v6254
    %v6332 = vmul.f32 %v6331, %v6330
    %v6333 = vrot.slane %v6089, 6
    %v6335 = vmul.f32 %v6254, %v6333
    %v6336 = vadd.f32 %v6332, %v6335
    %6337 = vst.msk [vmem:[#allocation2 + $0x8] sm:$0x30] %vm1125, %v6336
    %v6339 = vrot.slane %v6336, 4
    %v6340 = vsel %vm395, %v6339, 0
    %6342 = vmatprep.subr.mxu0 0.0
    %6343 = vmatpush1.msra.mxu0 %v4614
    %6344 = vmatprep.subr.mxu0 0.0
    %6345 = vmatpush1.msra.mxu0 %v4615
    %6346 = vmatprep.subr.mxu0 0.0
    %6347 = vmatpush1.msra.mxu0 %v4616
    %6348 = vmatprep.subr.mxu0 0.0
    %6349 = vmatpush1.msra.mxu0 %v4617
    %6350 = vmatprep.subr.mxu0 0.0
    %6351 = vmatpush1.msra.mxu0 0.0
    %6352 = vmatprep.subr.mxu0 0.0
    %6353 = vmatpush1.msra.mxu0 0.0
    %6354 = vmatprep.subr.mxu0 0.0
    %6355 = vmatpush1.msra.mxu0 0.0
    %6356 = vmatprep.subr.mxu0 0.0
    %6357 = vmatpush1.msra.mxu0 0.0
    %6358 = vmatprep.subr.mxu0 0.0
    %6359 = vmatpush1.msra.mxu0 0.0
    %6360 = vmatprep.subr.mxu0 0.0
    %6361 = vmatpush1.msra.mxu0 0.0
    %6362 = vmatprep.subr.mxu0 0.0
    %6363 = vmatpush1.msra.mxu0 0.0
    %6364 = vmatprep.subr.mxu0 0.0
    %6365 = vmatpush1.msra.mxu0 0.0
    %6366 = vmatprep.subr.mxu0 0.0
    %6367 = vmatpush1.msra.mxu0 0.0
    %6368 = vmatprep.subr.mxu0 0.0
    %6369 = vmatpush1.msra.mxu0 0.0
    %6370 = vmatprep.subr.mxu0 0.0
    %6371 = vmatpush1.msra.mxu0 0.0
    %6372 = vmatprep.subr.mxu0 0.0
    %6373 = vmatpush1.msra.mxu0 0.0
    %6374 = vmatprep.subr.mxu0 0.0
    %6375 = vmatpush1.msra.mxu0 0.0
    %6376 = vmatprep.subr.mxu0 0.0
    %6377 = vmatpush1.msra.mxu0 0.0
    %6378 = vmatprep.subr.mxu0 0.0
    %6379 = vmatpush1.msra.mxu0 0.0
    %6380 = vmatprep.subr.mxu0 0.0
    %6381 = vmatpush1.msra.mxu0 0.0
    %6382 = vmatprep.subr.mxu0 0.0
    %6383 = vmatpush1.msra.mxu0 0.0
    %6384 = vmatprep.subr.mxu0 0.0
    %6385 = vmatpush1.msra.mxu0 0.0
    %6386 = vmatprep.subr.mxu0 0.0
    %6387 = vmatpush1.msra.mxu0 0.0
    %6388 = vmatprep.subr.mxu0 0.0
    %6389 = vmatpush1.msra.mxu0 0.0
    %6390 = vmatprep.subr.mxu0 0.0
    %6391 = vmatpush1.msra.mxu0 0.0
    %6392 = vmatprep.subr.mxu0 0.0
    %6393 = vmatpush1.msra.mxu0 0.0
    %6394 = vmatprep.subr.mxu0 0.0
    %6395 = vmatpush1.msra.mxu0 0.0
    %6396 = vmatprep.subr.mxu0 0.0
    %6397 = vmatpush1.msra.mxu0 0.0
    %6398 = vmatprep.subr.mxu0 0.0
    %6399 = vmatpush1.msra.mxu0 0.0
    %6400 = vmatprep.subr.mxu0 0.0
    %6401 = vmatpush1.msra.mxu0 0.0
    %6402 = vmatprep.subr.mxu0 0.0
    %6403 = vmatpush1.msra.mxu0 0.0
    %6404 = vmatprep.subr.mxu0 0.0
    %6405 = vmatpush1.msra.mxu0 0.0
    %6406 = vmatprep.mubr.f32.mxu0 0.0
    %6407 = vmatmul.mubr.f32.gmra.mrb[0].mxu0 %v6340
    %v6408 = vpop.f32.mrb[0].mxu0
    %v6409 = vadd.f32 0.0, %v6408
    %v6410 = vpop.f32.mrb[0].mxu0
    %6411 = vdwg.mxu0
    %v6413 = vrot.slane %v6409, 2
    %v6415 = vadd.f32 %v4405, %v6413
    %v6416 = vxor.u32 %v6415, 2147483648
    %v6417 = vmul.f32 %v6416, 1.442695
    %v6418 = vpow.pop %v6417
    %v6419 = vadd.f32 %v6418, 1.0
    %v6420 = vrcp.pop %v6419
    %v6421 = vmul.f32 1.0, %v6420
    %6422 = vmatprep.subr.mxu0 0.0
    %6423 = vmatpush1.msra.mxu0 %v4619
    %6424 = vmatprep.subr.mxu0 0.0
    %6425 = vmatpush1.msra.mxu0 %v4620
    %6426 = vmatprep.subr.mxu0 0.0
    %6427 = vmatpush1.msra.mxu0 %v4621
    %6428 = vmatprep.subr.mxu0 0.0
    %6429 = vmatpush1.msra.mxu0 %v4622
    %6430 = vmatprep.subr.mxu0 0.0
    %6431 = vmatpush1.msra.mxu0 0.0
    %6432 = vmatprep.subr.mxu0 0.0
    %6433 = vmatpush1.msra.mxu0 0.0
    %6434 = vmatprep.subr.mxu0 0.0
    %6435 = vmatpush1.msra.mxu0 0.0
    %6436 = vmatprep.subr.mxu0 0.0
    %6437 = vmatpush1.msra.mxu0 0.0
    %6438 = vmatprep.subr.mxu0 0.0
    %6439 = vmatpush1.msra.mxu0 0.0
    %6440 = vmatprep.subr.mxu0 0.0
    %6441 = vmatpush1.msra.mxu0 0.0
    %6442 = vmatprep.subr.mxu0 0.0
    %6443 = vmatpush1.msra.mxu0 0.0
    %6444 = vmatprep.subr.mxu0 0.0
    %6445 = vmatpush1.msra.mxu0 0.0
    %6446 = vmatprep.subr.mxu0 0.0
    %6447 = vmatpush1.msra.mxu0 0.0
    %6448 = vmatprep.subr.mxu0 0.0
    %6449 = vmatpush1.msra.mxu0 0.0
    %6450 = vmatprep.subr.mxu0 0.0
    %6451 = vmatpush1.msra.mxu0 0.0
    %6452 = vmatprep.subr.mxu0 0.0
    %6453 = vmatpush1.msra.mxu0 0.0
    %6454 = vmatprep.subr.mxu0 0.0
    %6455 = vmatpush1.msra.mxu0 0.0
    %6456 = vmatprep.subr.mxu0 0.0
    %6457 = vmatpush1.msra.mxu0 0.0
    %6458 = vmatprep.subr.mxu0 0.0
    %6459 = vmatpush1.msra.mxu0 0.0
    %6460 = vmatprep.subr.mxu0 0.0
    %6461 = vmatpush1.msra.mxu0 0.0
    %6462 = vmatprep.subr.mxu0 0.0
    %6463 = vmatpush1.msra.mxu0 0.0
    %6464 = vmatprep.subr.mxu0 0.0
    %6465 = vmatpush1.msra.mxu0 0.0
    %6466 = vmatprep.subr.mxu0 0.0
    %6467 = vmatpush1.msra.mxu0 0.0
    %6468 = vmatprep.subr.mxu0 0.0
    %6469 = vmatpush1.msra.mxu0 0.0
    %6470 = vmatprep.subr.mxu0 0.0
    %6471 = vmatpush1.msra.mxu0 0.0
    %6472 = vmatprep.subr.mxu0 0.0
    %6473 = vmatpush1.msra.mxu0 0.0
    %6474 = vmatprep.subr.mxu0 0.0
    %6475 = vmatpush1.msra.mxu0 0.0
    %6476 = vmatprep.subr.mxu0 0.0
    %6477 = vmatpush1.msra.mxu0 0.0
    %6478 = vmatprep.subr.mxu0 0.0
    %6479 = vmatpush1.msra.mxu0 0.0
    %6480 = vmatprep.subr.mxu0 0.0
    %6481 = vmatpush1.msra.mxu0 0.0
    %6482 = vmatprep.subr.mxu0 0.0
    %6483 = vmatpush1.msra.mxu0 0.0
    %6484 = vmatprep.subr.mxu0 0.0
    %6485 = vmatpush1.msra.mxu0 0.0
    %6486 = vmatprep.mubr.f32.mxu0 0.0
    %6487 = vmatmul.mubr.f32.gmra.mrb[0].mxu0 %v6340
    %v6488 = vpop.f32.mrb[0].mxu0
    %v6489 = vadd.f32 0.0, %v6488
    %v6490 = vpop.f32.mrb[0].mxu0
    %6491 = vdwg.mxu0
    %v6493 = vrot.slane %v6489, 2
    %v6495 = vadd.f32 %v4503, %v6493
    %v6496 = vxor.u32 %v6495, 2147483648
    %v6497 = vmul.f32 %v6496, 1.442695
    %v6498 = vpow.pop %v6497
    %v6499 = vadd.f32 %v6498, 1.0
    %v6500 = vrcp.pop %v6499
    %v6501 = vmul.f32 1.0, %v6500
    %6502 = vmatprep.subr.mxu0 0.0
    %6503 = vmatpush1.msra.mxu0 %v4624
    %6504 = vmatprep.subr.mxu0 0.0
    %6505 = vmatpush1.msra.mxu0 %v4625
    %6506 = vmatprep.subr.mxu0 0.0
    %6507 = vmatpush1.msra.mxu0 %v4626
    %6508 = vmatprep.subr.mxu0 0.0
    %6509 = vmatpush1.msra.mxu0 %v4627
    %6510 = vmatprep.subr.mxu0 0.0
    %6511 = vmatpush1.msra.mxu0 0.0
    %6512 = vmatprep.subr.mxu0 0.0
    %6513 = vmatpush1.msra.mxu0 0.0
    %6514 = vmatprep.subr.mxu0 0.0
    %6515 = vmatpush1.msra.mxu0 0.0
    %6516 = vmatprep.subr.mxu0 0.0
    %6517 = vmatpush1.msra.mxu0 0.0
    %6518 = vmatprep.subr.mxu0 0.0
    %6519 = vmatpush1.msra.mxu0 0.0
    %6520 = vmatprep.subr.mxu0 0.0
    %6521 = vmatpush1.msra.mxu0 0.0
    %6522 = vmatprep.subr.mxu0 0.0
    %6523 = vmatpush1.msra.mxu0 0.0
    %6524 = vmatprep.subr.mxu0 0.0
    %6525 = vmatpush1.msra.mxu0 0.0
    %6526 = vmatprep.subr.mxu0 0.0
    %6527 = vmatpush1.msra.mxu0 0.0
    %6528 = vmatprep.subr.mxu0 0.0
    %6529 = vmatpush1.msra.mxu0 0.0
    %6530 = vmatprep.subr.mxu0 0.0
    %6531 = vmatpush1.msra.mxu0 0.0
    %6532 = vmatprep.subr.mxu0 0.0
    %6533 = vmatpush1.msra.mxu0 0.0
    %6534 = vmatprep.subr.mxu0 0.0
    %6535 = vmatpush1.msra.mxu0 0.0
    %6536 = vmatprep.subr.mxu0 0.0
    %6537 = vmatpush1.msra.mxu0 0.0
    %6538 = vmatprep.subr.mxu0 0.0
    %6539 = vmatpush1.msra.mxu0 0.0
    %6540 = vmatprep.subr.mxu0 0.0
    %6541 = vmatpush1.msra.mxu0 0.0
    %6542 = vmatprep.subr.mxu0 0.0
    %6543 = vmatpush1.msra.mxu0 0.0
    %6544 = vmatprep.subr.mxu0 0.0
    %6545 = vmatpush1.msra.mxu0 0.0
    %6546 = vmatprep.subr.mxu0 0.0
    %6547 = vmatpush1.msra.mxu0 0.0
    %6548 = vmatprep.subr.mxu0 0.0
    %6549 = vmatpush1.msra.mxu0 0.0
    %6550 = vmatprep.subr.mxu0 0.0
    %6551 = vmatpush1.msra.mxu0 0.0
    %6552 = vmatprep.subr.mxu0 0.0
    %6553 = vmatpush1.msra.mxu0 0.0
    %6554 = vmatprep.subr.mxu0 0.0
    %6555 = vmatpush1.msra.mxu0 0.0
    %6556 = vmatprep.subr.mxu0 0.0
    %6557 = vmatpush1.msra.mxu0 0.0
    %6558 = vmatprep.subr.mxu0 0.0
    %6559 = vmatpush1.msra.mxu0 0.0
    %6560 = vmatprep.subr.mxu0 0.0
    %6561 = vmatpush1.msra.mxu0 0.0
    %6562 = vmatprep.subr.mxu0 0.0
    %6563 = vmatpush1.msra.mxu0 0.0
    %6564 = vmatprep.subr.mxu0 0.0
    %6565 = vmatpush1.msra.mxu0 0.0
    %6566 = vmatprep.mubr.f32.mxu0 0.0
    %6567 = vmatmul.mubr.f32.gmra.mrb[0].mxu0 %v6340
    %v6568 = vpop.f32.mrb[0].mxu0
    %v6569 = vadd.f32 %v4634, %v6568
    %v6570 = vpop.f32.mrb[0].mxu0
    %6571 = vdwg.mxu0
    %v6573 = vrot.slane %v6569, 2
    %v6575 = vmul.f32 %v6421, %v6573
    %v6576 = vadd.f32 %v4601, %v6575
    %v6577 = vtanh.pop %v6576
    %v6578 = vsub.f32 1.0, %v6501
    %v6579 = vmul.f32 %v6578, %v6577
    %v6580 = vrot.slane %v6336, 6
    %v6582 = vmul.f32 %v6501, %v6580
    %v6583 = vadd.f32 %v6579, %v6582
    %6584 = vst.msk [vmem:[#allocation2 + $0x8] sm:$0xc0] %vm1373, %v6583
    %v6586 = vrot.slane %v6583, 6
    %v6587 = vsel %vm395, %v6586, 0
    %6589 = vmatprep.subr.mxu0 0.0
    %6590 = vmatpush1.msra.mxu0 %v4614
    %6591 = vmatprep.subr.mxu0 0.0
    %6592 = vmatpush1.msra.mxu0 %v4615
    %6593 = vmatprep.subr.mxu0 0.0
    %6594 = vmatpush1.msra.mxu0 %v4616
    %6595 = vmatprep.subr.mxu0 0.0
    %6596 = vmatpush1.msra.mxu0 %v4617
    %6597 = vmatprep.subr.mxu0 0.0
    %6598 = vmatpush1.msra.mxu0 0.0
    %6599 = vmatprep.subr.mxu0 0.0
    %6600 = vmatpush1.msra.mxu0 0.0
    %6601 = vmatprep.subr.mxu0 0.0
    %6602 = vmatpush1.msra.mxu0 0.0
    %6603 = vmatprep.subr.mxu0 0.0
    %6604 = vmatpush1.msra.mxu0 0.0
    %6605 = vmatprep.subr.mxu0 0.0
    %6606 = vmatpush1.msra.mxu0 0.0
    %6607 = vmatprep.subr.mxu0 0.0
    %6608 = vmatpush1.msra.mxu0 0.0
    %6609 = vmatprep.subr.mxu0 0.0
    %6610 = vmatpush1.msra.mxu0 0.0
    %6611 = vmatprep.subr.mxu0 0.0
    %6612 = vmatpush1.msra.mxu0 0.0
    %6613 = vmatprep.subr.mxu0 0.0
    %6614 = vmatpush1.msra.mxu0 0.0
    %6615 = vmatprep.subr.mxu0 0.0
    %6616 = vmatpush1.msra.mxu0 0.0
    %6617 = vmatprep.subr.mxu0 0.0
    %6618 = vmatpush1.msra.mxu0 0.0
    %6619 = vmatprep.subr.mxu0 0.0
    %6620 = vmatpush1.msra.mxu0 0.0
    %6621 = vmatprep.subr.mxu0 0.0
    %6622 = vmatpush1.msra.mxu0 0.0
    %6623 = vmatprep.subr.mxu0 0.0
    %6624 = vmatpush1.msra.mxu0 0.0
    %6625 = vmatprep.subr.mxu0 0.0
    %6626 = vmatpush1.msra.mxu0 0.0
    %6627 = vmatprep.subr.mxu0 0.0
    %6628 = vmatpush1.msra.mxu0 0.0
    %6629 = vmatprep.subr.mxu0 0.0
    %6630 = vmatpush1.msra.mxu0 0.0
    %6631 = vmatprep.subr.mxu0 0.0
    %6632 = vmatpush1.msra.mxu0 0.0
    %6633 = vmatprep.subr.mxu0 0.0
    %6634 = vmatpush1.msra.mxu0 0.0
    %6635 = vmatprep.subr.mxu0 0.0
    %6636 = vmatpush1.msra.mxu0 0.0
    %6637 = vmatprep.subr.mxu0 0.0
    %6638 = vmatpush1.msra.mxu0 0.0
    %6639 = vmatprep.subr.mxu0 0.0
    %6640 = vmatpush1.msra.mxu0 0.0
    %6641 = vmatprep.subr.mxu0 0.0
    %6642 = vmatpush1.msra.mxu0 0.0
    %6643 = vmatprep.subr.mxu0 0.0
    %6644 = vmatpush1.msra.mxu0 0.0
    %6645 = vmatprep.subr.mxu0 0.0
    %6646 = vmatpush1.msra.mxu0 0.0
    %6647 = vmatprep.subr.mxu0 0.0
    %6648 = vmatpush1.msra.mxu0 0.0
    %6649 = vmatprep.subr.mxu0 0.0
    %6650 = vmatpush1.msra.mxu0 0.0
    %6651 = vmatprep.subr.mxu0 0.0
    %6652 = vmatpush1.msra.mxu0 0.0
    %6653 = vmatprep.mubr.f32.mxu0 0.0
    %6654 = vmatmul.mubr.f32.gmra.mrb[0].mxu0 %v6587
    %v6655 = vpop.f32.mrb[0].mxu0
    %v6656 = vadd.f32 0.0, %v6655
    %v6657 = vpop.f32.mrb[0].mxu0
    %6658 = vdwg.mxu0
    %v6659 = vadd.f32 %v4410, %v6656
    %v6660 = vxor.u32 %v6659, 2147483648
    %v6661 = vmul.f32 %v6660, 1.442695
    %v6662 = vpow.pop %v6661
    %v6663 = vadd.f32 %v6662, 1.0
    %v6664 = vrcp.pop %v6663
    %v6665 = vmul.f32 1.0, %v6664
    %6666 = vmatprep.subr.mxu0 0.0
    %6667 = vmatpush1.msra.mxu0 %v4619
    %6668 = vmatprep.subr.mxu0 0.0
    %6669 = vmatpush1.msra.mxu0 %v4620
    %6670 = vmatprep.subr.mxu0 0.0
    %6671 = vmatpush1.msra.mxu0 %v4621
    %6672 = vmatprep.subr.mxu0 0.0
    %6673 = vmatpush1.msra.mxu0 %v4622
    %6674 = vmatprep.subr.mxu0 0.0
    %6675 = vmatpush1.msra.mxu0 0.0
    %6676 = vmatprep.subr.mxu0 0.0
    %6677 = vmatpush1.msra.mxu0 0.0
    %6678 = vmatprep.subr.mxu0 0.0
    %6679 = vmatpush1.msra.mxu0 0.0
    %6680 = vmatprep.subr.mxu0 0.0
    %6681 = vmatpush1.msra.mxu0 0.0
    %6682 = vmatprep.subr.mxu0 0.0
    %6683 = vmatpush1.msra.mxu0 0.0
    %6684 = vmatprep.subr.mxu0 0.0
    %6685 = vmatpush1.msra.mxu0 0.0
    %6686 = vmatprep.subr.mxu0 0.0
    %6687 = vmatpush1.msra.mxu0 0.0
    %6688 = vmatprep.subr.mxu0 0.0
    %6689 = vmatpush1.msra.mxu0 0.0
    %6690 = vmatprep.subr.mxu0 0.0
    %6691 = vmatpush1.msra.mxu0 0.0
    %6692 = vmatprep.subr.mxu0 0.0
    %6693 = vmatpush1.msra.mxu0 0.0
    %6694 = vmatprep.subr.mxu0 0.0
    %6695 = vmatpush1.msra.mxu0 0.0
    %6696 = vmatprep.subr.mxu0 0.0
    %6697 = vmatpush1.msra.mxu0 0.0
    %6698 = vmatprep.subr.mxu0 0.0
    %6699 = vmatpush1.msra.mxu0 0.0
    %6700 = vmatprep.subr.mxu0 0.0
    %6701 = vmatpush1.msra.mxu0 0.0
    %6702 = vmatprep.subr.mxu0 0.0
    %6703 = vmatpush1.msra.mxu0 0.0
    %6704 = vmatprep.subr.mxu0 0.0
    %6705 = vmatpush1.msra.mxu0 0.0
    %6706 = vmatprep.subr.mxu0 0.0
    %6707 = vmatpush1.msra.mxu0 0.0
    %6708 = vmatprep.subr.mxu0 0.0
    %6709 = vmatpush1.msra.mxu0 0.0
    %6710 = vmatprep.subr.mxu0 0.0
    %6711 = vmatpush1.msra.mxu0 0.0
    %6712 = vmatprep.subr.mxu0 0.0
    %6713 = vmatpush1.msra.mxu0 0.0
    %6714 = vmatprep.subr.mxu0 0.0
    %6715 = vmatpush1.msra.mxu0 0.0
    %6716 = vmatprep.subr.mxu0 0.0
    %6717 = vmatpush1.msra.mxu0 0.0
    %6718 = vmatprep.subr.mxu0 0.0
    %6719 = vmatpush1.msra.mxu0 0.0
    %6720 = vmatprep.subr.mxu0 0.0
    %6721 = vmatpush1.msra.mxu0 0.0
    %6722 = vmatprep.subr.mxu0 0.0
    %6723 = vmatpush1.msra.mxu0 0.0
    %6724 = vmatprep.subr.mxu0 0.0
    %6725 = vmatpush1.msra.mxu0 0.0
    %6726 = vmatprep.subr.mxu0 0.0
    %6727 = vmatpush1.msra.mxu0 0.0
    %6728 = vmatprep.subr.mxu0 0.0
    %6729 = vmatpush1.msra.mxu0 0.0
    %6730 = vmatprep.mubr.f32.mxu0 0.0
    %6731 = vmatmul.mubr.f32.gmra.mrb[0].mxu0 %v6587
    %v6732 = vpop.f32.mrb[0].mxu0
    %v6733 = vadd.f32 0.0, %v6732
    %v6734 = vpop.f32.mrb[0].mxu0
    %6735 = vdwg.mxu0
    %v6736 = vadd.f32 %v4508, %v6733
    %v6737 = vxor.u32 %v6736, 2147483648
    %v6738 = vmul.f32 %v6737, 1.442695
    %v6739 = vpow.pop %v6738
    %v6740 = vadd.f32 %v6739, 1.0
    %v6741 = vrcp.pop %v6740
    %v6742 = vmul.f32 1.0, %v6741
    %6743 = vmatprep.subr.mxu0 0.0
    %6744 = vmatpush1.msra.mxu0 %v4624
    %6745 = vmatprep.subr.mxu0 0.0
    %6746 = vmatpush1.msra.mxu0 %v4625
    %6747 = vmatprep.subr.mxu0 0.0
    %6748 = vmatpush1.msra.mxu0 %v4626
    %6749 = vmatprep.subr.mxu0 0.0
    %6750 = vmatpush1.msra.mxu0 %v4627
    %6751 = vmatprep.subr.mxu0 0.0
    %6752 = vmatpush1.msra.mxu0 0.0
    %6753 = vmatprep.subr.mxu0 0.0
    %6754 = vmatpush1.msra.mxu0 0.0
    %6755 = vmatprep.subr.mxu0 0.0
    %6756 = vmatpush1.msra.mxu0 0.0
    %6757 = vmatprep.subr.mxu0 0.0
    %6758 = vmatpush1.msra.mxu0 0.0
    %6759 = vmatprep.subr.mxu0 0.0
    %6760 = vmatpush1.msra.mxu0 0.0
    %6761 = vmatprep.subr.mxu0 0.0
    %6762 = vmatpush1.msra.mxu0 0.0
    %6763 = vmatprep.subr.mxu0 0.0
    %6764 = vmatpush1.msra.mxu0 0.0
    %6765 = vmatprep.subr.mxu0 0.0
    %6766 = vmatpush1.msra.mxu0 0.0
    %6767 = vmatprep.subr.mxu0 0.0
    %6768 = vmatpush1.msra.mxu0 0.0
    %6769 = vmatprep.subr.mxu0 0.0
    %6770 = vmatpush1.msra.mxu0 0.0
    %6771 = vmatprep.subr.mxu0 0.0
    %6772 = vmatpush1.msra.mxu0 0.0
    %6773 = vmatprep.subr.mxu0 0.0
    %6774 = vmatpush1.msra.mxu0 0.0
    %6775 = vmatprep.subr.mxu0 0.0
    %6776 = vmatpush1.msra.mxu0 0.0
    %6777 = vmatprep.subr.mxu0 0.0
    %6778 = vmatpush1.msra.mxu0 0.0
    %6779 = vmatprep.subr.mxu0 0.0
    %6780 = vmatpush1.msra.mxu0 0.0
    %6781 = vmatprep.subr.mxu0 0.0
    %6782 = vmatpush1.msra.mxu0 0.0
    %6783 = vmatprep.subr.mxu0 0.0
    %6784 = vmatpush1.msra.mxu0 0.0
    %6785 = vmatprep.subr.mxu0 0.0
    %6786 = vmatpush1.msra.mxu0 0.0
    %6787 = vmatprep.subr.mxu0 0.0
    %6788 = vmatpush1.msra.mxu0 0.0
    %6789 = vmatprep.subr.mxu0 0.0
    %6790 = vmatpush1.msra.mxu0 0.0
    %6791 = vmatprep.subr.mxu0 0.0
    %6792 = vmatpush1.msra.mxu0 0.0
    %6793 = vmatprep.subr.mxu0 0.0
    %6794 = vmatpush1.msra.mxu0 0.0
    %6795 = vmatprep.subr.mxu0 0.0
    %6796 = vmatpush1.msra.mxu0 0.0
    %6797 = vmatprep.subr.mxu0 0.0
    %6798 = vmatpush1.msra.mxu0 0.0
    %6799 = vmatprep.subr.mxu0 0.0
    %6800 = vmatpush1.msra.mxu0 0.0
    %6801 = vmatprep.subr.mxu0 0.0
    %6802 = vmatpush1.msra.mxu0 0.0
    %6803 = vmatprep.subr.mxu0 0.0
    %6804 = vmatpush1.msra.mxu0 0.0
    %6805 = vmatprep.subr.mxu0 0.0
    %6806 = vmatpush1.msra.mxu0 0.0
    %6807 = vmatprep.mubr.f32.mxu0 0.0
    %6808 = vmatmul.mubr.f32.gmra.mrb[0].mxu0 %v6587
    %v6809 = vpop.f32.mrb[0].mxu0
    %v6810 = vadd.f32 %v4634, %v6809
    %v6811 = vpop.f32.mrb[0].mxu0
    %6812 = vdwg.mxu0
    %v6813 = vmul.f32 %v6665, %v6810
    %v6814 = vadd.f32 %v4606, %v6813
    %v6815 = vtanh.pop %v6814
    %v6816 = vsub.f32 1.0, %v6742
    %v6817 = vmul.f32 %v6816, %v6815
    %v6819 = vmul.f32 %v6742, %v6586
    %v6820 = vadd.f32 %v6817, %v6819
    %6821 = vst.msk [vmem:[#allocation2 + $0x10] sm:$0x3] %vm630, %v6820
    %v6823 = vsel %vm395, %v6820, 0
    %6825 = vmatprep.subr.mxu0 0.0
    %6826 = vmatpush1.msra.mxu0 %v4614
    %6827 = vmatprep.subr.mxu0 0.0
    %6828 = vmatpush1.msra.mxu0 %v4615
    %6829 = vmatprep.subr.mxu0 0.0
    %6830 = vmatpush1.msra.mxu0 %v4616
    %6831 = vmatprep.subr.mxu0 0.0
    %6832 = vmatpush1.msra.mxu0 %v4617
    %6833 = vmatprep.subr.mxu0 0.0
    %6834 = vmatpush1.msra.mxu0 0.0
    %6835 = vmatprep.subr.mxu0 0.0
    %6836 = vmatpush1.msra.mxu0 0.0
    %6837 = vmatprep.subr.mxu0 0.0
    %6838 = vmatpush1.msra.mxu0 0.0
    %6839 = vmatprep.subr.mxu0 0.0
    %6840 = vmatpush1.msra.mxu0 0.0
    %6841 = vmatprep.subr.mxu0 0.0
    %6842 = vmatpush1.msra.mxu0 0.0
    %6843 = vmatprep.subr.mxu0 0.0
    %6844 = vmatpush1.msra.mxu0 0.0
    %6845 = vmatprep.subr.mxu0 0.0
    %6846 = vmatpush1.msra.mxu0 0.0
    %6847 = vmatprep.subr.mxu0 0.0
    %6848 = vmatpush1.msra.mxu0 0.0
    %6849 = vmatprep.subr.mxu0 0.0
    %6850 = vmatpush1.msra.mxu0 0.0
    %6851 = vmatprep.subr.mxu0 0.0
    %6852 = vmatpush1.msra.mxu0 0.0
    %6853 = vmatprep.subr.mxu0 0.0
    %6854 = vmatpush1.msra.mxu0 0.0
    %6855 = vmatprep.subr.mxu0 0.0
    %6856 = vmatpush1.msra.mxu0 0.0
    %6857 = vmatprep.subr.mxu0 0.0
    %6858 = vmatpush1.msra.mxu0 0.0
    %6859 = vmatprep.subr.mxu0 0.0
    %6860 = vmatpush1.msra.mxu0 0.0
    %6861 = vmatprep.subr.mxu0 0.0
    %6862 = vmatpush1.msra.mxu0 0.0
    %6863 = vmatprep.subr.mxu0 0.0
    %6864 = vmatpush1.msra.mxu0 0.0
    %6865 = vmatprep.subr.mxu0 0.0
    %6866 = vmatpush1.msra.mxu0 0.0
    %6867 = vmatprep.subr.mxu0 0.0
    %6868 = vmatpush1.msra.mxu0 0.0
    %6869 = vmatprep.subr.mxu0 0.0
    %6870 = vmatpush1.msra.mxu0 0.0
    %6871 = vmatprep.subr.mxu0 0.0
    %6872 = vmatpush1.msra.mxu0 0.0
    %6873 = vmatprep.subr.mxu0 0.0
    %6874 = vmatpush1.msra.mxu0 0.0
    %6875 = vmatprep.subr.mxu0 0.0
    %6876 = vmatpush1.msra.mxu0 0.0
    %6877 = vmatprep.subr.mxu0 0.0
    %6878 = vmatpush1.msra.mxu0 0.0
    %6879 = vmatprep.subr.mxu0 0.0
    %6880 = vmatpush1.msra.mxu0 0.0
    %6881 = vmatprep.subr.mxu0 0.0
    %6882 = vmatpush1.msra.mxu0 0.0
    %6883 = vmatprep.subr.mxu0 0.0
    %6884 = vmatpush1.msra.mxu0 0.0
    %6885 = vmatprep.subr.mxu0 0.0
    %6886 = vmatpush1.msra.mxu0 0.0
    %6887 = vmatprep.subr.mxu0 0.0
    %6888 = vmatpush1.msra.mxu0 0.0
    %6889 = vmatprep.mubr.f32.mxu0 0.0
    %6890 = vmatmul.mubr.f32.gmra.mrb[0].mxu0 %v6823
    %v6891 = vpop.f32.mrb[0].mxu0
    %v6892 = vadd.f32 0.0, %v6891
    %v6893 = vpop.f32.mrb[0].mxu0
    %6894 = vdwg.mxu0
    %v6896 = vrot.slane %v6892, 6
    %v6898 = vadd.f32 %v4410, %v6896
    %v6899 = vxor.u32 %v6898, 2147483648
    %v6900 = vmul.f32 %v6899, 1.442695
    %v6901 = vpow.pop %v6900
    %v6902 = vadd.f32 %v6901, 1.0
    %v6903 = vrcp.pop %v6902
    %v6904 = vmul.f32 1.0, %v6903
    %6905 = vmatprep.subr.mxu0 0.0
    %6906 = vmatpush1.msra.mxu0 %v4619
    %6907 = vmatprep.subr.mxu0 0.0
    %6908 = vmatpush1.msra.mxu0 %v4620
    %6909 = vmatprep.subr.mxu0 0.0
    %6910 = vmatpush1.msra.mxu0 %v4621
    %6911 = vmatprep.subr.mxu0 0.0
    %6912 = vmatpush1.msra.mxu0 %v4622
    %6913 = vmatprep.subr.mxu0 0.0
    %6914 = vmatpush1.msra.mxu0 0.0
    %6915 = vmatprep.subr.mxu0 0.0
    %6916 = vmatpush1.msra.mxu0 0.0
    %6917 = vmatprep.subr.mxu0 0.0
    %6918 = vmatpush1.msra.mxu0 0.0
    %6919 = vmatprep.subr.mxu0 0.0
    %6920 = vmatpush1.msra.mxu0 0.0
    %6921 = vmatprep.subr.mxu0 0.0
    %6922 = vmatpush1.msra.mxu0 0.0
    %6923 = vmatprep.subr.mxu0 0.0
    %6924 = vmatpush1.msra.mxu0 0.0
    %6925 = vmatprep.subr.mxu0 0.0
    %6926 = vmatpush1.msra.mxu0 0.0
    %6927 = vmatprep.subr.mxu0 0.0
    %6928 = vmatpush1.msra.mxu0 0.0
    %6929 = vmatprep.subr.mxu0 0.0
    %6930 = vmatpush1.msra.mxu0 0.0
    %6931 = vmatprep.subr.mxu0 0.0
    %6932 = vmatpush1.msra.mxu0 0.0
    %6933 = vmatprep.subr.mxu0 0.0
    %6934 = vmatpush1.msra.mxu0 0.0
    %6935 = vmatprep.subr.mxu0 0.0
    %6936 = vmatpush1.msra.mxu0 0.0
    %6937 = vmatprep.subr.mxu0 0.0
    %6938 = vmatpush1.msra.mxu0 0.0
    %6939 = vmatprep.subr.mxu0 0.0
    %6940 = vmatpush1.msra.mxu0 0.0
    %6941 = vmatprep.subr.mxu0 0.0
    %6942 = vmatpush1.msra.mxu0 0.0
    %6943 = vmatprep.subr.mxu0 0.0
    %6944 = vmatpush1.msra.mxu0 0.0
    %6945 = vmatprep.subr.mxu0 0.0
    %6946 = vmatpush1.msra.mxu0 0.0
    %6947 = vmatprep.subr.mxu0 0.0
    %6948 = vmatpush1.msra.mxu0 0.0
    %6949 = vmatprep.subr.mxu0 0.0
    %6950 = vmatpush1.msra.mxu0 0.0
    %6951 = vmatprep.subr.mxu0 0.0
    %6952 = vmatpush1.msra.mxu0 0.0
    %6953 = vmatprep.subr.mxu0 0.0
    %6954 = vmatpush1.msra.mxu0 0.0
    %6955 = vmatprep.subr.mxu0 0.0
    %6956 = vmatpush1.msra.mxu0 0.0
    %6957 = vmatprep.subr.mxu0 0.0
    %6958 = vmatpush1.msra.mxu0 0.0
    %6959 = vmatprep.subr.mxu0 0.0
    %6960 = vmatpush1.msra.mxu0 0.0
    %6961 = vmatprep.subr.mxu0 0.0
    %6962 = vmatpush1.msra.mxu0 0.0
    %6963 = vmatprep.subr.mxu0 0.0
    %6964 = vmatpush1.msra.mxu0 0.0
    %6965 = vmatprep.subr.mxu0 0.0
    %6966 = vmatpush1.msra.mxu0 0.0
    %6967 = vmatprep.subr.mxu0 0.0
    %6968 = vmatpush1.msra.mxu0 0.0
    %6969 = vmatprep.mubr.f32.mxu0 0.0
    %6970 = vmatmul.mubr.f32.gmra.mrb[0].mxu0 %v6823
    %v6971 = vpop.f32.mrb[0].mxu0
    %v6972 = vadd.f32 0.0, %v6971
    %v6973 = vpop.f32.mrb[0].mxu0
    %6974 = vdwg.mxu0
    %v6976 = vrot.slane %v6972, 6
    %v6978 = vadd.f32 %v4508, %v6976
    %v6979 = vxor.u32 %v6978, 2147483648
    %v6980 = vmul.f32 %v6979, 1.442695
    %v6981 = vpow.pop %v6980
    %v6982 = vadd.f32 %v6981, 1.0
    %v6983 = vrcp.pop %v6982
    %v6984 = vmul.f32 1.0, %v6983
    %6985 = vmatprep.subr.mxu0 0.0
    %6986 = vmatpush1.msra.mxu0 %v4624
    %6987 = vmatprep.subr.mxu0 0.0
    %6988 = vmatpush1.msra.mxu0 %v4625
    %6989 = vmatprep.subr.mxu0 0.0
    %6990 = vmatpush1.msra.mxu0 %v4626
    %6991 = vmatprep.subr.mxu0 0.0
    %6992 = vmatpush1.msra.mxu0 %v4627
    %6993 = vmatprep.subr.mxu0 0.0
    %6994 = vmatpush1.msra.mxu0 0.0
    %6995 = vmatprep.subr.mxu0 0.0
    %6996 = vmatpush1.msra.mxu0 0.0
    %6997 = vmatprep.subr.mxu0 0.0
    %6998 = vmatpush1.msra.mxu0 0.0
    %6999 = vmatprep.subr.mxu0 0.0
    %7000 = vmatpush1.msra.mxu0 0.0
    %7001 = vmatprep.subr.mxu0 0.0
    %7002 = vmatpush1.msra.mxu0 0.0
    %7003 = vmatprep.subr.mxu0 0.0
    %7004 = vmatpush1.msra.mxu0 0.0
    %7005 = vmatprep.subr.mxu0 0.0
    %7006 = vmatpush1.msra.mxu0 0.0
    %7007 = vmatprep.subr.mxu0 0.0
    %7008 = vmatpush1.msra.mxu0 0.0
    %7009 = vmatprep.subr.mxu0 0.0
    %7010 = vmatpush1.msra.mxu0 0.0
    %7011 = vmatprep.subr.mxu0 0.0
    %7012 = vmatpush1.msra.mxu0 0.0
    %7013 = vmatprep.subr.mxu0 0.0
    %7014 = vmatpush1.msra.mxu0 0.0
    %7015 = vmatprep.subr.mxu0 0.0
    %7016 = vmatpush1.msra.mxu0 0.0
    %7017 = vmatprep.subr.mxu0 0.0
    %7018 = vmatpush1.msra.mxu0 0.0
    %7019 = vmatprep.subr.mxu0 0.0
    %7020 = vmatpush1.msra.mxu0 0.0
    %7021 = vmatprep.subr.mxu0 0.0
    %7022 = vmatpush1.msra.mxu0 0.0
    %7023 = vmatprep.subr.mxu0 0.0
    %7024 = vmatpush1.msra.mxu0 0.0
    %7025 = vmatprep.subr.mxu0 0.0
    %7026 = vmatpush1.msra.mxu0 0.0
    %7027 = vmatprep.subr.mxu0 0.0
    %7028 = vmatpush1.msra.mxu0 0.0
    %7029 = vmatprep.subr.mxu0 0.0
    %7030 = vmatpush1.msra.mxu0 0.0
    %7031 = vmatprep.subr.mxu0 0.0
    %7032 = vmatpush1.msra.mxu0 0.0
    %7033 = vmatprep.subr.mxu0 0.0
    %7034 = vmatpush1.msra.mxu0 0.0
    %7035 = vmatprep.subr.mxu0 0.0
    %7036 = vmatpush1.msra.mxu0 0.0
    %7037 = vmatprep.subr.mxu0 0.0
    %7038 = vmatpush1.msra.mxu0 0.0
    %7039 = vmatprep.subr.mxu0 0.0
    %7040 = vmatpush1.msra.mxu0 0.0
    %7041 = vmatprep.subr.mxu0 0.0
    %7042 = vmatpush1.msra.mxu0 0.0
    %7043 = vmatprep.subr.mxu0 0.0
    %7044 = vmatpush1.msra.mxu0 0.0
    %7045 = vmatprep.subr.mxu0 0.0
    %7046 = vmatpush1.msra.mxu0 0.0
    %7047 = vmatprep.subr.mxu0 0.0
    %7048 = vmatpush1.msra.mxu0 0.0
    %7049 = vmatprep.mubr.f32.mxu0 0.0
    %7050 = vmatmul.mubr.f32.gmra.mrb[0].mxu0 %v6823
    %v7051 = vpop.f32.mrb[0].mxu0
    %v7052 = vadd.f32 %v4634, %v7051
    %v7053 = vpop.f32.mrb[0].mxu0
    %7054 = vdwg.mxu0
    %v7056 = vrot.slane %v7052, 6
    %v7058 = vmul.f32 %v6904, %v7056
    %v7059 = vadd.f32 %v4606, %v7058
    %v7060 = vtanh.pop %v7059
    %v7061 = vsub.f32 1.0, %v6984
    %v7062 = vmul.f32 %v7061, %v7060
    %v7063 = vrot.slane %v6820, 6
    %v7065 = vmul.f32 %v6984, %v7063
    %v7066 = vadd.f32 %v7062, %v7065
    %7067 = vst.msk [vmem:[#allocation2 + $0x10] sm:$0xc] %vm877, %v7066
    %v7069 = vrot.slane %v7066, 2
    %v7070 = vsel %vm395, %v7069, 0
    %7072 = vmatprep.subr.mxu0 0.0
    %7073 = vmatpush1.msra.mxu0 %v4614
    %7074 = vmatprep.subr.mxu0 0.0
    %7075 = vmatpush1.msra.mxu0 %v4615
    %7076 = vmatprep.subr.mxu0 0.0
    %7077 = vmatpush1.msra.mxu0 %v4616
    %7078 = vmatprep.subr.mxu0 0.0
    %7079 = vmatpush1.msra.mxu0 %v4617
    %7080 = vmatprep.subr.mxu0 0.0
    %7081 = vmatpush1.msra.mxu0 0.0
    %7082 = vmatprep.subr.mxu0 0.0
    %7083 = vmatpush1.msra.mxu0 0.0
    %7084 = vmatprep.subr.mxu0 0.0
    %7085 = vmatpush1.msra.mxu0 0.0
    %7086 = vmatprep.subr.mxu0 0.0
    %7087 = vmatpush1.msra.mxu0 0.0
    %7088 = vmatprep.subr.mxu0 0.0
    %7089 = vmatpush1.msra.mxu0 0.0
    %7090 = vmatprep.subr.mxu0 0.0
    %7091 = vmatpush1.msra.mxu0 0.0
    %7092 = vmatprep.subr.mxu0 0.0
    %7093 = vmatpush1.msra.mxu0 0.0
    %7094 = vmatprep.subr.mxu0 0.0
    %7095 = vmatpush1.msra.mxu0 0.0
    %7096 = vmatprep.subr.mxu0 0.0
    %7097 = vmatpush1.msra.mxu0 0.0
    %7098 = vmatprep.subr.mxu0 0.0
    %7099 = vmatpush1.msra.mxu0 0.0
    %7100 = vmatprep.subr.mxu0 0.0
    %7101 = vmatpush1.msra.mxu0 0.0
    %7102 = vmatprep.subr.mxu0 0.0
    %7103 = vmatpush1.msra.mxu0 0.0
    %7104 = vmatprep.subr.mxu0 0.0
    %7105 = vmatpush1.msra.mxu0 0.0
    %7106 = vmatprep.subr.mxu0 0.0
    %7107 = vmatpush1.msra.mxu0 0.0
    %7108 = vmatprep.subr.mxu0 0.0
    %7109 = vmatpush1.msra.mxu0 0.0
    %7110 = vmatprep.subr.mxu0 0.0
    %7111 = vmatpush1.msra.mxu0 0.0
    %7112 = vmatprep.subr.mxu0 0.0
    %7113 = vmatpush1.msra.mxu0 0.0
    %7114 = vmatprep.subr.mxu0 0.0
    %7115 = vmatpush1.msra.mxu0 0.0
    %7116 = vmatprep.subr.mxu0 0.0
    %7117 = vmatpush1.msra.mxu0 0.0
    %7118 = vmatprep.subr.mxu0 0.0
    %7119 = vmatpush1.msra.mxu0 0.0
    %7120 = vmatprep.subr.mxu0 0.0
    %7121 = vmatpush1.msra.mxu0 0.0
    %7122 = vmatprep.subr.mxu0 0.0
    %7123 = vmatpush1.msra.mxu0 0.0
    %7124 = vmatprep.subr.mxu0 0.0
    %7125 = vmatpush1.msra.mxu0 0.0
    %7126 = vmatprep.subr.mxu0 0.0
    %7127 = vmatpush1.msra.mxu0 0.0
    %7128 = vmatprep.subr.mxu0 0.0
    %7129 = vmatpush1.msra.mxu0 0.0
    %7130 = vmatprep.subr.mxu0 0.0
    %7131 = vmatpush1.msra.mxu0 0.0
    %7132 = vmatprep.subr.mxu0 0.0
    %7133 = vmatpush1.msra.mxu0 0.0
    %7134 = vmatprep.subr.mxu0 0.0
    %7135 = vmatpush1.msra.mxu0 0.0
    %7136 = vmatprep.mubr.f32.mxu0 0.0
    %7137 = vmatmul.mubr.f32.gmra.mrb[0].mxu0 %v7070
    %v7138 = vpop.f32.mrb[0].mxu0
    %v7139 = vadd.f32 0.0, %v7138
    %v7140 = vpop.f32.mrb[0].mxu0
    %7141 = vdwg.mxu0
    %v7143 = vrot.slane %v7139, 4
    %v7145 = vadd.f32 %v4410, %v7143
    %v7146 = vxor.u32 %v7145, 2147483648
    %v7147 = vmul.f32 %v7146, 1.442695
    %v7148 = vpow.pop %v7147
    %v7149 = vadd.f32 %v7148, 1.0
    %v7150 = vrcp.pop %v7149
    %v7151 = vmul.f32 1.0, %v7150
    %7152 = vmatprep.subr.mxu0 0.0
    %7153 = vmatpush1.msra.mxu0 %v4619
    %7154 = vmatprep.subr.mxu0 0.0
    %7155 = vmatpush1.msra.mxu0 %v4620
    %7156 = vmatprep.subr.mxu0 0.0
    %7157 = vmatpush1.msra.mxu0 %v4621
    %7158 = vmatprep.subr.mxu0 0.0
    %7159 = vmatpush1.msra.mxu0 %v4622
    %7160 = vmatprep.subr.mxu0 0.0
    %7161 = vmatpush1.msra.mxu0 0.0
    %7162 = vmatprep.subr.mxu0 0.0
    %7163 = vmatpush1.msra.mxu0 0.0
    %7164 = vmatprep.subr.mxu0 0.0
    %7165 = vmatpush1.msra.mxu0 0.0
    %7166 = vmatprep.subr.mxu0 0.0
    %7167 = vmatpush1.msra.mxu0 0.0
    %7168 = vmatprep.subr.mxu0 0.0
    %7169 = vmatpush1.msra.mxu0 0.0
    %7170 = vmatprep.subr.mxu0 0.0
    %7171 = vmatpush1.msra.mxu0 0.0
    %7172 = vmatprep.subr.mxu0 0.0
    %7173 = vmatpush1.msra.mxu0 0.0
    %7174 = vmatprep.subr.mxu0 0.0
    %7175 = vmatpush1.msra.mxu0 0.0
    %7176 = vmatprep.subr.mxu0 0.0
    %7177 = vmatpush1.msra.mxu0 0.0
    %7178 = vmatprep.subr.mxu0 0.0
    %7179 = vmatpush1.msra.mxu0 0.0
    %7180 = vmatprep.subr.mxu0 0.0
    %7181 = vmatpush1.msra.mxu0 0.0
    %7182 = vmatprep.subr.mxu0 0.0
    %7183 = vmatpush1.msra.mxu0 0.0
    %7184 = vmatprep.subr.mxu0 0.0
    %7185 = vmatpush1.msra.mxu0 0.0
    %7186 = vmatprep.subr.mxu0 0.0
    %7187 = vmatpush1.msra.mxu0 0.0
    %7188 = vmatprep.subr.mxu0 0.0
    %7189 = vmatpush1.msra.mxu0 0.0
    %7190 = vmatprep.subr.mxu0 0.0
    %7191 = vmatpush1.msra.mxu0 0.0
    %7192 = vmatprep.subr.mxu0 0.0
    %7193 = vmatpush1.msra.mxu0 0.0
    %7194 = vmatprep.subr.mxu0 0.0
    %7195 = vmatpush1.msra.mxu0 0.0
    %7196 = vmatprep.subr.mxu0 0.0
    %7197 = vmatpush1.msra.mxu0 0.0
    %7198 = vmatprep.subr.mxu0 0.0
    %7199 = vmatpush1.msra.mxu0 0.0
    %7200 = vmatprep.subr.mxu0 0.0
    %7201 = vmatpush1.msra.mxu0 0.0
    %7202 = vmatprep.subr.mxu0 0.0
    %7203 = vmatpush1.msra.mxu0 0.0
    %7204 = vmatprep.subr.mxu0 0.0
    %7205 = vmatpush1.msra.mxu0 0.0
    %7206 = vmatprep.subr.mxu0 0.0
    %7207 = vmatpush1.msra.mxu0 0.0
    %7208 = vmatprep.subr.mxu0 0.0
    %7209 = vmatpush1.msra.mxu0 0.0
    %7210 = vmatprep.subr.mxu0 0.0
    %7211 = vmatpush1.msra.mxu0 0.0
    %7212 = vmatprep.subr.mxu0 0.0
    %7213 = vmatpush1.msra.mxu0 0.0
    %7214 = vmatprep.subr.mxu0 0.0
    %7215 = vmatpush1.msra.mxu0 0.0
    %7216 = vmatprep.mubr.f32.mxu0 0.0
    %7217 = vmatmul.mubr.f32.gmra.mrb[0].mxu0 %v7070
    %v7218 = vpop.f32.mrb[0].mxu0
    %v7219 = vadd.f32 0.0, %v7218
    %v7220 = vpop.f32.mrb[0].mxu0
    %7221 = vdwg.mxu0
    %v7223 = vrot.slane %v7219, 4
    %v7225 = vadd.f32 %v4508, %v7223
    %v7226 = vxor.u32 %v7225, 2147483648
    %v7227 = vmul.f32 %v7226, 1.442695
    %v7228 = vpow.pop %v7227
    %v7229 = vadd.f32 %v7228, 1.0
    %v7230 = vrcp.pop %v7229
    %v7231 = vmul.f32 1.0, %v7230
    %7232 = vmatprep.subr.mxu0 0.0
    %7233 = vmatpush1.msra.mxu0 %v4624
    %7234 = vmatprep.subr.mxu0 0.0
    %7235 = vmatpush1.msra.mxu0 %v4625
    %7236 = vmatprep.subr.mxu0 0.0
    %7237 = vmatpush1.msra.mxu0 %v4626
    %7238 = vmatprep.subr.mxu0 0.0
    %7239 = vmatpush1.msra.mxu0 %v4627
    %7240 = vmatprep.subr.mxu0 0.0
    %7241 = vmatpush1.msra.mxu0 0.0
    %7242 = vmatprep.subr.mxu0 0.0
    %7243 = vmatpush1.msra.mxu0 0.0
    %7244 = vmatprep.subr.mxu0 0.0
    %7245 = vmatpush1.msra.mxu0 0.0
    %7246 = vmatprep.subr.mxu0 0.0
    %7247 = vmatpush1.msra.mxu0 0.0
    %7248 = vmatprep.subr.mxu0 0.0
    %7249 = vmatpush1.msra.mxu0 0.0
    %7250 = vmatprep.subr.mxu0 0.0
    %7251 = vmatpush1.msra.mxu0 0.0
    %7252 = vmatprep.subr.mxu0 0.0
    %7253 = vmatpush1.msra.mxu0 0.0
    %7254 = vmatprep.subr.mxu0 0.0
    %7255 = vmatpush1.msra.mxu0 0.0
    %7256 = vmatprep.subr.mxu0 0.0
    %7257 = vmatpush1.msra.mxu0 0.0
    %7258 = vmatprep.subr.mxu0 0.0
    %7259 = vmatpush1.msra.mxu0 0.0
    %7260 = vmatprep.subr.mxu0 0.0
    %7261 = vmatpush1.msra.mxu0 0.0
    %7262 = vmatprep.subr.mxu0 0.0
    %7263 = vmatpush1.msra.mxu0 0.0
    %7264 = vmatprep.subr.mxu0 0.0
    %7265 = vmatpush1.msra.mxu0 0.0
    %7266 = vmatprep.subr.mxu0 0.0
    %7267 = vmatpush1.msra.mxu0 0.0
    %7268 = vmatprep.subr.mxu0 0.0
    %7269 = vmatpush1.msra.mxu0 0.0
    %7270 = vmatprep.subr.mxu0 0.0
    %7271 = vmatpush1.msra.mxu0 0.0
    %7272 = vmatprep.subr.mxu0 0.0
    %7273 = vmatpush1.msra.mxu0 0.0
    %7274 = vmatprep.subr.mxu0 0.0
    %7275 = vmatpush1.msra.mxu0 0.0
    %7276 = vmatprep.subr.mxu0 0.0
    %7277 = vmatpush1.msra.mxu0 0.0
    %7278 = vmatprep.subr.mxu0 0.0
    %7279 = vmatpush1.msra.mxu0 0.0
    %7280 = vmatprep.subr.mxu0 0.0
    %7281 = vmatpush1.msra.mxu0 0.0
    %7282 = vmatprep.subr.mxu0 0.0
    %7283 = vmatpush1.msra.mxu0 0.0
    %7284 = vmatprep.subr.mxu0 0.0
    %7285 = vmatpush1.msra.mxu0 0.0
    %7286 = vmatprep.subr.mxu0 0.0
    %7287 = vmatpush1.msra.mxu0 0.0
    %7288 = vmatprep.subr.mxu0 0.0
    %7289 = vmatpush1.msra.mxu0 0.0
    %7290 = vmatprep.subr.mxu0 0.0
    %7291 = vmatpush1.msra.mxu0 0.0
    %7292 = vmatprep.subr.mxu0 0.0
    %7293 = vmatpush1.msra.mxu0 0.0
    %7294 = vmatprep.subr.mxu0 0.0
    %7295 = vmatpush1.msra.mxu0 0.0
    %7296 = vmatprep.mubr.f32.mxu0 0.0
    %7297 = vmatmul.mubr.f32.gmra.mrb[0].mxu0 %v7070
    %v7298 = vpop.f32.mrb[0].mxu0
    %v7299 = vadd.f32 %v4634, %v7298
    %v7300 = vpop.f32.mrb[0].mxu0
    %7301 = vdwg.mxu0
    %v7303 = vrot.slane %v7299, 4
    %v7305 = vmul.f32 %v7151, %v7303
    %v7306 = vadd.f32 %v4606, %v7305
    %v7307 = vtanh.pop %v7306
    %v7308 = vsub.f32 1.0, %v7231
    %v7309 = vmul.f32 %v7308, %v7307
    %v7310 = vrot.slane %v7066, 6
    %v7312 = vmul.f32 %v7231, %v7310
    %v7313 = vadd.f32 %v7309, %v7312
    %7314 = vst.msk [vmem:[#allocation2 + $0x10] sm:$0x30] %vm1125, %v7313
    %v7316 = vrot.slane %v7313, 4
    %v7317 = vsel %vm395, %v7316, 0
    %7319 = vmatprep.subr.mxu0 0.0
    %7320 = vmatpush1.msra.mxu0 %v4614
    %7321 = vmatprep.subr.mxu0 0.0
    %7322 = vmatpush1.msra.mxu0 %v4615
    %7323 = vmatprep.subr.mxu0 0.0
    %7324 = vmatpush1.msra.mxu0 %v4616
    %7325 = vmatprep.subr.mxu0 0.0
    %7326 = vmatpush1.msra.mxu0 %v4617
    %7327 = vmatprep.subr.mxu0 0.0
    %7328 = vmatpush1.msra.mxu0 0.0
    %7329 = vmatprep.subr.mxu0 0.0
    %7330 = vmatpush1.msra.mxu0 0.0
    %7331 = vmatprep.subr.mxu0 0.0
    %7332 = vmatpush1.msra.mxu0 0.0
    %7333 = vmatprep.subr.mxu0 0.0
    %7334 = vmatpush1.msra.mxu0 0.0
    %7335 = vmatprep.subr.mxu0 0.0
    %7336 = vmatpush1.msra.mxu0 0.0
    %7337 = vmatprep.subr.mxu0 0.0
    %7338 = vmatpush1.msra.mxu0 0.0
    %7339 = vmatprep.subr.mxu0 0.0
    %7340 = vmatpush1.msra.mxu0 0.0
    %7341 = vmatprep.subr.mxu0 0.0
    %7342 = vmatpush1.msra.mxu0 0.0
    %7343 = vmatprep.subr.mxu0 0.0
    %7344 = vmatpush1.msra.mxu0 0.0
    %7345 = vmatprep.subr.mxu0 0.0
    %7346 = vmatpush1.msra.mxu0 0.0
    %7347 = vmatprep.subr.mxu0 0.0
    %7348 = vmatpush1.msra.mxu0 0.0
    %7349 = vmatprep.subr.mxu0 0.0
    %7350 = vmatpush1.msra.mxu0 0.0
    %7351 = vmatprep.subr.mxu0 0.0
    %7352 = vmatpush1.msra.mxu0 0.0
    %7353 = vmatprep.subr.mxu0 0.0
    %7354 = vmatpush1.msra.mxu0 0.0
    %7355 = vmatprep.subr.mxu0 0.0
    %7356 = vmatpush1.msra.mxu0 0.0
    %7357 = vmatprep.subr.mxu0 0.0
    %7358 = vmatpush1.msra.mxu0 0.0
    %7359 = vmatprep.subr.mxu0 0.0
    %7360 = vmatpush1.msra.mxu0 0.0
    %7361 = vmatprep.subr.mxu0 0.0
    %7362 = vmatpush1.msra.mxu0 0.0
    %7363 = vmatprep.subr.mxu0 0.0
    %7364 = vmatpush1.msra.mxu0 0.0
    %7365 = vmatprep.subr.mxu0 0.0
    %7366 = vmatpush1.msra.mxu0 0.0
    %7367 = vmatprep.subr.mxu0 0.0
    %7368 = vmatpush1.msra.mxu0 0.0
    %7369 = vmatprep.subr.mxu0 0.0
    %7370 = vmatpush1.msra.mxu0 0.0
    %7371 = vmatprep.subr.mxu0 0.0
    %7372 = vmatpush1.msra.mxu0 0.0
    %7373 = vmatprep.subr.mxu0 0.0
    %7374 = vmatpush1.msra.mxu0 0.0
    %7375 = vmatprep.subr.mxu0 0.0
    %7376 = vmatpush1.msra.mxu0 0.0
    %7377 = vmatprep.subr.mxu0 0.0
    %7378 = vmatpush1.msra.mxu0 0.0
    %7379 = vmatprep.subr.mxu0 0.0
    %7380 = vmatpush1.msra.mxu0 0.0
    %7381 = vmatprep.subr.mxu0 0.0
    %7382 = vmatpush1.msra.mxu0 0.0
    %7383 = vmatprep.mubr.f32.mxu0 0.0
    %7384 = vmatmul.mubr.f32.gmra.mrb[0].mxu0 %v7317
    %v7385 = vpop.f32.mrb[0].mxu0
    %v7386 = vadd.f32 0.0, %v7385
    %v7387 = vpop.f32.mrb[0].mxu0
    %7388 = vdwg.mxu0
    %v7390 = vrot.slane %v7386, 2
    %v7392 = vadd.f32 %v4410, %v7390
    %v7393 = vxor.u32 %v7392, 2147483648
    %v7394 = vmul.f32 %v7393, 1.442695
    %v7395 = vpow.pop %v7394
    %v7396 = vadd.f32 %v7395, 1.0
    %v7397 = vrcp.pop %v7396
    %v7398 = vmul.f32 1.0, %v7397
    %7399 = vmatprep.subr.mxu0 0.0
    %7400 = vmatpush1.msra.mxu0 %v4619
    %7401 = vmatprep.subr.mxu0 0.0
    %7402 = vmatpush1.msra.mxu0 %v4620
    %7403 = vmatprep.subr.mxu0 0.0
    %7404 = vmatpush1.msra.mxu0 %v4621
    %7405 = vmatprep.subr.mxu0 0.0
    %7406 = vmatpush1.msra.mxu0 %v4622
    %7407 = vmatprep.subr.mxu0 0.0
    %7408 = vmatpush1.msra.mxu0 0.0
    %7409 = vmatprep.subr.mxu0 0.0
    %7410 = vmatpush1.msra.mxu0 0.0
    %7411 = vmatprep.subr.mxu0 0.0
    %7412 = vmatpush1.msra.mxu0 0.0
    %7413 = vmatprep.subr.mxu0 0.0
    %7414 = vmatpush1.msra.mxu0 0.0
    %7415 = vmatprep.subr.mxu0 0.0
    %7416 = vmatpush1.msra.mxu0 0.0
    %7417 = vmatprep.subr.mxu0 0.0
    %7418 = vmatpush1.msra.mxu0 0.0
    %7419 = vmatprep.subr.mxu0 0.0
    %7420 = vmatpush1.msra.mxu0 0.0
    %7421 = vmatprep.subr.mxu0 0.0
    %7422 = vmatpush1.msra.mxu0 0.0
    %7423 = vmatprep.subr.mxu0 0.0
    %7424 = vmatpush1.msra.mxu0 0.0
    %7425 = vmatprep.subr.mxu0 0.0
    %7426 = vmatpush1.msra.mxu0 0.0
    %7427 = vmatprep.subr.mxu0 0.0
    %7428 = vmatpush1.msra.mxu0 0.0
    %7429 = vmatprep.subr.mxu0 0.0
    %7430 = vmatpush1.msra.mxu0 0.0
    %7431 = vmatprep.subr.mxu0 0.0
    %7432 = vmatpush1.msra.mxu0 0.0
    %7433 = vmatprep.subr.mxu0 0.0
    %7434 = vmatpush1.msra.mxu0 0.0
    %7435 = vmatprep.subr.mxu0 0.0
    %7436 = vmatpush1.msra.mxu0 0.0
    %7437 = vmatprep.subr.mxu0 0.0
    %7438 = vmatpush1.msra.mxu0 0.0
    %7439 = vmatprep.subr.mxu0 0.0
    %7440 = vmatpush1.msra.mxu0 0.0
    %7441 = vmatprep.subr.mxu0 0.0
    %7442 = vmatpush1.msra.mxu0 0.0
    %7443 = vmatprep.subr.mxu0 0.0
    %7444 = vmatpush1.msra.mxu0 0.0
    %7445 = vmatprep.subr.mxu0 0.0
    %7446 = vmatpush1.msra.mxu0 0.0
    %7447 = vmatprep.subr.mxu0 0.0
    %7448 = vmatpush1.msra.mxu0 0.0
    %7449 = vmatprep.subr.mxu0 0.0
    %7450 = vmatpush1.msra.mxu0 0.0
    %7451 = vmatprep.subr.mxu0 0.0
    %7452 = vmatpush1.msra.mxu0 0.0
    %7453 = vmatprep.subr.mxu0 0.0
    %7454 = vmatpush1.msra.mxu0 0.0
    %7455 = vmatprep.subr.mxu0 0.0
    %7456 = vmatpush1.msra.mxu0 0.0
    %7457 = vmatprep.subr.mxu0 0.0
    %7458 = vmatpush1.msra.mxu0 0.0
    %7459 = vmatprep.subr.mxu0 0.0
    %7460 = vmatpush1.msra.mxu0 0.0
    %7461 = vmatprep.subr.mxu0 0.0
    %7462 = vmatpush1.msra.mxu0 0.0
    %7463 = vmatprep.mubr.f32.mxu0 0.0
    %7464 = vmatmul.mubr.f32.gmra.mrb[0].mxu0 %v7317
    %v7465 = vpop.f32.mrb[0].mxu0
    %v7466 = vadd.f32 0.0, %v7465
    %v7467 = vpop.f32.mrb[0].mxu0
    %7468 = vdwg.mxu0
    %v7470 = vrot.slane %v7466, 2
    %v7472 = vadd.f32 %v4508, %v7470
    %v7473 = vxor.u32 %v7472, 2147483648
    %v7474 = vmul.f32 %v7473, 1.442695
    %v7475 = vpow.pop %v7474
    %v7476 = vadd.f32 %v7475, 1.0
    %v7477 = vrcp.pop %v7476
    %v7478 = vmul.f32 1.0, %v7477
    %7479 = vmatprep.subr.mxu0 0.0
    %7480 = vmatpush1.msra.mxu0 %v4624
    %7481 = vmatprep.subr.mxu0 0.0
    %7482 = vmatpush1.msra.mxu0 %v4625
    %7483 = vmatprep.subr.mxu0 0.0
    %7484 = vmatpush1.msra.mxu0 %v4626
    %7485 = vmatprep.subr.mxu0 0.0
    %7486 = vmatpush1.msra.mxu0 %v4627
    %7487 = vmatprep.subr.mxu0 0.0
    %7488 = vmatpush1.msra.mxu0 0.0
    %7489 = vmatprep.subr.mxu0 0.0
    %7490 = vmatpush1.msra.mxu0 0.0
    %7491 = vmatprep.subr.mxu0 0.0
    %7492 = vmatpush1.msra.mxu0 0.0
    %7493 = vmatprep.subr.mxu0 0.0
    %7494 = vmatpush1.msra.mxu0 0.0
    %7495 = vmatprep.subr.mxu0 0.0
    %7496 = vmatpush1.msra.mxu0 0.0
    %7497 = vmatprep.subr.mxu0 0.0
    %7498 = vmatpush1.msra.mxu0 0.0
    %7499 = vmatprep.subr.mxu0 0.0
    %7500 = vmatpush1.msra.mxu0 0.0
    %7501 = vmatprep.subr.mxu0 0.0
    %7502 = vmatpush1.msra.mxu0 0.0
    %7503 = vmatprep.subr.mxu0 0.0
    %7504 = vmatpush1.msra.mxu0 0.0
    %7505 = vmatprep.subr.mxu0 0.0
    %7506 = vmatpush1.msra.mxu0 0.0
    %7507 = vmatprep.subr.mxu0 0.0
    %7508 = vmatpush1.msra.mxu0 0.0
    %7509 = vmatprep.subr.mxu0 0.0
    %7510 = vmatpush1.msra.mxu0 0.0
    %7511 = vmatprep.subr.mxu0 0.0
    %7512 = vmatpush1.msra.mxu0 0.0
    %7513 = vmatprep.subr.mxu0 0.0
    %7514 = vmatpush1.msra.mxu0 0.0
    %7515 = vmatprep.subr.mxu0 0.0
    %7516 = vmatpush1.msra.mxu0 0.0
    %7517 = vmatprep.subr.mxu0 0.0
    %7518 = vmatpush1.msra.mxu0 0.0
    %7519 = vmatprep.subr.mxu0 0.0
    %7520 = vmatpush1.msra.mxu0 0.0
    %7521 = vmatprep.subr.mxu0 0.0
    %7522 = vmatpush1.msra.mxu0 0.0
    %7523 = vmatprep.subr.mxu0 0.0
    %7524 = vmatpush1.msra.mxu0 0.0
    %7525 = vmatprep.subr.mxu0 0.0
    %7526 = vmatpush1.msra.mxu0 0.0
    %7527 = vmatprep.subr.mxu0 0.0
    %7528 = vmatpush1.msra.mxu0 0.0
    %7529 = vmatprep.subr.mxu0 0.0
    %7530 = vmatpush1.msra.mxu0 0.0
    %7531 = vmatprep.subr.mxu0 0.0
    %7532 = vmatpush1.msra.mxu0 0.0
    %7533 = vmatprep.subr.mxu0 0.0
    %7534 = vmatpush1.msra.mxu0 0.0
    %7535 = vmatprep.subr.mxu0 0.0
    %7536 = vmatpush1.msra.mxu0 0.0
    %7537 = vmatprep.subr.mxu0 0.0
    %7538 = vmatpush1.msra.mxu0 0.0
    %7539 = vmatprep.subr.mxu0 0.0
    %7540 = vmatpush1.msra.mxu0 0.0
    %7541 = vmatprep.subr.mxu0 0.0
    %7542 = vmatpush1.msra.mxu0 0.0
    %7543 = vmatprep.mubr.f32.mxu0 0.0
    %7544 = vmatmul.mubr.f32.gmra.mrb[0].mxu0 %v7317
    %v7545 = vpop.f32.mrb[0].mxu0
    %v7546 = vadd.f32 %v4634, %v7545
    %v7547 = vpop.f32.mrb[0].mxu0
    %7548 = vdwg.mxu0
    %v7550 = vrot.slane %v7546, 2
    %v7552 = vmul.f32 %v7398, %v7550
    %v7553 = vadd.f32 %v4606, %v7552
    %v7554 = vtanh.pop %v7553
    %v7555 = vsub.f32 1.0, %v7478
    %v7556 = vmul.f32 %v7555, %v7554
    %v7557 = vrot.slane %v7313, 6
    %v7559 = vmul.f32 %v7478, %v7557
    %v7560 = vadd.f32 %v7556, %v7559
    %7561 = vst.msk [vmem:[#allocation2 + $0x10] sm:$0xc0] %vm1373, %v7560
    %v7563 = vrot.slane %v7560, 6
    %v7564 = vsel %vm395, %v7563, 0
    %7566 = vmatprep.subr.mxu0 0.0
    %7567 = vmatpush1.msra.mxu0 %v4614
    %7568 = vmatprep.subr.mxu0 0.0
    %7569 = vmatpush1.msra.mxu0 %v4615
    %7570 = vmatprep.subr.mxu0 0.0
    %7571 = vmatpush1.msra.mxu0 %v4616
    %7572 = vmatprep.subr.mxu0 0.0
    %7573 = vmatpush1.msra.mxu0 %v4617
    %7574 = vmatprep.subr.mxu0 0.0
    %7575 = vmatpush1.msra.mxu0 0.0
    %7576 = vmatprep.subr.mxu0 0.0
    %7577 = vmatpush1.msra.mxu0 0.0
    %7578 = vmatprep.subr.mxu0 0.0
    %7579 = vmatpush1.msra.mxu0 0.0
    %7580 = vmatprep.subr.mxu0 0.0
    %7581 = vmatpush1.msra.mxu0 0.0
    %7582 = vmatprep.subr.mxu0 0.0
    %7583 = vmatpush1.msra.mxu0 0.0
    %7584 = vmatprep.subr.mxu0 0.0
    %7585 = vmatpush1.msra.mxu0 0.0
    %7586 = vmatprep.subr.mxu0 0.0
    %7587 = vmatpush1.msra.mxu0 0.0
    %7588 = vmatprep.subr.mxu0 0.0
    %7589 = vmatpush1.msra.mxu0 0.0
    %7590 = vmatprep.subr.mxu0 0.0
    %7591 = vmatpush1.msra.mxu0 0.0
    %7592 = vmatprep.subr.mxu0 0.0
    %7593 = vmatpush1.msra.mxu0 0.0
    %7594 = vmatprep.subr.mxu0 0.0
    %7595 = vmatpush1.msra.mxu0 0.0
    %7596 = vmatprep.subr.mxu0 0.0
    %7597 = vmatpush1.msra.mxu0 0.0
    %7598 = vmatprep.subr.mxu0 0.0
    %7599 = vmatpush1.msra.mxu0 0.0
    %7600 = vmatprep.subr.mxu0 0.0
    %7601 = vmatpush1.msra.mxu0 0.0
    %7602 = vmatprep.subr.mxu0 0.0
    %7603 = vmatpush1.msra.mxu0 0.0
    %7604 = vmatprep.subr.mxu0 0.0
    %7605 = vmatpush1.msra.mxu0 0.0
    %7606 = vmatprep.subr.mxu0 0.0
    %7607 = vmatpush1.msra.mxu0 0.0
    %7608 = vmatprep.subr.mxu0 0.0
    %7609 = vmatpush1.msra.mxu0 0.0
    %7610 = vmatprep.subr.mxu0 0.0
    %7611 = vmatpush1.msra.mxu0 0.0
    %7612 = vmatprep.subr.mxu0 0.0
    %7613 = vmatpush1.msra.mxu0 0.0
    %7614 = vmatprep.subr.mxu0 0.0
    %7615 = vmatpush1.msra.mxu0 0.0
    %7616 = vmatprep.subr.mxu0 0.0
    %7617 = vmatpush1.msra.mxu0 0.0
    %7618 = vmatprep.subr.mxu0 0.0
    %7619 = vmatpush1.msra.mxu0 0.0
    %7620 = vmatprep.subr.mxu0 0.0
    %7621 = vmatpush1.msra.mxu0 0.0
    %7622 = vmatprep.subr.mxu0 0.0
    %7623 = vmatpush1.msra.mxu0 0.0
    %7624 = vmatprep.subr.mxu0 0.0
    %7625 = vmatpush1.msra.mxu0 0.0
    %7626 = vmatprep.subr.mxu0 0.0
    %7627 = vmatpush1.msra.mxu0 0.0
    %7628 = vmatprep.subr.mxu0 0.0
    %7629 = vmatpush1.msra.mxu0 0.0
    %7630 = vmatprep.mubr.f32.mxu0 0.0
    %7631 = vmatmul.mubr.f32.gmra.mrb[0].mxu0 %v7564
    %v7632 = vpop.f32.mrb[0].mxu0
    %v7633 = vadd.f32 0.0, %v7632
    %v7634 = vpop.f32.mrb[0].mxu0
    %7635 = vdwg.mxu0
    %v7636 = vadd.f32 %v4415, %v7633
    %v7637 = vxor.u32 %v7636, 2147483648
    %v7638 = vmul.f32 %v7637, 1.442695
    %v7639 = vpow.pop %v7638
    %v7640 = vadd.f32 %v7639, 1.0
    %v7641 = vrcp.pop %v7640
    %v7642 = vmul.f32 1.0, %v7641
    %7643 = vmatprep.subr.mxu0 0.0
    %7644 = vmatpush1.msra.mxu0 %v4619
    %7645 = vmatprep.subr.mxu0 0.0
    %7646 = vmatpush1.msra.mxu0 %v4620
    %7647 = vmatprep.subr.mxu0 0.0
    %7648 = vmatpush1.msra.mxu0 %v4621
    %7649 = vmatprep.subr.mxu0 0.0
    %7650 = vmatpush1.msra.mxu0 %v4622
    %7651 = vmatprep.subr.mxu0 0.0
    %7652 = vmatpush1.msra.mxu0 0.0
    %7653 = vmatprep.subr.mxu0 0.0
    %7654 = vmatpush1.msra.mxu0 0.0
    %7655 = vmatprep.subr.mxu0 0.0
    %7656 = vmatpush1.msra.mxu0 0.0
    %7657 = vmatprep.subr.mxu0 0.0
    %7658 = vmatpush1.msra.mxu0 0.0
    %7659 = vmatprep.subr.mxu0 0.0
    %7660 = vmatpush1.msra.mxu0 0.0
    %7661 = vmatprep.subr.mxu0 0.0
    %7662 = vmatpush1.msra.mxu0 0.0
    %7663 = vmatprep.subr.mxu0 0.0
    %7664 = vmatpush1.msra.mxu0 0.0
    %7665 = vmatprep.subr.mxu0 0.0
    %7666 = vmatpush1.msra.mxu0 0.0
    %7667 = vmatprep.subr.mxu0 0.0
    %7668 = vmatpush1.msra.mxu0 0.0
    %7669 = vmatprep.subr.mxu0 0.0
    %7670 = vmatpush1.msra.mxu0 0.0
    %7671 = vmatprep.subr.mxu0 0.0
    %7672 = vmatpush1.msra.mxu0 0.0
    %7673 = vmatprep.subr.mxu0 0.0
    %7674 = vmatpush1.msra.mxu0 0.0
    %7675 = vmatprep.subr.mxu0 0.0
    %7676 = vmatpush1.msra.mxu0 0.0
    %7677 = vmatprep.subr.mxu0 0.0
    %7678 = vmatpush1.msra.mxu0 0.0
    %7679 = vmatprep.subr.mxu0 0.0
    %7680 = vmatpush1.msra.mxu0 0.0
    %7681 = vmatprep.subr.mxu0 0.0
    %7682 = vmatpush1.msra.mxu0 0.0
    %7683 = vmatprep.subr.mxu0 0.0
    %7684 = vmatpush1.msra.mxu0 0.0
    %7685 = vmatprep.subr.mxu0 0.0
    %7686 = vmatpush1.msra.mxu0 0.0
    %7687 = vmatprep.subr.mxu0 0.0
    %7688 = vmatpush1.msra.mxu0 0.0
    %7689 = vmatprep.subr.mxu0 0.0
    %7690 = vmatpush1.msra.mxu0 0.0
    %7691 = vmatprep.subr.mxu0 0.0
    %7692 = vmatpush1.msra.mxu0 0.0
    %7693 = vmatprep.subr.mxu0 0.0
    %7694 = vmatpush1.msra.mxu0 0.0
    %7695 = vmatprep.subr.mxu0 0.0
    %7696 = vmatpush1.msra.mxu0 0.0
    %7697 = vmatprep.subr.mxu0 0.0
    %7698 = vmatpush1.msra.mxu0 0.0
    %7699 = vmatprep.subr.mxu0 0.0
    %7700 = vmatpush1.msra.mxu0 0.0
    %7701 = vmatprep.subr.mxu0 0.0
    %7702 = vmatpush1.msra.mxu0 0.0
    %7703 = vmatprep.subr.mxu0 0.0
    %7704 = vmatpush1.msra.mxu0 0.0
    %7705 = vmatprep.subr.mxu0 0.0
    %7706 = vmatpush1.msra.mxu0 0.0
    %7707 = vmatprep.mubr.f32.mxu0 0.0
    %7708 = vmatmul.mubr.f32.gmra.mrb[0].mxu0 %v7564
    %v7709 = vpop.f32.mrb[0].mxu0
    %v7710 = vadd.f32 0.0, %v7709
    %v7711 = vpop.f32.mrb[0].mxu0
    %7712 = vdwg.mxu0
    %v7713 = vadd.f32 %v4513, %v7710
    %v7714 = vxor.u32 %v7713, 2147483648
    %v7715 = vmul.f32 %v7714, 1.442695
    %v7716 = vpow.pop %v7715
    %v7717 = vadd.f32 %v7716, 1.0
    %v7718 = vrcp.pop %v7717
    %v7719 = vmul.f32 1.0, %v7718
    %7720 = vmatprep.subr.mxu0 0.0
    %7721 = vmatpush1.msra.mxu0 %v4624
    %7722 = vmatprep.subr.mxu0 0.0
    %7723 = vmatpush1.msra.mxu0 %v4625
    %7724 = vmatprep.subr.mxu0 0.0
    %7725 = vmatpush1.msra.mxu0 %v4626
    %7726 = vmatprep.subr.mxu0 0.0
    %7727 = vmatpush1.msra.mxu0 %v4627
    %7728 = vmatprep.subr.mxu0 0.0
    %7729 = vmatpush1.msra.mxu0 0.0
    %7730 = vmatprep.subr.mxu0 0.0
    %7731 = vmatpush1.msra.mxu0 0.0
    %7732 = vmatprep.subr.mxu0 0.0
    %7733 = vmatpush1.msra.mxu0 0.0
    %7734 = vmatprep.subr.mxu0 0.0
    %7735 = vmatpush1.msra.mxu0 0.0
    %7736 = vmatprep.subr.mxu0 0.0
    %7737 = vmatpush1.msra.mxu0 0.0
    %7738 = vmatprep.subr.mxu0 0.0
    %7739 = vmatpush1.msra.mxu0 0.0
    %7740 = vmatprep.subr.mxu0 0.0
    %7741 = vmatpush1.msra.mxu0 0.0
    %7742 = vmatprep.subr.mxu0 0.0
    %7743 = vmatpush1.msra.mxu0 0.0
    %7744 = vmatprep.subr.mxu0 0.0
    %7745 = vmatpush1.msra.mxu0 0.0
    %7746 = vmatprep.subr.mxu0 0.0
    %7747 = vmatpush1.msra.mxu0 0.0
    %7748 = vmatprep.subr.mxu0 0.0
    %7749 = vmatpush1.msra.mxu0 0.0
    %7750 = vmatprep.subr.mxu0 0.0
    %7751 = vmatpush1.msra.mxu0 0.0
    %7752 = vmatprep.subr.mxu0 0.0
    %7753 = vmatpush1.msra.mxu0 0.0
    %7754 = vmatprep.subr.mxu0 0.0
    %7755 = vmatpush1.msra.mxu0 0.0
    %7756 = vmatprep.subr.mxu0 0.0
    %7757 = vmatpush1.msra.mxu0 0.0
    %7758 = vmatprep.subr.mxu0 0.0
    %7759 = vmatpush1.msra.mxu0 0.0
    %7760 = vmatprep.subr.mxu0 0.0
    %7761 = vmatpush1.msra.mxu0 0.0
    %7762 = vmatprep.subr.mxu0 0.0
    %7763 = vmatpush1.msra.mxu0 0.0
    %7764 = vmatprep.subr.mxu0 0.0
    %7765 = vmatpush1.msra.mxu0 0.0
    %7766 = vmatprep.subr.mxu0 0.0
    %7767 = vmatpush1.msra.mxu0 0.0
    %7768 = vmatprep.subr.mxu0 0.0
    %7769 = vmatpush1.msra.mxu0 0.0
    %7770 = vmatprep.subr.mxu0 0.0
    %7771 = vmatpush1.msra.mxu0 0.0
    %7772 = vmatprep.subr.mxu0 0.0
    %7773 = vmatpush1.msra.mxu0 0.0
    %7774 = vmatprep.subr.mxu0 0.0
    %7775 = vmatpush1.msra.mxu0 0.0
    %7776 = vmatprep.subr.mxu0 0.0
    %7777 = vmatpush1.msra.mxu0 0.0
    %7778 = vmatprep.subr.mxu0 0.0
    %7779 = vmatpush1.msra.mxu0 0.0
    %7780 = vmatprep.subr.mxu0 0.0
    %7781 = vmatpush1.msra.mxu0 0.0
    %7782 = vmatprep.subr.mxu0 0.0
    %7783 = vmatpush1.msra.mxu0 0.0
    %7784 = vmatprep.mubr.f32.mxu0 0.0
    %7785 = vmatmul.mubr.f32.gmra.mrb[0].mxu0 %v7564
    %v7786 = vpop.f32.mrb[0].mxu0
    %v7787 = vadd.f32 %v4634, %v7786
    %v7788 = vpop.f32.mrb[0].mxu0
    %7789 = vdwg.mxu0
    %v7790 = vmul.f32 %v7642, %v7787
    %v7791 = vadd.f32 %v4611, %v7790
    %v7792 = vtanh.pop %v7791
    %v7793 = vsub.f32 1.0, %v7719
    %v7794 = vmul.f32 %v7793, %v7792
    %v7796 = vmul.f32 %v7719, %v7563
    %v7797 = vadd.f32 %v7794, %v7796
    %7798 = vst.msk [vmem:[#allocation2 + $0x18] sm:$0x3] %vm630, %v7797
    %v7800 = vsel %vm395, %v7797, 0
    %7802 = vmatprep.subr.mxu0 0.0
    %7803 = vmatpush1.msra.mxu0 %v4614
    %7804 = vmatprep.subr.mxu0 0.0
    %7805 = vmatpush1.msra.mxu0 %v4615
    %7806 = vmatprep.subr.mxu0 0.0
    %7807 = vmatpush1.msra.mxu0 %v4616
    %7808 = vmatprep.subr.mxu0 0.0
    %7809 = vmatpush1.msra.mxu0 %v4617
    %7810 = vmatprep.subr.mxu0 0.0
    %7811 = vmatpush1.msra.mxu0 0.0
    %7812 = vmatprep.subr.mxu0 0.0
    %7813 = vmatpush1.msra.mxu0 0.0
    %7814 = vmatprep.subr.mxu0 0.0
    %7815 = vmatpush1.msra.mxu0 0.0
    %7816 = vmatprep.subr.mxu0 0.0
    %7817 = vmatpush1.msra.mxu0 0.0
    %7818 = vmatprep.subr.mxu0 0.0
    %7819 = vmatpush1.msra.mxu0 0.0
    %7820 = vmatprep.subr.mxu0 0.0
    %7821 = vmatpush1.msra.mxu0 0.0
    %7822 = vmatprep.subr.mxu0 0.0
    %7823 = vmatpush1.msra.mxu0 0.0
    %7824 = vmatprep.subr.mxu0 0.0
    %7825 = vmatpush1.msra.mxu0 0.0
    %7826 = vmatprep.subr.mxu0 0.0
    %7827 = vmatpush1.msra.mxu0 0.0
    %7828 = vmatprep.subr.mxu0 0.0
    %7829 = vmatpush1.msra.mxu0 0.0
    %7830 = vmatprep.subr.mxu0 0.0
    %7831 = vmatpush1.msra.mxu0 0.0
    %7832 = vmatprep.subr.mxu0 0.0
    %7833 = vmatpush1.msra.mxu0 0.0
    %7834 = vmatprep.subr.mxu0 0.0
    %7835 = vmatpush1.msra.mxu0 0.0
    %7836 = vmatprep.subr.mxu0 0.0
    %7837 = vmatpush1.msra.mxu0 0.0
    %7838 = vmatprep.subr.mxu0 0.0
    %7839 = vmatpush1.msra.mxu0 0.0
    %7840 = vmatprep.subr.mxu0 0.0
    %7841 = vmatpush1.msra.mxu0 0.0
    %7842 = vmatprep.subr.mxu0 0.0
    %7843 = vmatpush1.msra.mxu0 0.0
    %7844 = vmatprep.subr.mxu0 0.0
    %7845 = vmatpush1.msra.mxu0 0.0
    %7846 = vmatprep.subr.mxu0 0.0
    %7847 = vmatpush1.msra.mxu0 0.0
    %7848 = vmatprep.subr.mxu0 0.0
    %7849 = vmatpush1.msra.mxu0 0.0
    %7850 = vmatprep.subr.mxu0 0.0
    %7851 = vmatpush1.msra.mxu0 0.0
    %7852 = vmatprep.subr.mxu0 0.0
    %7853 = vmatpush1.msra.mxu0 0.0
    %7854 = vmatprep.subr.mxu0 0.0
    %7855 = vmatpush1.msra.mxu0 0.0
    %7856 = vmatprep.subr.mxu0 0.0
    %7857 = vmatpush1.msra.mxu0 0.0
    %7858 = vmatprep.subr.mxu0 0.0
    %7859 = vmatpush1.msra.mxu0 0.0
    %7860 = vmatprep.subr.mxu0 0.0
    %7861 = vmatpush1.msra.mxu0 0.0
    %7862 = vmatprep.subr.mxu0 0.0
    %7863 = vmatpush1.msra.mxu0 0.0
    %7864 = vmatprep.subr.mxu0 0.0
    %7865 = vmatpush1.msra.mxu0 0.0
    %7866 = vmatprep.mubr.f32.mxu0 0.0
    %7867 = vmatmul.mubr.f32.gmra.mrb[0].mxu0 %v7800
    %v7868 = vpop.f32.mrb[0].mxu0
    %v7869 = vadd.f32 0.0, %v7868
    %v7870 = vpop.f32.mrb[0].mxu0
    %7871 = vdwg.mxu0
    %v7873 = vrot.slane %v7869, 6
    %v7875 = vadd.f32 %v4415, %v7873
    %v7876 = vxor.u32 %v7875, 2147483648
    %v7877 = vmul.f32 %v7876, 1.442695
    %v7878 = vpow.pop %v7877
    %v7879 = vadd.f32 %v7878, 1.0
    %v7880 = vrcp.pop %v7879
    %v7881 = vmul.f32 1.0, %v7880
    %7882 = vmatprep.subr.mxu0 0.0
    %7883 = vmatpush1.msra.mxu0 %v4619
    %7884 = vmatprep.subr.mxu0 0.0
    %7885 = vmatpush1.msra.mxu0 %v4620
    %7886 = vmatprep.subr.mxu0 0.0
    %7887 = vmatpush1.msra.mxu0 %v4621
    %7888 = vmatprep.subr.mxu0 0.0
    %7889 = vmatpush1.msra.mxu0 %v4622
    %7890 = vmatprep.subr.mxu0 0.0
    %7891 = vmatpush1.msra.mxu0 0.0
    %7892 = vmatprep.subr.mxu0 0.0
    %7893 = vmatpush1.msra.mxu0 0.0
    %7894 = vmatprep.subr.mxu0 0.0
    %7895 = vmatpush1.msra.mxu0 0.0
    %7896 = vmatprep.subr.mxu0 0.0
    %7897 = vmatpush1.msra.mxu0 0.0
    %7898 = vmatprep.subr.mxu0 0.0
    %7899 = vmatpush1.msra.mxu0 0.0
    %7900 = vmatprep.subr.mxu0 0.0
    %7901 = vmatpush1.msra.mxu0 0.0
    %7902 = vmatprep.subr.mxu0 0.0
    %7903 = vmatpush1.msra.mxu0 0.0
    %7904 = vmatprep.subr.mxu0 0.0
    %7905 = vmatpush1.msra.mxu0 0.0
    %7906 = vmatprep.subr.mxu0 0.0
    %7907 = vmatpush1.msra.mxu0 0.0
    %7908 = vmatprep.subr.mxu0 0.0
    %7909 = vmatpush1.msra.mxu0 0.0
    %7910 = vmatprep.subr.mxu0 0.0
    %7911 = vmatpush1.msra.mxu0 0.0
    %7912 = vmatprep.subr.mxu0 0.0
    %7913 = vmatpush1.msra.mxu0 0.0
    %7914 = vmatprep.subr.mxu0 0.0
    %7915 = vmatpush1.msra.mxu0 0.0
    %7916 = vmatprep.subr.mxu0 0.0
    %7917 = vmatpush1.msra.mxu0 0.0
    %7918 = vmatprep.subr.mxu0 0.0
    %7919 = vmatpush1.msra.mxu0 0.0
    %7920 = vmatprep.subr.mxu0 0.0
    %7921 = vmatpush1.msra.mxu0 0.0
    %7922 = vmatprep.subr.mxu0 0.0
    %7923 = vmatpush1.msra.mxu0 0.0
    %7924 = vmatprep.subr.mxu0 0.0
    %7925 = vmatpush1.msra.mxu0 0.0
    %7926 = vmatprep.subr.mxu0 0.0
    %7927 = vmatpush1.msra.mxu0 0.0
    %7928 = vmatprep.subr.mxu0 0.0
    %7929 = vmatpush1.msra.mxu0 0.0
    %7930 = vmatprep.subr.mxu0 0.0
    %7931 = vmatpush1.msra.mxu0 0.0
    %7932 = vmatprep.subr.mxu0 0.0
    %7933 = vmatpush1.msra.mxu0 0.0
    %7934 = vmatprep.subr.mxu0 0.0
    %7935 = vmatpush1.msra.mxu0 0.0
    %7936 = vmatprep.subr.mxu0 0.0
    %7937 = vmatpush1.msra.mxu0 0.0
    %7938 = vmatprep.subr.mxu0 0.0
    %7939 = vmatpush1.msra.mxu0 0.0
    %7940 = vmatprep.subr.mxu0 0.0
    %7941 = vmatpush1.msra.mxu0 0.0
    %7942 = vmatprep.subr.mxu0 0.0
    %7943 = vmatpush1.msra.mxu0 0.0
    %7944 = vmatprep.subr.mxu0 0.0
    %7945 = vmatpush1.msra.mxu0 0.0
    %7946 = vmatprep.mubr.f32.mxu0 0.0
    %7947 = vmatmul.mubr.f32.gmra.mrb[0].mxu0 %v7800
    %v7948 = vpop.f32.mrb[0].mxu0
    %v7949 = vadd.f32 0.0, %v7948
    %v7950 = vpop.f32.mrb[0].mxu0
    %7951 = vdwg.mxu0
    %v7953 = vrot.slane %v7949, 6
    %v7955 = vadd.f32 %v4513, %v7953
    %v7956 = vxor.u32 %v7955, 2147483648
    %v7957 = vmul.f32 %v7956, 1.442695
    %v7958 = vpow.pop %v7957
    %v7959 = vadd.f32 %v7958, 1.0
    %v7960 = vrcp.pop %v7959
    %v7961 = vmul.f32 1.0, %v7960
    %7962 = vmatprep.subr.mxu0 0.0
    %7963 = vmatpush1.msra.mxu0 %v4624
    %7964 = vmatprep.subr.mxu0 0.0
    %7965 = vmatpush1.msra.mxu0 %v4625
    %7966 = vmatprep.subr.mxu0 0.0
    %7967 = vmatpush1.msra.mxu0 %v4626
    %7968 = vmatprep.subr.mxu0 0.0
    %7969 = vmatpush1.msra.mxu0 %v4627
    %7970 = vmatprep.subr.mxu0 0.0
    %7971 = vmatpush1.msra.mxu0 0.0
    %7972 = vmatprep.subr.mxu0 0.0
    %7973 = vmatpush1.msra.mxu0 0.0
    %7974 = vmatprep.subr.mxu0 0.0
    %7975 = vmatpush1.msra.mxu0 0.0
    %7976 = vmatprep.subr.mxu0 0.0
    %7977 = vmatpush1.msra.mxu0 0.0
    %7978 = vmatprep.subr.mxu0 0.0
    %7979 = vmatpush1.msra.mxu0 0.0
    %7980 = vmatprep.subr.mxu0 0.0
    %7981 = vmatpush1.msra.mxu0 0.0
    %7982 = vmatprep.subr.mxu0 0.0
    %7983 = vmatpush1.msra.mxu0 0.0
    %7984 = vmatprep.subr.mxu0 0.0
    %7985 = vmatpush1.msra.mxu0 0.0
    %7986 = vmatprep.subr.mxu0 0.0
    %7987 = vmatpush1.msra.mxu0 0.0
    %7988 = vmatprep.subr.mxu0 0.0
    %7989 = vmatpush1.msra.mxu0 0.0
    %7990 = vmatprep.subr.mxu0 0.0
    %7991 = vmatpush1.msra.mxu0 0.0
    %7992 = vmatprep.subr.mxu0 0.0
    %7993 = vmatpush1.msra.mxu0 0.0
    %7994 = vmatprep.subr.mxu0 0.0
    %7995 = vmatpush1.msra.mxu0 0.0
    %7996 = vmatprep.subr.mxu0 0.0
    %7997 = vmatpush1.msra.mxu0 0.0
    %7998 = vmatprep.subr.mxu0 0.0
    %7999 = vmatpush1.msra.mxu0 0.0
    %8000 = vmatprep.subr.mxu0 0.0
    %8001 = vmatpush1.msra.mxu0 0.0
    %8002 = vmatprep.subr.mxu0 0.0
    %8003 = vmatpush1.msra.mxu0 0.0
    %8004 = vmatprep.subr.mxu0 0.0
    %8005 = vmatpush1.msra.mxu0 0.0
    %8006 = vmatprep.subr.mxu0 0.0
    %8007 = vmatpush1.msra.mxu0 0.0
    %8008 = vmatprep.subr.mxu0 0.0
    %8009 = vmatpush1.msra.mxu0 0.0
    %8010 = vmatprep.subr.mxu0 0.0
    %8011 = vmatpush1.msra.mxu0 0.0
    %8012 = vmatprep.subr.mxu0 0.0
    %8013 = vmatpush1.msra.mxu0 0.0
    %8014 = vmatprep.subr.mxu0 0.0
    %8015 = vmatpush1.msra.mxu0 0.0
    %8016 = vmatprep.subr.mxu0 0.0
    %8017 = vmatpush1.msra.mxu0 0.0
    %8018 = vmatprep.subr.mxu0 0.0
    %8019 = vmatpush1.msra.mxu0 0.0
    %8020 = vmatprep.subr.mxu0 0.0
    %8021 = vmatpush1.msra.mxu0 0.0
    %8022 = vmatprep.subr.mxu0 0.0
    %8023 = vmatpush1.msra.mxu0 0.0
    %8024 = vmatprep.subr.mxu0 0.0
    %8025 = vmatpush1.msra.mxu0 0.0
    %8026 = vmatprep.mubr.f32.mxu0 0.0
    %8027 = vmatmul.mubr.f32.gmra.mrb[0].mxu0 %v7800
    %v8028 = vpop.f32.mrb[0].mxu0
    %v8029 = vadd.f32 %v4634, %v8028
    %v8030 = vpop.f32.mrb[0].mxu0
    %8031 = vdwg.mxu0
    %v8033 = vrot.slane %v8029, 6
    %v8035 = vmul.f32 %v7881, %v8033
    %v8036 = vadd.f32 %v4611, %v8035
    %v8037 = vtanh.pop %v8036
    %v8038 = vsub.f32 1.0, %v7961
    %v8039 = vmul.f32 %v8038, %v8037
    %v8040 = vrot.slane %v7797, 6
    %v8042 = vmul.f32 %v7961, %v8040
    %v8043 = vadd.f32 %v8039, %v8042
    %8044 = vst.msk [vmem:[#allocation2 + $0x18] sm:$0xc] %vm877, %v8043
    %v8046 = vrot.slane %v8043, 2
    %v8047 = vsel %vm395, %v8046, 0
    %8049 = vmatprep.subr.mxu0 0.0
    %8050 = vmatpush1.msra.mxu0 %v4614
    %8051 = vmatprep.subr.mxu0 0.0
    %8052 = vmatpush1.msra.mxu0 %v4615
    %8053 = vmatprep.subr.mxu0 0.0
    %8054 = vmatpush1.msra.mxu0 %v4616
    %8055 = vmatprep.subr.mxu0 0.0
    %8056 = vmatpush1.msra.mxu0 %v4617
    %8057 = vmatprep.subr.mxu0 0.0
    %8058 = vmatpush1.msra.mxu0 0.0
    %8059 = vmatprep.subr.mxu0 0.0
    %8060 = vmatpush1.msra.mxu0 0.0
    %8061 = vmatprep.subr.mxu0 0.0
    %8062 = vmatpush1.msra.mxu0 0.0
    %8063 = vmatprep.subr.mxu0 0.0
    %8064 = vmatpush1.msra.mxu0 0.0
    %8065 = vmatprep.subr.mxu0 0.0
    %8066 = vmatpush1.msra.mxu0 0.0
    %8067 = vmatprep.subr.mxu0 0.0
    %8068 = vmatpush1.msra.mxu0 0.0
    %8069 = vmatprep.subr.mxu0 0.0
    %8070 = vmatpush1.msra.mxu0 0.0
    %8071 = vmatprep.subr.mxu0 0.0
    %8072 = vmatpush1.msra.mxu0 0.0
    %8073 = vmatprep.subr.mxu0 0.0
    %8074 = vmatpush1.msra.mxu0 0.0
    %8075 = vmatprep.subr.mxu0 0.0
    %8076 = vmatpush1.msra.mxu0 0.0
    %8077 = vmatprep.subr.mxu0 0.0
    %8078 = vmatpush1.msra.mxu0 0.0
    %8079 = vmatprep.subr.mxu0 0.0
    %8080 = vmatpush1.msra.mxu0 0.0
    %8081 = vmatprep.subr.mxu0 0.0
    %8082 = vmatpush1.msra.mxu0 0.0
    %8083 = vmatprep.subr.mxu0 0.0
    %8084 = vmatpush1.msra.mxu0 0.0
    %8085 = vmatprep.subr.mxu0 0.0
    %8086 = vmatpush1.msra.mxu0 0.0
    %8087 = vmatprep.subr.mxu0 0.0
    %8088 = vmatpush1.msra.mxu0 0.0
    %8089 = vmatprep.subr.mxu0 0.0
    %8090 = vmatpush1.msra.mxu0 0.0
    %8091 = vmatprep.subr.mxu0 0.0
    %8092 = vmatpush1.msra.mxu0 0.0
    %8093 = vmatprep.subr.mxu0 0.0
    %8094 = vmatpush1.msra.mxu0 0.0
    %8095 = vmatprep.subr.mxu0 0.0
    %8096 = vmatpush1.msra.mxu0 0.0
    %8097 = vmatprep.subr.mxu0 0.0
    %8098 = vmatpush1.msra.mxu0 0.0
    %8099 = vmatprep.subr.mxu0 0.0
    %8100 = vmatpush1.msra.mxu0 0.0
    %8101 = vmatprep.subr.mxu0 0.0
    %8102 = vmatpush1.msra.mxu0 0.0
    %8103 = vmatprep.subr.mxu0 0.0
    %8104 = vmatpush1.msra.mxu0 0.0
    %8105 = vmatprep.subr.mxu0 0.0
    %8106 = vmatpush1.msra.mxu0 0.0
    %8107 = vmatprep.subr.mxu0 0.0
    %8108 = vmatpush1.msra.mxu0 0.0
    %8109 = vmatprep.subr.mxu0 0.0
    %8110 = vmatpush1.msra.mxu0 0.0
    %8111 = vmatprep.subr.mxu0 0.0
    %8112 = vmatpush1.msra.mxu0 0.0
    %8113 = vmatprep.mubr.f32.mxu0 0.0
    %8114 = vmatmul.mubr.f32.gmra.mrb[0].mxu0 %v8047
    %v8115 = vpop.f32.mrb[0].mxu0
    %v8116 = vadd.f32 0.0, %v8115
    %v8117 = vpop.f32.mrb[0].mxu0
    %8118 = vdwg.mxu0
    %v8120 = vrot.slane %v8116, 4
    %v8122 = vadd.f32 %v4415, %v8120
    %v8123 = vxor.u32 %v8122, 2147483648
    %v8124 = vmul.f32 %v8123, 1.442695
    %v8125 = vpow.pop %v8124
    %v8126 = vadd.f32 %v8125, 1.0
    %v8127 = vrcp.pop %v8126
    %v8128 = vmul.f32 1.0, %v8127
    %8129 = vmatprep.subr.mxu0 0.0
    %8130 = vmatpush1.msra.mxu0 %v4619
    %8131 = vmatprep.subr.mxu0 0.0
    %8132 = vmatpush1.msra.mxu0 %v4620
    %8133 = vmatprep.subr.mxu0 0.0
    %8134 = vmatpush1.msra.mxu0 %v4621
    %8135 = vmatprep.subr.mxu0 0.0
    %8136 = vmatpush1.msra.mxu0 %v4622
    %8137 = vmatprep.subr.mxu0 0.0
    %8138 = vmatpush1.msra.mxu0 0.0
    %8139 = vmatprep.subr.mxu0 0.0
    %8140 = vmatpush1.msra.mxu0 0.0
    %8141 = vmatprep.subr.mxu0 0.0
    %8142 = vmatpush1.msra.mxu0 0.0
    %8143 = vmatprep.subr.mxu0 0.0
    %8144 = vmatpush1.msra.mxu0 0.0
    %8145 = vmatprep.subr.mxu0 0.0
    %8146 = vmatpush1.msra.mxu0 0.0
    %8147 = vmatprep.subr.mxu0 0.0
    %8148 = vmatpush1.msra.mxu0 0.0
    %8149 = vmatprep.subr.mxu0 0.0
    %8150 = vmatpush1.msra.mxu0 0.0
    %8151 = vmatprep.subr.mxu0 0.0
    %8152 = vmatpush1.msra.mxu0 0.0
    %8153 = vmatprep.subr.mxu0 0.0
    %8154 = vmatpush1.msra.mxu0 0.0
    %8155 = vmatprep.subr.mxu0 0.0
    %8156 = vmatpush1.msra.mxu0 0.0
    %8157 = vmatprep.subr.mxu0 0.0
    %8158 = vmatpush1.msra.mxu0 0.0
    %8159 = vmatprep.subr.mxu0 0.0
    %8160 = vmatpush1.msra.mxu0 0.0
    %8161 = vmatprep.subr.mxu0 0.0
    %8162 = vmatpush1.msra.mxu0 0.0
    %8163 = vmatprep.subr.mxu0 0.0
    %8164 = vmatpush1.msra.mxu0 0.0
    %8165 = vmatprep.subr.mxu0 0.0
    %8166 = vmatpush1.msra.mxu0 0.0
    %8167 = vmatprep.subr.mxu0 0.0
    %8168 = vmatpush1.msra.mxu0 0.0
    %8169 = vmatprep.subr.mxu0 0.0
    %8170 = vmatpush1.msra.mxu0 0.0
    %8171 = vmatprep.subr.mxu0 0.0
    %8172 = vmatpush1.msra.mxu0 0.0
    %8173 = vmatprep.subr.mxu0 0.0
    %8174 = vmatpush1.msra.mxu0 0.0
    %8175 = vmatprep.subr.mxu0 0.0
    %8176 = vmatpush1.msra.mxu0 0.0
    %8177 = vmatprep.subr.mxu0 0.0
    %8178 = vmatpush1.msra.mxu0 0.0
    %8179 = vmatprep.subr.mxu0 0.0
    %8180 = vmatpush1.msra.mxu0 0.0
    %8181 = vmatprep.subr.mxu0 0.0
    %8182 = vmatpush1.msra.mxu0 0.0
    %8183 = vmatprep.subr.mxu0 0.0
    %8184 = vmatpush1.msra.mxu0 0.0
    %8185 = vmatprep.subr.mxu0 0.0
    %8186 = vmatpush1.msra.mxu0 0.0
    %8187 = vmatprep.subr.mxu0 0.0
    %8188 = vmatpush1.msra.mxu0 0.0
    %8189 = vmatprep.subr.mxu0 0.0
    %8190 = vmatpush1.msra.mxu0 0.0
    %8191 = vmatprep.subr.mxu0 0.0
    %8192 = vmatpush1.msra.mxu0 0.0
    %8193 = vmatprep.mubr.f32.mxu0 0.0
    %8194 = vmatmul.mubr.f32.gmra.mrb[0].mxu0 %v8047
    %v8195 = vpop.f32.mrb[0].mxu0
    %v8196 = vadd.f32 0.0, %v8195
    %v8197 = vpop.f32.mrb[0].mxu0
    %8198 = vdwg.mxu0
    %v8200 = vrot.slane %v8196, 4
    %v8202 = vadd.f32 %v4513, %v8200
    %v8203 = vxor.u32 %v8202, 2147483648
    %v8204 = vmul.f32 %v8203, 1.442695
    %v8205 = vpow.pop %v8204
    %v8206 = vadd.f32 %v8205, 1.0
    %v8207 = vrcp.pop %v8206
    %v8208 = vmul.f32 1.0, %v8207
    %8209 = vmatprep.subr.mxu0 0.0
    %8210 = vmatpush1.msra.mxu0 %v4624
    %8211 = vmatprep.subr.mxu0 0.0
    %8212 = vmatpush1.msra.mxu0 %v4625
    %8213 = vmatprep.subr.mxu0 0.0
    %8214 = vmatpush1.msra.mxu0 %v4626
    %8215 = vmatprep.subr.mxu0 0.0
    %8216 = vmatpush1.msra.mxu0 %v4627
    %8217 = vmatprep.subr.mxu0 0.0
    %8218 = vmatpush1.msra.mxu0 0.0
    %8219 = vmatprep.subr.mxu0 0.0
    %8220 = vmatpush1.msra.mxu0 0.0
    %8221 = vmatprep.subr.mxu0 0.0
    %8222 = vmatpush1.msra.mxu0 0.0
    %8223 = vmatprep.subr.mxu0 0.0
    %8224 = vmatpush1.msra.mxu0 0.0
    %8225 = vmatprep.subr.mxu0 0.0
    %8226 = vmatpush1.msra.mxu0 0.0
    %8227 = vmatprep.subr.mxu0 0.0
    %8228 = vmatpush1.msra.mxu0 0.0
    %8229 = vmatprep.subr.mxu0 0.0
    %8230 = vmatpush1.msra.mxu0 0.0
    %8231 = vmatprep.subr.mxu0 0.0
    %8232 = vmatpush1.msra.mxu0 0.0
    %8233 = vmatprep.subr.mxu0 0.0
    %8234 = vmatpush1.msra.mxu0 0.0
    %8235 = vmatprep.subr.mxu0 0.0
    %8236 = vmatpush1.msra.mxu0 0.0
    %8237 = vmatprep.subr.mxu0 0.0
    %8238 = vmatpush1.msra.mxu0 0.0
    %8239 = vmatprep.subr.mxu0 0.0
    %8240 = vmatpush1.msra.mxu0 0.0
    %8241 = vmatprep.subr.mxu0 0.0
    %8242 = vmatpush1.msra.mxu0 0.0
    %8243 = vmatprep.subr.mxu0 0.0
    %8244 = vmatpush1.msra.mxu0 0.0
    %8245 = vmatprep.subr.mxu0 0.0
    %8246 = vmatpush1.msra.mxu0 0.0
    %8247 = vmatprep.subr.mxu0 0.0
    %8248 = vmatpush1.msra.mxu0 0.0
    %8249 = vmatprep.subr.mxu0 0.0
    %8250 = vmatpush1.msra.mxu0 0.0
    %8251 = vmatprep.subr.mxu0 0.0
    %8252 = vmatpush1.msra.mxu0 0.0
    %8253 = vmatprep.subr.mxu0 0.0
    %8254 = vmatpush1.msra.mxu0 0.0
    %8255 = vmatprep.subr.mxu0 0.0
    %8256 = vmatpush1.msra.mxu0 0.0
    %8257 = vmatprep.subr.mxu0 0.0
    %8258 = vmatpush1.msra.mxu0 0.0
    %8259 = vmatprep.subr.mxu0 0.0
    %8260 = vmatpush1.msra.mxu0 0.0
    %8261 = vmatprep.subr.mxu0 0.0
    %8262 = vmatpush1.msra.mxu0 0.0
    %8263 = vmatprep.subr.mxu0 0.0
    %8264 = vmatpush1.msra.mxu0 0.0
    %8265 = vmatprep.subr.mxu0 0.0
    %8266 = vmatpush1.msra.mxu0 0.0
    %8267 = vmatprep.subr.mxu0 0.0
    %8268 = vmatpush1.msra.mxu0 0.0
    %8269 = vmatprep.subr.mxu0 0.0
    %8270 = vmatpush1.msra.mxu0 0.0
    %8271 = vmatprep.subr.mxu0 0.0
    %8272 = vmatpush1.msra.mxu0 0.0
    %8273 = vmatprep.mubr.f32.mxu0 0.0
    %8274 = vmatmul.mubr.f32.gmra.mrb[0].mxu0 %v8047
    %v8275 = vpop.f32.mrb[0].mxu0
    %v8276 = vadd.f32 %v4634, %v8275
    %v8277 = vpop.f32.mrb[0].mxu0
    %8278 = vdwg.mxu0
    %v8280 = vrot.slane %v8276, 4
    %v8282 = vmul.f32 %v8128, %v8280
    %v8283 = vadd.f32 %v4611, %v8282
    %v8284 = vtanh.pop %v8283
    %v8285 = vsub.f32 1.0, %v8208
    %v8286 = vmul.f32 %v8285, %v8284
    %v8287 = vrot.slane %v8043, 6
    %v8289 = vmul.f32 %v8208, %v8287
    %v8290 = vadd.f32 %v8286, %v8289
    %8291 = vst.msk [vmem:[#allocation2 + $0x18] sm:$0x30] %vm1125, %v8290
    %v8293 = vrot.slane %v8290, 4
    %v8294 = vsel %vm395, %v8293, 0
    %8296 = vmatprep.subr.mxu0 0.0
    %8297 = vmatpush1.msra.mxu0 %v4614
    %8298 = vmatprep.subr.mxu0 0.0
    %8299 = vmatpush1.msra.mxu0 %v4615
    %8300 = vmatprep.subr.mxu0 0.0
    %8301 = vmatpush1.msra.mxu0 %v4616
    %8302 = vmatprep.subr.mxu0 0.0
    %8303 = vmatpush1.msra.mxu0 %v4617
    %8304 = vmatprep.subr.mxu0 0.0
    %8305 = vmatpush1.msra.mxu0 0.0
    %8306 = vmatprep.subr.mxu0 0.0
    %8307 = vmatpush1.msra.mxu0 0.0
    %8308 = vmatprep.subr.mxu0 0.0
    %8309 = vmatpush1.msra.mxu0 0.0
    %8310 = vmatprep.subr.mxu0 0.0
    %8311 = vmatpush1.msra.mxu0 0.0
    %8312 = vmatprep.subr.mxu0 0.0
    %8313 = vmatpush1.msra.mxu0 0.0
    %8314 = vmatprep.subr.mxu0 0.0
    %8315 = vmatpush1.msra.mxu0 0.0
    %8316 = vmatprep.subr.mxu0 0.0
    %8317 = vmatpush1.msra.mxu0 0.0
    %8318 = vmatprep.subr.mxu0 0.0
    %8319 = vmatpush1.msra.mxu0 0.0
    %8320 = vmatprep.subr.mxu0 0.0
    %8321 = vmatpush1.msra.mxu0 0.0
    %8322 = vmatprep.subr.mxu0 0.0
    %8323 = vmatpush1.msra.mxu0 0.0
    %8324 = vmatprep.subr.mxu0 0.0
    %8325 = vmatpush1.msra.mxu0 0.0
    %8326 = vmatprep.subr.mxu0 0.0
    %8327 = vmatpush1.msra.mxu0 0.0
    %8328 = vmatprep.subr.mxu0 0.0
    %8329 = vmatpush1.msra.mxu0 0.0
    %8330 = vmatprep.subr.mxu0 0.0
    %8331 = vmatpush1.msra.mxu0 0.0
    %8332 = vmatprep.subr.mxu0 0.0
    %8333 = vmatpush1.msra.mxu0 0.0
    %8334 = vmatprep.subr.mxu0 0.0
    %8335 = vmatpush1.msra.mxu0 0.0
    %8336 = vmatprep.subr.mxu0 0.0
    %8337 = vmatpush1.msra.mxu0 0.0
    %8338 = vmatprep.subr.mxu0 0.0
    %8339 = vmatpush1.msra.mxu0 0.0
    %8340 = vmatprep.subr.mxu0 0.0
    %8341 = vmatpush1.msra.mxu0 0.0
    %8342 = vmatprep.subr.mxu0 0.0
    %8343 = vmatpush1.msra.mxu0 0.0
    %8344 = vmatprep.subr.mxu0 0.0
    %8345 = vmatpush1.msra.mxu0 0.0
    %8346 = vmatprep.subr.mxu0 0.0
    %8347 = vmatpush1.msra.mxu0 0.0
    %8348 = vmatprep.subr.mxu0 0.0
    %8349 = vmatpush1.msra.mxu0 0.0
    %8350 = vmatprep.subr.mxu0 0.0
    %8351 = vmatpush1.msra.mxu0 0.0
    %8352 = vmatprep.subr.mxu0 0.0
    %8353 = vmatpush1.msra.mxu0 0.0
    %8354 = vmatprep.subr.mxu0 0.0
    %8355 = vmatpush1.msra.mxu0 0.0
    %8356 = vmatprep.subr.mxu0 0.0
    %8357 = vmatpush1.msra.mxu0 0.0
    %8358 = vmatprep.subr.mxu0 0.0
    %8359 = vmatpush1.msra.mxu0 0.0
    %8360 = vmatprep.mubr.f32.mxu0 0.0
    %8361 = vmatmul.mubr.f32.gmra.mrb[0].mxu0 %v8294
    %v8362 = vpop.f32.mrb[0].mxu0
    %v8363 = vadd.f32 0.0, %v8362
    %v8364 = vpop.f32.mrb[0].mxu0
    %8365 = vdwg.mxu0
    %v8367 = vrot.slane %v8363, 2
    %v8369 = vadd.f32 %v4415, %v8367
    %v8370 = vxor.u32 %v8369, 2147483648
    %v8371 = vmul.f32 %v8370, 1.442695
    %v8372 = vpow.pop %v8371
    %v8373 = vadd.f32 %v8372, 1.0
    %v8374 = vrcp.pop %v8373
    %v8375 = vmul.f32 1.0, %v8374
    %8376 = vmatprep.subr.mxu0 0.0
    %8377 = vmatpush1.msra.mxu0 %v4619
    %8378 = vmatprep.subr.mxu0 0.0
    %8379 = vmatpush1.msra.mxu0 %v4620
    %8380 = vmatprep.subr.mxu0 0.0
    %8381 = vmatpush1.msra.mxu0 %v4621
    %8382 = vmatprep.subr.mxu0 0.0
    %8383 = vmatpush1.msra.mxu0 %v4622
    %8384 = vmatprep.subr.mxu0 0.0
    %8385 = vmatpush1.msra.mxu0 0.0
    %8386 = vmatprep.subr.mxu0 0.0
    %8387 = vmatpush1.msra.mxu0 0.0
    %8388 = vmatprep.subr.mxu0 0.0
    %8389 = vmatpush1.msra.mxu0 0.0
    %8390 = vmatprep.subr.mxu0 0.0
    %8391 = vmatpush1.msra.mxu0 0.0
    %8392 = vmatprep.subr.mxu0 0.0
    %8393 = vmatpush1.msra.mxu0 0.0
    %8394 = vmatprep.subr.mxu0 0.0
    %8395 = vmatpush1.msra.mxu0 0.0
    %8396 = vmatprep.subr.mxu0 0.0
    %8397 = vmatpush1.msra.mxu0 0.0
    %8398 = vmatprep.subr.mxu0 0.0
    %8399 = vmatpush1.msra.mxu0 0.0
    %8400 = vmatprep.subr.mxu0 0.0
    %8401 = vmatpush1.msra.mxu0 0.0
    %8402 = vmatprep.subr.mxu0 0.0
    %8403 = vmatpush1.msra.mxu0 0.0
    %8404 = vmatprep.subr.mxu0 0.0
    %8405 = vmatpush1.msra.mxu0 0.0
    %8406 = vmatprep.subr.mxu0 0.0
    %8407 = vmatpush1.msra.mxu0 0.0
    %8408 = vmatprep.subr.mxu0 0.0
    %8409 = vmatpush1.msra.mxu0 0.0
    %8410 = vmatprep.subr.mxu0 0.0
    %8411 = vmatpush1.msra.mxu0 0.0
    %8412 = vmatprep.subr.mxu0 0.0
    %8413 = vmatpush1.msra.mxu0 0.0
    %8414 = vmatprep.subr.mxu0 0.0
    %8415 = vmatpush1.msra.mxu0 0.0
    %8416 = vmatprep.subr.mxu0 0.0
    %8417 = vmatpush1.msra.mxu0 0.0
    %8418 = vmatprep.subr.mxu0 0.0
    %8419 = vmatpush1.msra.mxu0 0.0
    %8420 = vmatprep.subr.mxu0 0.0
    %8421 = vmatpush1.msra.mxu0 0.0
    %8422 = vmatprep.subr.mxu0 0.0
    %8423 = vmatpush1.msra.mxu0 0.0
    %8424 = vmatprep.subr.mxu0 0.0
    %8425 = vmatpush1.msra.mxu0 0.0
    %8426 = vmatprep.subr.mxu0 0.0
    %8427 = vmatpush1.msra.mxu0 0.0
    %8428 = vmatprep.subr.mxu0 0.0
    %8429 = vmatpush1.msra.mxu0 0.0
    %8430 = vmatprep.subr.mxu0 0.0
    %8431 = vmatpush1.msra.mxu0 0.0
    %8432 = vmatprep.subr.mxu0 0.0
    %8433 = vmatpush1.msra.mxu0 0.0
    %8434 = vmatprep.subr.mxu0 0.0
    %8435 = vmatpush1.msra.mxu0 0.0
    %8436 = vmatprep.subr.mxu0 0.0
    %8437 = vmatpush1.msra.mxu0 0.0
    %8438 = vmatprep.subr.mxu0 0.0
    %8439 = vmatpush1.msra.mxu0 0.0
    %8440 = vmatprep.mubr.f32.mxu0 0.0
    %8441 = vmatmul.mubr.f32.gmra.mrb[0].mxu0 %v8294
    %v8442 = vpop.f32.mrb[0].mxu0
    %v8443 = vadd.f32 0.0, %v8442
    %v8444 = vpop.f32.mrb[0].mxu0
    %8445 = vdwg.mxu0
    %v8447 = vrot.slane %v8443, 2
    %v8449 = vadd.f32 %v4513, %v8447
    %v8450 = vxor.u32 %v8449, 2147483648
    %v8451 = vmul.f32 %v8450, 1.442695
    %v8452 = vpow.pop %v8451
    %v8453 = vadd.f32 %v8452, 1.0
    %v8454 = vrcp.pop %v8453
    %v8455 = vmul.f32 1.0, %v8454
    %8456 = vmatprep.subr.mxu0 0.0
    %8457 = vmatpush1.msra.mxu0 %v4624
    %8458 = vmatprep.subr.mxu0 0.0
    %8459 = vmatpush1.msra.mxu0 %v4625
    %8460 = vmatprep.subr.mxu0 0.0
    %8461 = vmatpush1.msra.mxu0 %v4626
    %8462 = vmatprep.subr.mxu0 0.0
    %8463 = vmatpush1.msra.mxu0 %v4627
    %8464 = vmatprep.subr.mxu0 0.0
    %8465 = vmatpush1.msra.mxu0 0.0
    %8466 = vmatprep.subr.mxu0 0.0
    %8467 = vmatpush1.msra.mxu0 0.0
    %8468 = vmatprep.subr.mxu0 0.0
    %8469 = vmatpush1.msra.mxu0 0.0
    %8470 = vmatprep.subr.mxu0 0.0
    %8471 = vmatpush1.msra.mxu0 0.0
    %8472 = vmatprep.subr.mxu0 0.0
    %8473 = vmatpush1.msra.mxu0 0.0
    %8474 = vmatprep.subr.mxu0 0.0
    %8475 = vmatpush1.msra.mxu0 0.0
    %8476 = vmatprep.subr.mxu0 0.0
    %8477 = vmatpush1.msra.mxu0 0.0
    %8478 = vmatprep.subr.mxu0 0.0
    %8479 = vmatpush1.msra.mxu0 0.0
    %8480 = vmatprep.subr.mxu0 0.0
    %8481 = vmatpush1.msra.mxu0 0.0
    %8482 = vmatprep.subr.mxu0 0.0
    %8483 = vmatpush1.msra.mxu0 0.0
    %8484 = vmatprep.subr.mxu0 0.0
    %8485 = vmatpush1.msra.mxu0 0.0
    %8486 = vmatprep.subr.mxu0 0.0
    %8487 = vmatpush1.msra.mxu0 0.0
    %8488 = vmatprep.subr.mxu0 0.0
    %8489 = vmatpush1.msra.mxu0 0.0
    %8490 = vmatprep.subr.mxu0 0.0
    %8491 = vmatpush1.msra.mxu0 0.0
    %8492 = vmatprep.subr.mxu0 0.0
    %8493 = vmatpush1.msra.mxu0 0.0
    %8494 = vmatprep.subr.mxu0 0.0
    %8495 = vmatpush1.msra.mxu0 0.0
    %8496 = vmatprep.subr.mxu0 0.0
    %8497 = vmatpush1.msra.mxu0 0.0
    %8498 = vmatprep.subr.mxu0 0.0
    %8499 = vmatpush1.msra.mxu0 0.0
    %8500 = vmatprep.subr.mxu0 0.0
    %8501 = vmatpush1.msra.mxu0 0.0
    %8502 = vmatprep.subr.mxu0 0.0
    %8503 = vmatpush1.msra.mxu0 0.0
    %8504 = vmatprep.subr.mxu0 0.0
    %8505 = vmatpush1.msra.mxu0 0.0
    %8506 = vmatprep.subr.mxu0 0.0
    %8507 = vmatpush1.msra.mxu0 0.0
    %8508 = vmatprep.subr.mxu0 0.0
    %8509 = vmatpush1.msra.mxu0 0.0
    %8510 = vmatprep.subr.mxu0 0.0
    %8511 = vmatpush1.msra.mxu0 0.0
    %8512 = vmatprep.subr.mxu0 0.0
    %8513 = vmatpush1.msra.mxu0 0.0
    %8514 = vmatprep.subr.mxu0 0.0
    %8515 = vmatpush1.msra.mxu0 0.0
    %8516 = vmatprep.subr.mxu0 0.0
    %8517 = vmatpush1.msra.mxu0 0.0
    %8518 = vmatprep.subr.mxu0 0.0
    %8519 = vmatpush1.msra.mxu0 0.0
    %8520 = vmatprep.mubr.f32.mxu0 0.0
    %8521 = vmatmul.mubr.f32.gmra.mrb[0].mxu0 %v8294
    %v8522 = vpop.f32.mrb[0].mxu0
    %v8523 = vadd.f32 %v4634, %v8522
    %v8524 = vpop.f32.mrb[0].mxu0
    %8525 = vdwg.mxu0
    %v8527 = vrot.slane %v8523, 2
    %v8529 = vmul.f32 %v8375, %v8527
    %v8530 = vadd.f32 %v4611, %v8529
    %v8531 = vtanh.pop %v8530
    %v8532 = vsub.f32 1.0, %v8455
    %v8533 = vmul.f32 %v8532, %v8531
    %v8534 = vrot.slane %v8290, 6
    %v8536 = vmul.f32 %v8455, %v8534
    %v8537 = vadd.f32 %v8533, %v8536
    %8538 = vst.msk [vmem:[#allocation2 + $0x18] sm:$0xc0] %vm1373, %v8537
    %v8539 = vld [vmem:[#allocation2 + $0x18] sm:$0xff]
    %v8540 = vld [vmem:[%s7] sm:$0xff]
    %v8541 = vld [vmem:[%s7 + $0x8] sm:$0xff]
    %v8542 = vld [vmem:[%s7 + $0x10] sm:$0xff]
    %v8543 = vld [vmem:[%s7 + $0x18] sm:$0xff]
    %v8544 = vld [vmem:[%s8] sm:$0x1]
    %v8546 = vlaneseq
    %v8547 = vshrl.u32 %v8546, 7
    %v8548 = vsub.s32 0, %v8547
    %v8549 = vrot.slane %v8544, %v8548
    %v8552 = vsel %vm395, %v8539, 0
    %8554 = vmatprep.subr.mxu0 0.0
    %8555 = vmatpush1.msra.mxu0 %v8540
    %8556 = vmatprep.subr.mxu0 0.0
    %8557 = vmatpush1.msra.mxu0 %v8541
    %8558 = vmatprep.subr.mxu0 0.0
    %8559 = vmatpush1.msra.mxu0 %v8542
    %8560 = vmatprep.subr.mxu0 0.0
    %8561 = vmatpush1.msra.mxu0 %v8543
    %8562 = vmatprep.subr.mxu0 0.0
    %8563 = vmatpush1.msra.mxu0 0.0
    %8564 = vmatprep.subr.mxu0 0.0
    %8565 = vmatpush1.msra.mxu0 0.0
    %8566 = vmatprep.subr.mxu0 0.0
    %8567 = vmatpush1.msra.mxu0 0.0
    %8568 = vmatprep.subr.mxu0 0.0
    %8569 = vmatpush1.msra.mxu0 0.0
    %8570 = vmatprep.subr.mxu0 0.0
    %8571 = vmatpush1.msra.mxu0 0.0
    %8572 = vmatprep.subr.mxu0 0.0
    %8573 = vmatpush1.msra.mxu0 0.0
    %8574 = vmatprep.subr.mxu0 0.0
    %8575 = vmatpush1.msra.mxu0 0.0
    %8576 = vmatprep.subr.mxu0 0.0
    %8577 = vmatpush1.msra.mxu0 0.0
    %8578 = vmatprep.subr.mxu0 0.0
    %8579 = vmatpush1.msra.mxu0 0.0
    %8580 = vmatprep.subr.mxu0 0.0
    %8581 = vmatpush1.msra.mxu0 0.0
    %8582 = vmatprep.subr.mxu0 0.0
    %8583 = vmatpush1.msra.mxu0 0.0
    %8584 = vmatprep.subr.mxu0 0.0
    %8585 = vmatpush1.msra.mxu0 0.0
    %8586 = vmatprep.subr.mxu0 0.0
    %8587 = vmatpush1.msra.mxu0 0.0
    %8588 = vmatprep.subr.mxu0 0.0
    %8589 = vmatpush1.msra.mxu0 0.0
    %8590 = vmatprep.subr.mxu0 0.0
    %8591 = vmatpush1.msra.mxu0 0.0
    %8592 = vmatprep.subr.mxu0 0.0
    %8593 = vmatpush1.msra.mxu0 0.0
    %8594 = vmatprep.subr.mxu0 0.0
    %8595 = vmatpush1.msra.mxu0 0.0
    %8596 = vmatprep.subr.mxu0 0.0
    %8597 = vmatpush1.msra.mxu0 0.0
    %8598 = vmatprep.subr.mxu0 0.0
    %8599 = vmatpush1.msra.mxu0 0.0
    %8600 = vmatprep.subr.mxu0 0.0
    %8601 = vmatpush1.msra.mxu0 0.0
    %8602 = vmatprep.subr.mxu0 0.0
    %8603 = vmatpush1.msra.mxu0 0.0
    %8604 = vmatprep.subr.mxu0 0.0
    %8605 = vmatpush1.msra.mxu0 0.0
    %8606 = vmatprep.subr.mxu0 0.0
    %8607 = vmatpush1.msra.mxu0 0.0
    %8608 = vmatprep.subr.mxu0 0.0
    %8609 = vmatpush1.msra.mxu0 0.0
    %8610 = vmatprep.subr.mxu0 0.0
    %8611 = vmatpush1.msra.mxu0 0.0
    %8612 = vmatprep.subr.mxu0 0.0
    %8613 = vmatpush1.msra.mxu0 0.0
    %8614 = vmatprep.subr.mxu0 0.0
    %8615 = vmatpush1.msra.mxu0 0.0
    %8616 = vmatprep.subr.mxu0 0.0
    %8617 = vmatpush1.msra.mxu0 0.0
    %8618 = vmatprep.mubr.f32.mxu0 0.0
    %8619 = vmatmul.mubr.f32.gmra.mrb[0].mxu0 %v8552
    %v8620 = vpop.f32.mrb[0].mxu0
    %v8621 = vadd.f32 %v8549, %v8620
    %v8622 = vpop.f32.mrb[0].mxu0
    %8623 = vdwg.mxu0
    %vm8624 = vcmask 31744
    %8625 = vst.msk [vmem:[%s9] sm:$0xff] %vm8624, %v8621
    // Predicated region
    $region50: #{tpu_custom_call.1} parent=1 // pred_check
      _
    $region51: #{tpu_custom_call.1} parent=1 // pred_check_branch
      %8627 = sbr.rel (0) target = $region53
    $region52: #{tpu_custom_call.1} parent=1 // pred_region
      _
    $region53: #{tpu_custom_call.1} parent=1 // pred_fallthru
      _
    // Predicated region
    $region54: #{tpu_custom_call.1} parent=1 // pred_check
      _
    $region55: #{tpu_custom_call.1} parent=1 // pred_check_branch
      %8629 = sbr.rel (0) target = $region57
    $region56: #{tpu_custom_call.1} parent=1 // pred_region
      _
    $region57: #{tpu_custom_call.1} parent=1 // pred_fallthru
      _
    %8630 = vsyncpa [#allocation4], 1
    %8631 = vsyncpa [#allocation6], 1

</llo_original>
